<compile_context>
chip_gen: v5e
topology: v5e:2x2
jax: 0.10.0
libtpu: 0.0.40
codegen_flags: <defaults>
</compile_context>

<pallas_src>
import jax
import jax.numpy as jnp
from jax.experimental import pallas as pl
from jax.experimental.pallas import tpu as pltpu


def _round_up(x, m):
    return (x + m - 1) // m * m


def _make_residual_kernel(nb, h, w, rs, cin_p, cout_p, wp, has_sc_conv):
    """Fused residual-block kernel for static (padded) shapes.

    Each grid step processes `nb` images.  Work inside the step is strip-mined over `rs`-row
    strips so every matmul LHS is (rs*w, 9*C) and all f32 temporaries stay strip-sized.
    """
    ms = rs * w            # im2col rows per strip
    k1 = 9 * cin_p         # conv1 contraction width
    k2 = 9 * cout_p        # conv2 contraction width
    n_strips = h // rs

    def kernel(x_ref, w1_ref, b1_ref, w2_ref, b2_ref, *rest):
        # x_ref    : (nb, H+2, W+2, Cin_p)  bf16   host zero-padded input
        # w1_ref   : (9*Cin_p, Cout_p)      bf16   BN1-scale-folded im2col weights
        # w2_ref   : (9*Cout_p, Cout_p)     bf16   BN2-scale-folded im2col weights
        # b*_ref   : (1, Cout_p)            f32    folded BN biases
        # wsc/bsc  : (optional) shortcut 1x1 conv weight (bf16) + folded BN bias (f32)
        # o_ref    : (nb, H, W, Cout_p)     f32    output block (also parks the shortcut value)
        # pad_ref  : (nb, H+2, Wp, Cout_p)  bf16   zero-bordered conv1 output
        # patch_ref: (rs*W, 9*max(Cin_p, Cout_p)) bf16   per-strip im2col patch matrix
        if has_sc_conv:
            wsc_ref, bsc_ref, o_ref, pad_ref, patch_ref = rest
        else:
            o_ref, pad_ref, patch_ref = rest

        b1 = b1_ref[...]
        b2 = b2_ref[...]
        bsc = bsc_ref[...] if has_sc_conv else None

        # ---- pad_ref: zero only the 1-pixel border (the interior is fully overwritten below).
        # Re-zeroed every step so the kernel stays correct when the batch grid axis is sharded
        # across TensorCores ("parallel" semantics).  Columns w+2..wp-1 are never read.
        zrow = jnp.zeros((nb, 1, wp, cout_p), pad_ref.dtype)
        zcol = jnp.zeros((nb, h, 1, cout_p), pad_ref.dtype)
        pad_ref[:, 0:1, :, :] = zrow
        pad_ref[:, h + 1:h + 2, :, :] = zrow
        pad_ref[:, 1:h + 1, 0:1, :] = zcol
        pad_ref[:, 1:h + 1, w + 1:w + 2, :] = zcol

        # ---- pass 1 (per strip): conv1 im2col -> single MXU matmul (K = 9*Cin_p) -> BN1 bias +
        # ReLU -> bf16, written straight into pad_ref's interior (no full-M f32 y1).  The shortcut
        # reuses conv1's im2col center tap (no extra x relayout) and is parked (f32) in o_ref
        # before conv2's patch build overwrites patch_ref.
        for b in range(nb):
            for s in range(n_strips):
                y0 = s * rs
                for dy in range(3):
                    for dx in range(3):
                        c0 = (dy * 3 + dx) * cin_p
                        patch_ref[:, c0:c0 + cin_p] = (
                            x_ref[b:b + 1, dy + y0:dy + y0 + rs, dx:dx + w, :]
                            .reshape(ms, cin_p))
                y1 = jnp.dot(patch_ref[:, :k1], w1_ref[...],
                             preferred_element_type=jnp.float32)
                y1 = jnp.maximum(y1 + b1, 0.0)
                pad_ref[b:b + 1, 1 + y0:1 + y0 + rs, 1:w + 1, :] = (
                    y1.reshape(1, rs, w, cout_p).astype(pad_ref.dtype))

                xc = patch_ref[:, 4 * cin_p:5 * cin_p]   # center tap == x[b, y0:y0+rs, :, :]
                if has_sc_conv:
                    sc = jnp.dot(xc, wsc_ref[...],
                                 preferred_element_type=jnp.float32) + bsc
                else:
                    sc = xc.astype(jnp.float32)          # cin_p == cout_p in this case
                o_ref[b:b + 1, y0:y0 + rs, :, :] = sc.reshape(1, rs, w, cout_p)

        # ---- pass 2 (per strip): conv2 im2col -> single MXU matmul (K = 9*Cout_p) -> BN2 bias +
        # shortcut add + ReLU, fused into the output block (no full-M f32 y2/out).
        for b in range(nb):
            for s in range(n_strips):
                y0 = s * rs
                for dy in range(3):
                    for dx in range(3):
                        c0 = (dy * 3 + dx) * cout_p
                        patch_ref[:, c0:c0 + cout_p] = (
                            pad_ref[b:b + 1, dy + y0:dy + y0 + rs, dx:dx + w, :]
                            .reshape(ms, cout_p))
                y2 = jnp.dot(patch_ref[:, :k2], w2_ref[...],
                             preferred_element_type=jnp.float32)
                sc = o_ref[b:b + 1, y0:y0 + rs, :, :].reshape(ms, cout_p)
                out = jnp.maximum(y2 + b2 + sc, 0.0)
                o_ref[b:b + 1, y0:y0 + rs, :, :] = out.reshape(1, rs, w, cout_p)

    return kernel


def _fold_bn_into_conv(w_oihw, bn, eps=1e-5):
    """Folds eval-mode BN scale into the conv weight; returns (HWIO weight, per-channel bias)."""
    gamma, beta, mean, var = bn
    scale = gamma / jnp.sqrt(var + eps)
    w_hwio = jnp.transpose(w_oihw, (2, 3, 1, 0)).astype(jnp.float32) * scale
    bias = beta - mean * scale
    return w_hwio, bias


def residual_block_forward(x_nchw, params, stride=1, eps=1e-5):
    # TODO(synk): stride > 1 not implemented; BN is inference-mode (running stats).
    assert stride == 1, "stride > 1 not implemented"
    n, cin, h, w = x_nchw.shape
    cout = params["w1"].shape[0]
    has_sc_conv = "wsc" in params
    if not has_sc_conv:
        assert cin == cout, "identity shortcut requires cin == cout"

    # lane-dense channel padding: last dim of every VMEM ref is a multiple of 128
    cin_p = _round_up(cin, 128)
    cout_p = _round_up(cout, 128)
    cmax = max(cin_p, cout_p)
    wp = _round_up(w + 2, 8)                       # sublane-align the pad scratch's W dim

    # rows per in-kernel strip: largest divisor of h giving <= ~512 im2col rows per strip
    # (keeps per-strip f32 temporaries vreg-friendly and the patch scratch strip-sized).
    rs = 1
    for r in range(1, h + 1):
        if h % r == 0 and r * w <= max(512, w):
            rs = r
    ms = rs * w

    # per-generation VMEM budget (v7x has half the physical VMEM of v5e/v6e).
    kind = jax.devices()[0].device_kind.lower()
    if "v7" in kind:
        budget, vmem_limit = 40 << 20, 48 << 20
    elif ("v6" in kind) or ("v5 lite" in kind) or ("v5e" in kind) or ("v5lite" in kind):
        budget, vmem_limit = 64 << 20, 100 << 20
    else:
        budget, vmem_limit = 24 << 20, 32 << 20

    def _step_bytes(nb_):
        in_blk = nb_ * (h + 2) * (w + 2) * cin_p * 2            # bf16 input block
        out_blk = nb_ * h * w * cout_p * 4                      # f32 output block
        weights = ((9 * cin_p + 9 * cout_p) * cout_p * 2
                   + (cin_p * cout_p * 2 if has_sc_conv else 0)
                   + 3 * cout_p * 4)
        pad_scr = nb_ * (h + 2) * wp * cout_p * 2               # bf16 pad scratch
        patch_scr = ms * 9 * cmax * 2                           # bf16 per-strip im2col scratch
        temps = 3 * ms * cout_p * 4                             # live f32 strip temporaries
        # blocked operands + weights are double-buffered by the pipeline; scratches are not.
        return 2 * in_blk + 2 * out_blk + 2 * weights + pad_scr + patch_scr + temps

    # images per grid step: prefer >= 2 grid steps whenever N >= 2 (v7x megacore sharding of the
    # "parallel" batch axis) while staying under the per-step VMEM budget; cap static unrolling.
    min_steps = 2 if n >= 2 else 1
    nb = 1
    for d in sorted((d for d in range(1, n + 1) if n % d == 0), reverse=True):
        if n // d < min_steps:
            continue
        if _step_bytes(d) > budget:
            continue
        if d * (h // rs) > 16:          # keep the static strip unroll small
            continue
        nb = d
        break

    # host-side glue: BN-scale folding, channel padding, bf16 casts, im2col weight layout
    w1, b1 = _fold_bn_into_conv(params["w1"], params["bn1"], eps)   # (3,3,cin,cout)
    w2, b2 = _fold_bn_into_conv(params["w2"], params["bn2"], eps)   # (3,3,cout,cout)
    w1p = jnp.zeros((3, 3, cin_p, cout_p), jnp.float32).at[:, :, :cin, :cout].set(w1)
    w2p = jnp.zeros((3, 3, cout_p, cout_p), jnp.float32).at[:, :, :cout, :cout].set(w2)
    w1m = w1p.reshape(9 * cin_p, cout_p).astype(jnp.bfloat16)
    w2m = w2p.reshape(9 * cout_p, cout_p).astype(jnp.bfloat16)
    b1p = jnp.zeros((1, cout_p), jnp.float32).at[0, :cout].set(b1)
    b2p = jnp.zeros((1, cout_p), jnp.float32).at[0, :cout].set(b2)

    # NCHW -> NHWC, spatial zero-pad, channel pad, bf16 for the MXU
    x = jnp.transpose(x_nchw, (0, 2, 3, 1))
    xp = jnp.zeros((n, h + 2, w + 2, cin_p), jnp.bfloat16)
    xp = xp.at[:, 1:h + 1, 1:w + 1, :cin].set(x.astype(jnp.bfloat16))

    extra_args, extra_specs = (), []
    if has_sc_conv:
        wsc, bsc = _fold_bn_into_conv(params["wsc"], params["bnsc"], eps)  # (1,1,cin,cout)
        wscp = jnp.zeros((cin_p, cout_p), jnp.float32).at[:cin, :cout].set(wsc[0, 0])
        bscp = jnp.zeros((1, cout_p), jnp.float32).at[0, :cout].set(bsc)
        extra_args = (wscp.astype(jnp.bfloat16), bscp)
        extra_specs = [pl.BlockSpec((cin_p, cout_p), lambda b: (0, 0)),
                       pl.BlockSpec((1, cout_p), lambda b: (0, 0))]

    kernel = _make_residual_kernel(nb, h, w, rs, cin_p, cout_p, wp, has_sc_conv)

    out_nhwc = pl.pallas_call(
        kernel,
        out_shape=jax.ShapeDtypeStruct((n, h, w, cout_p), jnp.float32),
        grid_spec=pltpu.PrefetchScalarGridSpec(
            num_scalar_prefetch=0,
            grid=(n // nb,),
            in_specs=[
                pl.BlockSpec((nb, h + 2, w + 2, cin_p), lambda b: (b, 0, 0, 0)),
                pl.BlockSpec((9 * cin_p, cout_p), lambda b: (0, 0)),
                pl.BlockSpec((1, cout_p), lambda b: (0, 0)),
                pl.BlockSpec((9 * cout_p, cout_p), lambda b: (0, 0)),
                pl.BlockSpec((1, cout_p), lambda b: (0, 0)),
                *extra_specs,
            ],
            out_specs=pl.BlockSpec((nb, h, w, cout_p), lambda b: (b, 0, 0, 0)),
            scratch_shapes=[
                pltpu.VMEM((nb, h + 2, wp, cout_p), jnp.bfloat16),   # zero-bordered conv1 output
                pltpu.VMEM((ms, 9 * cmax), jnp.bfloat16),            # per-strip im2col patches
            ],
        ),
        compiler_params=pltpu.CompilerParams(
            dimension_semantics=("parallel",),       # batch axis: disjoint outputs -> megacore-safe
            vmem_limit_bytes=vmem_limit),
    )(xp, w1m, b1p, w2m, b2p, *extra_args)

    # strip channel padding, back to NCHW (see TODO at top about skipping this for fused stacks)
    return jnp.transpose(out_nhwc[..., :cout], (0, 3, 1, 2))


def _reference_forward(x_nchw, params, eps=1e-5):
    x = jnp.transpose(x_nchw, (0, 2, 3, 1)).astype(jnp.float32)

    def conv(y, w_oihw, stride, pad):
        w = jnp.transpose(w_oihw, (2, 3, 1, 0))
        return jax.lax.conv_general_dilated(
            y, w, (stride, stride), [(pad, pad), (pad, pad)],
            dimension_numbers=("NHWC", "HWIO", "NHWC"))

    def bn(y, p):
        g, b, mu, v = p
        return (y - mu) / jnp.sqrt(v + eps) * g + b

    out = jax.nn.relu(bn(conv(x, params["w1"], 1, 1), params["bn1"]))
    out = bn(conv(out, params["w2"], 1, 1), params["bn2"])
    sc = bn(conv(x, params["wsc"], 1, 0), params["bnsc"]) if "wsc" in params else x
    out = jax.nn.relu(out + sc)
    return jnp.transpose(out, (0, 3, 1, 2))


def make_params(key, cin, cout, stride):
    ks = jax.random.split(key, 6)

    def bn_params(k, c):
        k1, k2, k3, k4 = jax.random.split(k, 4)
        gamma = 0.5 + jax.random.uniform(k1, (c,), jnp.float32)
        beta = 0.1 * jax.random.normal(k2, (c,), jnp.float32)
        mean = 0.1 * jax.random.normal(k3, (c,), jnp.float32)
        var = 0.5 + jax.random.uniform(k4, (c,), jnp.float32)
        return gamma, beta, mean, var

    p = {
        "w1": 0.1 * jax.random.normal(ks[0], (cout, cin, 3, 3), jnp.float32),
        "bn1": bn_params(ks[1], cout),
        "w2": 0.1 * jax.random.normal(ks[2], (cout, cout, 3, 3), jnp.float32),
        "bn2": bn_params(ks[3], cout),
    }
    if stride != 1 or cin != cout:
        p["wsc"] = 0.1 * jax.random.normal(ks[4], (cout, cin, 1, 1), jnp.float32)
        p["bnsc"] = bn_params(ks[5], cout)
    return p


if __name__ == "__main__":
    key = jax.random.PRNGKey(0)

    # case 1: inchannel != outchannel -> 1x1-conv + BN shortcut path
    k1, k2 = jax.random.split(key)
    x1 = jax.random.normal(k1, (2, 4, 16, 16), jnp.float32)
    p1 = make_params(k2, 4, 8, 1)
    out1 = jax.block_until_ready(residual_block_forward(x1, p1, stride=1))
    ref1 = jax.block_until_ready(_reference_forward(x1, p1))
    assert out1.shape == (2, 8, 16, 16), out1.shape
    # tolerance loosened vs the f32 reference because MXU inputs are bf16 (f32 accumulation)
    assert jnp.allclose(out1, ref1, atol=1e-1, rtol=5e-2), float(jnp.max(jnp.abs(out1 - ref1)))

    # case 2: inchannel == outchannel, stride == 1 -> identity shortcut path
    k3, k4 = jax.random.split(k2)
    x2 = jax.random.normal(k3, (2, 8, 16, 16), jnp.float32)
    p2 = make_params(k4, 8, 8, 1)
    out2 = jax.block_until_ready(residual_block_forward(x2, p2, stride=1))
    ref2 = jax.block_until_ready(_reference_forward(x2, p2))
    assert out2.shape == (2, 8, 16, 16), out2.shape
    assert jnp.allclose(out2, ref2, atol=1e-1, rtol=5e-2), float(jnp.max(jnp.abs(out2 - ref2)))

    print("KERNEL_OK")
</pallas_src>

<mosaic_0001>
module attributes {stable_mosaic.version = 11 : i64} {
  func.func @kernel(%arg0: i32, %arg1: memref<1x18x18x128xbf16, #tpu.memory_space<vmem>>, %arg2: memref<1152x128xbf16, #tpu.memory_space<vmem>>, %arg3: memref<1x128xf32, #tpu.memory_space<vmem>>, %arg4: memref<1152x128xbf16, #tpu.memory_space<vmem>>, %arg5: memref<1x128xf32, #tpu.memory_space<vmem>>, %arg6: memref<128x128xbf16, #tpu.memory_space<vmem>>, %arg7: memref<1x128xf32, #tpu.memory_space<vmem>>, %arg8: memref<1x16x16x128xf32, #tpu.memory_space<vmem>>, %arg9: memref<1x18x24x128xbf16, #tpu.memory_space<vmem>>, %arg10: memref<256x1152xbf16, #tpu.memory_space<vmem>>) attributes {dimension_semantics = [#tpu.dimension_semantics<parallel>], iteration_bounds = array<i64: 2>, scalar_prefetch = 0 : i64, scratch_operands = 2 : i64, tpu.core_type = #tpu.core_type<tc>, window_params = [{transform_indices = @transform_0, window_bounds = array<i64: 1, 18, 18, 128>}, {pipeline_mode = #tpu.pipeline_mode<synchronous>, transform_indices = @transform_1, window_bounds = array<i64: 1152, 128>}, {pipeline_mode = #tpu.pipeline_mode<synchronous>, transform_indices = @transform_2, window_bounds = array<i64: 1, 128>}, {pipeline_mode = #tpu.pipeline_mode<synchronous>, transform_indices = @transform_3, window_bounds = array<i64: 1152, 128>}, {pipeline_mode = #tpu.pipeline_mode<synchronous>, transform_indices = @transform_4, window_bounds = array<i64: 1, 128>}, {pipeline_mode = #tpu.pipeline_mode<synchronous>, transform_indices = @transform_5, window_bounds = array<i64: 128, 128>}, {pipeline_mode = #tpu.pipeline_mode<synchronous>, transform_indices = @transform_6, window_bounds = array<i64: 1, 128>}, {transform_indices = @transform_7, window_bounds = array<i64: 1, 16, 16, 128>}]} {
    %c0 = arith.constant 0 : index
    %c0_0 = arith.constant 0 : index
    %0 = vector.load %arg3[%c0, %c0_0] : memref<1x128xf32, #tpu.memory_space<vmem>>, vector<1x128xf32>
    %c0_1 = arith.constant 0 : index
    %c0_2 = arith.constant 0 : index
    %1 = vector.load %arg5[%c0_1, %c0_2] : memref<1x128xf32, #tpu.memory_space<vmem>>, vector<1x128xf32>
    %c0_3 = arith.constant 0 : index
    %c0_4 = arith.constant 0 : index
    %2 = vector.load %arg7[%c0_3, %c0_4] : memref<1x128xf32, #tpu.memory_space<vmem>>, vector<1x128xf32>
    %cst = arith.constant 0.000000e+00 : bf16
    %3 = vector.broadcast %cst : bf16 to vector<1x1x24x128xbf16>
    %cst_5 = arith.constant 0.000000e+00 : bf16
    %4 = vector.broadcast %cst_5 : bf16 to vector<1x16x1x128xbf16>
    %c0_6 = arith.constant 0 : index
    %c0_7 = arith.constant 0 : index
    %c0_8 = arith.constant 0 : index
    %c0_9 = arith.constant 0 : index
    %5 = vector.load %arg9[%c0_6, %c0_7, %c0_8, %c0_9] : memref<1x18x24x128xbf16, #tpu.memory_space<vmem>>, vector<1x1x24x128xbf16>
    tpu.vector_store %arg9[%c0_6, %c0_7, %c0_8, %c0_9], %3 {strides = array<i32>} : memref<1x18x24x128xbf16, #tpu.memory_space<vmem>>, vector<1x1x24x128xbf16>,
    %c0_10 = arith.constant 0 : index
    %c17 = arith.constant 17 : index
    %c0_11 = arith.constant 0 : index
    %c0_12 = arith.constant 0 : index
    %6 = vector.load %arg9[%c0_10, %c17, %c0_11, %c0_12] : memref<1x18x24x128xbf16, #tpu.memory_space<vmem>>, vector<1x1x24x128xbf16>
    tpu.vector_store %arg9[%c0_10, %c17, %c0_11, %c0_12], %3 {strides = array<i32>} : memref<1x18x24x128xbf16, #tpu.memory_space<vmem>>, vector<1x1x24x128xbf16>,
    %c0_13 = arith.constant 0 : index
    %c1 = arith.constant 1 : index
    %c0_14 = arith.constant 0 : index
    %c0_15 = arith.constant 0 : index
    %7 = vector.load %arg9[%c0_13, %c1, %c0_14, %c0_15] : memref<1x18x24x128xbf16, #tpu.memory_space<vmem>>, vector<1x16x1x128xbf16>
    tpu.vector_store %arg9[%c0_13, %c1, %c0_14, %c0_15], %4 {strides = array<i32>} : memref<1x18x24x128xbf16, #tpu.memory_space<vmem>>, vector<1x16x1x128xbf16>,
    %c0_16 = arith.constant 0 : index
    %c1_17 = arith.constant 1 : index
    %c17_18 = arith.constant 17 : index
    %c0_19 = arith.constant 0 : index
    %8 = vector.load %arg9[%c0_16, %c1_17, %c17_18, %c0_19] : memref<1x18x24x128xbf16, #tpu.memory_space<vmem>>, vector<1x16x1x128xbf16>
    tpu.vector_store %arg9[%c0_16, %c1_17, %c17_18, %c0_19], %4 {strides = array<i32>} : memref<1x18x24x128xbf16, #tpu.memory_space<vmem>>, vector<1x16x1x128xbf16>,
    %c0_20 = arith.constant 0 : index
    %c0_21 = arith.constant 0 : index
    %c0_22 = arith.constant 0 : index
    %c0_23 = arith.constant 0 : index
    %9 = vector.load %arg1[%c0_20, %c0_21, %c0_22, %c0_23] : memref<1x18x18x128xbf16, #tpu.memory_space<vmem>>, vector<1x16x16x128xbf16>
    %10 = vector.shape_cast %9 : vector<1x16x16x128xbf16> to vector<256x128xbf16>
    %c0_24 = arith.constant 0 : index
    %c0_25 = arith.constant 0 : index
    %11 = vector.load %arg10[%c0_24, %c0_25] : memref<256x1152xbf16, #tpu.memory_space<vmem>>, vector<256x128xbf16>
    tpu.vector_store %arg10[%c0_24, %c0_25], %10 {strides = array<i32>} : memref<256x1152xbf16, #tpu.memory_space<vmem>>, vector<256x128xbf16>,
    %c0_26 = arith.constant 0 : index
    %c0_27 = arith.constant 0 : index
    %c1_28 = arith.constant 1 : index
    %c0_29 = arith.constant 0 : index
    %12 = vector.load %arg1[%c0_26, %c0_27, %c1_28, %c0_29] : memref<1x18x18x128xbf16, #tpu.memory_space<vmem>>, vector<1x16x16x128xbf16>
    %13 = vector.shape_cast %12 : vector<1x16x16x128xbf16> to vector<256x128xbf16>
    %c0_30 = arith.constant 0 : index
    %c128 = arith.constant 128 : index
    %14 = vector.load %arg10[%c0_30, %c128] : memref<256x1152xbf16, #tpu.memory_space<vmem>>, vector<256x128xbf16>
    tpu.vector_store %arg10[%c0_30, %c128], %13 {strides = array<i32>} : memref<256x1152xbf16, #tpu.memory_space<vmem>>, vector<256x128xbf16>,
    %c0_31 = arith.constant 0 : index
    %c0_32 = arith.constant 0 : index
    %c2 = arith.constant 2 : index
    %c0_33 = arith.constant 0 : index
    %15 = vector.load %arg1[%c0_31, %c0_32, %c2, %c0_33] : memref<1x18x18x128xbf16, #tpu.memory_space<vmem>>, vector<1x16x16x128xbf16>
    %16 = vector.shape_cast %15 : vector<1x16x16x128xbf16> to vector<256x128xbf16>
    %c0_34 = arith.constant 0 : index
    %c256 = arith.constant 256 : index
    %17 = vector.load %arg10[%c0_34, %c256] : memref<256x1152xbf16, #tpu.memory_space<vmem>>, vector<256x128xbf16>
    tpu.vector_store %arg10[%c0_34, %c256], %16 {strides = array<i32>} : memref<256x1152xbf16, #tpu.memory_space<vmem>>, vector<256x128xbf16>,
    %c0_35 = arith.constant 0 : index
    %c1_36 = arith.constant 1 : index
    %c0_37 = arith.constant 0 : index
    %c0_38 = arith.constant 0 : index
    %18 = vector.load %arg1[%c0_35, %c1_36, %c0_37, %c0_38] : memref<1x18x18x128xbf16, #tpu.memory_space<vmem>>, vector<1x16x16x128xbf16>
    %19 = vector.shape_cast %18 : vector<1x16x16x128xbf16> to vector<256x128xbf16>
    %c0_39 = arith.constant 0 : index
    %c384 = arith.constant 384 : index
    %20 = vector.load %arg10[%c0_39, %c384] : memref<256x1152xbf16, #tpu.memory_space<vmem>>, vector<256x128xbf16>
    tpu.vector_store %arg10[%c0_39, %c384], %19 {strides = array<i32>} : memref<256x1152xbf16, #tpu.memory_space<vmem>>, vector<256x128xbf16>,
    %c0_40 = arith.constant 0 : index
    %c1_41 = arith.constant 1 : index
    %c1_42 = arith.constant 1 : index
    %c0_43 = arith.constant 0 : index
    %21 = vector.load %arg1[%c0_40, %c1_41, %c1_42, %c0_43] : memref<1x18x18x128xbf16, #tpu.memory_space<vmem>>, vector<1x16x16x128xbf16>
    %22 = vector.shape_cast %21 : vector<1x16x16x128xbf16> to vector<256x128xbf16>
    %c0_44 = arith.constant 0 : index
    %c512 = arith.constant 512 : index
    %23 = vector.load %arg10[%c0_44, %c512] : memref<256x1152xbf16, #tpu.memory_space<vmem>>, vector<256x128xbf16>
    tpu.vector_store %arg10[%c0_44, %c512], %22 {strides = array<i32>} : memref<256x1152xbf16, #tpu.memory_space<vmem>>, vector<256x128xbf16>,
    %c0_45 = arith.constant 0 : index
    %c1_46 = arith.constant 1 : index
    %c2_47 = arith.constant 2 : index
    %c0_48 = arith.constant 0 : index
    %24 = vector.load %arg1[%c0_45, %c1_46, %c2_47, %c0_48] : memref<1x18x18x128xbf16, #tpu.memory_space<vmem>>, vector<1x16x16x128xbf16>
    %25 = vector.shape_cast %24 : vector<1x16x16x128xbf16> to vector<256x128xbf16>
    %c0_49 = arith.constant 0 : index
    %c640 = arith.constant 640 : index
    %26 = vector.load %arg10[%c0_49, %c640] : memref<256x1152xbf16, #tpu.memory_space<vmem>>, vector<256x128xbf16>
    tpu.vector_store %arg10[%c0_49, %c640], %25 {strides = array<i32>} : memref<256x1152xbf16, #tpu.memory_space<vmem>>, vector<256x128xbf16>,
    %c0_50 = arith.constant 0 : index
    %c2_51 = arith.constant 2 : index
    %c0_52 = arith.constant 0 : index
    %c0_53 = arith.constant 0 : index
    %27 = vector.load %arg1[%c0_50, %c2_51, %c0_52, %c0_53] : memref<1x18x18x128xbf16, #tpu.memory_space<vmem>>, vector<1x16x16x128xbf16>
    %28 = vector.shape_cast %27 : vector<1x16x16x128xbf16> to vector<256x128xbf16>
    %c0_54 = arith.constant 0 : index
    %c768 = arith.constant 768 : index
    %29 = vector.load %arg10[%c0_54, %c768] : memref<256x1152xbf16, #tpu.memory_space<vmem>>, vector<256x128xbf16>
    tpu.vector_store %arg10[%c0_54, %c768], %28 {strides = array<i32>} : memref<256x1152xbf16, #tpu.memory_space<vmem>>, vector<256x128xbf16>,
    %c0_55 = arith.constant 0 : index
    %c2_56 = arith.constant 2 : index
    %c1_57 = arith.constant 1 : index
    %c0_58 = arith.constant 0 : index
    %30 = vector.load %arg1[%c0_55, %c2_56, %c1_57, %c0_58] : memref<1x18x18x128xbf16, #tpu.memory_space<vmem>>, vector<1x16x16x128xbf16>
    %31 = vector.shape_cast %30 : vector<1x16x16x128xbf16> to vector<256x128xbf16>
    %c0_59 = arith.constant 0 : index
    %c896 = arith.constant 896 : index
    %32 = vector.load %arg10[%c0_59, %c896] : memref<256x1152xbf16, #tpu.memory_space<vmem>>, vector<256x128xbf16>
    tpu.vector_store %arg10[%c0_59, %c896], %31 {strides = array<i32>} : memref<256x1152xbf16, #tpu.memory_space<vmem>>, vector<256x128xbf16>,
    %c0_60 = arith.constant 0 : index
    %c2_61 = arith.constant 2 : index
    %c2_62 = arith.constant 2 : index
    %c0_63 = arith.constant 0 : index
    %33 = vector.load %arg1[%c0_60, %c2_61, %c2_62, %c0_63] : memref<1x18x18x128xbf16, #tpu.memory_space<vmem>>, vector<1x16x16x128xbf16>
    %34 = vector.shape_cast %33 : vector<1x16x16x128xbf16> to vector<256x128xbf16>
    %c0_64 = arith.constant 0 : index
    %c1024 = arith.constant 1024 : index
    %35 = vector.load %arg10[%c0_64, %c1024] : memref<256x1152xbf16, #tpu.memory_space<vmem>>, vector<256x128xbf16>
    tpu.vector_store %arg10[%c0_64, %c1024], %34 {strides = array<i32>} : memref<256x1152xbf16, #tpu.memory_space<vmem>>, vector<256x128xbf16>,
    %c0_65 = arith.constant 0 : index
    %c0_66 = arith.constant 0 : index
    %36 = vector.load %arg10[%c0_65, %c0_66] : memref<256x1152xbf16, #tpu.memory_space<vmem>>, vector<256x1152xbf16>
    %c0_67 = arith.constant 0 : index
    %c0_68 = arith.constant 0 : index
    %37 = vector.load %arg2[%c0_67, %c0_68] : memref<1152x128xbf16, #tpu.memory_space<vmem>>, vector<1152x128xbf16>
    %cst_69 = arith.constant dense<0.000000e+00> : vector<256x128xf32>
    %38 = tpu.matmul %36, %37, %cst_69 {dimension_numbers = #tpu.dot_dimension_numbers<[1], [0], [0], [1], [0, 0, 1, 1], [], []>} : vector<256x1152xbf16>, vector<1152x128xbf16>, vector<256x128xf32> -> vector<256x128xf32>
    %39 = vector.broadcast %0 : vector<1x128xf32> to vector<256x128xf32>
    %40 = arith.addf %38, %39 : vector<256x128xf32>
    %cst_70 = arith.constant 0.000000e+00 : f32
    %41 = vector.broadcast %cst_70 : f32 to vector<256x128xf32>
    %42 = arith.maximumf %40, %41 : vector<256x128xf32>
    %43 = vector.shape_cast %42 : vector<256x128xf32> to vector<1x16x16x128xf32>
    %44 = arith.truncf %43 : vector<1x16x16x128xf32> to vector<1x16x16x128xbf16>
    %c0_71 = arith.constant 0 : index
    %c1_72 = arith.constant 1 : index
    %c1_73 = arith.constant 1 : index
    %c0_74 = arith.constant 0 : index
    %45 = vector.load %arg9[%c0_71, %c1_72, %c1_73, %c0_74] : memref<1x18x24x128xbf16, #tpu.memory_space<vmem>>, vector<1x16x16x128xbf16>
    tpu.vector_store %arg9[%c0_71, %c1_72, %c1_73, %c0_74], %44 {strides = array<i32>} : memref<1x18x24x128xbf16, #tpu.memory_space<vmem>>, vector<1x16x16x128xbf16>,
    %c0_75 = arith.constant 0 : index
    %c512_76 = arith.constant 512 : index
    %46 = vector.load %arg10[%c0_75, %c512_76] : memref<256x1152xbf16, #tpu.memory_space<vmem>>, vector<256x128xbf16>
    %c0_77 = arith.constant 0 : index
    %c0_78 = arith.constant 0 : index
    %47 = vector.load %arg6[%c0_77, %c0_78] : memref<128x128xbf16, #tpu.memory_space<vmem>>, vector<128x128xbf16>
    %cst_79 = arith.constant dense<0.000000e+00> : vector<256x128xf32>
    %48 = tpu.matmul %46, %47, %cst_79 {dimension_numbers = #tpu.dot_dimension_numbers<[1], [0], [0], [1], [0, 0, 1, 1], [], []>} : vector<256x128xbf16>, vector<128x128xbf16>, vector<256x128xf32> -> vector<256x128xf32>
    %49 = vector.broadcast %2 : vector<1x128xf32> to vector<256x128xf32>
    %50 = arith.addf %48, %49 : vector<256x128xf32>
    %51 = vector.shape_cast %50 : vector<256x128xf32> to vector<1x16x16x128xf32>
    %c0_80 = arith.constant 0 : index
    %c0_81 = arith.constant 0 : index
    %c0_82 = arith.constant 0 : index
    %c0_83 = arith.constant 0 : index
    %52 = vector.load %arg8[%c0_80, %c0_81, %c0_82, %c0_83] : memref<1x16x16x128xf32, #tpu.memory_space<vmem>>, vector<1x16x16x128xf32>
    tpu.vector_store %arg8[%c0_80, %c0_81, %c0_82, %c0_83], %51 {strides = array<i32>} : memref<1x16x16x128xf32, #tpu.memory_space<vmem>>, vector<1x16x16x128xf32>,
    %c0_84 = arith.constant 0 : index
    %c0_85 = arith.constant 0 : index
    %c0_86 = arith.constant 0 : index
    %c0_87 = arith.constant 0 : index
    %53 = vector.load %arg9[%c0_84, %c0_85, %c0_86, %c0_87] : memref<1x18x24x128xbf16, #tpu.memory_space<vmem>>, vector<1x16x16x128xbf16>
    %54 = vector.shape_cast %53 : vector<1x16x16x128xbf16> to vector<256x128xbf16>
    %c0_88 = arith.constant 0 : index
    %c0_89 = arith.constant 0 : index
    %55 = vector.load %arg10[%c0_88, %c0_89] : memref<256x1152xbf16, #tpu.memory_space<vmem>>, vector<256x128xbf16>
    tpu.vector_store %arg10[%c0_88, %c0_89], %54 {strides = array<i32>} : memref<256x1152xbf16, #tpu.memory_space<vmem>>, vector<256x128xbf16>,
    %c0_90 = arith.constant 0 : index
    %c0_91 = arith.constant 0 : index
    %c1_92 = arith.constant 1 : index
    %c0_93 = arith.constant 0 : index
    %56 = vector.load %arg9[%c0_90, %c0_91, %c1_92, %c0_93] : memref<1x18x24x128xbf16, #tpu.memory_space<vmem>>, vector<1x16x16x128xbf16>
    %57 = vector.shape_cast %56 : vector<1x16x16x128xbf16> to vector<256x128xbf16>
    %c0_94 = arith.constant 0 : index
    %c128_95 = arith.constant 128 : index
    %58 = vector.load %arg10[%c0_94, %c128_95] : memref<256x1152xbf16, #tpu.memory_space<vmem>>, vector<256x128xbf16>
    tpu.vector_store %arg10[%c0_94, %c128_95], %57 {strides = array<i32>} : memref<256x1152xbf16, #tpu.memory_space<vmem>>, vector<256x128xbf16>,
    %c0_96 = arith.constant 0 : index
    %c0_97 = arith.constant 0 : index
    %c2_98 = arith.constant 2 : index
    %c0_99 = arith.constant 0 : index
    %59 = vector.load %arg9[%c0_96, %c0_97, %c2_98, %c0_99] : memref<1x18x24x128xbf16, #tpu.memory_space<vmem>>, vector<1x16x16x128xbf16>
    %60 = vector.shape_cast %59 : vector<1x16x16x128xbf16> to vector<256x128xbf16>
    %c0_100 = arith.constant 0 : index
    %c256_101 = arith.constant 256 : index
    %61 = vector.load %arg10[%c0_100, %c256_101] : memref<256x1152xbf16, #tpu.memory_space<vmem>>, vector<256x128xbf16>
    tpu.vector_store %arg10[%c0_100, %c256_101], %60 {strides = array<i32>} : memref<256x1152xbf16, #tpu.memory_space<vmem>>, vector<256x128xbf16>,
    %c0_102 = arith.constant 0 : index
    %c1_103 = arith.constant 1 : index
    %c0_104 = arith.constant 0 : index
    %c0_105 = arith.constant 0 : index
    %62 = vector.load %arg9[%c0_102, %c1_103, %c0_104, %c0_105] : memref<1x18x24x128xbf16, #tpu.memory_space<vmem>>, vector<1x16x16x128xbf16>
    %63 = vector.shape_cast %62 : vector<1x16x16x128xbf16> to vector<256x128xbf16>
    %c0_106 = arith.constant 0 : index
    %c384_107 = arith.constant 384 : index
    %64 = vector.load %arg10[%c0_106, %c384_107] : memref<256x1152xbf16, #tpu.memory_space<vmem>>, vector<256x128xbf16>
    tpu.vector_store %arg10[%c0_106, %c384_107], %63 {strides = array<i32>} : memref<256x1152xbf16, #tpu.memory_space<vmem>>, vector<256x128xbf16>,
    %c0_108 = arith.constant 0 : index
    %c1_109 = arith.constant 1 : index
    %c1_110 = arith.constant 1 : index
    %c0_111 = arith.constant 0 : index
    %65 = vector.load %arg9[%c0_108, %c1_109, %c1_110, %c0_111] : memref<1x18x24x128xbf16, #tpu.memory_space<vmem>>, vector<1x16x16x128xbf16>
    %66 = vector.shape_cast %65 : vector<1x16x16x128xbf16> to vector<256x128xbf16>
    %c0_112 = arith.constant 0 : index
    %c512_113 = arith.constant 512 : index
    %67 = vector.load %arg10[%c0_112, %c512_113] : memref<256x1152xbf16, #tpu.memory_space<vmem>>, vector<256x128xbf16>
    tpu.vector_store %arg10[%c0_112, %c512_113], %66 {strides = array<i32>} : memref<256x1152xbf16, #tpu.memory_space<vmem>>, vector<256x128xbf16>,
    %c0_114 = arith.constant 0 : index
    %c1_115 = arith.constant 1 : index
    %c2_116 = arith.constant 2 : index
    %c0_117 = arith.constant 0 : index
    %68 = vector.load %arg9[%c0_114, %c1_115, %c2_116, %c0_117] : memref<1x18x24x128xbf16, #tpu.memory_space<vmem>>, vector<1x16x16x128xbf16>
    %69 = vector.shape_cast %68 : vector<1x16x16x128xbf16> to vector<256x128xbf16>
    %c0_118 = arith.constant 0 : index
    %c640_119 = arith.constant 640 : index
    %70 = vector.load %arg10[%c0_118, %c640_119] : memref<256x1152xbf16, #tpu.memory_space<vmem>>, vector<256x128xbf16>
    tpu.vector_store %arg10[%c0_118, %c640_119], %69 {strides = array<i32>} : memref<256x1152xbf16, #tpu.memory_space<vmem>>, vector<256x128xbf16>,
    %c0_120 = arith.constant 0 : index
    %c2_121 = arith.constant 2 : index
    %c0_122 = arith.constant 0 : index
    %c0_123 = arith.constant 0 : index
    %71 = vector.load %arg9[%c0_120, %c2_121, %c0_122, %c0_123] : memref<1x18x24x128xbf16, #tpu.memory_space<vmem>>, vector<1x16x16x128xbf16>
    %72 = vector.shape_cast %71 : vector<1x16x16x128xbf16> to vector<256x128xbf16>
    %c0_124 = arith.constant 0 : index
    %c768_125 = arith.constant 768 : index
    %73 = vector.load %arg10[%c0_124, %c768_125] : memref<256x1152xbf16, #tpu.memory_space<vmem>>, vector<256x128xbf16>
    tpu.vector_store %arg10[%c0_124, %c768_125], %72 {strides = array<i32>} : memref<256x1152xbf16, #tpu.memory_space<vmem>>, vector<256x128xbf16>,
    %c0_126 = arith.constant 0 : index
    %c2_127 = arith.constant 2 : index
    %c1_128 = arith.constant 1 : index
    %c0_129 = arith.constant 0 : index
    %74 = vector.load %arg9[%c0_126, %c2_127, %c1_128, %c0_129] : memref<1x18x24x128xbf16, #tpu.memory_space<vmem>>, vector<1x16x16x128xbf16>
    %75 = vector.shape_cast %74 : vector<1x16x16x128xbf16> to vector<256x128xbf16>
    %c0_130 = arith.constant 0 : index
    %c896_131 = arith.constant 896 : index
    %76 = vector.load %arg10[%c0_130, %c896_131] : memref<256x1152xbf16, #tpu.memory_space<vmem>>, vector<256x128xbf16>
    tpu.vector_store %arg10[%c0_130, %c896_131], %75 {strides = array<i32>} : memref<256x1152xbf16, #tpu.memory_space<vmem>>, vector<256x128xbf16>,
    %c0_132 = arith.constant 0 : index
    %c2_133 = arith.constant 2 : index
    %c2_134 = arith.constant 2 : index
    %c0_135 = arith.constant 0 : index
    %77 = vector.load %arg9[%c0_132, %c2_133, %c2_134, %c0_135] : memref<1x18x24x128xbf16, #tpu.memory_space<vmem>>, vector<1x16x16x128xbf16>
    %78 = vector.shape_cast %77 : vector<1x16x16x128xbf16> to vector<256x128xbf16>
    %c0_136 = arith.constant 0 : index
    %c1024_137 = arith.constant 1024 : index
    %79 = vector.load %arg10[%c0_136, %c1024_137] : memref<256x1152xbf16, #tpu.memory_space<vmem>>, vector<256x128xbf16>
    tpu.vector_store %arg10[%c0_136, %c1024_137], %78 {strides = array<i32>} : memref<256x1152xbf16, #tpu.memory_space<vmem>>, vector<256x128xbf16>,
    %c0_138 = arith.constant 0 : index
    %c0_139 = arith.constant 0 : index
    %80 = vector.load %arg10[%c0_138, %c0_139] : memref<256x1152xbf16, #tpu.memory_space<vmem>>, vector<256x1152xbf16>
    %c0_140 = arith.constant 0 : index
    %c0_141 = arith.constant 0 : index
    %81 = vector.load %arg4[%c0_140, %c0_141] : memref<1152x128xbf16, #tpu.memory_space<vmem>>, vector<1152x128xbf16>
    %cst_142 = arith.constant dense<0.000000e+00> : vector<256x128xf32>
    %82 = tpu.matmul %80, %81, %cst_142 {dimension_numbers = #tpu.dot_dimension_numbers<[1], [0], [0], [1], [0, 0, 1, 1], [], []>} : vector<256x1152xbf16>, vector<1152x128xbf16>, vector<256x128xf32> -> vector<256x128xf32>
    %c0_143 = arith.constant 0 : index
    %c0_144 = arith.constant 0 : index
    %c0_145 = arith.constant 0 : index
    %c0_146 = arith.constant 0 : index
    %83 = vector.load %arg8[%c0_143, %c0_144, %c0_145, %c0_146] : memref<1x16x16x128xf32, #tpu.memory_space<vmem>>, vector<1x16x16x128xf32>
    %84 = vector.shape_cast %83 : vector<1x16x16x128xf32> to vector<256x128xf32>
    %85 = vector.broadcast %1 : vector<1x128xf32> to vector<256x128xf32>
    %86 = arith.addf %82, %85 : vector<256x128xf32>
    %87 = arith.addf %86, %84 : vector<256x128xf32>
    %cst_147 = arith.constant 0.000000e+00 : f32
    %88 = vector.broadcast %cst_147 : f32 to vector<256x128xf32>
    %89 = arith.maximumf %87, %88 : vector<256x128xf32>
    %90 = vector.shape_cast %89 : vector<256x128xf32> to vector<1x16x16x128xf32>
    %c0_148 = arith.constant 0 : index
    %c0_149 = arith.constant 0 : index
    %c0_150 = arith.constant 0 : index
    %c0_151 = arith.constant 0 : index
    %91 = vector.load %arg8[%c0_148, %c0_149, %c0_150, %c0_151] : memref<1x16x16x128xf32, #tpu.memory_space<vmem>>, vector<1x16x16x128xf32>
    tpu.vector_store %arg8[%c0_148, %c0_149, %c0_150, %c0_151], %90 {strides = array<i32>} : memref<1x16x16x128xf32, #tpu.memory_space<vmem>>, vector<1x16x16x128xf32>,
    return
  }
  func.func @transform_0(%arg0: i32) -> (i32, i32, i32, i32) {
    %c0_i32 = arith.constant 0 : i32
    %c0_i32_0 = arith.constant 0 : i32
    %c0_i32_1 = arith.constant 0 : i32
    %c0_i32_2 = arith.constant 0 : i32
    return %arg0, %c0_i32, %c0_i32_0, %c0_i32_1 : i32, i32, i32, i32
  }
  func.func @transform_1(%arg0: i32) -> (i32, i32) {
    %c0_i32 = arith.constant 0 : i32
    %c0_i32_0 = arith.constant 0 : i32
    %c0_i32_1 = arith.constant 0 : i32
    return %c0_i32, %c0_i32_0 : i32, i32
  }
  func.func @transform_2(%arg0: i32) -> (i32, i32) {
    %c0_i32 = arith.constant 0 : i32
    %c0_i32_0 = arith.constant 0 : i32
    %c0_i32_1 = arith.constant 0 : i32
    return %c0_i32, %c0_i32_0 : i32, i32
  }
  func.func @transform_3(%arg0: i32) -> (i32, i32) {
    %c0_i32 = arith.constant 0 : i32
    %c0_i32_0 = arith.constant 0 : i32
    %c0_i32_1 = arith.constant 0 : i32
    return %c0_i32, %c0_i32_0 : i32, i32
  }
  func.func @transform_4(%arg0: i32) -> (i32, i32) {
    %c0_i32 = arith.constant 0 : i32
    %c0_i32_0 = arith.constant 0 : i32
    %c0_i32_1 = arith.constant 0 : i32
    return %c0_i32, %c0_i32_0 : i32, i32
  }
  func.func @transform_5(%arg0: i32) -> (i32, i32) {
    %c0_i32 = arith.constant 0 : i32
    %c0_i32_0 = arith.constant 0 : i32
    %c0_i32_1 = arith.constant 0 : i32
    return %c0_i32, %c0_i32_0 : i32, i32
  }
  func.func @transform_6(%arg0: i32) -> (i32, i32) {
    %c0_i32 = arith.constant 0 : i32
    %c0_i32_0 = arith.constant 0 : i32
    %c0_i32_1 = arith.constant 0 : i32
    return %c0_i32, %c0_i32_0 : i32, i32
  }
  func.func @transform_7(%arg0: i32) -> (i32, i32, i32, i32) {
    %c0_i32 = arith.constant 0 : i32
    %c0_i32_0 = arith.constant 0 : i32
    %c0_i32_1 = arith.constant 0 : i32
    %c0_i32_2 = arith.constant 0 : i32
    return %arg0, %c0_i32, %c0_i32_0, %c0_i32_1 : i32, i32, i32, i32
  }
}

</mosaic_0001>

<llo_original>
// kernel: tpu_custom_call.1
$region0: #{tpu_custom_call.1}
  #allocation0 [shape = 'u32[]', space=smem, size = 0x4, offset = 0x4, fixed_abs, tag = 'smem constant byte address 0x4 - core index']
  #allocation1 [shape = 'u32[72,128]{1,0:T(1,128)}', space=vmem, size = 0x9000, scoped, tag = 'internal scratch']
  #allocation2 [shape = 'bf16[1,18,24,128]{3,2,1,0:T(8,128)(2,1)}', space=vmem, size = 0x1b000, scoped, tag = 'scratch operand']
  #allocation3 [shape = 'bf16[256,1152]{1,0:T(8,128)(2,1)}', space=vmem, size = 0x90000, scoped, tag = 'scratch operand']
  %s0 = inlined_call_operand.vmem [shape: bf16[2,18,18,128], index: 0, kind: input, shape index: {}]
  %s1 = inlined_call_operand.vmem [shape: bf16[1152,128], index: 1, kind: input, shape index: {}]
  %s2 = inlined_call_operand.vmem [shape: f32[1,128], index: 2, kind: input, shape index: {}]
  %s3 = inlined_call_operand.hbm [shape: bf16[1152,128], index: 3, kind: input, shape index: {}]
  %s4 = inlined_call_operand.vmem [shape: f32[1,128], index: 4, kind: input, shape index: {}]
  %s5 = inlined_call_operand.vmem [shape: bf16[128,128], index: 5, kind: input, shape index: {}]
  %s6 = inlined_call_operand.vmem [shape: f32[1,128], index: 6, kind: input, shape index: {}]
  %s7 = inlined_call_operand.hbm [shape: f32[2,16,16,128], index: 7, kind: output, shape index: {}]
  %s8 = sld [smem:[#allocation0]]
  $region65: #{tpu_custom_call.1} parent=0
    _
  %s10 = ssub.s32 1, %s8
  %s11 = scalar_select 0, %s10, %s8
  $region1: #{tpu_custom_call.1} parent=0
    #allocation4 [shape = 'u8[294912]{0}', space=vmem, size = 0x48000, scoped, tag = 'input window, operand 3, single buffered']
    #allocation5 [shape = 's32[2]{0}', space=sflag, size = 0x8, scoped, tag = 'scoped memory for tpu_custom_call.1']
    #allocation6 [shape = 's32[2]{0}', space=sflag, size = 0x8, scoped, tag = 'scoped memory for tpu_custom_call.1']
    #allocation7 [shape = 'u8[262144]{0}', space=vmem, size = 0x40000, scoped, tag = 'output window, operand 0']
    %12 = vsyncpa [#allocation5], 0
    %13 = vsyncpa [#allocation6], 0
    %s14 = scalar_lea.sflag [#allocation6], 1
    %15 = vsyncpa %s14, 0
    loop: start=0, step=1, limit=4
    $region2: #{tpu_custom_call.1} parent=1 // loop_pre_header
      _
    $region3: #{tpu_custom_call.1} parent=1 // loop_header
      %s17 = sphi 0, %s21
      %p18 = scmp.ge.s32.totalorder %s17, 4
      %s27 = sphi 0, %s29
      %s30 = sphi 0, %s27
      %s31 = sphi 0, %s30
      %s47 = sphi 0, %s31
      %s51 = sphi 0, %s51
      %s53 = sphi 0, %s51
      %s54 = sphi 0, %s53
      %s68 = sphi 0, %s54
      %s72 = sphi 0, %s72
      %s74 = sphi 0, %s72
      %s75 = sphi 0, %s74
      %s89 = sphi 0, %s75
      %s93 = sphi 0, %s93
      %s95 = sphi 0, %s93
      %s96 = sphi 0, %s95
      %s110 = sphi 0, %s96
      %s114 = sphi 0, %s114
      %s116 = sphi 0, %s114
      %s117 = sphi 0, %s116
      %s131 = sphi 0, %s117
      %s135 = sphi 0, %s135
      %s137 = sphi 0, %s135
      %s138 = sphi 0, %s137
      %s152 = sphi 0, %s138
      %s156 = sphi 0, %s156
      %s158 = sphi 0, %s156
      %s159 = sphi 0, %s158
      %s173 = sphi 0, %s159
      %s179 = sphi 0, %s181
      %s182 = sphi 0, %s179
      %s183 = sphi 0, %s182
      %s199 = sphi 0, %s183
    $region4: #{tpu_custom_call.1} parent=1 // loop_header_branch
      %20 = sbr.rel (%p18) target = $region8
    $region5: #{tpu_custom_call.1} parent=1 // loop_body
      %s22 = ssub.s32 %s17, 1
      %s23 = ssub.s32 %s17, 2
      %s24 = sadd.s32 %s17, 1
      %s25 = ssub.s32 %s17, %s24
      %p26 = scmp.eq.s32.totalorder %s25, 0
      %s28 = sadd.s32 %s27, 1
      %s29 = scalar_select %p26, %s27, %s28
      %p32 = pneg %p26
      %p33 = scmp.eq.s32.totalorder %s17, 1
      %p34 = por %p32, %p33
      %p35 = scmp.ne.s32.totalorder %s27, %s30
      %p36 = scmp.eq.s32.totalorder %s17, 0
      %p37 = por %p35, %p36
      %p38 = scmp.ne.s32.totalorder %s27, %s30
      %p39 = scmp.eq.s32.totalorder %s22, 1
      %p40 = por %p38, %p39
      %p41 = scmp.ne.s32.totalorder %s30, %s31
      %p42 = scmp.eq.s32.totalorder %s22, 0
      %p43 = por %p41, %p42
      %p44 = scmp.ne.s32.totalorder %s30, %s31
      %p45 = scmp.eq.s32.totalorder %s23, 1
      %p46 = por %p44, %p45
      %p48 = scmp.ne.s32.totalorder %s31, %s47
      %p49 = scmp.eq.s32.totalorder %s23, 0
      %p50 = por %p48, %p49
      %s52 = sadd.s32 %s51, 1
      %p55 = scmp.eq.s32.totalorder %s17, 1
      %p56 = scmp.ne.s32.totalorder %s51, %s53
      %p57 = scmp.eq.s32.totalorder %s17, 0
      %p58 = por %p56, %p57
      %p59 = scmp.ne.s32.totalorder %s51, %s53
      %p60 = scmp.eq.s32.totalorder %s22, 1
      %p61 = por %p59, %p60
      %p62 = scmp.ne.s32.totalorder %s53, %s54
      %p63 = scmp.eq.s32.totalorder %s22, 0
      %p64 = por %p62, %p63
      %p65 = scmp.ne.s32.totalorder %s53, %s54
      %p66 = scmp.eq.s32.totalorder %s23, 1
      %p67 = por %p65, %p66
      %p69 = scmp.ne.s32.totalorder %s54, %s68
      %p70 = scmp.eq.s32.totalorder %s23, 0
      %p71 = por %p69, %p70
      %s73 = sadd.s32 %s72, 1
      %p76 = scmp.eq.s32.totalorder %s17, 1
      %p77 = scmp.ne.s32.totalorder %s72, %s74
      %p78 = scmp.eq.s32.totalorder %s17, 0
      %p79 = por %p77, %p78
      %p80 = scmp.ne.s32.totalorder %s72, %s74
      %p81 = scmp.eq.s32.totalorder %s22, 1
      %p82 = por %p80, %p81
      %p83 = scmp.ne.s32.totalorder %s74, %s75
      %p84 = scmp.eq.s32.totalorder %s22, 0
      %p85 = por %p83, %p84
      %p86 = scmp.ne.s32.totalorder %s74, %s75
      %p87 = scmp.eq.s32.totalorder %s23, 1
      %p88 = por %p86, %p87
      %p90 = scmp.ne.s32.totalorder %s75, %s89
      %p91 = scmp.eq.s32.totalorder %s23, 0
      %p92 = por %p90, %p91
      %s94 = sadd.s32 %s93, 1
      %p97 = scmp.eq.s32.totalorder %s17, 1
      %p98 = scmp.ne.s32.totalorder %s93, %s95
      %p99 = scmp.eq.s32.totalorder %s17, 0
      %p100 = por %p98, %p99
      %p101 = scmp.ne.s32.totalorder %s93, %s95
      %p102 = scmp.eq.s32.totalorder %s22, 1
      %p103 = por %p101, %p102
      %p104 = scmp.ne.s32.totalorder %s95, %s96
      %p105 = scmp.eq.s32.totalorder %s22, 0
      %p106 = por %p104, %p105
      %p107 = scmp.ne.s32.totalorder %s95, %s96
      %p108 = scmp.eq.s32.totalorder %s23, 1
      %p109 = por %p107, %p108
      %p111 = scmp.ne.s32.totalorder %s96, %s110
      %p112 = scmp.eq.s32.totalorder %s23, 0
      %p113 = por %p111, %p112
      %s115 = sadd.s32 %s114, 1
      %p118 = scmp.eq.s32.totalorder %s17, 1
      %p119 = scmp.ne.s32.totalorder %s114, %s116
      %p120 = scmp.eq.s32.totalorder %s17, 0
      %p121 = por %p119, %p120
      %p122 = scmp.ne.s32.totalorder %s114, %s116
      %p123 = scmp.eq.s32.totalorder %s22, 1
      %p124 = por %p122, %p123
      %p125 = scmp.ne.s32.totalorder %s116, %s117
      %p126 = scmp.eq.s32.totalorder %s22, 0
      %p127 = por %p125, %p126
      %p128 = scmp.ne.s32.totalorder %s116, %s117
      %p129 = scmp.eq.s32.totalorder %s23, 1
      %p130 = por %p128, %p129
      %p132 = scmp.ne.s32.totalorder %s117, %s131
      %p133 = scmp.eq.s32.totalorder %s23, 0
      %p134 = por %p132, %p133
      %s136 = sadd.s32 %s135, 1
      %p139 = scmp.eq.s32.totalorder %s17, 1
      %p140 = scmp.ne.s32.totalorder %s135, %s137
      %p141 = scmp.eq.s32.totalorder %s17, 0
      %p142 = por %p140, %p141
      %p143 = scmp.ne.s32.totalorder %s135, %s137
      %p144 = scmp.eq.s32.totalorder %s22, 1
      %p145 = por %p143, %p144
      %p146 = scmp.ne.s32.totalorder %s137, %s138
      %p147 = scmp.eq.s32.totalorder %s22, 0
      %p148 = por %p146, %p147
      %p149 = scmp.ne.s32.totalorder %s137, %s138
      %p150 = scmp.eq.s32.totalorder %s23, 1
      %p151 = por %p149, %p150
      %p153 = scmp.ne.s32.totalorder %s138, %s152
      %p154 = scmp.eq.s32.totalorder %s23, 0
      %p155 = por %p153, %p154
      %s157 = sadd.s32 %s156, 1
      %p160 = scmp.eq.s32.totalorder %s17, 1
      %p161 = scmp.ne.s32.totalorder %s156, %s158
      %p162 = scmp.eq.s32.totalorder %s17, 0
      %p163 = por %p161, %p162
      %p164 = scmp.ne.s32.totalorder %s156, %s158
      %p165 = scmp.eq.s32.totalorder %s22, 1
      %p166 = por %p164, %p165
      %p167 = scmp.ne.s32.totalorder %s158, %s159
      %p168 = scmp.eq.s32.totalorder %s22, 0
      %p169 = por %p167, %p168
      %p170 = scmp.ne.s32.totalorder %s158, %s159
      %p171 = scmp.eq.s32.totalorder %s23, 1
      %p172 = por %p170, %p171
      %p174 = scmp.ne.s32.totalorder %s159, %s173
      %p175 = scmp.eq.s32.totalorder %s23, 0
      %p176 = por %p174, %p175
      %s177 = ssub.s32 %s17, %s24
      %p178 = scmp.eq.s32.totalorder %s177, 0
      %s180 = sadd.s32 %s179, 1
      %s181 = scalar_select %p178, %s179, %s180
      %p184 = pneg %p178
      %p185 = scmp.eq.s32.totalorder %s17, 1
      %p186 = por %p184, %p185
      %p187 = scmp.ne.s32.totalorder %s179, %s182
      %p188 = scmp.eq.s32.totalorder %s17, 0
      %p189 = por %p187, %p188
      %p190 = scmp.ne.s32.totalorder %s179, %s182
      %p191 = scmp.eq.s32.totalorder %s22, 1
      %p192 = por %p190, %p191
      %p193 = scmp.ne.s32.totalorder %s182, %s183
      %p194 = scmp.eq.s32.totalorder %s22, 0
      %p195 = por %p193, %p194
      %p196 = scmp.ne.s32.totalorder %s182, %s183
      %p197 = scmp.eq.s32.totalorder %s23, 1
      %p198 = por %p196, %p197
      %p200 = scmp.ne.s32.totalorder %s183, %s199
      %p201 = scmp.eq.s32.totalorder %s23, 0
      %p202 = por %p200, %p201
      %p203 = scmp.le.s32.totalorder 1, %s17
      %p204 = scmp.lt.s32.totalorder %s17, 3
      %p205 = pnand %p203, %p204
      %p206 = pneg %p205
      // Predicated region
      $region9: #{tpu_custom_call.1} parent=5 // pred_check
        _
      $region10: #{tpu_custom_call.1} parent=5 // pred_check_branch
        %208 = sbr.rel (%p205) target = $region12
      $region11: #{tpu_custom_call.1} parent=5 // pred_region
        %s209 = ssub.s32 %s17, 1
        // Predicated region
        $region13: #{tpu_custom_call.1} parent=11 // pred_check
          %p210 = pneg %p64
        $region14: #{tpu_custom_call.1} parent=11 // pred_check_branch
          %212 = sbr.rel (%p210) target = $region16
        $region15: #{tpu_custom_call.1} parent=11 // pred_region
          _
        $region16: #{tpu_custom_call.1} parent=11 // pred_fallthru
          _
        // Predicated region
        $region17: #{tpu_custom_call.1} parent=11 // pred_check
          %p213 = pneg %p85
        $region18: #{tpu_custom_call.1} parent=11 // pred_check_branch
          %215 = sbr.rel (%p213) target = $region20
        $region19: #{tpu_custom_call.1} parent=11 // pred_region
          _
        $region20: #{tpu_custom_call.1} parent=11 // pred_fallthru
          _
        // Predicated region
        $region21: #{tpu_custom_call.1} parent=11 // pred_check
          %p216 = pneg %p106
        $region22: #{tpu_custom_call.1} parent=11 // pred_check_branch
          %218 = sbr.rel (%p216) target = $region24
        $region23: #{tpu_custom_call.1} parent=11 // pred_region
          %220 = vsyncadd [#allocation5], 0
          %s221 = sshll.u32 %s3, 4
          %s222 = int_to_ptr.hbm [resolvable:$true] %s221
          %s223 = sshll.u32 [#allocation4], 4
          %s224 = int_to_ptr.vmem [resolvable:$true] %s223
          %229 = dma.hbm_to_vmem [thread:$0]  %s222, 9216, %s224, [#allocation5], 64, 64, 4
        $region24: #{tpu_custom_call.1} parent=11 // pred_fallthru
          _
        // Predicated region
        $region25: #{tpu_custom_call.1} parent=11 // pred_check
          %p230 = pneg %p127
        $region26: #{tpu_custom_call.1} parent=11 // pred_check_branch
          %232 = sbr.rel (%p230) target = $region28
        $region27: #{tpu_custom_call.1} parent=11 // pred_region
          _
        $region28: #{tpu_custom_call.1} parent=11 // pred_fallthru
          _
        // Predicated region
        $region29: #{tpu_custom_call.1} parent=11 // pred_check
          %p233 = pneg %p148
        $region30: #{tpu_custom_call.1} parent=11 // pred_check_branch
          %235 = sbr.rel (%p233) target = $region32
        $region31: #{tpu_custom_call.1} parent=11 // pred_region
          _
        $region32: #{tpu_custom_call.1} parent=11 // pred_fallthru
          _
        // Predicated region
        $region33: #{tpu_custom_call.1} parent=11 // pred_check
          %p236 = pneg %p169
        $region34: #{tpu_custom_call.1} parent=11 // pred_check_branch
          %238 = sbr.rel (%p236) target = $region36
        $region35: #{tpu_custom_call.1} parent=11 // pred_region
          _
        $region36: #{tpu_custom_call.1} parent=11 // pred_fallthru
          _
      $region12: #{tpu_custom_call.1} parent=5 // pred_fallthru
        _
      %p239 = scmp.lt.s32.totalorder %s17, 2
      // Predicated region
      $region37: #{tpu_custom_call.1} parent=5 // pred_check
        %p240 = pneg %p239
      $region38: #{tpu_custom_call.1} parent=5 // pred_check_branch
        %242 = sbr.rel (%p240) target = $region40
      $region39: #{tpu_custom_call.1} parent=5 // pred_region
        // Predicated region
        $region41: #{tpu_custom_call.1} parent=39 // pred_check
          %p243 = pneg %p37
        $region42: #{tpu_custom_call.1} parent=39 // pred_check_branch
          %245 = sbr.rel (%p243) target = $region44
        $region43: #{tpu_custom_call.1} parent=39 // pred_region
          %p246 = scmp.lt.s32.totalorder %s17, 1
          %s247 = scalar_select %p246, %s17, 1
          %s248 = smul.addr %s247, 54
          %s249 = smul.addr %s248, 4
          %s250 = scalar_lea.vmem %s0, %s249
        $region44: #{tpu_custom_call.1} parent=39 // pred_fallthru
          _
      $region40: #{tpu_custom_call.1} parent=5 // pred_fallthru
        _
      %p251 = scmp.le.s32.totalorder 1, %s17
      %p252 = scmp.lt.s32.totalorder %s17, 3
      %p253 = pnand %p251, %p252
      %p254 = pneg %p253
      // Predicated region
      $region45: #{tpu_custom_call.1} parent=5 // pred_check
        _
      $region46: #{tpu_custom_call.1} parent=5 // pred_check_branch
        %256 = sbr.rel (%p253) target = $region48
      $region47: #{tpu_custom_call.1} parent=5 // pred_region
        %s257 = ssub.s32 %s17, 1
        // Predicated region
        $region49: #{tpu_custom_call.1} parent=47 // pred_check
          %p258 = pneg %p106
        $region50: #{tpu_custom_call.1} parent=47 // pred_check_branch
          %260 = sbr.rel (%p258) target = $region52
        $region51: #{tpu_custom_call.1} parent=47 // pred_region
          %262 = dma.done [#allocation5], 9216
        $region52: #{tpu_custom_call.1} parent=47 // pred_fallthru
          _
        %p263 = scmp.lt.s32.totalorder %s22, 1
        %s264 = scalar_select %p263, %s22, 1
        %s265 = smul.addr %s264, 54
        %s266 = smul.addr %s265, 4
        %s267 = scalar_lea.vmem %s0, %s266
        %p268 = pneg %p43
        %p269 = pneg %p40
        %p270 = pneg %p64
        %p271 = pneg %p61
        %p272 = pneg %p85
        %p273 = pneg %p82
        %p274 = pneg %p106
        %p275 = pneg %p103
        %p276 = pneg %p127
        %p277 = pneg %p124
        %p278 = pneg %p148
        %p279 = pneg %p145
        %p280 = pneg %p169
        %p281 = pneg %p166
        %p282 = pneg %p195
        %p283 = pneg %p192
        %s284 = sand.u32 %s182, 1
        %s285 = scalar_lea.sflag [#allocation6], %s284
        %s286 = sand.u32 %s182, 1
        %s287 = smul.addr %s286, 256
        %s288 = scalar_lea.vmem [#allocation7], %s287
        %p289 = scmp.lt.s32.totalorder %s22, 1
        %s290 = scalar_select %p289, %s22, 1
        %s291 = smul.addr %s290, 54
        %s292 = smul.addr %s291, 4
        %s293 = scalar_lea.vmem %s0, %s292
        %v295 = vld [vmem:[%s2] sm:$0x1]
        %v296 = vld [vmem:[%s4] sm:$0x1]
        %v297 = vld [vmem:[%s6] sm:$0x1]
        %298 = vst [vmem:[#allocation2] sm:$0xf] 0
        %299 = vst [vmem:[#allocation2 + $0x4] sm:$0xf] 0
        %300 = vst [vmem:[#allocation2 + $0x8] sm:$0xf] 0
        %s301 = scalar_lea.vmem [#allocation2], 204
        %302 = vst [vmem:[%s301] sm:$0xf] 0
        %303 = vst [vmem:[%s301 + $0x4] sm:$0xf] 0
        %304 = vst [vmem:[%s301 + $0x8] sm:$0xf] 0
        %s305 = scalar_lea.vmem [#allocation2], 12
        %vm306 = vcmask 1040384
        %vm307 = vsmask.f32 256
        %vm308 = vmand %vm306, %vm307
        %v309 = vld [vmem:[%s305] sm:$0x1]
        %v310 = vsel %vm308, 0, %v309
        %311 = vst [vmem:[%s305] sm:$0x1] %v310
        %v312 = vld [vmem:[%s305 + $0xc] sm:$0x1]
        %v313 = vsel %vm308, 0, %v312
        %314 = vst [vmem:[%s305 + $0xc] sm:$0x1] %v313
        %v315 = vld [vmem:[%s305 + $0x18] sm:$0x1]
        %v316 = vsel %vm308, 0, %v315
        %317 = vst [vmem:[%s305 + $0x18] sm:$0x1] %v316
        %v318 = vld [vmem:[%s305 + $0x24] sm:$0x1]
        %v319 = vsel %vm308, 0, %v318
        %320 = vst [vmem:[%s305 + $0x24] sm:$0x1] %v319
        %v321 = vld [vmem:[%s305 + $0x30] sm:$0x1]
        %v322 = vsel %vm308, 0, %v321
        %323 = vst [vmem:[%s305 + $0x30] sm:$0x1] %v322
        %v324 = vld [vmem:[%s305 + $0x3c] sm:$0x1]
        %v325 = vsel %vm308, 0, %v324
        %326 = vst [vmem:[%s305 + $0x3c] sm:$0x1] %v325
        %v327 = vld [vmem:[%s305 + $0x48] sm:$0x1]
        %v328 = vsel %vm308, 0, %v327
        %329 = vst [vmem:[%s305 + $0x48] sm:$0x1] %v328
        %v330 = vld [vmem:[%s305 + $0x54] sm:$0x1]
        %v331 = vsel %vm308, 0, %v330
        %332 = vst [vmem:[%s305 + $0x54] sm:$0x1] %v331
        %v333 = vld [vmem:[%s305 + $0x60] sm:$0x1]
        %v334 = vsel %vm308, 0, %v333
        %335 = vst [vmem:[%s305 + $0x60] sm:$0x1] %v334
        %v336 = vld [vmem:[%s305 + $0x6c] sm:$0x1]
        %v337 = vsel %vm308, 0, %v336
        %338 = vst [vmem:[%s305 + $0x6c] sm:$0x1] %v337
        %v339 = vld [vmem:[%s305 + $0x78] sm:$0x1]
        %v340 = vsel %vm308, 0, %v339
        %341 = vst [vmem:[%s305 + $0x78] sm:$0x1] %v340
        %v342 = vld [vmem:[%s305 + $0x84] sm:$0x1]
        %v343 = vsel %vm308, 0, %v342
        %344 = vst [vmem:[%s305 + $0x84] sm:$0x1] %v343
        %v345 = vld [vmem:[%s305 + $0x90] sm:$0x1]
        %v346 = vsel %vm308, 0, %v345
        %347 = vst [vmem:[%s305 + $0x90] sm:$0x1] %v346
        %v348 = vld [vmem:[%s305 + $0x9c] sm:$0x1]
        %v349 = vsel %vm308, 0, %v348
        %350 = vst [vmem:[%s305 + $0x9c] sm:$0x1] %v349
        %v351 = vld [vmem:[%s305 + $0xa8] sm:$0x1]
        %v352 = vsel %vm308, 0, %v351
        %353 = vst [vmem:[%s305 + $0xa8] sm:$0x1] %v352
        %v354 = vld [vmem:[%s305 + $0xb4] sm:$0x1]
        %v355 = vsel %vm308, 0, %v354
        %356 = vst [vmem:[%s305 + $0xb4] sm:$0x1] %v355
        %vm357 = vsmask.f32 7938
        %vm358 = vmand %vm306, %vm357
        %v359 = vld [vmem:[%s305 + $0x8] sm:$0x1]
        %v360 = vsel %vm358, 0, %v359
        %361 = vst [vmem:[%s305 + $0x8] sm:$0x1] %v360
        %v362 = vld [vmem:[%s305 + $0x14] sm:$0x1]
        %v363 = vsel %vm358, 0, %v362
        %364 = vst [vmem:[%s305 + $0x14] sm:$0x1] %v363
        %v365 = vld [vmem:[%s305 + $0x20] sm:$0x1]
        %v366 = vsel %vm358, 0, %v365
        %367 = vst [vmem:[%s305 + $0x20] sm:$0x1] %v366
        %v368 = vld [vmem:[%s305 + $0x2c] sm:$0x1]
        %v369 = vsel %vm358, 0, %v368
        %370 = vst [vmem:[%s305 + $0x2c] sm:$0x1] %v369
        %v371 = vld [vmem:[%s305 + $0x38] sm:$0x1]
        %v372 = vsel %vm358, 0, %v371
        %373 = vst [vmem:[%s305 + $0x38] sm:$0x1] %v372
        %v374 = vld [vmem:[%s305 + $0x44] sm:$0x1]
        %v375 = vsel %vm358, 0, %v374
        %376 = vst [vmem:[%s305 + $0x44] sm:$0x1] %v375
        %v377 = vld [vmem:[%s305 + $0x50] sm:$0x1]
        %v378 = vsel %vm358, 0, %v377
        %379 = vst [vmem:[%s305 + $0x50] sm:$0x1] %v378
        %v380 = vld [vmem:[%s305 + $0x5c] sm:$0x1]
        %v381 = vsel %vm358, 0, %v380
        %382 = vst [vmem:[%s305 + $0x5c] sm:$0x1] %v381
        %v383 = vld [vmem:[%s305 + $0x68] sm:$0x1]
        %v384 = vsel %vm358, 0, %v383
        %385 = vst [vmem:[%s305 + $0x68] sm:$0x1] %v384
        %v386 = vld [vmem:[%s305 + $0x74] sm:$0x1]
        %v387 = vsel %vm358, 0, %v386
        %388 = vst [vmem:[%s305 + $0x74] sm:$0x1] %v387
        %v389 = vld [vmem:[%s305 + $0x80] sm:$0x1]
        %v390 = vsel %vm358, 0, %v389
        %391 = vst [vmem:[%s305 + $0x80] sm:$0x1] %v390
        %v392 = vld [vmem:[%s305 + $0x8c] sm:$0x1]
        %v393 = vsel %vm358, 0, %v392
        %394 = vst [vmem:[%s305 + $0x8c] sm:$0x1] %v393
        %v395 = vld [vmem:[%s305 + $0x98] sm:$0x1]
        %v396 = vsel %vm358, 0, %v395
        %397 = vst [vmem:[%s305 + $0x98] sm:$0x1] %v396
        %v398 = vld [vmem:[%s305 + $0xa4] sm:$0x1]
        %v399 = vsel %vm358, 0, %v398
        %400 = vst [vmem:[%s305 + $0xa4] sm:$0x1] %v399
        %v401 = vld [vmem:[%s305 + $0xb0] sm:$0x1]
        %v402 = vsel %vm358, 0, %v401
        %403 = vst [vmem:[%s305 + $0xb0] sm:$0x1] %v402
        %v404 = vld [vmem:[%s305 + $0xbc] sm:$0x1]
        %v405 = vsel %vm358, 0, %v404
        %406 = vst [vmem:[%s305 + $0xbc] sm:$0x1] %v405
        %v407 = vld [vmem:[%s293] sm:$0xf]
        %v408 = vld [vmem:[%s293 + $0x4] sm:$0xf]
        %v409 = vld [vmem:[%s293 + $0xc] sm:$0xf]
        %v410 = vld [vmem:[%s293 + $0x10] sm:$0xf]
        %v411 = vld [vmem:[%s293 + $0x18] sm:$0xf]
        %v412 = vld [vmem:[%s293 + $0x1c] sm:$0xf]
        %v413 = vld [vmem:[%s293 + $0x24] sm:$0xf]
        %v414 = vld [vmem:[%s293 + $0x28] sm:$0xf]
        %v415 = vld [vmem:[%s293 + $0x30] sm:$0xf]
        %v416 = vld [vmem:[%s293 + $0x34] sm:$0xf]
        %v417 = vld [vmem:[%s293 + $0x3c] sm:$0xf]
        %v418 = vld [vmem:[%s293 + $0x40] sm:$0xf]
        %v419 = vld [vmem:[%s293 + $0x48] sm:$0xf]
        %v420 = vld [vmem:[%s293 + $0x4c] sm:$0xf]
        %v421 = vld [vmem:[%s293 + $0x54] sm:$0xf]
        %v422 = vld [vmem:[%s293 + $0x58] sm:$0xf]
        %v423 = vld [vmem:[%s293 + $0x60] sm:$0xf]
        %v424 = vld [vmem:[%s293 + $0x64] sm:$0xf]
        %v425 = vld [vmem:[%s293 + $0x6c] sm:$0xf]
        %v426 = vld [vmem:[%s293 + $0x70] sm:$0xf]
        %v427 = vld [vmem:[%s293 + $0x78] sm:$0xf]
        %v428 = vld [vmem:[%s293 + $0x7c] sm:$0xf]
        %v429 = vld [vmem:[%s293 + $0x84] sm:$0xf]
        %v430 = vld [vmem:[%s293 + $0x88] sm:$0xf]
        %v431 = vld [vmem:[%s293 + $0x90] sm:$0xf]
        %v432 = vld [vmem:[%s293 + $0x94] sm:$0xf]
        %v433 = vld [vmem:[%s293 + $0x9c] sm:$0xf]
        %v434 = vld [vmem:[%s293 + $0xa0] sm:$0xf]
        %v435 = vld [vmem:[%s293 + $0xa8] sm:$0xf]
        %v436 = vld [vmem:[%s293 + $0xac] sm:$0xf]
        %v437 = vld [vmem:[%s293 + $0xb4] sm:$0xf]
        %v438 = vld [vmem:[%s293 + $0xb8] sm:$0xf]
        %439 = vst [vmem:[#allocation3] sm:$0xf] %v407
        %440 = vst [vmem:[#allocation3 + $0x24] sm:$0xf] %v408
        %441 = vst [vmem:[#allocation3 + $0x48] sm:$0xf] %v409
        %442 = vst [vmem:[#allocation3 + $0x6c] sm:$0xf] %v410
        %443 = vst [vmem:[#allocation3 + $0x90] sm:$0xf] %v411
        %444 = vst [vmem:[#allocation3 + $0xb4] sm:$0xf] %v412
        %445 = vst [vmem:[#allocation3 + $0xd8] sm:$0xf] %v413
        %446 = vst [vmem:[#allocation3 + $0xfc] sm:$0xf] %v414
        %447 = vst [vmem:[#allocation3 + $0x120] sm:$0xf] %v415
        %448 = vst [vmem:[#allocation3 + $0x144] sm:$0xf] %v416
        %449 = vst [vmem:[#allocation3 + $0x168] sm:$0xf] %v417
        %450 = vst [vmem:[#allocation3 + $0x18c] sm:$0xf] %v418
        %451 = vst [vmem:[#allocation3 + $0x1b0] sm:$0xf] %v419
        %452 = vst [vmem:[#allocation3 + $0x1d4] sm:$0xf] %v420
        %453 = vst [vmem:[#allocation3 + $0x1f8] sm:$0xf] %v421
        %454 = vst [vmem:[#allocation3 + $0x21c] sm:$0xf] %v422
        %455 = vst [vmem:[#allocation3 + $0x240] sm:$0xf] %v423
        %456 = vst [vmem:[#allocation3 + $0x264] sm:$0xf] %v424
        %457 = vst [vmem:[#allocation3 + $0x288] sm:$0xf] %v425
        %458 = vst [vmem:[#allocation3 + $0x2ac] sm:$0xf] %v426
        %459 = vst [vmem:[#allocation3 + $0x2d0] sm:$0xf] %v427
        %460 = vst [vmem:[#allocation3 + $0x2f4] sm:$0xf] %v428
        %461 = vst [vmem:[#allocation3 + $0x318] sm:$0xf] %v429
        %462 = vst [vmem:[#allocation3 + $0x33c] sm:$0xf] %v430
        %463 = vst [vmem:[#allocation3 + $0x360] sm:$0xf] %v431
        %464 = vst [vmem:[#allocation3 + $0x384] sm:$0xf] %v432
        %465 = vst [vmem:[#allocation3 + $0x3a8] sm:$0xf] %v433
        %466 = vst [vmem:[#allocation3 + $0x3cc] sm:$0xf] %v434
        %467 = vst [vmem:[#allocation3 + $0x3f0] sm:$0xf] %v435
        %468 = vst [vmem:[#allocation3 + $0x414] sm:$0xf] %v436
        %469 = vst [vmem:[#allocation3 + $0x438] sm:$0xf] %v437
        %470 = vst [vmem:[#allocation3 + $0x45c] sm:$0xf] %v438
        %v471 = vld [vmem:[%s293] sm:$0xf]
        %v472 = vld [vmem:[%s293 + $0x4] sm:$0xf]
        %v473 = vld [vmem:[%s293 + $0x8] sm:$0x1]
        %v474 = vld [vmem:[%s293 + $0xc] sm:$0xf]
        %v475 = vld [vmem:[%s293 + $0x10] sm:$0xf]
        %v476 = vld [vmem:[%s293 + $0x14] sm:$0x1]
        %v477 = vld [vmem:[%s293 + $0x18] sm:$0xf]
        %v478 = vld [vmem:[%s293 + $0x1c] sm:$0xf]
        %v479 = vld [vmem:[%s293 + $0x20] sm:$0x1]
        %v480 = vld [vmem:[%s293 + $0x24] sm:$0xf]
        %v481 = vld [vmem:[%s293 + $0x28] sm:$0xf]
        %v482 = vld [vmem:[%s293 + $0x2c] sm:$0x1]
        %v483 = vld [vmem:[%s293 + $0x30] sm:$0xf]
        %v484 = vld [vmem:[%s293 + $0x34] sm:$0xf]
        %v485 = vld [vmem:[%s293 + $0x38] sm:$0x1]
        %v486 = vld [vmem:[%s293 + $0x3c] sm:$0xf]
        %v487 = vld [vmem:[%s293 + $0x40] sm:$0xf]
        %v488 = vld [vmem:[%s293 + $0x44] sm:$0x1]
        %v489 = vld [vmem:[%s293 + $0x48] sm:$0xf]
        %v490 = vld [vmem:[%s293 + $0x4c] sm:$0xf]
        %v491 = vld [vmem:[%s293 + $0x50] sm:$0x1]
        %v492 = vld [vmem:[%s293 + $0x54] sm:$0xf]
        %v493 = vld [vmem:[%s293 + $0x58] sm:$0xf]
        %v494 = vld [vmem:[%s293 + $0x5c] sm:$0x1]
        %v495 = vld [vmem:[%s293 + $0x60] sm:$0xf]
        %v496 = vld [vmem:[%s293 + $0x64] sm:$0xf]
        %v497 = vld [vmem:[%s293 + $0x68] sm:$0x1]
        %v498 = vld [vmem:[%s293 + $0x6c] sm:$0xf]
        %v499 = vld [vmem:[%s293 + $0x70] sm:$0xf]
        %v500 = vld [vmem:[%s293 + $0x74] sm:$0x1]
        %v501 = vld [vmem:[%s293 + $0x78] sm:$0xf]
        %v502 = vld [vmem:[%s293 + $0x7c] sm:$0xf]
        %v503 = vld [vmem:[%s293 + $0x80] sm:$0x1]
        %v504 = vld [vmem:[%s293 + $0x84] sm:$0xf]
        %v505 = vld [vmem:[%s293 + $0x88] sm:$0xf]
        %v506 = vld [vmem:[%s293 + $0x8c] sm:$0x1]
        %v507 = vld [vmem:[%s293 + $0x90] sm:$0xf]
        %v508 = vld [vmem:[%s293 + $0x94] sm:$0xf]
        %v509 = vld [vmem:[%s293 + $0x98] sm:$0x1]
        %v510 = vld [vmem:[%s293 + $0x9c] sm:$0xf]
        %v511 = vld [vmem:[%s293 + $0xa0] sm:$0xf]
        %v512 = vld [vmem:[%s293 + $0xa4] sm:$0x1]
        %v513 = vld [vmem:[%s293 + $0xa8] sm:$0xf]
        %v514 = vld [vmem:[%s293 + $0xac] sm:$0xf]
        %v515 = vld [vmem:[%s293 + $0xb0] sm:$0x1]
        %v516 = vld [vmem:[%s293 + $0xb4] sm:$0xf]
        %v517 = vld [vmem:[%s293 + $0xb8] sm:$0xf]
        %v518 = vld [vmem:[%s293 + $0xbc] sm:$0x1]
        %vm519 = vsmask.f32 3328
        %vm520 = vsmask.f32 7440
        %vm521 = vmor %vm519, %vm520
        %v523 = vshrl.u32 %v471, 16
        %v525 = vrot.slane %v523, 4
        %v526 = vshll.u32 %v471, 16
        %v528 = vrot.slane %v526, 5
        %v529 = vor.u32 %v525, %v528
        %v530 = vrot.slane %v529, 4
        %v532 = vshll.u32 %v472, 16
        %v534 = vrot.slane %v532, 5
        %v535 = vsel %vm521, %v530, %v534
        %v536 = vshrl.u32 %v472, 16
        %v538 = vrot.slane %v536, 4
        %v539 = vor.u32 %v538, %v534
        %v540 = vrot.slane %v539, 4
        %v542 = vshll.u32 %v473, 16
        %v544 = vrot.slane %v542, 5
        %v545 = vsel %vm521, %v540, %v544
        %v547 = vshrl.u32 %v474, 16
        %v549 = vrot.slane %v547, 4
        %v550 = vshll.u32 %v474, 16
        %v552 = vrot.slane %v550, 5
        %v553 = vor.u32 %v549, %v552
        %v554 = vrot.slane %v553, 4
        %v556 = vshll.u32 %v475, 16
        %v558 = vrot.slane %v556, 5
        %v559 = vsel %vm521, %v554, %v558
        %v560 = vshrl.u32 %v475, 16
        %v562 = vrot.slane %v560, 4
        %v563 = vor.u32 %v562, %v558
        %v564 = vrot.slane %v563, 4
        %v566 = vshll.u32 %v476, 16
        %v568 = vrot.slane %v566, 5
        %v569 = vsel %vm521, %v564, %v568
        %v571 = vshrl.u32 %v477, 16
        %v573 = vrot.slane %v571, 4
        %v574 = vshll.u32 %v477, 16
        %v576 = vrot.slane %v574, 5
        %v577 = vor.u32 %v573, %v576
        %v578 = vrot.slane %v577, 4
        %v580 = vshll.u32 %v478, 16
        %v582 = vrot.slane %v580, 5
        %v583 = vsel %vm521, %v578, %v582
        %v584 = vshrl.u32 %v478, 16
        %v586 = vrot.slane %v584, 4
        %v587 = vor.u32 %v586, %v582
        %v588 = vrot.slane %v587, 4
        %v590 = vshll.u32 %v479, 16
        %v592 = vrot.slane %v590, 5
        %v593 = vsel %vm521, %v588, %v592
        %v595 = vshrl.u32 %v480, 16
        %v597 = vrot.slane %v595, 4
        %v598 = vshll.u32 %v480, 16
        %v600 = vrot.slane %v598, 5
        %v601 = vor.u32 %v597, %v600
        %v602 = vrot.slane %v601, 4
        %v604 = vshll.u32 %v481, 16
        %v606 = vrot.slane %v604, 5
        %v607 = vsel %vm521, %v602, %v606
        %v608 = vshrl.u32 %v481, 16
        %v610 = vrot.slane %v608, 4
        %v611 = vor.u32 %v610, %v606
        %v612 = vrot.slane %v611, 4
        %v614 = vshll.u32 %v482, 16
        %v616 = vrot.slane %v614, 5
        %v617 = vsel %vm521, %v612, %v616
        %v619 = vshrl.u32 %v483, 16
        %v621 = vrot.slane %v619, 4
        %v622 = vshll.u32 %v483, 16
        %v624 = vrot.slane %v622, 5
        %v625 = vor.u32 %v621, %v624
        %v626 = vrot.slane %v625, 4
        %v628 = vshll.u32 %v484, 16
        %v630 = vrot.slane %v628, 5
        %v631 = vsel %vm521, %v626, %v630
        %v632 = vshrl.u32 %v484, 16
        %v634 = vrot.slane %v632, 4
        %v635 = vor.u32 %v634, %v630
        %v636 = vrot.slane %v635, 4
        %v638 = vshll.u32 %v485, 16
        %v640 = vrot.slane %v638, 5
        %v641 = vsel %vm521, %v636, %v640
        %v643 = vshrl.u32 %v486, 16
        %v645 = vrot.slane %v643, 4
        %v646 = vshll.u32 %v486, 16
        %v648 = vrot.slane %v646, 5
        %v649 = vor.u32 %v645, %v648
        %v650 = vrot.slane %v649, 4
        %v652 = vshll.u32 %v487, 16
        %v654 = vrot.slane %v652, 5
        %v655 = vsel %vm521, %v650, %v654
        %v656 = vshrl.u32 %v487, 16
        %v658 = vrot.slane %v656, 4
        %v659 = vor.u32 %v658, %v654
        %v660 = vrot.slane %v659, 4
        %v662 = vshll.u32 %v488, 16
        %v664 = vrot.slane %v662, 5
        %v665 = vsel %vm521, %v660, %v664
        %v667 = vshrl.u32 %v489, 16
        %v669 = vrot.slane %v667, 4
        %v670 = vshll.u32 %v489, 16
        %v672 = vrot.slane %v670, 5
        %v673 = vor.u32 %v669, %v672
        %v674 = vrot.slane %v673, 4
        %v676 = vshll.u32 %v490, 16
        %v678 = vrot.slane %v676, 5
        %v679 = vsel %vm521, %v674, %v678
        %v680 = vshrl.u32 %v490, 16
        %v682 = vrot.slane %v680, 4
        %v683 = vor.u32 %v682, %v678
        %v684 = vrot.slane %v683, 4
        %v686 = vshll.u32 %v491, 16
        %v688 = vrot.slane %v686, 5
        %v689 = vsel %vm521, %v684, %v688
        %v691 = vshrl.u32 %v492, 16
        %v693 = vrot.slane %v691, 4
        %v694 = vshll.u32 %v492, 16
        %v696 = vrot.slane %v694, 5
        %v697 = vor.u32 %v693, %v696
        %v698 = vrot.slane %v697, 4
        %v700 = vshll.u32 %v493, 16
        %v702 = vrot.slane %v700, 5
        %v703 = vsel %vm521, %v698, %v702
        %v704 = vshrl.u32 %v493, 16
        %v706 = vrot.slane %v704, 4
        %v707 = vor.u32 %v706, %v702
        %v708 = vrot.slane %v707, 4
        %v710 = vshll.u32 %v494, 16
        %v712 = vrot.slane %v710, 5
        %v713 = vsel %vm521, %v708, %v712
        %v715 = vshrl.u32 %v495, 16
        %v717 = vrot.slane %v715, 4
        %v718 = vshll.u32 %v495, 16
        %v720 = vrot.slane %v718, 5
        %v721 = vor.u32 %v717, %v720
        %v722 = vrot.slane %v721, 4
        %v724 = vshll.u32 %v496, 16
        %v726 = vrot.slane %v724, 5
        %v727 = vsel %vm521, %v722, %v726
        %v728 = vshrl.u32 %v496, 16
        %v730 = vrot.slane %v728, 4
        %v731 = vor.u32 %v730, %v726
        %v732 = vrot.slane %v731, 4
        %v734 = vshll.u32 %v497, 16
        %v736 = vrot.slane %v734, 5
        %v737 = vsel %vm521, %v732, %v736
        %v739 = vshrl.u32 %v498, 16
        %v741 = vrot.slane %v739, 4
        %v742 = vshll.u32 %v498, 16
        %v744 = vrot.slane %v742, 5
        %v745 = vor.u32 %v741, %v744
        %v746 = vrot.slane %v745, 4
        %v748 = vshll.u32 %v499, 16
        %v750 = vrot.slane %v748, 5
        %v751 = vsel %vm521, %v746, %v750
        %v752 = vshrl.u32 %v499, 16
        %v754 = vrot.slane %v752, 4
        %v755 = vor.u32 %v754, %v750
        %v756 = vrot.slane %v755, 4
        %v758 = vshll.u32 %v500, 16
        %v760 = vrot.slane %v758, 5
        %v761 = vsel %vm521, %v756, %v760
        %v763 = vshrl.u32 %v501, 16
        %v765 = vrot.slane %v763, 4
        %v766 = vshll.u32 %v501, 16
        %v768 = vrot.slane %v766, 5
        %v769 = vor.u32 %v765, %v768
        %v770 = vrot.slane %v769, 4
        %v772 = vshll.u32 %v502, 16
        %v774 = vrot.slane %v772, 5
        %v775 = vsel %vm521, %v770, %v774
        %v776 = vshrl.u32 %v502, 16
        %v778 = vrot.slane %v776, 4
        %v779 = vor.u32 %v778, %v774
        %v780 = vrot.slane %v779, 4
        %v782 = vshll.u32 %v503, 16
        %v784 = vrot.slane %v782, 5
        %v785 = vsel %vm521, %v780, %v784
        %v787 = vshrl.u32 %v504, 16
        %v789 = vrot.slane %v787, 4
        %v790 = vshll.u32 %v504, 16
        %v792 = vrot.slane %v790, 5
        %v793 = vor.u32 %v789, %v792
        %v794 = vrot.slane %v793, 4
        %v796 = vshll.u32 %v505, 16
        %v798 = vrot.slane %v796, 5
        %v799 = vsel %vm521, %v794, %v798
        %v800 = vshrl.u32 %v505, 16
        %v802 = vrot.slane %v800, 4
        %v803 = vor.u32 %v802, %v798
        %v804 = vrot.slane %v803, 4
        %v806 = vshll.u32 %v506, 16
        %v808 = vrot.slane %v806, 5
        %v809 = vsel %vm521, %v804, %v808
        %v811 = vshrl.u32 %v507, 16
        %v813 = vrot.slane %v811, 4
        %v814 = vshll.u32 %v507, 16
        %v816 = vrot.slane %v814, 5
        %v817 = vor.u32 %v813, %v816
        %v818 = vrot.slane %v817, 4
        %v820 = vshll.u32 %v508, 16
        %v822 = vrot.slane %v820, 5
        %v823 = vsel %vm521, %v818, %v822
        %v824 = vshrl.u32 %v508, 16
        %v826 = vrot.slane %v824, 4
        %v827 = vor.u32 %v826, %v822
        %v828 = vrot.slane %v827, 4
        %v830 = vshll.u32 %v509, 16
        %v832 = vrot.slane %v830, 5
        %v833 = vsel %vm521, %v828, %v832
        %v835 = vshrl.u32 %v510, 16
        %v837 = vrot.slane %v835, 4
        %v838 = vshll.u32 %v510, 16
        %v840 = vrot.slane %v838, 5
        %v841 = vor.u32 %v837, %v840
        %v842 = vrot.slane %v841, 4
        %v844 = vshll.u32 %v511, 16
        %v846 = vrot.slane %v844, 5
        %v847 = vsel %vm521, %v842, %v846
        %v848 = vshrl.u32 %v511, 16
        %v850 = vrot.slane %v848, 4
        %v851 = vor.u32 %v850, %v846
        %v852 = vrot.slane %v851, 4
        %v854 = vshll.u32 %v512, 16
        %v856 = vrot.slane %v854, 5
        %v857 = vsel %vm521, %v852, %v856
        %v859 = vshrl.u32 %v513, 16
        %v861 = vrot.slane %v859, 4
        %v862 = vshll.u32 %v513, 16
        %v864 = vrot.slane %v862, 5
        %v865 = vor.u32 %v861, %v864
        %v866 = vrot.slane %v865, 4
        %v868 = vshll.u32 %v514, 16
        %v870 = vrot.slane %v868, 5
        %v871 = vsel %vm521, %v866, %v870
        %v872 = vshrl.u32 %v514, 16
        %v874 = vrot.slane %v872, 4
        %v875 = vor.u32 %v874, %v870
        %v876 = vrot.slane %v875, 4
        %v878 = vshll.u32 %v515, 16
        %v880 = vrot.slane %v878, 5
        %v881 = vsel %vm521, %v876, %v880
        %v883 = vshrl.u32 %v516, 16
        %v885 = vrot.slane %v883, 4
        %v886 = vshll.u32 %v516, 16
        %v888 = vrot.slane %v886, 5
        %v889 = vor.u32 %v885, %v888
        %v890 = vrot.slane %v889, 4
        %v892 = vshll.u32 %v517, 16
        %v894 = vrot.slane %v892, 5
        %v895 = vsel %vm521, %v890, %v894
        %v896 = vshrl.u32 %v517, 16
        %v898 = vrot.slane %v896, 4
        %v899 = vor.u32 %v898, %v894
        %v900 = vrot.slane %v899, 4
        %v902 = vshll.u32 %v518, 16
        %v904 = vrot.slane %v902, 5
        %v905 = vsel %vm521, %v900, %v904
        %938 = vst [vmem:[#allocation3 + $0x4] sm:$0xf] %v535
        %939 = vst [vmem:[#allocation3 + $0x28] sm:$0xf] %v545
        %940 = vst [vmem:[#allocation3 + $0x4c] sm:$0xf] %v559
        %941 = vst [vmem:[#allocation3 + $0x70] sm:$0xf] %v569
        %942 = vst [vmem:[#allocation3 + $0x94] sm:$0xf] %v583
        %943 = vst [vmem:[#allocation3 + $0xb8] sm:$0xf] %v593
        %944 = vst [vmem:[#allocation3 + $0xdc] sm:$0xf] %v607
        %945 = vst [vmem:[#allocation3 + $0x100] sm:$0xf] %v617
        %946 = vst [vmem:[#allocation3 + $0x124] sm:$0xf] %v631
        %947 = vst [vmem:[#allocation3 + $0x148] sm:$0xf] %v641
        %948 = vst [vmem:[#allocation3 + $0x16c] sm:$0xf] %v655
        %949 = vst [vmem:[#allocation3 + $0x190] sm:$0xf] %v665
        %950 = vst [vmem:[#allocation3 + $0x1b4] sm:$0xf] %v679
        %951 = vst [vmem:[#allocation3 + $0x1d8] sm:$0xf] %v689
        %952 = vst [vmem:[#allocation3 + $0x1fc] sm:$0xf] %v703
        %953 = vst [vmem:[#allocation3 + $0x220] sm:$0xf] %v713
        %954 = vst [vmem:[#allocation3 + $0x244] sm:$0xf] %v727
        %955 = vst [vmem:[#allocation3 + $0x268] sm:$0xf] %v737
        %956 = vst [vmem:[#allocation3 + $0x28c] sm:$0xf] %v751
        %957 = vst [vmem:[#allocation3 + $0x2b0] sm:$0xf] %v761
        %958 = vst [vmem:[#allocation3 + $0x2d4] sm:$0xf] %v775
        %959 = vst [vmem:[#allocation3 + $0x2f8] sm:$0xf] %v785
        %960 = vst [vmem:[#allocation3 + $0x31c] sm:$0xf] %v799
        %961 = vst [vmem:[#allocation3 + $0x340] sm:$0xf] %v809
        %962 = vst [vmem:[#allocation3 + $0x364] sm:$0xf] %v823
        %963 = vst [vmem:[#allocation3 + $0x388] sm:$0xf] %v833
        %964 = vst [vmem:[#allocation3 + $0x3ac] sm:$0xf] %v847
        %965 = vst [vmem:[#allocation3 + $0x3d0] sm:$0xf] %v857
        %966 = vst [vmem:[#allocation3 + $0x3f4] sm:$0xf] %v871
        %967 = vst [vmem:[#allocation3 + $0x418] sm:$0xf] %v881
        %968 = vst [vmem:[#allocation3 + $0x43c] sm:$0xf] %v895
        %969 = vst [vmem:[#allocation3 + $0x460] sm:$0xf] %v905
        %v970 = vld [vmem:[%s293] sm:$0xe]
        %v971 = vld [vmem:[%s293 + $0x4] sm:$0xf]
        %v972 = vld [vmem:[%s293 + $0x8] sm:$0x1]
        %v973 = vld [vmem:[%s293 + $0xc] sm:$0xe]
        %v974 = vld [vmem:[%s293 + $0x10] sm:$0xf]
        %v975 = vld [vmem:[%s293 + $0x14] sm:$0x1]
        %v976 = vld [vmem:[%s293 + $0x18] sm:$0xe]
        %v977 = vld [vmem:[%s293 + $0x1c] sm:$0xf]
        %v978 = vld [vmem:[%s293 + $0x20] sm:$0x1]
        %v979 = vld [vmem:[%s293 + $0x24] sm:$0xe]
        %v980 = vld [vmem:[%s293 + $0x28] sm:$0xf]
        %v981 = vld [vmem:[%s293 + $0x2c] sm:$0x1]
        %v982 = vld [vmem:[%s293 + $0x30] sm:$0xe]
        %v983 = vld [vmem:[%s293 + $0x34] sm:$0xf]
        %v984 = vld [vmem:[%s293 + $0x38] sm:$0x1]
        %v985 = vld [vmem:[%s293 + $0x3c] sm:$0xe]
        %v986 = vld [vmem:[%s293 + $0x40] sm:$0xf]
        %v987 = vld [vmem:[%s293 + $0x44] sm:$0x1]
        %v988 = vld [vmem:[%s293 + $0x48] sm:$0xe]
        %v989 = vld [vmem:[%s293 + $0x4c] sm:$0xf]
        %v990 = vld [vmem:[%s293 + $0x50] sm:$0x1]
        %v991 = vld [vmem:[%s293 + $0x54] sm:$0xe]
        %v992 = vld [vmem:[%s293 + $0x58] sm:$0xf]
        %v993 = vld [vmem:[%s293 + $0x5c] sm:$0x1]
        %v994 = vld [vmem:[%s293 + $0x60] sm:$0xe]
        %v995 = vld [vmem:[%s293 + $0x64] sm:$0xf]
        %v996 = vld [vmem:[%s293 + $0x68] sm:$0x1]
        %v997 = vld [vmem:[%s293 + $0x6c] sm:$0xe]
        %v998 = vld [vmem:[%s293 + $0x70] sm:$0xf]
        %v999 = vld [vmem:[%s293 + $0x74] sm:$0x1]
        %v1000 = vld [vmem:[%s293 + $0x78] sm:$0xe]
        %v1001 = vld [vmem:[%s293 + $0x7c] sm:$0xf]
        %v1002 = vld [vmem:[%s293 + $0x80] sm:$0x1]
        %v1003 = vld [vmem:[%s293 + $0x84] sm:$0xe]
        %v1004 = vld [vmem:[%s293 + $0x88] sm:$0xf]
        %v1005 = vld [vmem:[%s293 + $0x8c] sm:$0x1]
        %v1006 = vld [vmem:[%s293 + $0x90] sm:$0xe]
        %v1007 = vld [vmem:[%s293 + $0x94] sm:$0xf]
        %v1008 = vld [vmem:[%s293 + $0x98] sm:$0x1]
        %v1009 = vld [vmem:[%s293 + $0x9c] sm:$0xe]
        %v1010 = vld [vmem:[%s293 + $0xa0] sm:$0xf]
        %v1011 = vld [vmem:[%s293 + $0xa4] sm:$0x1]
        %v1012 = vld [vmem:[%s293 + $0xa8] sm:$0xe]
        %v1013 = vld [vmem:[%s293 + $0xac] sm:$0xf]
        %v1014 = vld [vmem:[%s293 + $0xb0] sm:$0x1]
        %v1015 = vld [vmem:[%s293 + $0xb4] sm:$0xe]
        %v1016 = vld [vmem:[%s293 + $0xb8] sm:$0xf]
        %v1017 = vld [vmem:[%s293 + $0xbc] sm:$0x1]
        %vm1066 = vcmask 1042432
        %vm1067 = vcmask 1046532
        %vm1068 = vmor %vm1066, %vm1067
        %v1069 = vrot.slane %v970, 5
        %v1070 = vrot.slane %v1069, 4
        %v1071 = vrot.slane %v971, 5
        %v1072 = vsel %vm1068, %v1070, %v1071
        %v1073 = vrot.slane %v1071, 4
        %v1074 = vrot.slane %v972, 5
        %v1075 = vsel %vm1068, %v1073, %v1074
        %v1076 = vrot.slane %v973, 5
        %v1077 = vrot.slane %v1076, 4
        %v1078 = vrot.slane %v974, 5
        %v1079 = vsel %vm1068, %v1077, %v1078
        %v1080 = vrot.slane %v1078, 4
        %v1081 = vrot.slane %v975, 5
        %v1082 = vsel %vm1068, %v1080, %v1081
        %v1083 = vrot.slane %v976, 5
        %v1084 = vrot.slane %v1083, 4
        %v1085 = vrot.slane %v977, 5
        %v1086 = vsel %vm1068, %v1084, %v1085
        %v1087 = vrot.slane %v1085, 4
        %v1088 = vrot.slane %v978, 5
        %v1089 = vsel %vm1068, %v1087, %v1088
        %v1090 = vrot.slane %v979, 5
        %v1091 = vrot.slane %v1090, 4
        %v1092 = vrot.slane %v980, 5
        %v1093 = vsel %vm1068, %v1091, %v1092
        %v1094 = vrot.slane %v1092, 4
        %v1095 = vrot.slane %v981, 5
        %v1096 = vsel %vm1068, %v1094, %v1095
        %v1097 = vrot.slane %v982, 5
        %v1098 = vrot.slane %v1097, 4
        %v1099 = vrot.slane %v983, 5
        %v1100 = vsel %vm1068, %v1098, %v1099
        %v1101 = vrot.slane %v1099, 4
        %v1102 = vrot.slane %v984, 5
        %v1103 = vsel %vm1068, %v1101, %v1102
        %v1104 = vrot.slane %v985, 5
        %v1105 = vrot.slane %v1104, 4
        %v1106 = vrot.slane %v986, 5
        %v1107 = vsel %vm1068, %v1105, %v1106
        %v1108 = vrot.slane %v1106, 4
        %v1109 = vrot.slane %v987, 5
        %v1110 = vsel %vm1068, %v1108, %v1109
        %v1111 = vrot.slane %v988, 5
        %v1112 = vrot.slane %v1111, 4
        %v1113 = vrot.slane %v989, 5
        %v1114 = vsel %vm1068, %v1112, %v1113
        %v1115 = vrot.slane %v1113, 4
        %v1116 = vrot.slane %v990, 5
        %v1117 = vsel %vm1068, %v1115, %v1116
        %v1118 = vrot.slane %v991, 5
        %v1119 = vrot.slane %v1118, 4
        %v1120 = vrot.slane %v992, 5
        %v1121 = vsel %vm1068, %v1119, %v1120
        %v1122 = vrot.slane %v1120, 4
        %v1123 = vrot.slane %v993, 5
        %v1124 = vsel %vm1068, %v1122, %v1123
        %v1125 = vrot.slane %v994, 5
        %v1126 = vrot.slane %v1125, 4
        %v1127 = vrot.slane %v995, 5
        %v1128 = vsel %vm1068, %v1126, %v1127
        %v1129 = vrot.slane %v1127, 4
        %v1130 = vrot.slane %v996, 5
        %v1131 = vsel %vm1068, %v1129, %v1130
        %v1132 = vrot.slane %v997, 5
        %v1133 = vrot.slane %v1132, 4
        %v1134 = vrot.slane %v998, 5
        %v1135 = vsel %vm1068, %v1133, %v1134
        %v1136 = vrot.slane %v1134, 4
        %v1137 = vrot.slane %v999, 5
        %v1138 = vsel %vm1068, %v1136, %v1137
        %v1139 = vrot.slane %v1000, 5
        %v1140 = vrot.slane %v1139, 4
        %v1141 = vrot.slane %v1001, 5
        %v1142 = vsel %vm1068, %v1140, %v1141
        %v1143 = vrot.slane %v1141, 4
        %v1144 = vrot.slane %v1002, 5
        %v1145 = vsel %vm1068, %v1143, %v1144
        %v1146 = vrot.slane %v1003, 5
        %v1147 = vrot.slane %v1146, 4
        %v1148 = vrot.slane %v1004, 5
        %v1149 = vsel %vm1068, %v1147, %v1148
        %v1150 = vrot.slane %v1148, 4
        %v1151 = vrot.slane %v1005, 5
        %v1152 = vsel %vm1068, %v1150, %v1151
        %v1153 = vrot.slane %v1006, 5
        %v1154 = vrot.slane %v1153, 4
        %v1155 = vrot.slane %v1007, 5
        %v1156 = vsel %vm1068, %v1154, %v1155
        %v1157 = vrot.slane %v1155, 4
        %v1158 = vrot.slane %v1008, 5
        %v1159 = vsel %vm1068, %v1157, %v1158
        %v1160 = vrot.slane %v1009, 5
        %v1161 = vrot.slane %v1160, 4
        %v1162 = vrot.slane %v1010, 5
        %v1163 = vsel %vm1068, %v1161, %v1162
        %v1164 = vrot.slane %v1162, 4
        %v1165 = vrot.slane %v1011, 5
        %v1166 = vsel %vm1068, %v1164, %v1165
        %v1167 = vrot.slane %v1012, 5
        %v1168 = vrot.slane %v1167, 4
        %v1169 = vrot.slane %v1013, 5
        %v1170 = vsel %vm1068, %v1168, %v1169
        %v1171 = vrot.slane %v1169, 4
        %v1172 = vrot.slane %v1014, 5
        %v1173 = vsel %vm1068, %v1171, %v1172
        %v1174 = vrot.slane %v1015, 5
        %v1175 = vrot.slane %v1174, 4
        %v1176 = vrot.slane %v1016, 5
        %v1177 = vsel %vm1068, %v1175, %v1176
        %v1178 = vrot.slane %v1176, 4
        %v1179 = vrot.slane %v1017, 5
        %v1180 = vsel %vm1068, %v1178, %v1179
        %1213 = vst [vmem:[#allocation3 + $0x8] sm:$0xf] %v1072
        %1214 = vst [vmem:[#allocation3 + $0x2c] sm:$0xf] %v1075
        %1215 = vst [vmem:[#allocation3 + $0x50] sm:$0xf] %v1079
        %1216 = vst [vmem:[#allocation3 + $0x74] sm:$0xf] %v1082
        %1217 = vst [vmem:[#allocation3 + $0x98] sm:$0xf] %v1086
        %1218 = vst [vmem:[#allocation3 + $0xbc] sm:$0xf] %v1089
        %1219 = vst [vmem:[#allocation3 + $0xe0] sm:$0xf] %v1093
        %1220 = vst [vmem:[#allocation3 + $0x104] sm:$0xf] %v1096
        %1221 = vst [vmem:[#allocation3 + $0x128] sm:$0xf] %v1100
        %1222 = vst [vmem:[#allocation3 + $0x14c] sm:$0xf] %v1103
        %1223 = vst [vmem:[#allocation3 + $0x170] sm:$0xf] %v1107
        %1224 = vst [vmem:[#allocation3 + $0x194] sm:$0xf] %v1110
        %1225 = vst [vmem:[#allocation3 + $0x1b8] sm:$0xf] %v1114
        %1226 = vst [vmem:[#allocation3 + $0x1dc] sm:$0xf] %v1117
        %1227 = vst [vmem:[#allocation3 + $0x200] sm:$0xf] %v1121
        %1228 = vst [vmem:[#allocation3 + $0x224] sm:$0xf] %v1124
        %1229 = vst [vmem:[#allocation3 + $0x248] sm:$0xf] %v1128
        %1230 = vst [vmem:[#allocation3 + $0x26c] sm:$0xf] %v1131
        %1231 = vst [vmem:[#allocation3 + $0x290] sm:$0xf] %v1135
        %1232 = vst [vmem:[#allocation3 + $0x2b4] sm:$0xf] %v1138
        %1233 = vst [vmem:[#allocation3 + $0x2d8] sm:$0xf] %v1142
        %1234 = vst [vmem:[#allocation3 + $0x2fc] sm:$0xf] %v1145
        %1235 = vst [vmem:[#allocation3 + $0x320] sm:$0xf] %v1149
        %1236 = vst [vmem:[#allocation3 + $0x344] sm:$0xf] %v1152
        %1237 = vst [vmem:[#allocation3 + $0x368] sm:$0xf] %v1156
        %1238 = vst [vmem:[#allocation3 + $0x38c] sm:$0xf] %v1159
        %1239 = vst [vmem:[#allocation3 + $0x3b0] sm:$0xf] %v1163
        %1240 = vst [vmem:[#allocation3 + $0x3d4] sm:$0xf] %v1166
        %1241 = vst [vmem:[#allocation3 + $0x3f8] sm:$0xf] %v1170
        %1242 = vst [vmem:[#allocation3 + $0x41c] sm:$0xf] %v1173
        %1243 = vst [vmem:[#allocation3 + $0x440] sm:$0xf] %v1177
        %1244 = vst [vmem:[#allocation3 + $0x464] sm:$0xf] %v1180
        %s1245 = scalar_lea.vmem %s293, 12
        %v1246 = vld [vmem:[%s1245] sm:$0xf]
        %v1247 = vld [vmem:[%s1245 + $0x4] sm:$0xf]
        %v1248 = vld [vmem:[%s1245 + $0xc] sm:$0xf]
        %v1249 = vld [vmem:[%s1245 + $0x10] sm:$0xf]
        %v1250 = vld [vmem:[%s1245 + $0x18] sm:$0xf]
        %v1251 = vld [vmem:[%s1245 + $0x1c] sm:$0xf]
        %v1252 = vld [vmem:[%s1245 + $0x24] sm:$0xf]
        %v1253 = vld [vmem:[%s1245 + $0x28] sm:$0xf]
        %v1254 = vld [vmem:[%s1245 + $0x30] sm:$0xf]
        %v1255 = vld [vmem:[%s1245 + $0x34] sm:$0xf]
        %v1256 = vld [vmem:[%s1245 + $0x3c] sm:$0xf]
        %v1257 = vld [vmem:[%s1245 + $0x40] sm:$0xf]
        %v1258 = vld [vmem:[%s1245 + $0x48] sm:$0xf]
        %v1259 = vld [vmem:[%s1245 + $0x4c] sm:$0xf]
        %v1260 = vld [vmem:[%s1245 + $0x54] sm:$0xf]
        %v1261 = vld [vmem:[%s1245 + $0x58] sm:$0xf]
        %v1262 = vld [vmem:[%s1245 + $0x60] sm:$0xf]
        %v1263 = vld [vmem:[%s1245 + $0x64] sm:$0xf]
        %v1264 = vld [vmem:[%s1245 + $0x6c] sm:$0xf]
        %v1265 = vld [vmem:[%s1245 + $0x70] sm:$0xf]
        %v1266 = vld [vmem:[%s1245 + $0x78] sm:$0xf]
        %v1267 = vld [vmem:[%s1245 + $0x7c] sm:$0xf]
        %v1268 = vld [vmem:[%s1245 + $0x84] sm:$0xf]
        %v1269 = vld [vmem:[%s1245 + $0x88] sm:$0xf]
        %v1270 = vld [vmem:[%s1245 + $0x90] sm:$0xf]
        %v1271 = vld [vmem:[%s1245 + $0x94] sm:$0xf]
        %v1272 = vld [vmem:[%s1245 + $0x9c] sm:$0xf]
        %v1273 = vld [vmem:[%s1245 + $0xa0] sm:$0xf]
        %v1274 = vld [vmem:[%s1245 + $0xa8] sm:$0xf]
        %v1275 = vld [vmem:[%s1245 + $0xac] sm:$0xf]
        %v1276 = vld [vmem:[%s1245 + $0xb4] sm:$0xf]
        %v1277 = vld [vmem:[%s1245 + $0xb8] sm:$0xf]
        %1278 = vst [vmem:[#allocation3 + $0xc] sm:$0xf] %v1246
        %1279 = vst [vmem:[#allocation3 + $0x30] sm:$0xf] %v1247
        %1280 = vst [vmem:[#allocation3 + $0x54] sm:$0xf] %v1248
        %1281 = vst [vmem:[#allocation3 + $0x78] sm:$0xf] %v1249
        %1282 = vst [vmem:[#allocation3 + $0x9c] sm:$0xf] %v1250
        %1283 = vst [vmem:[#allocation3 + $0xc0] sm:$0xf] %v1251
        %1284 = vst [vmem:[#allocation3 + $0xe4] sm:$0xf] %v1252
        %1285 = vst [vmem:[#allocation3 + $0x108] sm:$0xf] %v1253
        %1286 = vst [vmem:[#allocation3 + $0x12c] sm:$0xf] %v1254
        %1287 = vst [vmem:[#allocation3 + $0x150] sm:$0xf] %v1255
        %1288 = vst [vmem:[#allocation3 + $0x174] sm:$0xf] %v1256
        %1289 = vst [vmem:[#allocation3 + $0x198] sm:$0xf] %v1257
        %1290 = vst [vmem:[#allocation3 + $0x1bc] sm:$0xf] %v1258
        %1291 = vst [vmem:[#allocation3 + $0x1e0] sm:$0xf] %v1259
        %1292 = vst [vmem:[#allocation3 + $0x204] sm:$0xf] %v1260
        %1293 = vst [vmem:[#allocation3 + $0x228] sm:$0xf] %v1261
        %1294 = vst [vmem:[#allocation3 + $0x24c] sm:$0xf] %v1262
        %1295 = vst [vmem:[#allocation3 + $0x270] sm:$0xf] %v1263
        %1296 = vst [vmem:[#allocation3 + $0x294] sm:$0xf] %v1264
        %1297 = vst [vmem:[#allocation3 + $0x2b8] sm:$0xf] %v1265
        %1298 = vst [vmem:[#allocation3 + $0x2dc] sm:$0xf] %v1266
        %1299 = vst [vmem:[#allocation3 + $0x300] sm:$0xf] %v1267
        %1300 = vst [vmem:[#allocation3 + $0x324] sm:$0xf] %v1268
        %1301 = vst [vmem:[#allocation3 + $0x348] sm:$0xf] %v1269
        %1302 = vst [vmem:[#allocation3 + $0x36c] sm:$0xf] %v1270
        %1303 = vst [vmem:[#allocation3 + $0x390] sm:$0xf] %v1271
        %1304 = vst [vmem:[#allocation3 + $0x3b4] sm:$0xf] %v1272
        %1305 = vst [vmem:[#allocation3 + $0x3d8] sm:$0xf] %v1273
        %1306 = vst [vmem:[#allocation3 + $0x3fc] sm:$0xf] %v1274
        %1307 = vst [vmem:[#allocation3 + $0x420] sm:$0xf] %v1275
        %1308 = vst [vmem:[#allocation3 + $0x444] sm:$0xf] %v1276
        %1309 = vst [vmem:[#allocation3 + $0x468] sm:$0xf] %v1277
        %v1310 = vld [vmem:[%s1245] sm:$0xf]
        %v1311 = vld [vmem:[%s1245 + $0x4] sm:$0xf]
        %v1312 = vld [vmem:[%s1245 + $0x8] sm:$0x1]
        %v1313 = vld [vmem:[%s1245 + $0xc] sm:$0xf]
        %v1314 = vld [vmem:[%s1245 + $0x10] sm:$0xf]
        %v1315 = vld [vmem:[%s1245 + $0x14] sm:$0x1]
        %v1316 = vld [vmem:[%s1245 + $0x18] sm:$0xf]
        %v1317 = vld [vmem:[%s1245 + $0x1c] sm:$0xf]
        %v1318 = vld [vmem:[%s1245 + $0x20] sm:$0x1]
        %v1319 = vld [vmem:[%s1245 + $0x24] sm:$0xf]
        %v1320 = vld [vmem:[%s1245 + $0x28] sm:$0xf]
        %v1321 = vld [vmem:[%s1245 + $0x2c] sm:$0x1]
        %v1322 = vld [vmem:[%s1245 + $0x30] sm:$0xf]
        %v1323 = vld [vmem:[%s1245 + $0x34] sm:$0xf]
        %v1324 = vld [vmem:[%s1245 + $0x38] sm:$0x1]
        %v1325 = vld [vmem:[%s1245 + $0x3c] sm:$0xf]
        %v1326 = vld [vmem:[%s1245 + $0x40] sm:$0xf]
        %v1327 = vld [vmem:[%s1245 + $0x44] sm:$0x1]
        %v1328 = vld [vmem:[%s1245 + $0x48] sm:$0xf]
        %v1329 = vld [vmem:[%s1245 + $0x4c] sm:$0xf]
        %v1330 = vld [vmem:[%s1245 + $0x50] sm:$0x1]
        %v1331 = vld [vmem:[%s1245 + $0x54] sm:$0xf]
        %v1332 = vld [vmem:[%s1245 + $0x58] sm:$0xf]
        %v1333 = vld [vmem:[%s1245 + $0x5c] sm:$0x1]
        %v1334 = vld [vmem:[%s1245 + $0x60] sm:$0xf]
        %v1335 = vld [vmem:[%s1245 + $0x64] sm:$0xf]
        %v1336 = vld [vmem:[%s1245 + $0x68] sm:$0x1]
        %v1337 = vld [vmem:[%s1245 + $0x6c] sm:$0xf]
        %v1338 = vld [vmem:[%s1245 + $0x70] sm:$0xf]
        %v1339 = vld [vmem:[%s1245 + $0x74] sm:$0x1]
        %v1340 = vld [vmem:[%s1245 + $0x78] sm:$0xf]
        %v1341 = vld [vmem:[%s1245 + $0x7c] sm:$0xf]
        %v1342 = vld [vmem:[%s1245 + $0x80] sm:$0x1]
        %v1343 = vld [vmem:[%s1245 + $0x84] sm:$0xf]
        %v1344 = vld [vmem:[%s1245 + $0x88] sm:$0xf]
        %v1345 = vld [vmem:[%s1245 + $0x8c] sm:$0x1]
        %v1346 = vld [vmem:[%s1245 + $0x90] sm:$0xf]
        %v1347 = vld [vmem:[%s1245 + $0x94] sm:$0xf]
        %v1348 = vld [vmem:[%s1245 + $0x98] sm:$0x1]
        %v1349 = vld [vmem:[%s1245 + $0x9c] sm:$0xf]
        %v1350 = vld [vmem:[%s1245 + $0xa0] sm:$0xf]
        %v1351 = vld [vmem:[%s1245 + $0xa4] sm:$0x1]
        %v1352 = vld [vmem:[%s1245 + $0xa8] sm:$0xf]
        %v1353 = vld [vmem:[%s1245 + $0xac] sm:$0xf]
        %v1354 = vld [vmem:[%s1245 + $0xb0] sm:$0x1]
        %v1355 = vld [vmem:[%s1245 + $0xb4] sm:$0xf]
        %v1356 = vld [vmem:[%s1245 + $0xb8] sm:$0xf]
        %v1357 = vld [vmem:[%s1245 + $0xbc] sm:$0x1]
        %v1359 = vshrl.u32 %v1310, 16
        %v1361 = vrot.slane %v1359, 4
        %v1362 = vshll.u32 %v1310, 16
        %v1364 = vrot.slane %v1362, 5
        %v1365 = vor.u32 %v1361, %v1364
        %v1366 = vrot.slane %v1365, 4
        %v1368 = vshll.u32 %v1311, 16
        %v1370 = vrot.slane %v1368, 5
        %v1371 = vsel %vm521, %v1366, %v1370
        %v1372 = vshrl.u32 %v1311, 16
        %v1374 = vrot.slane %v1372, 4
        %v1375 = vor.u32 %v1374, %v1370
        %v1376 = vrot.slane %v1375, 4
        %v1378 = vshll.u32 %v1312, 16
        %v1380 = vrot.slane %v1378, 5
        %v1381 = vsel %vm521, %v1376, %v1380
        %v1383 = vshrl.u32 %v1313, 16
        %v1385 = vrot.slane %v1383, 4
        %v1386 = vshll.u32 %v1313, 16
        %v1388 = vrot.slane %v1386, 5
        %v1389 = vor.u32 %v1385, %v1388
        %v1390 = vrot.slane %v1389, 4
        %v1392 = vshll.u32 %v1314, 16
        %v1394 = vrot.slane %v1392, 5
        %v1395 = vsel %vm521, %v1390, %v1394
        %v1396 = vshrl.u32 %v1314, 16
        %v1398 = vrot.slane %v1396, 4
        %v1399 = vor.u32 %v1398, %v1394
        %v1400 = vrot.slane %v1399, 4
        %v1402 = vshll.u32 %v1315, 16
        %v1404 = vrot.slane %v1402, 5
        %v1405 = vsel %vm521, %v1400, %v1404
        %v1407 = vshrl.u32 %v1316, 16
        %v1409 = vrot.slane %v1407, 4
        %v1410 = vshll.u32 %v1316, 16
        %v1412 = vrot.slane %v1410, 5
        %v1413 = vor.u32 %v1409, %v1412
        %v1414 = vrot.slane %v1413, 4
        %v1416 = vshll.u32 %v1317, 16
        %v1418 = vrot.slane %v1416, 5
        %v1419 = vsel %vm521, %v1414, %v1418
        %v1420 = vshrl.u32 %v1317, 16
        %v1422 = vrot.slane %v1420, 4
        %v1423 = vor.u32 %v1422, %v1418
        %v1424 = vrot.slane %v1423, 4
        %v1426 = vshll.u32 %v1318, 16
        %v1428 = vrot.slane %v1426, 5
        %v1429 = vsel %vm521, %v1424, %v1428
        %v1431 = vshrl.u32 %v1319, 16
        %v1433 = vrot.slane %v1431, 4
        %v1434 = vshll.u32 %v1319, 16
        %v1436 = vrot.slane %v1434, 5
        %v1437 = vor.u32 %v1433, %v1436
        %v1438 = vrot.slane %v1437, 4
        %v1440 = vshll.u32 %v1320, 16
        %v1442 = vrot.slane %v1440, 5
        %v1443 = vsel %vm521, %v1438, %v1442
        %v1444 = vshrl.u32 %v1320, 16
        %v1446 = vrot.slane %v1444, 4
        %v1447 = vor.u32 %v1446, %v1442
        %v1448 = vrot.slane %v1447, 4
        %v1450 = vshll.u32 %v1321, 16
        %v1452 = vrot.slane %v1450, 5
        %v1453 = vsel %vm521, %v1448, %v1452
        %v1455 = vshrl.u32 %v1322, 16
        %v1457 = vrot.slane %v1455, 4
        %v1458 = vshll.u32 %v1322, 16
        %v1460 = vrot.slane %v1458, 5
        %v1461 = vor.u32 %v1457, %v1460
        %v1462 = vrot.slane %v1461, 4
        %v1464 = vshll.u32 %v1323, 16
        %v1466 = vrot.slane %v1464, 5
        %v1467 = vsel %vm521, %v1462, %v1466
        %v1468 = vshrl.u32 %v1323, 16
        %v1470 = vrot.slane %v1468, 4
        %v1471 = vor.u32 %v1470, %v1466
        %v1472 = vrot.slane %v1471, 4
        %v1474 = vshll.u32 %v1324, 16
        %v1476 = vrot.slane %v1474, 5
        %v1477 = vsel %vm521, %v1472, %v1476
        %v1479 = vshrl.u32 %v1325, 16
        %v1481 = vrot.slane %v1479, 4
        %v1482 = vshll.u32 %v1325, 16
        %v1484 = vrot.slane %v1482, 5
        %v1485 = vor.u32 %v1481, %v1484
        %v1486 = vrot.slane %v1485, 4
        %v1488 = vshll.u32 %v1326, 16
        %v1490 = vrot.slane %v1488, 5
        %v1491 = vsel %vm521, %v1486, %v1490
        %v1492 = vshrl.u32 %v1326, 16
        %v1494 = vrot.slane %v1492, 4
        %v1495 = vor.u32 %v1494, %v1490
        %v1496 = vrot.slane %v1495, 4
        %v1498 = vshll.u32 %v1327, 16
        %v1500 = vrot.slane %v1498, 5
        %v1501 = vsel %vm521, %v1496, %v1500
        %v1503 = vshrl.u32 %v1328, 16
        %v1505 = vrot.slane %v1503, 4
        %v1506 = vshll.u32 %v1328, 16
        %v1508 = vrot.slane %v1506, 5
        %v1509 = vor.u32 %v1505, %v1508
        %v1510 = vrot.slane %v1509, 4
        %v1512 = vshll.u32 %v1329, 16
        %v1514 = vrot.slane %v1512, 5
        %v1515 = vsel %vm521, %v1510, %v1514
        %v1516 = vshrl.u32 %v1329, 16
        %v1518 = vrot.slane %v1516, 4
        %v1519 = vor.u32 %v1518, %v1514
        %v1520 = vrot.slane %v1519, 4
        %v1522 = vshll.u32 %v1330, 16
        %v1524 = vrot.slane %v1522, 5
        %v1525 = vsel %vm521, %v1520, %v1524
        %v1527 = vshrl.u32 %v1331, 16
        %v1529 = vrot.slane %v1527, 4
        %v1530 = vshll.u32 %v1331, 16
        %v1532 = vrot.slane %v1530, 5
        %v1533 = vor.u32 %v1529, %v1532
        %v1534 = vrot.slane %v1533, 4
        %v1536 = vshll.u32 %v1332, 16
        %v1538 = vrot.slane %v1536, 5
        %v1539 = vsel %vm521, %v1534, %v1538
        %v1540 = vshrl.u32 %v1332, 16
        %v1542 = vrot.slane %v1540, 4
        %v1543 = vor.u32 %v1542, %v1538
        %v1544 = vrot.slane %v1543, 4
        %v1546 = vshll.u32 %v1333, 16
        %v1548 = vrot.slane %v1546, 5
        %v1549 = vsel %vm521, %v1544, %v1548
        %v1551 = vshrl.u32 %v1334, 16
        %v1553 = vrot.slane %v1551, 4
        %v1554 = vshll.u32 %v1334, 16
        %v1556 = vrot.slane %v1554, 5
        %v1557 = vor.u32 %v1553, %v1556
        %v1558 = vrot.slane %v1557, 4
        %v1560 = vshll.u32 %v1335, 16
        %v1562 = vrot.slane %v1560, 5
        %v1563 = vsel %vm521, %v1558, %v1562
        %v1564 = vshrl.u32 %v1335, 16
        %v1566 = vrot.slane %v1564, 4
        %v1567 = vor.u32 %v1566, %v1562
        %v1568 = vrot.slane %v1567, 4
        %v1570 = vshll.u32 %v1336, 16
        %v1572 = vrot.slane %v1570, 5
        %v1573 = vsel %vm521, %v1568, %v1572
        %v1575 = vshrl.u32 %v1337, 16
        %v1577 = vrot.slane %v1575, 4
        %v1578 = vshll.u32 %v1337, 16
        %v1580 = vrot.slane %v1578, 5
        %v1581 = vor.u32 %v1577, %v1580
        %v1582 = vrot.slane %v1581, 4
        %v1584 = vshll.u32 %v1338, 16
        %v1586 = vrot.slane %v1584, 5
        %v1587 = vsel %vm521, %v1582, %v1586
        %v1588 = vshrl.u32 %v1338, 16
        %v1590 = vrot.slane %v1588, 4
        %v1591 = vor.u32 %v1590, %v1586
        %v1592 = vrot.slane %v1591, 4
        %v1594 = vshll.u32 %v1339, 16
        %v1596 = vrot.slane %v1594, 5
        %v1597 = vsel %vm521, %v1592, %v1596
        %v1599 = vshrl.u32 %v1340, 16
        %v1601 = vrot.slane %v1599, 4
        %v1602 = vshll.u32 %v1340, 16
        %v1604 = vrot.slane %v1602, 5
        %v1605 = vor.u32 %v1601, %v1604
        %v1606 = vrot.slane %v1605, 4
        %v1608 = vshll.u32 %v1341, 16
        %v1610 = vrot.slane %v1608, 5
        %v1611 = vsel %vm521, %v1606, %v1610
        %v1612 = vshrl.u32 %v1341, 16
        %v1614 = vrot.slane %v1612, 4
        %v1615 = vor.u32 %v1614, %v1610
        %v1616 = vrot.slane %v1615, 4
        %v1618 = vshll.u32 %v1342, 16
        %v1620 = vrot.slane %v1618, 5
        %v1621 = vsel %vm521, %v1616, %v1620
        %v1623 = vshrl.u32 %v1343, 16
        %v1625 = vrot.slane %v1623, 4
        %v1626 = vshll.u32 %v1343, 16
        %v1628 = vrot.slane %v1626, 5
        %v1629 = vor.u32 %v1625, %v1628
        %v1630 = vrot.slane %v1629, 4
        %v1632 = vshll.u32 %v1344, 16
        %v1634 = vrot.slane %v1632, 5
        %v1635 = vsel %vm521, %v1630, %v1634
        %v1636 = vshrl.u32 %v1344, 16
        %v1638 = vrot.slane %v1636, 4
        %v1639 = vor.u32 %v1638, %v1634
        %v1640 = vrot.slane %v1639, 4
        %v1642 = vshll.u32 %v1345, 16
        %v1644 = vrot.slane %v1642, 5
        %v1645 = vsel %vm521, %v1640, %v1644
        %v1647 = vshrl.u32 %v1346, 16
        %v1649 = vrot.slane %v1647, 4
        %v1650 = vshll.u32 %v1346, 16
        %v1652 = vrot.slane %v1650, 5
        %v1653 = vor.u32 %v1649, %v1652
        %v1654 = vrot.slane %v1653, 4
        %v1656 = vshll.u32 %v1347, 16
        %v1658 = vrot.slane %v1656, 5
        %v1659 = vsel %vm521, %v1654, %v1658
        %v1660 = vshrl.u32 %v1347, 16
        %v1662 = vrot.slane %v1660, 4
        %v1663 = vor.u32 %v1662, %v1658
        %v1664 = vrot.slane %v1663, 4
        %v1666 = vshll.u32 %v1348, 16
        %v1668 = vrot.slane %v1666, 5
        %v1669 = vsel %vm521, %v1664, %v1668
        %v1671 = vshrl.u32 %v1349, 16
        %v1673 = vrot.slane %v1671, 4
        %v1674 = vshll.u32 %v1349, 16
        %v1676 = vrot.slane %v1674, 5
        %v1677 = vor.u32 %v1673, %v1676
        %v1678 = vrot.slane %v1677, 4
        %v1680 = vshll.u32 %v1350, 16
        %v1682 = vrot.slane %v1680, 5
        %v1683 = vsel %vm521, %v1678, %v1682
        %v1684 = vshrl.u32 %v1350, 16
        %v1686 = vrot.slane %v1684, 4
        %v1687 = vor.u32 %v1686, %v1682
        %v1688 = vrot.slane %v1687, 4
        %v1690 = vshll.u32 %v1351, 16
        %v1692 = vrot.slane %v1690, 5
        %v1693 = vsel %vm521, %v1688, %v1692
        %v1695 = vshrl.u32 %v1352, 16
        %v1697 = vrot.slane %v1695, 4
        %v1698 = vshll.u32 %v1352, 16
        %v1700 = vrot.slane %v1698, 5
        %v1701 = vor.u32 %v1697, %v1700
        %v1702 = vrot.slane %v1701, 4
        %v1704 = vshll.u32 %v1353, 16
        %v1706 = vrot.slane %v1704, 5
        %v1707 = vsel %vm521, %v1702, %v1706
        %v1708 = vshrl.u32 %v1353, 16
        %v1710 = vrot.slane %v1708, 4
        %v1711 = vor.u32 %v1710, %v1706
        %v1712 = vrot.slane %v1711, 4
        %v1714 = vshll.u32 %v1354, 16
        %v1716 = vrot.slane %v1714, 5
        %v1717 = vsel %vm521, %v1712, %v1716
        %v1719 = vshrl.u32 %v1355, 16
        %v1721 = vrot.slane %v1719, 4
        %v1722 = vshll.u32 %v1355, 16
        %v1724 = vrot.slane %v1722, 5
        %v1725 = vor.u32 %v1721, %v1724
        %v1726 = vrot.slane %v1725, 4
        %v1728 = vshll.u32 %v1356, 16
        %v1730 = vrot.slane %v1728, 5
        %v1731 = vsel %vm521, %v1726, %v1730
        %v1732 = vshrl.u32 %v1356, 16
        %v1734 = vrot.slane %v1732, 4
        %v1735 = vor.u32 %v1734, %v1730
        %v1736 = vrot.slane %v1735, 4
        %v1738 = vshll.u32 %v1357, 16
        %v1740 = vrot.slane %v1738, 5
        %v1741 = vsel %vm521, %v1736, %v1740
        %1774 = vst [vmem:[#allocation3 + $0x10] sm:$0xf] %v1371
        %1775 = vst [vmem:[#allocation3 + $0x34] sm:$0xf] %v1381
        %1776 = vst [vmem:[#allocation3 + $0x58] sm:$0xf] %v1395
        %1777 = vst [vmem:[#allocation3 + $0x7c] sm:$0xf] %v1405
        %1778 = vst [vmem:[#allocation3 + $0xa0] sm:$0xf] %v1419
        %1779 = vst [vmem:[#allocation3 + $0xc4] sm:$0xf] %v1429
        %1780 = vst [vmem:[#allocation3 + $0xe8] sm:$0xf] %v1443
        %1781 = vst [vmem:[#allocation3 + $0x10c] sm:$0xf] %v1453
        %1782 = vst [vmem:[#allocation3 + $0x130] sm:$0xf] %v1467
        %1783 = vst [vmem:[#allocation3 + $0x154] sm:$0xf] %v1477
        %1784 = vst [vmem:[#allocation3 + $0x178] sm:$0xf] %v1491
        %1785 = vst [vmem:[#allocation3 + $0x19c] sm:$0xf] %v1501
        %1786 = vst [vmem:[#allocation3 + $0x1c0] sm:$0xf] %v1515
        %1787 = vst [vmem:[#allocation3 + $0x1e4] sm:$0xf] %v1525
        %1788 = vst [vmem:[#allocation3 + $0x208] sm:$0xf] %v1539
        %1789 = vst [vmem:[#allocation3 + $0x22c] sm:$0xf] %v1549
        %1790 = vst [vmem:[#allocation3 + $0x250] sm:$0xf] %v1563
        %1791 = vst [vmem:[#allocation3 + $0x274] sm:$0xf] %v1573
        %1792 = vst [vmem:[#allocation3 + $0x298] sm:$0xf] %v1587
        %1793 = vst [vmem:[#allocation3 + $0x2bc] sm:$0xf] %v1597
        %1794 = vst [vmem:[#allocation3 + $0x2e0] sm:$0xf] %v1611
        %1795 = vst [vmem:[#allocation3 + $0x304] sm:$0xf] %v1621
        %1796 = vst [vmem:[#allocation3 + $0x328] sm:$0xf] %v1635
        %1797 = vst [vmem:[#allocation3 + $0x34c] sm:$0xf] %v1645
        %1798 = vst [vmem:[#allocation3 + $0x370] sm:$0xf] %v1659
        %1799 = vst [vmem:[#allocation3 + $0x394] sm:$0xf] %v1669
        %1800 = vst [vmem:[#allocation3 + $0x3b8] sm:$0xf] %v1683
        %1801 = vst [vmem:[#allocation3 + $0x3dc] sm:$0xf] %v1693
        %1802 = vst [vmem:[#allocation3 + $0x400] sm:$0xf] %v1707
        %1803 = vst [vmem:[#allocation3 + $0x424] sm:$0xf] %v1717
        %1804 = vst [vmem:[#allocation3 + $0x448] sm:$0xf] %v1731
        %1805 = vst [vmem:[#allocation3 + $0x46c] sm:$0xf] %v1741
        %v1806 = vld [vmem:[%s1245] sm:$0xe]
        %v1807 = vld [vmem:[%s1245 + $0x4] sm:$0xf]
        %v1808 = vld [vmem:[%s1245 + $0x8] sm:$0x1]
        %v1809 = vld [vmem:[%s1245 + $0xc] sm:$0xe]
        %v1810 = vld [vmem:[%s1245 + $0x10] sm:$0xf]
        %v1811 = vld [vmem:[%s1245 + $0x14] sm:$0x1]
        %v1812 = vld [vmem:[%s1245 + $0x18] sm:$0xe]
        %v1813 = vld [vmem:[%s1245 + $0x1c] sm:$0xf]
        %v1814 = vld [vmem:[%s1245 + $0x20] sm:$0x1]
        %v1815 = vld [vmem:[%s1245 + $0x24] sm:$0xe]
        %v1816 = vld [vmem:[%s1245 + $0x28] sm:$0xf]
        %v1817 = vld [vmem:[%s1245 + $0x2c] sm:$0x1]
        %v1818 = vld [vmem:[%s1245 + $0x30] sm:$0xe]
        %v1819 = vld [vmem:[%s1245 + $0x34] sm:$0xf]
        %v1820 = vld [vmem:[%s1245 + $0x38] sm:$0x1]
        %v1821 = vld [vmem:[%s1245 + $0x3c] sm:$0xe]
        %v1822 = vld [vmem:[%s1245 + $0x40] sm:$0xf]
        %v1823 = vld [vmem:[%s1245 + $0x44] sm:$0x1]
        %v1824 = vld [vmem:[%s1245 + $0x48] sm:$0xe]
        %v1825 = vld [vmem:[%s1245 + $0x4c] sm:$0xf]
        %v1826 = vld [vmem:[%s1245 + $0x50] sm:$0x1]
        %v1827 = vld [vmem:[%s1245 + $0x54] sm:$0xe]
        %v1828 = vld [vmem:[%s1245 + $0x58] sm:$0xf]
        %v1829 = vld [vmem:[%s1245 + $0x5c] sm:$0x1]
        %v1830 = vld [vmem:[%s1245 + $0x60] sm:$0xe]
        %v1831 = vld [vmem:[%s1245 + $0x64] sm:$0xf]
        %v1832 = vld [vmem:[%s1245 + $0x68] sm:$0x1]
        %v1833 = vld [vmem:[%s1245 + $0x6c] sm:$0xe]
        %v1834 = vld [vmem:[%s1245 + $0x70] sm:$0xf]
        %v1835 = vld [vmem:[%s1245 + $0x74] sm:$0x1]
        %v1836 = vld [vmem:[%s1245 + $0x78] sm:$0xe]
        %v1837 = vld [vmem:[%s1245 + $0x7c] sm:$0xf]
        %v1838 = vld [vmem:[%s1245 + $0x80] sm:$0x1]
        %v1839 = vld [vmem:[%s1245 + $0x84] sm:$0xe]
        %v1840 = vld [vmem:[%s1245 + $0x88] sm:$0xf]
        %v1841 = vld [vmem:[%s1245 + $0x8c] sm:$0x1]
        %v1842 = vld [vmem:[%s1245 + $0x90] sm:$0xe]
        %v1843 = vld [vmem:[%s1245 + $0x94] sm:$0xf]
        %v1844 = vld [vmem:[%s1245 + $0x98] sm:$0x1]
        %v1845 = vld [vmem:[%s1245 + $0x9c] sm:$0xe]
        %v1846 = vld [vmem:[%s1245 + $0xa0] sm:$0xf]
        %v1847 = vld [vmem:[%s1245 + $0xa4] sm:$0x1]
        %v1848 = vld [vmem:[%s1245 + $0xa8] sm:$0xe]
        %v1849 = vld [vmem:[%s1245 + $0xac] sm:$0xf]
        %v1850 = vld [vmem:[%s1245 + $0xb0] sm:$0x1]
        %v1851 = vld [vmem:[%s1245 + $0xb4] sm:$0xe]
        %v1852 = vld [vmem:[%s1245 + $0xb8] sm:$0xf]
        %v1853 = vld [vmem:[%s1245 + $0xbc] sm:$0x1]
        %v1902 = vrot.slane %v1806, 5
        %v1903 = vrot.slane %v1902, 4
        %v1904 = vrot.slane %v1807, 5
        %v1905 = vsel %vm1068, %v1903, %v1904
        %v1906 = vrot.slane %v1904, 4
        %v1907 = vrot.slane %v1808, 5
        %v1908 = vsel %vm1068, %v1906, %v1907
        %v1909 = vrot.slane %v1809, 5
        %v1910 = vrot.slane %v1909, 4
        %v1911 = vrot.slane %v1810, 5
        %v1912 = vsel %vm1068, %v1910, %v1911
        %v1913 = vrot.slane %v1911, 4
        %v1914 = vrot.slane %v1811, 5
        %v1915 = vsel %vm1068, %v1913, %v1914
        %v1916 = vrot.slane %v1812, 5
        %v1917 = vrot.slane %v1916, 4
        %v1918 = vrot.slane %v1813, 5
        %v1919 = vsel %vm1068, %v1917, %v1918
        %v1920 = vrot.slane %v1918, 4
        %v1921 = vrot.slane %v1814, 5
        %v1922 = vsel %vm1068, %v1920, %v1921
        %v1923 = vrot.slane %v1815, 5
        %v1924 = vrot.slane %v1923, 4
        %v1925 = vrot.slane %v1816, 5
        %v1926 = vsel %vm1068, %v1924, %v1925
        %v1927 = vrot.slane %v1925, 4
        %v1928 = vrot.slane %v1817, 5
        %v1929 = vsel %vm1068, %v1927, %v1928
        %v1930 = vrot.slane %v1818, 5
        %v1931 = vrot.slane %v1930, 4
        %v1932 = vrot.slane %v1819, 5
        %v1933 = vsel %vm1068, %v1931, %v1932
        %v1934 = vrot.slane %v1932, 4
        %v1935 = vrot.slane %v1820, 5
        %v1936 = vsel %vm1068, %v1934, %v1935
        %v1937 = vrot.slane %v1821, 5
        %v1938 = vrot.slane %v1937, 4
        %v1939 = vrot.slane %v1822, 5
        %v1940 = vsel %vm1068, %v1938, %v1939
        %v1941 = vrot.slane %v1939, 4
        %v1942 = vrot.slane %v1823, 5
        %v1943 = vsel %vm1068, %v1941, %v1942
        %v1944 = vrot.slane %v1824, 5
        %v1945 = vrot.slane %v1944, 4
        %v1946 = vrot.slane %v1825, 5
        %v1947 = vsel %vm1068, %v1945, %v1946
        %v1948 = vrot.slane %v1946, 4
        %v1949 = vrot.slane %v1826, 5
        %v1950 = vsel %vm1068, %v1948, %v1949
        %v1951 = vrot.slane %v1827, 5
        %v1952 = vrot.slane %v1951, 4
        %v1953 = vrot.slane %v1828, 5
        %v1954 = vsel %vm1068, %v1952, %v1953
        %v1955 = vrot.slane %v1953, 4
        %v1956 = vrot.slane %v1829, 5
        %v1957 = vsel %vm1068, %v1955, %v1956
        %v1958 = vrot.slane %v1830, 5
        %v1959 = vrot.slane %v1958, 4
        %v1960 = vrot.slane %v1831, 5
        %v1961 = vsel %vm1068, %v1959, %v1960
        %v1962 = vrot.slane %v1960, 4
        %v1963 = vrot.slane %v1832, 5
        %v1964 = vsel %vm1068, %v1962, %v1963
        %v1965 = vrot.slane %v1833, 5
        %v1966 = vrot.slane %v1965, 4
        %v1967 = vrot.slane %v1834, 5
        %v1968 = vsel %vm1068, %v1966, %v1967
        %v1969 = vrot.slane %v1967, 4
        %v1970 = vrot.slane %v1835, 5
        %v1971 = vsel %vm1068, %v1969, %v1970
        %v1972 = vrot.slane %v1836, 5
        %v1973 = vrot.slane %v1972, 4
        %v1974 = vrot.slane %v1837, 5
        %v1975 = vsel %vm1068, %v1973, %v1974
        %v1976 = vrot.slane %v1974, 4
        %v1977 = vrot.slane %v1838, 5
        %v1978 = vsel %vm1068, %v1976, %v1977
        %v1979 = vrot.slane %v1839, 5
        %v1980 = vrot.slane %v1979, 4
        %v1981 = vrot.slane %v1840, 5
        %v1982 = vsel %vm1068, %v1980, %v1981
        %v1983 = vrot.slane %v1981, 4
        %v1984 = vrot.slane %v1841, 5
        %v1985 = vsel %vm1068, %v1983, %v1984
        %v1986 = vrot.slane %v1842, 5
        %v1987 = vrot.slane %v1986, 4
        %v1988 = vrot.slane %v1843, 5
        %v1989 = vsel %vm1068, %v1987, %v1988
        %v1990 = vrot.slane %v1988, 4
        %v1991 = vrot.slane %v1844, 5
        %v1992 = vsel %vm1068, %v1990, %v1991
        %v1993 = vrot.slane %v1845, 5
        %v1994 = vrot.slane %v1993, 4
        %v1995 = vrot.slane %v1846, 5
        %v1996 = vsel %vm1068, %v1994, %v1995
        %v1997 = vrot.slane %v1995, 4
        %v1998 = vrot.slane %v1847, 5
        %v1999 = vsel %vm1068, %v1997, %v1998
        %v2000 = vrot.slane %v1848, 5
        %v2001 = vrot.slane %v2000, 4
        %v2002 = vrot.slane %v1849, 5
        %v2003 = vsel %vm1068, %v2001, %v2002
        %v2004 = vrot.slane %v2002, 4
        %v2005 = vrot.slane %v1850, 5
        %v2006 = vsel %vm1068, %v2004, %v2005
        %v2007 = vrot.slane %v1851, 5
        %v2008 = vrot.slane %v2007, 4
        %v2009 = vrot.slane %v1852, 5
        %v2010 = vsel %vm1068, %v2008, %v2009
        %v2011 = vrot.slane %v2009, 4
        %v2012 = vrot.slane %v1853, 5
        %v2013 = vsel %vm1068, %v2011, %v2012
        %2046 = vst [vmem:[#allocation3 + $0x14] sm:$0xf] %v1905
        %2047 = vst [vmem:[#allocation3 + $0x38] sm:$0xf] %v1908
        %2048 = vst [vmem:[#allocation3 + $0x5c] sm:$0xf] %v1912
        %2049 = vst [vmem:[#allocation3 + $0x80] sm:$0xf] %v1915
        %2050 = vst [vmem:[#allocation3 + $0xa4] sm:$0xf] %v1919
        %2051 = vst [vmem:[#allocation3 + $0xc8] sm:$0xf] %v1922
        %2052 = vst [vmem:[#allocation3 + $0xec] sm:$0xf] %v1926
        %2053 = vst [vmem:[#allocation3 + $0x110] sm:$0xf] %v1929
        %2054 = vst [vmem:[#allocation3 + $0x134] sm:$0xf] %v1933
        %2055 = vst [vmem:[#allocation3 + $0x158] sm:$0xf] %v1936
        %2056 = vst [vmem:[#allocation3 + $0x17c] sm:$0xf] %v1940
        %2057 = vst [vmem:[#allocation3 + $0x1a0] sm:$0xf] %v1943
        %2058 = vst [vmem:[#allocation3 + $0x1c4] sm:$0xf] %v1947
        %2059 = vst [vmem:[#allocation3 + $0x1e8] sm:$0xf] %v1950
        %2060 = vst [vmem:[#allocation3 + $0x20c] sm:$0xf] %v1954
        %2061 = vst [vmem:[#allocation3 + $0x230] sm:$0xf] %v1957
        %2062 = vst [vmem:[#allocation3 + $0x254] sm:$0xf] %v1961
        %2063 = vst [vmem:[#allocation3 + $0x278] sm:$0xf] %v1964
        %2064 = vst [vmem:[#allocation3 + $0x29c] sm:$0xf] %v1968
        %2065 = vst [vmem:[#allocation3 + $0x2c0] sm:$0xf] %v1971
        %2066 = vst [vmem:[#allocation3 + $0x2e4] sm:$0xf] %v1975
        %2067 = vst [vmem:[#allocation3 + $0x308] sm:$0xf] %v1978
        %2068 = vst [vmem:[#allocation3 + $0x32c] sm:$0xf] %v1982
        %2069 = vst [vmem:[#allocation3 + $0x350] sm:$0xf] %v1985
        %2070 = vst [vmem:[#allocation3 + $0x374] sm:$0xf] %v1989
        %2071 = vst [vmem:[#allocation3 + $0x398] sm:$0xf] %v1992
        %2072 = vst [vmem:[#allocation3 + $0x3bc] sm:$0xf] %v1996
        %2073 = vst [vmem:[#allocation3 + $0x3e0] sm:$0xf] %v1999
        %2074 = vst [vmem:[#allocation3 + $0x404] sm:$0xf] %v2003
        %2075 = vst [vmem:[#allocation3 + $0x428] sm:$0xf] %v2006
        %2076 = vst [vmem:[#allocation3 + $0x44c] sm:$0xf] %v2010
        %2077 = vst [vmem:[#allocation3 + $0x470] sm:$0xf] %v2013
        %s2078 = scalar_lea.vmem %s293, 24
        %v2079 = vld [vmem:[%s2078] sm:$0xf]
        %v2080 = vld [vmem:[%s2078 + $0x4] sm:$0xf]
        %v2081 = vld [vmem:[%s2078 + $0xc] sm:$0xf]
        %v2082 = vld [vmem:[%s2078 + $0x10] sm:$0xf]
        %v2083 = vld [vmem:[%s2078 + $0x18] sm:$0xf]
        %v2084 = vld [vmem:[%s2078 + $0x1c] sm:$0xf]
        %v2085 = vld [vmem:[%s2078 + $0x24] sm:$0xf]
        %v2086 = vld [vmem:[%s2078 + $0x28] sm:$0xf]
        %v2087 = vld [vmem:[%s2078 + $0x30] sm:$0xf]
        %v2088 = vld [vmem:[%s2078 + $0x34] sm:$0xf]
        %v2089 = vld [vmem:[%s2078 + $0x3c] sm:$0xf]
        %v2090 = vld [vmem:[%s2078 + $0x40] sm:$0xf]
        %v2091 = vld [vmem:[%s2078 + $0x48] sm:$0xf]
        %v2092 = vld [vmem:[%s2078 + $0x4c] sm:$0xf]
        %v2093 = vld [vmem:[%s2078 + $0x54] sm:$0xf]
        %v2094 = vld [vmem:[%s2078 + $0x58] sm:$0xf]
        %v2095 = vld [vmem:[%s2078 + $0x60] sm:$0xf]
        %v2096 = vld [vmem:[%s2078 + $0x64] sm:$0xf]
        %v2097 = vld [vmem:[%s2078 + $0x6c] sm:$0xf]
        %v2098 = vld [vmem:[%s2078 + $0x70] sm:$0xf]
        %v2099 = vld [vmem:[%s2078 + $0x78] sm:$0xf]
        %v2100 = vld [vmem:[%s2078 + $0x7c] sm:$0xf]
        %v2101 = vld [vmem:[%s2078 + $0x84] sm:$0xf]
        %v2102 = vld [vmem:[%s2078 + $0x88] sm:$0xf]
        %v2103 = vld [vmem:[%s2078 + $0x90] sm:$0xf]
        %v2104 = vld [vmem:[%s2078 + $0x94] sm:$0xf]
        %v2105 = vld [vmem:[%s2078 + $0x9c] sm:$0xf]
        %v2106 = vld [vmem:[%s2078 + $0xa0] sm:$0xf]
        %v2107 = vld [vmem:[%s2078 + $0xa8] sm:$0xf]
        %v2108 = vld [vmem:[%s2078 + $0xac] sm:$0xf]
        %v2109 = vld [vmem:[%s2078 + $0xb4] sm:$0xf]
        %v2110 = vld [vmem:[%s2078 + $0xb8] sm:$0xf]
        %2111 = vst [vmem:[#allocation3 + $0x18] sm:$0xf] %v2079
        %2112 = vst [vmem:[#allocation3 + $0x3c] sm:$0xf] %v2080
        %2113 = vst [vmem:[#allocation3 + $0x60] sm:$0xf] %v2081
        %2114 = vst [vmem:[#allocation3 + $0x84] sm:$0xf] %v2082
        %2115 = vst [vmem:[#allocation3 + $0xa8] sm:$0xf] %v2083
        %2116 = vst [vmem:[#allocation3 + $0xcc] sm:$0xf] %v2084
        %2117 = vst [vmem:[#allocation3 + $0xf0] sm:$0xf] %v2085
        %2118 = vst [vmem:[#allocation3 + $0x114] sm:$0xf] %v2086
        %2119 = vst [vmem:[#allocation3 + $0x138] sm:$0xf] %v2087
        %2120 = vst [vmem:[#allocation3 + $0x15c] sm:$0xf] %v2088
        %2121 = vst [vmem:[#allocation3 + $0x180] sm:$0xf] %v2089
        %2122 = vst [vmem:[#allocation3 + $0x1a4] sm:$0xf] %v2090
        %2123 = vst [vmem:[#allocation3 + $0x1c8] sm:$0xf] %v2091
        %2124 = vst [vmem:[#allocation3 + $0x1ec] sm:$0xf] %v2092
        %2125 = vst [vmem:[#allocation3 + $0x210] sm:$0xf] %v2093
        %2126 = vst [vmem:[#allocation3 + $0x234] sm:$0xf] %v2094
        %2127 = vst [vmem:[#allocation3 + $0x258] sm:$0xf] %v2095
        %2128 = vst [vmem:[#allocation3 + $0x27c] sm:$0xf] %v2096
        %2129 = vst [vmem:[#allocation3 + $0x2a0] sm:$0xf] %v2097
        %2130 = vst [vmem:[#allocation3 + $0x2c4] sm:$0xf] %v2098
        %2131 = vst [vmem:[#allocation3 + $0x2e8] sm:$0xf] %v2099
        %2132 = vst [vmem:[#allocation3 + $0x30c] sm:$0xf] %v2100
        %2133 = vst [vmem:[#allocation3 + $0x330] sm:$0xf] %v2101
        %2134 = vst [vmem:[#allocation3 + $0x354] sm:$0xf] %v2102
        %2135 = vst [vmem:[#allocation3 + $0x378] sm:$0xf] %v2103
        %2136 = vst [vmem:[#allocation3 + $0x39c] sm:$0xf] %v2104
        %2137 = vst [vmem:[#allocation3 + $0x3c0] sm:$0xf] %v2105
        %2138 = vst [vmem:[#allocation3 + $0x3e4] sm:$0xf] %v2106
        %2139 = vst [vmem:[#allocation3 + $0x408] sm:$0xf] %v2107
        %2140 = vst [vmem:[#allocation3 + $0x42c] sm:$0xf] %v2108
        %2141 = vst [vmem:[#allocation3 + $0x450] sm:$0xf] %v2109
        %2142 = vst [vmem:[#allocation3 + $0x474] sm:$0xf] %v2110
        %v2143 = vld [vmem:[%s2078] sm:$0xf]
        %v2144 = vld [vmem:[%s2078 + $0x4] sm:$0xf]
        %v2145 = vld [vmem:[%s2078 + $0x8] sm:$0x1]
        %v2146 = vld [vmem:[%s2078 + $0xc] sm:$0xf]
        %v2147 = vld [vmem:[%s2078 + $0x10] sm:$0xf]
        %v2148 = vld [vmem:[%s2078 + $0x14] sm:$0x1]
        %v2149 = vld [vmem:[%s2078 + $0x18] sm:$0xf]
        %v2150 = vld [vmem:[%s2078 + $0x1c] sm:$0xf]
        %v2151 = vld [vmem:[%s2078 + $0x20] sm:$0x1]
        %v2152 = vld [vmem:[%s2078 + $0x24] sm:$0xf]
        %v2153 = vld [vmem:[%s2078 + $0x28] sm:$0xf]
        %v2154 = vld [vmem:[%s2078 + $0x2c] sm:$0x1]
        %v2155 = vld [vmem:[%s2078 + $0x30] sm:$0xf]
        %v2156 = vld [vmem:[%s2078 + $0x34] sm:$0xf]
        %v2157 = vld [vmem:[%s2078 + $0x38] sm:$0x1]
        %v2158 = vld [vmem:[%s2078 + $0x3c] sm:$0xf]
        %v2159 = vld [vmem:[%s2078 + $0x40] sm:$0xf]
        %v2160 = vld [vmem:[%s2078 + $0x44] sm:$0x1]
        %v2161 = vld [vmem:[%s2078 + $0x48] sm:$0xf]
        %v2162 = vld [vmem:[%s2078 + $0x4c] sm:$0xf]
        %v2163 = vld [vmem:[%s2078 + $0x50] sm:$0x1]
        %v2164 = vld [vmem:[%s2078 + $0x54] sm:$0xf]
        %v2165 = vld [vmem:[%s2078 + $0x58] sm:$0xf]
        %v2166 = vld [vmem:[%s2078 + $0x5c] sm:$0x1]
        %v2167 = vld [vmem:[%s2078 + $0x60] sm:$0xf]
        %v2168 = vld [vmem:[%s2078 + $0x64] sm:$0xf]
        %v2169 = vld [vmem:[%s2078 + $0x68] sm:$0x1]
        %v2170 = vld [vmem:[%s2078 + $0x6c] sm:$0xf]
        %v2171 = vld [vmem:[%s2078 + $0x70] sm:$0xf]
        %v2172 = vld [vmem:[%s2078 + $0x74] sm:$0x1]
        %v2173 = vld [vmem:[%s2078 + $0x78] sm:$0xf]
        %v2174 = vld [vmem:[%s2078 + $0x7c] sm:$0xf]
        %v2175 = vld [vmem:[%s2078 + $0x80] sm:$0x1]
        %v2176 = vld [vmem:[%s2078 + $0x84] sm:$0xf]
        %v2177 = vld [vmem:[%s2078 + $0x88] sm:$0xf]
        %v2178 = vld [vmem:[%s2078 + $0x8c] sm:$0x1]
        %v2179 = vld [vmem:[%s2078 + $0x90] sm:$0xf]
        %v2180 = vld [vmem:[%s2078 + $0x94] sm:$0xf]
        %v2181 = vld [vmem:[%s2078 + $0x98] sm:$0x1]
        %v2182 = vld [vmem:[%s2078 + $0x9c] sm:$0xf]
        %v2183 = vld [vmem:[%s2078 + $0xa0] sm:$0xf]
        %v2184 = vld [vmem:[%s2078 + $0xa4] sm:$0x1]
        %v2185 = vld [vmem:[%s2078 + $0xa8] sm:$0xf]
        %v2186 = vld [vmem:[%s2078 + $0xac] sm:$0xf]
        %v2187 = vld [vmem:[%s2078 + $0xb0] sm:$0x1]
        %v2188 = vld [vmem:[%s2078 + $0xb4] sm:$0xf]
        %v2189 = vld [vmem:[%s2078 + $0xb8] sm:$0xf]
        %v2190 = vld [vmem:[%s2078 + $0xbc] sm:$0x1]
        %v2192 = vshrl.u32 %v2143, 16
        %v2194 = vrot.slane %v2192, 4
        %v2195 = vshll.u32 %v2143, 16
        %v2197 = vrot.slane %v2195, 5
        %v2198 = vor.u32 %v2194, %v2197
        %v2199 = vrot.slane %v2198, 4
        %v2201 = vshll.u32 %v2144, 16
        %v2203 = vrot.slane %v2201, 5
        %v2204 = vsel %vm521, %v2199, %v2203
        %v2205 = vshrl.u32 %v2144, 16
        %v2207 = vrot.slane %v2205, 4
        %v2208 = vor.u32 %v2207, %v2203
        %v2209 = vrot.slane %v2208, 4
        %v2211 = vshll.u32 %v2145, 16
        %v2213 = vrot.slane %v2211, 5
        %v2214 = vsel %vm521, %v2209, %v2213
        %v2216 = vshrl.u32 %v2146, 16
        %v2218 = vrot.slane %v2216, 4
        %v2219 = vshll.u32 %v2146, 16
        %v2221 = vrot.slane %v2219, 5
        %v2222 = vor.u32 %v2218, %v2221
        %v2223 = vrot.slane %v2222, 4
        %v2225 = vshll.u32 %v2147, 16
        %v2227 = vrot.slane %v2225, 5
        %v2228 = vsel %vm521, %v2223, %v2227
        %v2229 = vshrl.u32 %v2147, 16
        %v2231 = vrot.slane %v2229, 4
        %v2232 = vor.u32 %v2231, %v2227
        %v2233 = vrot.slane %v2232, 4
        %v2235 = vshll.u32 %v2148, 16
        %v2237 = vrot.slane %v2235, 5
        %v2238 = vsel %vm521, %v2233, %v2237
        %v2240 = vshrl.u32 %v2149, 16
        %v2242 = vrot.slane %v2240, 4
        %v2243 = vshll.u32 %v2149, 16
        %v2245 = vrot.slane %v2243, 5
        %v2246 = vor.u32 %v2242, %v2245
        %v2247 = vrot.slane %v2246, 4
        %v2249 = vshll.u32 %v2150, 16
        %v2251 = vrot.slane %v2249, 5
        %v2252 = vsel %vm521, %v2247, %v2251
        %v2253 = vshrl.u32 %v2150, 16
        %v2255 = vrot.slane %v2253, 4
        %v2256 = vor.u32 %v2255, %v2251
        %v2257 = vrot.slane %v2256, 4
        %v2259 = vshll.u32 %v2151, 16
        %v2261 = vrot.slane %v2259, 5
        %v2262 = vsel %vm521, %v2257, %v2261
        %v2264 = vshrl.u32 %v2152, 16
        %v2266 = vrot.slane %v2264, 4
        %v2267 = vshll.u32 %v2152, 16
        %v2269 = vrot.slane %v2267, 5
        %v2270 = vor.u32 %v2266, %v2269
        %v2271 = vrot.slane %v2270, 4
        %v2273 = vshll.u32 %v2153, 16
        %v2275 = vrot.slane %v2273, 5
        %v2276 = vsel %vm521, %v2271, %v2275
        %v2277 = vshrl.u32 %v2153, 16
        %v2279 = vrot.slane %v2277, 4
        %v2280 = vor.u32 %v2279, %v2275
        %v2281 = vrot.slane %v2280, 4
        %v2283 = vshll.u32 %v2154, 16
        %v2285 = vrot.slane %v2283, 5
        %v2286 = vsel %vm521, %v2281, %v2285
        %v2288 = vshrl.u32 %v2155, 16
        %v2290 = vrot.slane %v2288, 4
        %v2291 = vshll.u32 %v2155, 16
        %v2293 = vrot.slane %v2291, 5
        %v2294 = vor.u32 %v2290, %v2293
        %v2295 = vrot.slane %v2294, 4
        %v2297 = vshll.u32 %v2156, 16
        %v2299 = vrot.slane %v2297, 5
        %v2300 = vsel %vm521, %v2295, %v2299
        %v2301 = vshrl.u32 %v2156, 16
        %v2303 = vrot.slane %v2301, 4
        %v2304 = vor.u32 %v2303, %v2299
        %v2305 = vrot.slane %v2304, 4
        %v2307 = vshll.u32 %v2157, 16
        %v2309 = vrot.slane %v2307, 5
        %v2310 = vsel %vm521, %v2305, %v2309
        %v2312 = vshrl.u32 %v2158, 16
        %v2314 = vrot.slane %v2312, 4
        %v2315 = vshll.u32 %v2158, 16
        %v2317 = vrot.slane %v2315, 5
        %v2318 = vor.u32 %v2314, %v2317
        %v2319 = vrot.slane %v2318, 4
        %v2321 = vshll.u32 %v2159, 16
        %v2323 = vrot.slane %v2321, 5
        %v2324 = vsel %vm521, %v2319, %v2323
        %v2325 = vshrl.u32 %v2159, 16
        %v2327 = vrot.slane %v2325, 4
        %v2328 = vor.u32 %v2327, %v2323
        %v2329 = vrot.slane %v2328, 4
        %v2331 = vshll.u32 %v2160, 16
        %v2333 = vrot.slane %v2331, 5
        %v2334 = vsel %vm521, %v2329, %v2333
        %v2336 = vshrl.u32 %v2161, 16
        %v2338 = vrot.slane %v2336, 4
        %v2339 = vshll.u32 %v2161, 16
        %v2341 = vrot.slane %v2339, 5
        %v2342 = vor.u32 %v2338, %v2341
        %v2343 = vrot.slane %v2342, 4
        %v2345 = vshll.u32 %v2162, 16
        %v2347 = vrot.slane %v2345, 5
        %v2348 = vsel %vm521, %v2343, %v2347
        %v2349 = vshrl.u32 %v2162, 16
        %v2351 = vrot.slane %v2349, 4
        %v2352 = vor.u32 %v2351, %v2347
        %v2353 = vrot.slane %v2352, 4
        %v2355 = vshll.u32 %v2163, 16
        %v2357 = vrot.slane %v2355, 5
        %v2358 = vsel %vm521, %v2353, %v2357
        %v2360 = vshrl.u32 %v2164, 16
        %v2362 = vrot.slane %v2360, 4
        %v2363 = vshll.u32 %v2164, 16
        %v2365 = vrot.slane %v2363, 5
        %v2366 = vor.u32 %v2362, %v2365
        %v2367 = vrot.slane %v2366, 4
        %v2369 = vshll.u32 %v2165, 16
        %v2371 = vrot.slane %v2369, 5
        %v2372 = vsel %vm521, %v2367, %v2371
        %v2373 = vshrl.u32 %v2165, 16
        %v2375 = vrot.slane %v2373, 4
        %v2376 = vor.u32 %v2375, %v2371
        %v2377 = vrot.slane %v2376, 4
        %v2379 = vshll.u32 %v2166, 16
        %v2381 = vrot.slane %v2379, 5
        %v2382 = vsel %vm521, %v2377, %v2381
        %v2384 = vshrl.u32 %v2167, 16
        %v2386 = vrot.slane %v2384, 4
        %v2387 = vshll.u32 %v2167, 16
        %v2389 = vrot.slane %v2387, 5
        %v2390 = vor.u32 %v2386, %v2389
        %v2391 = vrot.slane %v2390, 4
        %v2393 = vshll.u32 %v2168, 16
        %v2395 = vrot.slane %v2393, 5
        %v2396 = vsel %vm521, %v2391, %v2395
        %v2397 = vshrl.u32 %v2168, 16
        %v2399 = vrot.slane %v2397, 4
        %v2400 = vor.u32 %v2399, %v2395
        %v2401 = vrot.slane %v2400, 4
        %v2403 = vshll.u32 %v2169, 16
        %v2405 = vrot.slane %v2403, 5
        %v2406 = vsel %vm521, %v2401, %v2405
        %v2408 = vshrl.u32 %v2170, 16
        %v2410 = vrot.slane %v2408, 4
        %v2411 = vshll.u32 %v2170, 16
        %v2413 = vrot.slane %v2411, 5
        %v2414 = vor.u32 %v2410, %v2413
        %v2415 = vrot.slane %v2414, 4
        %v2417 = vshll.u32 %v2171, 16
        %v2419 = vrot.slane %v2417, 5
        %v2420 = vsel %vm521, %v2415, %v2419
        %v2421 = vshrl.u32 %v2171, 16
        %v2423 = vrot.slane %v2421, 4
        %v2424 = vor.u32 %v2423, %v2419
        %v2425 = vrot.slane %v2424, 4
        %v2427 = vshll.u32 %v2172, 16
        %v2429 = vrot.slane %v2427, 5
        %v2430 = vsel %vm521, %v2425, %v2429
        %v2432 = vshrl.u32 %v2173, 16
        %v2434 = vrot.slane %v2432, 4
        %v2435 = vshll.u32 %v2173, 16
        %v2437 = vrot.slane %v2435, 5
        %v2438 = vor.u32 %v2434, %v2437
        %v2439 = vrot.slane %v2438, 4
        %v2441 = vshll.u32 %v2174, 16
        %v2443 = vrot.slane %v2441, 5
        %v2444 = vsel %vm521, %v2439, %v2443
        %v2445 = vshrl.u32 %v2174, 16
        %v2447 = vrot.slane %v2445, 4
        %v2448 = vor.u32 %v2447, %v2443
        %v2449 = vrot.slane %v2448, 4
        %v2451 = vshll.u32 %v2175, 16
        %v2453 = vrot.slane %v2451, 5
        %v2454 = vsel %vm521, %v2449, %v2453
        %v2456 = vshrl.u32 %v2176, 16
        %v2458 = vrot.slane %v2456, 4
        %v2459 = vshll.u32 %v2176, 16
        %v2461 = vrot.slane %v2459, 5
        %v2462 = vor.u32 %v2458, %v2461
        %v2463 = vrot.slane %v2462, 4
        %v2465 = vshll.u32 %v2177, 16
        %v2467 = vrot.slane %v2465, 5
        %v2468 = vsel %vm521, %v2463, %v2467
        %v2469 = vshrl.u32 %v2177, 16
        %v2471 = vrot.slane %v2469, 4
        %v2472 = vor.u32 %v2471, %v2467
        %v2473 = vrot.slane %v2472, 4
        %v2475 = vshll.u32 %v2178, 16
        %v2477 = vrot.slane %v2475, 5
        %v2478 = vsel %vm521, %v2473, %v2477
        %v2480 = vshrl.u32 %v2179, 16
        %v2482 = vrot.slane %v2480, 4
        %v2483 = vshll.u32 %v2179, 16
        %v2485 = vrot.slane %v2483, 5
        %v2486 = vor.u32 %v2482, %v2485
        %v2487 = vrot.slane %v2486, 4
        %v2489 = vshll.u32 %v2180, 16
        %v2491 = vrot.slane %v2489, 5
        %v2492 = vsel %vm521, %v2487, %v2491
        %v2493 = vshrl.u32 %v2180, 16
        %v2495 = vrot.slane %v2493, 4
        %v2496 = vor.u32 %v2495, %v2491
        %v2497 = vrot.slane %v2496, 4
        %v2499 = vshll.u32 %v2181, 16
        %v2501 = vrot.slane %v2499, 5
        %v2502 = vsel %vm521, %v2497, %v2501
        %v2504 = vshrl.u32 %v2182, 16
        %v2506 = vrot.slane %v2504, 4
        %v2507 = vshll.u32 %v2182, 16
        %v2509 = vrot.slane %v2507, 5
        %v2510 = vor.u32 %v2506, %v2509
        %v2511 = vrot.slane %v2510, 4
        %v2513 = vshll.u32 %v2183, 16
        %v2515 = vrot.slane %v2513, 5
        %v2516 = vsel %vm521, %v2511, %v2515
        %v2517 = vshrl.u32 %v2183, 16
        %v2519 = vrot.slane %v2517, 4
        %v2520 = vor.u32 %v2519, %v2515
        %v2521 = vrot.slane %v2520, 4
        %v2523 = vshll.u32 %v2184, 16
        %v2525 = vrot.slane %v2523, 5
        %v2526 = vsel %vm521, %v2521, %v2525
        %v2528 = vshrl.u32 %v2185, 16
        %v2530 = vrot.slane %v2528, 4
        %v2531 = vshll.u32 %v2185, 16
        %v2533 = vrot.slane %v2531, 5
        %v2534 = vor.u32 %v2530, %v2533
        %v2535 = vrot.slane %v2534, 4
        %v2537 = vshll.u32 %v2186, 16
        %v2539 = vrot.slane %v2537, 5
        %v2540 = vsel %vm521, %v2535, %v2539
        %v2541 = vshrl.u32 %v2186, 16
        %v2543 = vrot.slane %v2541, 4
        %v2544 = vor.u32 %v2543, %v2539
        %v2545 = vrot.slane %v2544, 4
        %v2547 = vshll.u32 %v2187, 16
        %v2549 = vrot.slane %v2547, 5
        %v2550 = vsel %vm521, %v2545, %v2549
        %v2552 = vshrl.u32 %v2188, 16
        %v2554 = vrot.slane %v2552, 4
        %v2555 = vshll.u32 %v2188, 16
        %v2557 = vrot.slane %v2555, 5
        %v2558 = vor.u32 %v2554, %v2557
        %v2559 = vrot.slane %v2558, 4
        %v2561 = vshll.u32 %v2189, 16
        %v2563 = vrot.slane %v2561, 5
        %v2564 = vsel %vm521, %v2559, %v2563
        %v2565 = vshrl.u32 %v2189, 16
        %v2567 = vrot.slane %v2565, 4
        %v2568 = vor.u32 %v2567, %v2563
        %v2569 = vrot.slane %v2568, 4
        %v2571 = vshll.u32 %v2190, 16
        %v2573 = vrot.slane %v2571, 5
        %v2574 = vsel %vm521, %v2569, %v2573
        %2607 = vst [vmem:[#allocation3 + $0x1c] sm:$0xf] %v2204
        %2608 = vst [vmem:[#allocation3 + $0x40] sm:$0xf] %v2214
        %2609 = vst [vmem:[#allocation3 + $0x64] sm:$0xf] %v2228
        %2610 = vst [vmem:[#allocation3 + $0x88] sm:$0xf] %v2238
        %2611 = vst [vmem:[#allocation3 + $0xac] sm:$0xf] %v2252
        %2612 = vst [vmem:[#allocation3 + $0xd0] sm:$0xf] %v2262
        %2613 = vst [vmem:[#allocation3 + $0xf4] sm:$0xf] %v2276
        %2614 = vst [vmem:[#allocation3 + $0x118] sm:$0xf] %v2286
        %2615 = vst [vmem:[#allocation3 + $0x13c] sm:$0xf] %v2300
        %2616 = vst [vmem:[#allocation3 + $0x160] sm:$0xf] %v2310
        %2617 = vst [vmem:[#allocation3 + $0x184] sm:$0xf] %v2324
        %2618 = vst [vmem:[#allocation3 + $0x1a8] sm:$0xf] %v2334
        %2619 = vst [vmem:[#allocation3 + $0x1cc] sm:$0xf] %v2348
        %2620 = vst [vmem:[#allocation3 + $0x1f0] sm:$0xf] %v2358
        %2621 = vst [vmem:[#allocation3 + $0x214] sm:$0xf] %v2372
        %2622 = vst [vmem:[#allocation3 + $0x238] sm:$0xf] %v2382
        %2623 = vst [vmem:[#allocation3 + $0x25c] sm:$0xf] %v2396
        %2624 = vst [vmem:[#allocation3 + $0x280] sm:$0xf] %v2406
        %2625 = vst [vmem:[#allocation3 + $0x2a4] sm:$0xf] %v2420
        %2626 = vst [vmem:[#allocation3 + $0x2c8] sm:$0xf] %v2430
        %2627 = vst [vmem:[#allocation3 + $0x2ec] sm:$0xf] %v2444
        %2628 = vst [vmem:[#allocation3 + $0x310] sm:$0xf] %v2454
        %2629 = vst [vmem:[#allocation3 + $0x334] sm:$0xf] %v2468
        %2630 = vst [vmem:[#allocation3 + $0x358] sm:$0xf] %v2478
        %2631 = vst [vmem:[#allocation3 + $0x37c] sm:$0xf] %v2492
        %2632 = vst [vmem:[#allocation3 + $0x3a0] sm:$0xf] %v2502
        %2633 = vst [vmem:[#allocation3 + $0x3c4] sm:$0xf] %v2516
        %2634 = vst [vmem:[#allocation3 + $0x3e8] sm:$0xf] %v2526
        %2635 = vst [vmem:[#allocation3 + $0x40c] sm:$0xf] %v2540
        %2636 = vst [vmem:[#allocation3 + $0x430] sm:$0xf] %v2550
        %2637 = vst [vmem:[#allocation3 + $0x454] sm:$0xf] %v2564
        %2638 = vst [vmem:[#allocation3 + $0x478] sm:$0xf] %v2574
        %v2639 = vld [vmem:[%s2078] sm:$0xe]
        %v2640 = vld [vmem:[%s2078 + $0x4] sm:$0xf]
        %v2641 = vld [vmem:[%s2078 + $0x8] sm:$0x1]
        %v2642 = vld [vmem:[%s2078 + $0xc] sm:$0xe]
        %v2643 = vld [vmem:[%s2078 + $0x10] sm:$0xf]
        %v2644 = vld [vmem:[%s2078 + $0x14] sm:$0x1]
        %v2645 = vld [vmem:[%s2078 + $0x18] sm:$0xe]
        %v2646 = vld [vmem:[%s2078 + $0x1c] sm:$0xf]
        %v2647 = vld [vmem:[%s2078 + $0x20] sm:$0x1]
        %v2648 = vld [vmem:[%s2078 + $0x24] sm:$0xe]
        %v2649 = vld [vmem:[%s2078 + $0x28] sm:$0xf]
        %v2650 = vld [vmem:[%s2078 + $0x2c] sm:$0x1]
        %v2651 = vld [vmem:[%s2078 + $0x30] sm:$0xe]
        %v2652 = vld [vmem:[%s2078 + $0x34] sm:$0xf]
        %v2653 = vld [vmem:[%s2078 + $0x38] sm:$0x1]
        %v2654 = vld [vmem:[%s2078 + $0x3c] sm:$0xe]
        %v2655 = vld [vmem:[%s2078 + $0x40] sm:$0xf]
        %v2656 = vld [vmem:[%s2078 + $0x44] sm:$0x1]
        %v2657 = vld [vmem:[%s2078 + $0x48] sm:$0xe]
        %v2658 = vld [vmem:[%s2078 + $0x4c] sm:$0xf]
        %v2659 = vld [vmem:[%s2078 + $0x50] sm:$0x1]
        %v2660 = vld [vmem:[%s2078 + $0x54] sm:$0xe]
        %v2661 = vld [vmem:[%s2078 + $0x58] sm:$0xf]
        %v2662 = vld [vmem:[%s2078 + $0x5c] sm:$0x1]
        %v2663 = vld [vmem:[%s2078 + $0x60] sm:$0xe]
        %v2664 = vld [vmem:[%s2078 + $0x64] sm:$0xf]
        %v2665 = vld [vmem:[%s2078 + $0x68] sm:$0x1]
        %v2666 = vld [vmem:[%s2078 + $0x6c] sm:$0xe]
        %v2667 = vld [vmem:[%s2078 + $0x70] sm:$0xf]
        %v2668 = vld [vmem:[%s2078 + $0x74] sm:$0x1]
        %v2669 = vld [vmem:[%s2078 + $0x78] sm:$0xe]
        %v2670 = vld [vmem:[%s2078 + $0x7c] sm:$0xf]
        %v2671 = vld [vmem:[%s2078 + $0x80] sm:$0x1]
        %v2672 = vld [vmem:[%s2078 + $0x84] sm:$0xe]
        %v2673 = vld [vmem:[%s2078 + $0x88] sm:$0xf]
        %v2674 = vld [vmem:[%s2078 + $0x8c] sm:$0x1]
        %v2675 = vld [vmem:[%s2078 + $0x90] sm:$0xe]
        %v2676 = vld [vmem:[%s2078 + $0x94] sm:$0xf]
        %v2677 = vld [vmem:[%s2078 + $0x98] sm:$0x1]
        %v2678 = vld [vmem:[%s2078 + $0x9c] sm:$0xe]
        %v2679 = vld [vmem:[%s2078 + $0xa0] sm:$0xf]
        %v2680 = vld [vmem:[%s2078 + $0xa4] sm:$0x1]
        %v2681 = vld [vmem:[%s2078 + $0xa8] sm:$0xe]
        %v2682 = vld [vmem:[%s2078 + $0xac] sm:$0xf]
        %v2683 = vld [vmem:[%s2078 + $0xb0] sm:$0x1]
        %v2684 = vld [vmem:[%s2078 + $0xb4] sm:$0xe]
        %v2685 = vld [vmem:[%s2078 + $0xb8] sm:$0xf]
        %v2686 = vld [vmem:[%s2078 + $0xbc] sm:$0x1]
        %v2735 = vrot.slane %v2639, 5
        %v2736 = vrot.slane %v2735, 4
        %v2737 = vrot.slane %v2640, 5
        %v2738 = vsel %vm1068, %v2736, %v2737
        %v2739 = vrot.slane %v2737, 4
        %v2740 = vrot.slane %v2641, 5
        %v2741 = vsel %vm1068, %v2739, %v2740
        %v2742 = vrot.slane %v2642, 5
        %v2743 = vrot.slane %v2742, 4
        %v2744 = vrot.slane %v2643, 5
        %v2745 = vsel %vm1068, %v2743, %v2744
        %v2746 = vrot.slane %v2744, 4
        %v2747 = vrot.slane %v2644, 5
        %v2748 = vsel %vm1068, %v2746, %v2747
        %v2749 = vrot.slane %v2645, 5
        %v2750 = vrot.slane %v2749, 4
        %v2751 = vrot.slane %v2646, 5
        %v2752 = vsel %vm1068, %v2750, %v2751
        %v2753 = vrot.slane %v2751, 4
        %v2754 = vrot.slane %v2647, 5
        %v2755 = vsel %vm1068, %v2753, %v2754
        %v2756 = vrot.slane %v2648, 5
        %v2757 = vrot.slane %v2756, 4
        %v2758 = vrot.slane %v2649, 5
        %v2759 = vsel %vm1068, %v2757, %v2758
        %v2760 = vrot.slane %v2758, 4
        %v2761 = vrot.slane %v2650, 5
        %v2762 = vsel %vm1068, %v2760, %v2761
        %v2763 = vrot.slane %v2651, 5
        %v2764 = vrot.slane %v2763, 4
        %v2765 = vrot.slane %v2652, 5
        %v2766 = vsel %vm1068, %v2764, %v2765
        %v2767 = vrot.slane %v2765, 4
        %v2768 = vrot.slane %v2653, 5
        %v2769 = vsel %vm1068, %v2767, %v2768
        %v2770 = vrot.slane %v2654, 5
        %v2771 = vrot.slane %v2770, 4
        %v2772 = vrot.slane %v2655, 5
        %v2773 = vsel %vm1068, %v2771, %v2772
        %v2774 = vrot.slane %v2772, 4
        %v2775 = vrot.slane %v2656, 5
        %v2776 = vsel %vm1068, %v2774, %v2775
        %v2777 = vrot.slane %v2657, 5
        %v2778 = vrot.slane %v2777, 4
        %v2779 = vrot.slane %v2658, 5
        %v2780 = vsel %vm1068, %v2778, %v2779
        %v2781 = vrot.slane %v2779, 4
        %v2782 = vrot.slane %v2659, 5
        %v2783 = vsel %vm1068, %v2781, %v2782
        %v2784 = vrot.slane %v2660, 5
        %v2785 = vrot.slane %v2784, 4
        %v2786 = vrot.slane %v2661, 5
        %v2787 = vsel %vm1068, %v2785, %v2786
        %v2788 = vrot.slane %v2786, 4
        %v2789 = vrot.slane %v2662, 5
        %v2790 = vsel %vm1068, %v2788, %v2789
        %v2791 = vrot.slane %v2663, 5
        %v2792 = vrot.slane %v2791, 4
        %v2793 = vrot.slane %v2664, 5
        %v2794 = vsel %vm1068, %v2792, %v2793
        %v2795 = vrot.slane %v2793, 4
        %v2796 = vrot.slane %v2665, 5
        %v2797 = vsel %vm1068, %v2795, %v2796
        %v2798 = vrot.slane %v2666, 5
        %v2799 = vrot.slane %v2798, 4
        %v2800 = vrot.slane %v2667, 5
        %v2801 = vsel %vm1068, %v2799, %v2800
        %v2802 = vrot.slane %v2800, 4
        %v2803 = vrot.slane %v2668, 5
        %v2804 = vsel %vm1068, %v2802, %v2803
        %v2805 = vrot.slane %v2669, 5
        %v2806 = vrot.slane %v2805, 4
        %v2807 = vrot.slane %v2670, 5
        %v2808 = vsel %vm1068, %v2806, %v2807
        %v2809 = vrot.slane %v2807, 4
        %v2810 = vrot.slane %v2671, 5
        %v2811 = vsel %vm1068, %v2809, %v2810
        %v2812 = vrot.slane %v2672, 5
        %v2813 = vrot.slane %v2812, 4
        %v2814 = vrot.slane %v2673, 5
        %v2815 = vsel %vm1068, %v2813, %v2814
        %v2816 = vrot.slane %v2814, 4
        %v2817 = vrot.slane %v2674, 5
        %v2818 = vsel %vm1068, %v2816, %v2817
        %v2819 = vrot.slane %v2675, 5
        %v2820 = vrot.slane %v2819, 4
        %v2821 = vrot.slane %v2676, 5
        %v2822 = vsel %vm1068, %v2820, %v2821
        %v2823 = vrot.slane %v2821, 4
        %v2824 = vrot.slane %v2677, 5
        %v2825 = vsel %vm1068, %v2823, %v2824
        %v2826 = vrot.slane %v2678, 5
        %v2827 = vrot.slane %v2826, 4
        %v2828 = vrot.slane %v2679, 5
        %v2829 = vsel %vm1068, %v2827, %v2828
        %v2830 = vrot.slane %v2828, 4
        %v2831 = vrot.slane %v2680, 5
        %v2832 = vsel %vm1068, %v2830, %v2831
        %v2833 = vrot.slane %v2681, 5
        %v2834 = vrot.slane %v2833, 4
        %v2835 = vrot.slane %v2682, 5
        %v2836 = vsel %vm1068, %v2834, %v2835
        %v2837 = vrot.slane %v2835, 4
        %v2838 = vrot.slane %v2683, 5
        %v2839 = vsel %vm1068, %v2837, %v2838
        %v2840 = vrot.slane %v2684, 5
        %v2841 = vrot.slane %v2840, 4
        %v2842 = vrot.slane %v2685, 5
        %v2843 = vsel %vm1068, %v2841, %v2842
        %v2844 = vrot.slane %v2842, 4
        %v2845 = vrot.slane %v2686, 5
        %v2846 = vsel %vm1068, %v2844, %v2845
        %2879 = vst [vmem:[#allocation3 + $0x20] sm:$0xf] %v2738
        %2880 = vst [vmem:[#allocation3 + $0x44] sm:$0xf] %v2741
        %2881 = vst [vmem:[#allocation3 + $0x68] sm:$0xf] %v2745
        %2882 = vst [vmem:[#allocation3 + $0x8c] sm:$0xf] %v2748
        %2883 = vst [vmem:[#allocation3 + $0xb0] sm:$0xf] %v2752
        %2884 = vst [vmem:[#allocation3 + $0xd4] sm:$0xf] %v2755
        %2885 = vst [vmem:[#allocation3 + $0xf8] sm:$0xf] %v2759
        %2886 = vst [vmem:[#allocation3 + $0x11c] sm:$0xf] %v2762
        %2887 = vst [vmem:[#allocation3 + $0x140] sm:$0xf] %v2766
        %2888 = vst [vmem:[#allocation3 + $0x164] sm:$0xf] %v2769
        %2889 = vst [vmem:[#allocation3 + $0x188] sm:$0xf] %v2773
        %2890 = vst [vmem:[#allocation3 + $0x1ac] sm:$0xf] %v2776
        %2891 = vst [vmem:[#allocation3 + $0x1d0] sm:$0xf] %v2780
        %2892 = vst [vmem:[#allocation3 + $0x1f4] sm:$0xf] %v2783
        %2893 = vst [vmem:[#allocation3 + $0x218] sm:$0xf] %v2787
        %2894 = vst [vmem:[#allocation3 + $0x23c] sm:$0xf] %v2790
        %2895 = vst [vmem:[#allocation3 + $0x260] sm:$0xf] %v2794
        %2896 = vst [vmem:[#allocation3 + $0x284] sm:$0xf] %v2797
        %2897 = vst [vmem:[#allocation3 + $0x2a8] sm:$0xf] %v2801
        %2898 = vst [vmem:[#allocation3 + $0x2cc] sm:$0xf] %v2804
        %2899 = vst [vmem:[#allocation3 + $0x2f0] sm:$0xf] %v2808
        %2900 = vst [vmem:[#allocation3 + $0x314] sm:$0xf] %v2811
        %2901 = vst [vmem:[#allocation3 + $0x338] sm:$0xf] %v2815
        %2902 = vst [vmem:[#allocation3 + $0x35c] sm:$0xf] %v2818
        %2903 = vst [vmem:[#allocation3 + $0x380] sm:$0xf] %v2822
        %2904 = vst [vmem:[#allocation3 + $0x3a4] sm:$0xf] %v2825
        %2905 = vst [vmem:[#allocation3 + $0x3c8] sm:$0xf] %v2829
        %2906 = vst [vmem:[#allocation3 + $0x3ec] sm:$0xf] %v2832
        %2907 = vst [vmem:[#allocation3 + $0x410] sm:$0xf] %v2836
        %2908 = vst [vmem:[#allocation3 + $0x434] sm:$0xf] %v2839
        %2909 = vst [vmem:[#allocation3 + $0x458] sm:$0xf] %v2843
        %2910 = vst [vmem:[#allocation3 + $0x47c] sm:$0xf] %v2846
        %v2911 = vld [vmem:[#allocation3] sm:$0xff]
        %v2912 = vld [vmem:[#allocation3 + $0x8] sm:$0xff]
        %v2913 = vld [vmem:[#allocation3 + $0x10] sm:$0xff]
        %v2914 = vld [vmem:[#allocation3 + $0x18] sm:$0xff]
        %v2915 = vld [vmem:[#allocation3 + $0x20] sm:$0xf]
        %v2916 = vld [vmem:[#allocation3 + $0x24] sm:$0xff]
        %v2917 = vld [vmem:[#allocation3 + $0x2c] sm:$0xff]
        %v2918 = vld [vmem:[#allocation3 + $0x34] sm:$0xff]
        %v2919 = vld [vmem:[#allocation3 + $0x3c] sm:$0xff]
        %v2920 = vld [vmem:[#allocation3 + $0x44] sm:$0xf]
        %v2921 = vld [vmem:[#allocation3 + $0x48] sm:$0xff]
        %v2922 = vld [vmem:[#allocation3 + $0x50] sm:$0xff]
        %v2923 = vld [vmem:[#allocation3 + $0x58] sm:$0xff]
        %v2924 = vld [vmem:[#allocation3 + $0x60] sm:$0xff]
        %v2925 = vld [vmem:[#allocation3 + $0x68] sm:$0xf]
        %v2926 = vld [vmem:[#allocation3 + $0x6c] sm:$0xff]
        %v2927 = vld [vmem:[#allocation3 + $0x74] sm:$0xff]
        %v2928 = vld [vmem:[#allocation3 + $0x7c] sm:$0xff]
        %v2929 = vld [vmem:[#allocation3 + $0x84] sm:$0xff]
        %v2930 = vld [vmem:[#allocation3 + $0x8c] sm:$0xf]
        %v2931 = vld [vmem:[#allocation3 + $0x90] sm:$0xff]
        %v2932 = vld [vmem:[#allocation3 + $0x98] sm:$0xff]
        %v2933 = vld [vmem:[#allocation3 + $0xa0] sm:$0xff]
        %v2934 = vld [vmem:[#allocation3 + $0xa8] sm:$0xff]
        %v2935 = vld [vmem:[#allocation3 + $0xb0] sm:$0xf]
        %v2936 = vld [vmem:[#allocation3 + $0xb4] sm:$0xff]
        %v2937 = vld [vmem:[#allocation3 + $0xbc] sm:$0xff]
        %v2938 = vld [vmem:[#allocation3 + $0xc4] sm:$0xff]
        %v2939 = vld [vmem:[#allocation3 + $0xcc] sm:$0xff]
        %v2940 = vld [vmem:[#allocation3 + $0xd4] sm:$0xf]
        %v2941 = vld [vmem:[#allocation3 + $0xd8] sm:$0xff]
        %v2942 = vld [vmem:[#allocation3 + $0xe0] sm:$0xff]
        %v2943 = vld [vmem:[#allocation3 + $0xe8] sm:$0xff]
        %v2944 = vld [vmem:[#allocation3 + $0xf0] sm:$0xff]
        %v2945 = vld [vmem:[#allocation3 + $0xf8] sm:$0xf]
        %v2946 = vld [vmem:[#allocation3 + $0xfc] sm:$0xff]
        %v2947 = vld [vmem:[#allocation3 + $0x104] sm:$0xff]
        %v2948 = vld [vmem:[#allocation3 + $0x10c] sm:$0xff]
        %v2949 = vld [vmem:[#allocation3 + $0x114] sm:$0xff]
        %v2950 = vld [vmem:[#allocation3 + $0x11c] sm:$0xf]
        %v2951 = vld [vmem:[#allocation3 + $0x120] sm:$0xff]
        %v2952 = vld [vmem:[#allocation3 + $0x128] sm:$0xff]
        %v2953 = vld [vmem:[#allocation3 + $0x130] sm:$0xff]
        %v2954 = vld [vmem:[#allocation3 + $0x138] sm:$0xff]
        %v2955 = vld [vmem:[#allocation3 + $0x140] sm:$0xf]
        %v2956 = vld [vmem:[#allocation3 + $0x144] sm:$0xff]
        %v2957 = vld [vmem:[#allocation3 + $0x14c] sm:$0xff]
        %v2958 = vld [vmem:[#allocation3 + $0x154] sm:$0xff]
        %v2959 = vld [vmem:[#allocation3 + $0x15c] sm:$0xff]
        %v2960 = vld [vmem:[#allocation3 + $0x164] sm:$0xf]
        %v2961 = vld [vmem:[#allocation3 + $0x168] sm:$0xff]
        %v2962 = vld [vmem:[#allocation3 + $0x170] sm:$0xff]
        %v2963 = vld [vmem:[#allocation3 + $0x178] sm:$0xff]
        %v2964 = vld [vmem:[#allocation3 + $0x180] sm:$0xff]
        %v2965 = vld [vmem:[#allocation3 + $0x188] sm:$0xf]
        %v2966 = vld [vmem:[#allocation3 + $0x18c] sm:$0xff]
        %v2967 = vld [vmem:[#allocation3 + $0x194] sm:$0xff]
        %v2968 = vld [vmem:[#allocation3 + $0x19c] sm:$0xff]
        %v2969 = vld [vmem:[#allocation3 + $0x1a4] sm:$0xff]
        %v2970 = vld [vmem:[#allocation3 + $0x1ac] sm:$0xf]
        %v2971 = vld [vmem:[#allocation3 + $0x1b0] sm:$0xff]
        %v2972 = vld [vmem:[#allocation3 + $0x1b8] sm:$0xff]
        %v2973 = vld [vmem:[#allocation3 + $0x1c0] sm:$0xff]
        %v2974 = vld [vmem:[#allocation3 + $0x1c8] sm:$0xff]
        %v2975 = vld [vmem:[#allocation3 + $0x1d0] sm:$0xf]
        %v2976 = vld [vmem:[#allocation3 + $0x1d4] sm:$0xff]
        %v2977 = vld [vmem:[#allocation3 + $0x1dc] sm:$0xff]
        %v2978 = vld [vmem:[#allocation3 + $0x1e4] sm:$0xff]
        %v2979 = vld [vmem:[#allocation3 + $0x1ec] sm:$0xff]
        %v2980 = vld [vmem:[#allocation3 + $0x1f4] sm:$0xf]
        %v2981 = vld [vmem:[#allocation3 + $0x1f8] sm:$0xff]
        %v2982 = vld [vmem:[#allocation3 + $0x200] sm:$0xff]
        %v2983 = vld [vmem:[#allocation3 + $0x208] sm:$0xff]
        %v2984 = vld [vmem:[#allocation3 + $0x210] sm:$0xff]
        %v2985 = vld [vmem:[#allocation3 + $0x218] sm:$0xf]
        %v2986 = vld [vmem:[#allocation3 + $0x21c] sm:$0xff]
        %v2987 = vld [vmem:[#allocation3 + $0x224] sm:$0xff]
        %v2988 = vld [vmem:[#allocation3 + $0x22c] sm:$0xff]
        %v2989 = vld [vmem:[#allocation3 + $0x234] sm:$0xff]
        %v2990 = vld [vmem:[#allocation3 + $0x23c] sm:$0xf]
        %v2991 = vld [vmem:[#allocation3 + $0x240] sm:$0xff]
        %v2992 = vld [vmem:[#allocation3 + $0x248] sm:$0xff]
        %v2993 = vld [vmem:[#allocation3 + $0x250] sm:$0xff]
        %v2994 = vld [vmem:[#allocation3 + $0x258] sm:$0xff]
        %v2995 = vld [vmem:[#allocation3 + $0x260] sm:$0xf]
        %v2996 = vld [vmem:[#allocation3 + $0x264] sm:$0xff]
        %v2997 = vld [vmem:[#allocation3 + $0x26c] sm:$0xff]
        %v2998 = vld [vmem:[#allocation3 + $0x274] sm:$0xff]
        %v2999 = vld [vmem:[#allocation3 + $0x27c] sm:$0xff]
        %v3000 = vld [vmem:[#allocation3 + $0x284] sm:$0xf]
        %v3001 = vld [vmem:[#allocation3 + $0x288] sm:$0xff]
        %v3002 = vld [vmem:[#allocation3 + $0x290] sm:$0xff]
        %v3003 = vld [vmem:[#allocation3 + $0x298] sm:$0xff]
        %v3004 = vld [vmem:[#allocation3 + $0x2a0] sm:$0xff]
        %v3005 = vld [vmem:[#allocation3 + $0x2a8] sm:$0xf]
        %v3006 = vld [vmem:[#allocation3 + $0x2ac] sm:$0xff]
        %v3007 = vld [vmem:[#allocation3 + $0x2b4] sm:$0xff]
        %v3008 = vld [vmem:[#allocation3 + $0x2bc] sm:$0xff]
        %v3009 = vld [vmem:[#allocation3 + $0x2c4] sm:$0xff]
        %v3010 = vld [vmem:[#allocation3 + $0x2cc] sm:$0xf]
        %v3011 = vld [vmem:[#allocation3 + $0x2d0] sm:$0xff]
        %v3012 = vld [vmem:[#allocation3 + $0x2d8] sm:$0xff]
        %v3013 = vld [vmem:[#allocation3 + $0x2e0] sm:$0xff]
        %v3014 = vld [vmem:[#allocation3 + $0x2e8] sm:$0xff]
        %v3015 = vld [vmem:[#allocation3 + $0x2f0] sm:$0xf]
        %v3016 = vld [vmem:[#allocation3 + $0x2f4] sm:$0xff]
        %v3017 = vld [vmem:[#allocation3 + $0x2fc] sm:$0xff]
        %v3018 = vld [vmem:[#allocation3 + $0x304] sm:$0xff]
        %v3019 = vld [vmem:[#allocation3 + $0x30c] sm:$0xff]
        %v3020 = vld [vmem:[#allocation3 + $0x314] sm:$0xf]
        %v3021 = vld [vmem:[#allocation3 + $0x318] sm:$0xff]
        %v3022 = vld [vmem:[#allocation3 + $0x320] sm:$0xff]
        %v3023 = vld [vmem:[#allocation3 + $0x328] sm:$0xff]
        %v3024 = vld [vmem:[#allocation3 + $0x330] sm:$0xff]
        %v3025 = vld [vmem:[#allocation3 + $0x338] sm:$0xf]
        %v3026 = vld [vmem:[#allocation3 + $0x33c] sm:$0xff]
        %v3027 = vld [vmem:[#allocation3 + $0x344] sm:$0xff]
        %v3028 = vld [vmem:[#allocation3 + $0x34c] sm:$0xff]
        %v3029 = vld [vmem:[#allocation3 + $0x354] sm:$0xff]
        %v3030 = vld [vmem:[#allocation3 + $0x35c] sm:$0xf]
        %v3031 = vld [vmem:[#allocation3 + $0x360] sm:$0xff]
        %v3032 = vld [vmem:[#allocation3 + $0x368] sm:$0xff]
        %v3033 = vld [vmem:[#allocation3 + $0x370] sm:$0xff]
        %v3034 = vld [vmem:[#allocation3 + $0x378] sm:$0xff]
        %v3035 = vld [vmem:[#allocation3 + $0x380] sm:$0xf]
        %v3036 = vld [vmem:[#allocation3 + $0x384] sm:$0xff]
        %v3037 = vld [vmem:[#allocation3 + $0x38c] sm:$0xff]
        %v3038 = vld [vmem:[#allocation3 + $0x394] sm:$0xff]
        %v3039 = vld [vmem:[#allocation3 + $0x39c] sm:$0xff]
        %v3040 = vld [vmem:[#allocation3 + $0x3a4] sm:$0xf]
        %v3041 = vld [vmem:[#allocation3 + $0x3a8] sm:$0xff]
        %v3042 = vld [vmem:[#allocation3 + $0x3b0] sm:$0xff]
        %v3043 = vld [vmem:[#allocation3 + $0x3b8] sm:$0xff]
        %v3044 = vld [vmem:[#allocation3 + $0x3c0] sm:$0xff]
        %v3045 = vld [vmem:[#allocation3 + $0x3c8] sm:$0xf]
        %v3046 = vld [vmem:[#allocation3 + $0x3cc] sm:$0xff]
        %v3047 = vld [vmem:[#allocation3 + $0x3d4] sm:$0xff]
        %v3048 = vld [vmem:[#allocation3 + $0x3dc] sm:$0xff]
        %v3049 = vld [vmem:[#allocation3 + $0x3e4] sm:$0xff]
        %v3050 = vld [vmem:[#allocation3 + $0x3ec] sm:$0xf]
        %v3051 = vld [vmem:[#allocation3 + $0x3f0] sm:$0xff]
        %v3052 = vld [vmem:[#allocation3 + $0x3f8] sm:$0xff]
        %v3053 = vld [vmem:[#allocation3 + $0x400] sm:$0xff]
        %v3054 = vld [vmem:[#allocation3 + $0x408] sm:$0xff]
        %v3055 = vld [vmem:[#allocation3 + $0x410] sm:$0xf]
        %v3056 = vld [vmem:[#allocation3 + $0x414] sm:$0xff]
        %v3057 = vld [vmem:[#allocation3 + $0x41c] sm:$0xff]
        %v3058 = vld [vmem:[#allocation3 + $0x424] sm:$0xff]
        %v3059 = vld [vmem:[#allocation3 + $0x42c] sm:$0xff]
        %v3060 = vld [vmem:[#allocation3 + $0x434] sm:$0xf]
        %v3061 = vld [vmem:[#allocation3 + $0x438] sm:$0xff]
        %v3062 = vld [vmem:[#allocation3 + $0x440] sm:$0xff]
        %v3063 = vld [vmem:[#allocation3 + $0x448] sm:$0xff]
        %v3064 = vld [vmem:[#allocation3 + $0x450] sm:$0xff]
        %v3065 = vld [vmem:[#allocation3 + $0x458] sm:$0xf]
        %v3066 = vld [vmem:[#allocation3 + $0x45c] sm:$0xff]
        %v3067 = vld [vmem:[#allocation3 + $0x464] sm:$0xff]
        %v3068 = vld [vmem:[#allocation3 + $0x46c] sm:$0xff]
        %v3069 = vld [vmem:[#allocation3 + $0x474] sm:$0xff]
        %v3070 = vld [vmem:[#allocation3 + $0x47c] sm:$0xf]
        %v3071 = vld [vmem:[%s1] sm:$0xf]
        %v3072 = vld [vmem:[%s1 + $0x4] sm:$0xf]
        %v3073 = vld [vmem:[%s1 + $0x8] sm:$0xf]
        %v3074 = vld [vmem:[%s1 + $0xc] sm:$0xf]
        %v3075 = vld [vmem:[%s1 + $0x10] sm:$0xf]
        %v3076 = vld [vmem:[%s1 + $0x14] sm:$0xf]
        %v3077 = vld [vmem:[%s1 + $0x18] sm:$0xf]
        %v3078 = vld [vmem:[%s1 + $0x1c] sm:$0xf]
        %v3079 = vld [vmem:[%s1 + $0x20] sm:$0xf]
        %v3080 = vld [vmem:[%s1 + $0x24] sm:$0xf]
        %v3081 = vld [vmem:[%s1 + $0x28] sm:$0xf]
        %v3082 = vld [vmem:[%s1 + $0x2c] sm:$0xf]
        %v3083 = vld [vmem:[%s1 + $0x30] sm:$0xf]
        %v3084 = vld [vmem:[%s1 + $0x34] sm:$0xf]
        %v3085 = vld [vmem:[%s1 + $0x38] sm:$0xf]
        %v3086 = vld [vmem:[%s1 + $0x3c] sm:$0xf]
        %v3087 = vld [vmem:[%s1 + $0x40] sm:$0xf]
        %v3088 = vld [vmem:[%s1 + $0x44] sm:$0xf]
        %v3089 = vld [vmem:[%s1 + $0x48] sm:$0xf]
        %v3090 = vld [vmem:[%s1 + $0x4c] sm:$0xf]
        %v3091 = vld [vmem:[%s1 + $0x50] sm:$0xf]
        %v3092 = vld [vmem:[%s1 + $0x54] sm:$0xf]
        %v3093 = vld [vmem:[%s1 + $0x58] sm:$0xf]
        %v3094 = vld [vmem:[%s1 + $0x5c] sm:$0xf]
        %v3095 = vld [vmem:[%s1 + $0x60] sm:$0xf]
        %v3096 = vld [vmem:[%s1 + $0x64] sm:$0xf]
        %v3097 = vld [vmem:[%s1 + $0x68] sm:$0xf]
        %v3098 = vld [vmem:[%s1 + $0x6c] sm:$0xf]
        %v3099 = vld [vmem:[%s1 + $0x70] sm:$0xf]
        %v3100 = vld [vmem:[%s1 + $0x74] sm:$0xf]
        %v3101 = vld [vmem:[%s1 + $0x78] sm:$0xf]
        %v3102 = vld [vmem:[%s1 + $0x7c] sm:$0xf]
        %v3103 = vld [vmem:[%s1 + $0x80] sm:$0xf]
        %v3104 = vld [vmem:[%s1 + $0x84] sm:$0xf]
        %v3105 = vld [vmem:[%s1 + $0x88] sm:$0xf]
        %v3106 = vld [vmem:[%s1 + $0x8c] sm:$0xf]
        %v3107 = vld [vmem:[%s1 + $0x90] sm:$0xf]
        %v3108 = vld [vmem:[%s1 + $0x94] sm:$0xf]
        %v3109 = vld [vmem:[%s1 + $0x98] sm:$0xf]
        %v3110 = vld [vmem:[%s1 + $0x9c] sm:$0xf]
        %v3111 = vld [vmem:[%s1 + $0xa0] sm:$0xf]
        %v3112 = vld [vmem:[%s1 + $0xa4] sm:$0xf]
        %v3113 = vld [vmem:[%s1 + $0xa8] sm:$0xf]
        %v3114 = vld [vmem:[%s1 + $0xac] sm:$0xf]
        %v3115 = vld [vmem:[%s1 + $0xb0] sm:$0xf]
        %v3116 = vld [vmem:[%s1 + $0xb4] sm:$0xf]
        %v3117 = vld [vmem:[%s1 + $0xb8] sm:$0xf]
        %v3118 = vld [vmem:[%s1 + $0xbc] sm:$0xf]
        %v3119 = vld [vmem:[%s1 + $0xc0] sm:$0xf]
        %v3120 = vld [vmem:[%s1 + $0xc4] sm:$0xf]
        %v3121 = vld [vmem:[%s1 + $0xc8] sm:$0xf]
        %v3122 = vld [vmem:[%s1 + $0xcc] sm:$0xf]
        %v3123 = vld [vmem:[%s1 + $0xd0] sm:$0xf]
        %v3124 = vld [vmem:[%s1 + $0xd4] sm:$0xf]
        %v3125 = vld [vmem:[%s1 + $0xd8] sm:$0xf]
        %v3126 = vld [vmem:[%s1 + $0xdc] sm:$0xf]
        %v3127 = vld [vmem:[%s1 + $0xe0] sm:$0xf]
        %v3128 = vld [vmem:[%s1 + $0xe4] sm:$0xf]
        %v3129 = vld [vmem:[%s1 + $0xe8] sm:$0xf]
        %v3130 = vld [vmem:[%s1 + $0xec] sm:$0xf]
        %v3131 = vld [vmem:[%s1 + $0xf0] sm:$0xf]
        %v3132 = vld [vmem:[%s1 + $0xf4] sm:$0xf]
        %v3133 = vld [vmem:[%s1 + $0xf8] sm:$0xf]
        %v3134 = vld [vmem:[%s1 + $0xfc] sm:$0xf]
        %v3135 = vld [vmem:[%s1 + $0x100] sm:$0xf]
        %v3136 = vld [vmem:[%s1 + $0x104] sm:$0xf]
        %v3137 = vld [vmem:[%s1 + $0x108] sm:$0xf]
        %v3138 = vld [vmem:[%s1 + $0x10c] sm:$0xf]
        %v3139 = vld [vmem:[%s1 + $0x110] sm:$0xf]
        %v3140 = vld [vmem:[%s1 + $0x114] sm:$0xf]
        %v3141 = vld [vmem:[%s1 + $0x118] sm:$0xf]
        %v3142 = vld [vmem:[%s1 + $0x11c] sm:$0xf]
        %v3143 = vld [vmem:[%s1 + $0x120] sm:$0xf]
        %v3144 = vld [vmem:[%s1 + $0x124] sm:$0xf]
        %v3145 = vld [vmem:[%s1 + $0x128] sm:$0xf]
        %v3146 = vld [vmem:[%s1 + $0x12c] sm:$0xf]
        %v3147 = vld [vmem:[%s1 + $0x130] sm:$0xf]
        %v3148 = vld [vmem:[%s1 + $0x134] sm:$0xf]
        %v3149 = vld [vmem:[%s1 + $0x138] sm:$0xf]
        %v3150 = vld [vmem:[%s1 + $0x13c] sm:$0xf]
        %v3151 = vld [vmem:[%s1 + $0x140] sm:$0xf]
        %v3152 = vld [vmem:[%s1 + $0x144] sm:$0xf]
        %v3153 = vld [vmem:[%s1 + $0x148] sm:$0xf]
        %v3154 = vld [vmem:[%s1 + $0x14c] sm:$0xf]
        %v3155 = vld [vmem:[%s1 + $0x150] sm:$0xf]
        %v3156 = vld [vmem:[%s1 + $0x154] sm:$0xf]
        %v3157 = vld [vmem:[%s1 + $0x158] sm:$0xf]
        %v3158 = vld [vmem:[%s1 + $0x15c] sm:$0xf]
        %v3159 = vld [vmem:[%s1 + $0x160] sm:$0xf]
        %v3160 = vld [vmem:[%s1 + $0x164] sm:$0xf]
        %v3161 = vld [vmem:[%s1 + $0x168] sm:$0xf]
        %v3162 = vld [vmem:[%s1 + $0x16c] sm:$0xf]
        %v3163 = vld [vmem:[%s1 + $0x170] sm:$0xf]
        %v3164 = vld [vmem:[%s1 + $0x174] sm:$0xf]
        %v3165 = vld [vmem:[%s1 + $0x178] sm:$0xf]
        %v3166 = vld [vmem:[%s1 + $0x17c] sm:$0xf]
        %v3167 = vld [vmem:[%s1 + $0x180] sm:$0xf]
        %v3168 = vld [vmem:[%s1 + $0x184] sm:$0xf]
        %v3169 = vld [vmem:[%s1 + $0x188] sm:$0xf]
        %v3170 = vld [vmem:[%s1 + $0x18c] sm:$0xf]
        %v3171 = vld [vmem:[%s1 + $0x190] sm:$0xf]
        %v3172 = vld [vmem:[%s1 + $0x194] sm:$0xf]
        %v3173 = vld [vmem:[%s1 + $0x198] sm:$0xf]
        %v3174 = vld [vmem:[%s1 + $0x19c] sm:$0xf]
        %v3175 = vld [vmem:[%s1 + $0x1a0] sm:$0xf]
        %v3176 = vld [vmem:[%s1 + $0x1a4] sm:$0xf]
        %v3177 = vld [vmem:[%s1 + $0x1a8] sm:$0xf]
        %v3178 = vld [vmem:[%s1 + $0x1ac] sm:$0xf]
        %v3179 = vld [vmem:[%s1 + $0x1b0] sm:$0xf]
        %v3180 = vld [vmem:[%s1 + $0x1b4] sm:$0xf]
        %v3181 = vld [vmem:[%s1 + $0x1b8] sm:$0xf]
        %v3182 = vld [vmem:[%s1 + $0x1bc] sm:$0xf]
        %v3183 = vld [vmem:[%s1 + $0x1c0] sm:$0xf]
        %v3184 = vld [vmem:[%s1 + $0x1c4] sm:$0xf]
        %v3185 = vld [vmem:[%s1 + $0x1c8] sm:$0xf]
        %v3186 = vld [vmem:[%s1 + $0x1cc] sm:$0xf]
        %v3187 = vld [vmem:[%s1 + $0x1d0] sm:$0xf]
        %v3188 = vld [vmem:[%s1 + $0x1d4] sm:$0xf]
        %v3189 = vld [vmem:[%s1 + $0x1d8] sm:$0xf]
        %v3190 = vld [vmem:[%s1 + $0x1dc] sm:$0xf]
        %v3191 = vld [vmem:[%s1 + $0x1e0] sm:$0xf]
        %v3192 = vld [vmem:[%s1 + $0x1e4] sm:$0xf]
        %v3193 = vld [vmem:[%s1 + $0x1e8] sm:$0xf]
        %v3194 = vld [vmem:[%s1 + $0x1ec] sm:$0xf]
        %v3195 = vld [vmem:[%s1 + $0x1f0] sm:$0xf]
        %v3196 = vld [vmem:[%s1 + $0x1f4] sm:$0xf]
        %v3197 = vld [vmem:[%s1 + $0x1f8] sm:$0xf]
        %v3198 = vld [vmem:[%s1 + $0x1fc] sm:$0xf]
        %v3199 = vld [vmem:[%s1 + $0x200] sm:$0xf]
        %v3200 = vld [vmem:[%s1 + $0x204] sm:$0xf]
        %v3201 = vld [vmem:[%s1 + $0x208] sm:$0xf]
        %v3202 = vld [vmem:[%s1 + $0x20c] sm:$0xf]
        %v3203 = vld [vmem:[%s1 + $0x210] sm:$0xf]
        %v3204 = vld [vmem:[%s1 + $0x214] sm:$0xf]
        %v3205 = vld [vmem:[%s1 + $0x218] sm:$0xf]
        %v3206 = vld [vmem:[%s1 + $0x21c] sm:$0xf]
        %v3207 = vld [vmem:[%s1 + $0x220] sm:$0xf]
        %v3208 = vld [vmem:[%s1 + $0x224] sm:$0xf]
        %v3209 = vld [vmem:[%s1 + $0x228] sm:$0xf]
        %v3210 = vld [vmem:[%s1 + $0x22c] sm:$0xf]
        %v3211 = vld [vmem:[%s1 + $0x230] sm:$0xf]
        %v3212 = vld [vmem:[%s1 + $0x234] sm:$0xf]
        %v3213 = vld [vmem:[%s1 + $0x238] sm:$0xf]
        %v3214 = vld [vmem:[%s1 + $0x23c] sm:$0xf]
        %v3216 = vperm.slane %v295, 0
        %v3378 = vunpack.c.l.b16 %v2911
        %v3379 = vunpack.c.h.b16 %v2911
        %v3380 = vunpack.c.l.b16 %v2912
        %v3381 = vunpack.c.h.b16 %v2912
        %v3382 = vunpack.c.l.b16 %v2913
        %v3383 = vunpack.c.h.b16 %v2913
        %v3384 = vunpack.c.l.b16 %v2914
        %v3385 = vunpack.c.h.b16 %v2914
        %v3386 = vunpack.c.l.b16 %v2915
        %v3387 = vunpack.c.l.b16 %v2916
        %v3388 = vunpack.c.h.b16 %v2916
        %v3389 = vunpack.c.l.b16 %v2917
        %v3390 = vunpack.c.h.b16 %v2917
        %v3391 = vunpack.c.l.b16 %v2918
        %v3392 = vunpack.c.h.b16 %v2918
        %v3393 = vunpack.c.l.b16 %v2919
        %v3394 = vunpack.c.h.b16 %v2919
        %v3395 = vunpack.c.l.b16 %v2920
        %v3396 = vunpack.c.l.b16 %v2921
        %v3397 = vunpack.c.h.b16 %v2921
        %v3398 = vunpack.c.l.b16 %v2922
        %v3399 = vunpack.c.h.b16 %v2922
        %v3400 = vunpack.c.l.b16 %v2923
        %v3401 = vunpack.c.h.b16 %v2923
        %v3402 = vunpack.c.l.b16 %v2924
        %v3403 = vunpack.c.h.b16 %v2924
        %v3404 = vunpack.c.l.b16 %v2925
        %v3405 = vunpack.c.l.b16 %v2926
        %v3406 = vunpack.c.h.b16 %v2926
        %v3407 = vunpack.c.l.b16 %v2927
        %v3408 = vunpack.c.h.b16 %v2927
        %v3409 = vunpack.c.l.b16 %v2928
        %v3410 = vunpack.c.h.b16 %v2928
        %v3411 = vunpack.c.l.b16 %v2929
        %v3412 = vunpack.c.h.b16 %v2929
        %v3413 = vunpack.c.l.b16 %v2930
        %v3414 = vunpack.c.l.b16 %v2931
        %v3415 = vunpack.c.h.b16 %v2931
        %v3416 = vunpack.c.l.b16 %v2932
        %v3417 = vunpack.c.h.b16 %v2932
        %v3418 = vunpack.c.l.b16 %v2933
        %v3419 = vunpack.c.h.b16 %v2933
        %v3420 = vunpack.c.l.b16 %v2934
        %v3421 = vunpack.c.h.b16 %v2934
        %v3422 = vunpack.c.l.b16 %v2935
        %v3423 = vunpack.c.l.b16 %v2936
        %v3424 = vunpack.c.h.b16 %v2936
        %v3425 = vunpack.c.l.b16 %v2937
        %v3426 = vunpack.c.h.b16 %v2937
        %v3427 = vunpack.c.l.b16 %v2938
        %v3428 = vunpack.c.h.b16 %v2938
        %v3429 = vunpack.c.l.b16 %v2939
        %v3430 = vunpack.c.h.b16 %v2939
        %v3431 = vunpack.c.l.b16 %v2940
        %v3432 = vunpack.c.l.b16 %v2941
        %v3433 = vunpack.c.h.b16 %v2941
        %v3434 = vunpack.c.l.b16 %v2942
        %v3435 = vunpack.c.h.b16 %v2942
        %v3436 = vunpack.c.l.b16 %v2943
        %v3437 = vunpack.c.h.b16 %v2943
        %v3438 = vunpack.c.l.b16 %v2944
        %v3439 = vunpack.c.h.b16 %v2944
        %v3440 = vunpack.c.l.b16 %v2945
        %v3441 = vunpack.c.l.b16 %v2946
        %v3442 = vunpack.c.h.b16 %v2946
        %v3443 = vunpack.c.l.b16 %v2947
        %v3444 = vunpack.c.h.b16 %v2947
        %v3445 = vunpack.c.l.b16 %v2948
        %v3446 = vunpack.c.h.b16 %v2948
        %v3447 = vunpack.c.l.b16 %v2949
        %v3448 = vunpack.c.h.b16 %v2949
        %v3449 = vunpack.c.l.b16 %v2950
        %v3450 = vunpack.c.l.b16 %v2951
        %v3451 = vunpack.c.h.b16 %v2951
        %v3452 = vunpack.c.l.b16 %v2952
        %v3453 = vunpack.c.h.b16 %v2952
        %v3454 = vunpack.c.l.b16 %v2953
        %v3455 = vunpack.c.h.b16 %v2953
        %v3456 = vunpack.c.l.b16 %v2954
        %v3457 = vunpack.c.h.b16 %v2954
        %v3458 = vunpack.c.l.b16 %v2955
        %v3459 = vunpack.c.l.b16 %v2956
        %v3460 = vunpack.c.h.b16 %v2956
        %v3461 = vunpack.c.l.b16 %v2957
        %v3462 = vunpack.c.h.b16 %v2957
        %v3463 = vunpack.c.l.b16 %v2958
        %v3464 = vunpack.c.h.b16 %v2958
        %v3465 = vunpack.c.l.b16 %v2959
        %v3466 = vunpack.c.h.b16 %v2959
        %v3467 = vunpack.c.l.b16 %v2960
        %v3468 = vunpack.c.l.b16 %v2961
        %v3469 = vunpack.c.h.b16 %v2961
        %v3470 = vunpack.c.l.b16 %v2962
        %v3471 = vunpack.c.h.b16 %v2962
        %v3472 = vunpack.c.l.b16 %v2963
        %v3473 = vunpack.c.h.b16 %v2963
        %v3474 = vunpack.c.l.b16 %v2964
        %v3475 = vunpack.c.h.b16 %v2964
        %v3476 = vunpack.c.l.b16 %v2965
        %v3477 = vunpack.c.l.b16 %v2966
        %v3478 = vunpack.c.h.b16 %v2966
        %v3479 = vunpack.c.l.b16 %v2967
        %v3480 = vunpack.c.h.b16 %v2967
        %v3481 = vunpack.c.l.b16 %v2968
        %v3482 = vunpack.c.h.b16 %v2968
        %v3483 = vunpack.c.l.b16 %v2969
        %v3484 = vunpack.c.h.b16 %v2969
        %v3485 = vunpack.c.l.b16 %v2970
        %v3486 = vunpack.c.l.b16 %v2971
        %v3487 = vunpack.c.h.b16 %v2971
        %v3488 = vunpack.c.l.b16 %v2972
        %v3489 = vunpack.c.h.b16 %v2972
        %v3490 = vunpack.c.l.b16 %v2973
        %v3491 = vunpack.c.h.b16 %v2973
        %v3492 = vunpack.c.l.b16 %v2974
        %v3493 = vunpack.c.h.b16 %v2974
        %v3494 = vunpack.c.l.b16 %v2975
        %v3495 = vunpack.c.l.b16 %v2976
        %v3496 = vunpack.c.h.b16 %v2976
        %v3497 = vunpack.c.l.b16 %v2977
        %v3498 = vunpack.c.h.b16 %v2977
        %v3499 = vunpack.c.l.b16 %v2978
        %v3500 = vunpack.c.h.b16 %v2978
        %v3501 = vunpack.c.l.b16 %v2979
        %v3502 = vunpack.c.h.b16 %v2979
        %v3503 = vunpack.c.l.b16 %v2980
        %v3504 = vunpack.c.l.b16 %v2981
        %v3505 = vunpack.c.h.b16 %v2981
        %v3506 = vunpack.c.l.b16 %v2982
        %v3507 = vunpack.c.h.b16 %v2982
        %v3508 = vunpack.c.l.b16 %v2983
        %v3509 = vunpack.c.h.b16 %v2983
        %v3510 = vunpack.c.l.b16 %v2984
        %v3511 = vunpack.c.h.b16 %v2984
        %v3512 = vunpack.c.l.b16 %v2985
        %v3513 = vunpack.c.l.b16 %v2986
        %v3514 = vunpack.c.h.b16 %v2986
        %v3515 = vunpack.c.l.b16 %v2987
        %v3516 = vunpack.c.h.b16 %v2987
        %v3517 = vunpack.c.l.b16 %v2988
        %v3518 = vunpack.c.h.b16 %v2988
        %v3519 = vunpack.c.l.b16 %v2989
        %v3520 = vunpack.c.h.b16 %v2989
        %v3521 = vunpack.c.l.b16 %v2990
        %v3522 = vunpack.c.l.b16 %v2991
        %v3523 = vunpack.c.h.b16 %v2991
        %v3524 = vunpack.c.l.b16 %v2992
        %v3525 = vunpack.c.h.b16 %v2992
        %v3526 = vunpack.c.l.b16 %v2993
        %v3527 = vunpack.c.h.b16 %v2993
        %v3528 = vunpack.c.l.b16 %v2994
        %v3529 = vunpack.c.h.b16 %v2994
        %v3530 = vunpack.c.l.b16 %v2995
        %v3531 = vunpack.c.l.b16 %v2996
        %v3532 = vunpack.c.h.b16 %v2996
        %v3533 = vunpack.c.l.b16 %v2997
        %v3534 = vunpack.c.h.b16 %v2997
        %v3535 = vunpack.c.l.b16 %v2998
        %v3536 = vunpack.c.h.b16 %v2998
        %v3537 = vunpack.c.l.b16 %v2999
        %v3538 = vunpack.c.h.b16 %v2999
        %v3539 = vunpack.c.l.b16 %v3000
        %v3540 = vunpack.c.l.b16 %v3001
        %v3541 = vunpack.c.h.b16 %v3001
        %v3542 = vunpack.c.l.b16 %v3002
        %v3543 = vunpack.c.h.b16 %v3002
        %v3544 = vunpack.c.l.b16 %v3003
        %v3545 = vunpack.c.h.b16 %v3003
        %v3546 = vunpack.c.l.b16 %v3004
        %v3547 = vunpack.c.h.b16 %v3004
        %v3548 = vunpack.c.l.b16 %v3005
        %v3549 = vunpack.c.l.b16 %v3006
        %v3550 = vunpack.c.h.b16 %v3006
        %v3551 = vunpack.c.l.b16 %v3007
        %v3552 = vunpack.c.h.b16 %v3007
        %v3553 = vunpack.c.l.b16 %v3008
        %v3554 = vunpack.c.h.b16 %v3008
        %v3555 = vunpack.c.l.b16 %v3009
        %v3556 = vunpack.c.h.b16 %v3009
        %v3557 = vunpack.c.l.b16 %v3010
        %v3558 = vunpack.c.l.b16 %v3011
        %v3559 = vunpack.c.h.b16 %v3011
        %v3560 = vunpack.c.l.b16 %v3012
        %v3561 = vunpack.c.h.b16 %v3012
        %v3562 = vunpack.c.l.b16 %v3013
        %v3563 = vunpack.c.h.b16 %v3013
        %v3564 = vunpack.c.l.b16 %v3014
        %v3565 = vunpack.c.h.b16 %v3014
        %v3566 = vunpack.c.l.b16 %v3015
        %v3567 = vunpack.c.l.b16 %v3016
        %v3568 = vunpack.c.h.b16 %v3016
        %v3569 = vunpack.c.l.b16 %v3017
        %v3570 = vunpack.c.h.b16 %v3017
        %v3571 = vunpack.c.l.b16 %v3018
        %v3572 = vunpack.c.h.b16 %v3018
        %v3573 = vunpack.c.l.b16 %v3019
        %v3574 = vunpack.c.h.b16 %v3019
        %v3575 = vunpack.c.l.b16 %v3020
        %v3576 = vunpack.c.l.b16 %v3021
        %v3577 = vunpack.c.h.b16 %v3021
        %v3578 = vunpack.c.l.b16 %v3022
        %v3579 = vunpack.c.h.b16 %v3022
        %v3580 = vunpack.c.l.b16 %v3023
        %v3581 = vunpack.c.h.b16 %v3023
        %v3582 = vunpack.c.l.b16 %v3024
        %v3583 = vunpack.c.h.b16 %v3024
        %v3584 = vunpack.c.l.b16 %v3025
        %v3585 = vunpack.c.l.b16 %v3026
        %v3586 = vunpack.c.h.b16 %v3026
        %v3587 = vunpack.c.l.b16 %v3027
        %v3588 = vunpack.c.h.b16 %v3027
        %v3589 = vunpack.c.l.b16 %v3028
        %v3590 = vunpack.c.h.b16 %v3028
        %v3591 = vunpack.c.l.b16 %v3029
        %v3592 = vunpack.c.h.b16 %v3029
        %v3593 = vunpack.c.l.b16 %v3030
        %v3594 = vunpack.c.l.b16 %v3031
        %v3595 = vunpack.c.h.b16 %v3031
        %v3596 = vunpack.c.l.b16 %v3032
        %v3597 = vunpack.c.h.b16 %v3032
        %v3598 = vunpack.c.l.b16 %v3033
        %v3599 = vunpack.c.h.b16 %v3033
        %v3600 = vunpack.c.l.b16 %v3034
        %v3601 = vunpack.c.h.b16 %v3034
        %v3602 = vunpack.c.l.b16 %v3035
        %v3603 = vunpack.c.l.b16 %v3036
        %v3604 = vunpack.c.h.b16 %v3036
        %v3605 = vunpack.c.l.b16 %v3037
        %v3606 = vunpack.c.h.b16 %v3037
        %v3607 = vunpack.c.l.b16 %v3038
        %v3608 = vunpack.c.h.b16 %v3038
        %v3609 = vunpack.c.l.b16 %v3039
        %v3610 = vunpack.c.h.b16 %v3039
        %v3611 = vunpack.c.l.b16 %v3040
        %v3612 = vunpack.c.l.b16 %v3041
        %v3613 = vunpack.c.h.b16 %v3041
        %v3614 = vunpack.c.l.b16 %v3042
        %v3615 = vunpack.c.h.b16 %v3042
        %v3616 = vunpack.c.l.b16 %v3043
        %v3617 = vunpack.c.h.b16 %v3043
        %v3618 = vunpack.c.l.b16 %v3044
        %v3619 = vunpack.c.h.b16 %v3044
        %v3620 = vunpack.c.l.b16 %v3045
        %v3621 = vunpack.c.l.b16 %v3046
        %v3622 = vunpack.c.h.b16 %v3046
        %v3623 = vunpack.c.l.b16 %v3047
        %v3624 = vunpack.c.h.b16 %v3047
        %v3625 = vunpack.c.l.b16 %v3048
        %v3626 = vunpack.c.h.b16 %v3048
        %v3627 = vunpack.c.l.b16 %v3049
        %v3628 = vunpack.c.h.b16 %v3049
        %v3629 = vunpack.c.l.b16 %v3050
        %v3630 = vunpack.c.l.b16 %v3051
        %v3631 = vunpack.c.h.b16 %v3051
        %v3632 = vunpack.c.l.b16 %v3052
        %v3633 = vunpack.c.h.b16 %v3052
        %v3634 = vunpack.c.l.b16 %v3053
        %v3635 = vunpack.c.h.b16 %v3053
        %v3636 = vunpack.c.l.b16 %v3054
        %v3637 = vunpack.c.h.b16 %v3054
        %v3638 = vunpack.c.l.b16 %v3055
        %v3639 = vunpack.c.l.b16 %v3056
        %v3640 = vunpack.c.h.b16 %v3056
        %v3641 = vunpack.c.l.b16 %v3057
        %v3642 = vunpack.c.h.b16 %v3057
        %v3643 = vunpack.c.l.b16 %v3058
        %v3644 = vunpack.c.h.b16 %v3058
        %v3645 = vunpack.c.l.b16 %v3059
        %v3646 = vunpack.c.h.b16 %v3059
        %v3647 = vunpack.c.l.b16 %v3060
        %v3648 = vunpack.c.l.b16 %v3061
        %v3649 = vunpack.c.h.b16 %v3061
        %v3650 = vunpack.c.l.b16 %v3062
        %v3651 = vunpack.c.h.b16 %v3062
        %v3652 = vunpack.c.l.b16 %v3063
        %v3653 = vunpack.c.h.b16 %v3063
        %v3654 = vunpack.c.l.b16 %v3064
        %v3655 = vunpack.c.h.b16 %v3064
        %v3656 = vunpack.c.l.b16 %v3065
        %v3657 = vunpack.c.l.b16 %v3066
        %v3658 = vunpack.c.h.b16 %v3066
        %v3659 = vunpack.c.l.b16 %v3067
        %v3660 = vunpack.c.h.b16 %v3067
        %v3661 = vunpack.c.l.b16 %v3068
        %v3662 = vunpack.c.h.b16 %v3068
        %v3663 = vunpack.c.l.b16 %v3069
        %v3664 = vunpack.c.h.b16 %v3069
        %v3665 = vunpack.c.l.b16 %v3070
        %v3666 = vpack.c.b16 %v3387, %v3378
        %v3667 = vpack.c.b16 %v3388, %v3379
        %v3668 = vpack.c.b16 %v3389, %v3380
        %v3669 = vpack.c.b16 %v3390, %v3381
        %v3670 = vpack.c.b16 %v3391, %v3382
        %v3671 = vpack.c.b16 %v3392, %v3383
        %v3672 = vpack.c.b16 %v3393, %v3384
        %v3673 = vpack.c.b16 %v3394, %v3385
        %v3674 = vpack.c.b16 %v3395, %v3386
        %v3675 = vpack.c.b16 %v3405, %v3396
        %v3676 = vpack.c.b16 %v3406, %v3397
        %v3677 = vpack.c.b16 %v3407, %v3398
        %v3678 = vpack.c.b16 %v3408, %v3399
        %v3679 = vpack.c.b16 %v3409, %v3400
        %v3680 = vpack.c.b16 %v3410, %v3401
        %v3681 = vpack.c.b16 %v3411, %v3402
        %v3682 = vpack.c.b16 %v3412, %v3403
        %v3683 = vpack.c.b16 %v3413, %v3404
        %v3684 = vpack.c.b16 %v3423, %v3414
        %v3685 = vpack.c.b16 %v3424, %v3415
        %v3686 = vpack.c.b16 %v3425, %v3416
        %v3687 = vpack.c.b16 %v3426, %v3417
        %v3688 = vpack.c.b16 %v3427, %v3418
        %v3689 = vpack.c.b16 %v3428, %v3419
        %v3690 = vpack.c.b16 %v3429, %v3420
        %v3691 = vpack.c.b16 %v3430, %v3421
        %v3692 = vpack.c.b16 %v3431, %v3422
        %v3693 = vpack.c.b16 %v3441, %v3432
        %v3694 = vpack.c.b16 %v3442, %v3433
        %v3695 = vpack.c.b16 %v3443, %v3434
        %v3696 = vpack.c.b16 %v3444, %v3435
        %v3697 = vpack.c.b16 %v3445, %v3436
        %v3698 = vpack.c.b16 %v3446, %v3437
        %v3699 = vpack.c.b16 %v3447, %v3438
        %v3700 = vpack.c.b16 %v3448, %v3439
        %v3701 = vpack.c.b16 %v3449, %v3440
        %v3702 = vpack.c.b16 %v3459, %v3450
        %v3703 = vpack.c.b16 %v3460, %v3451
        %v3704 = vpack.c.b16 %v3461, %v3452
        %v3705 = vpack.c.b16 %v3462, %v3453
        %v3706 = vpack.c.b16 %v3463, %v3454
        %v3707 = vpack.c.b16 %v3464, %v3455
        %v3708 = vpack.c.b16 %v3465, %v3456
        %v3709 = vpack.c.b16 %v3466, %v3457
        %v3710 = vpack.c.b16 %v3467, %v3458
        %v3711 = vpack.c.b16 %v3477, %v3468
        %v3712 = vpack.c.b16 %v3478, %v3469
        %v3713 = vpack.c.b16 %v3479, %v3470
        %v3714 = vpack.c.b16 %v3480, %v3471
        %v3715 = vpack.c.b16 %v3481, %v3472
        %v3716 = vpack.c.b16 %v3482, %v3473
        %v3717 = vpack.c.b16 %v3483, %v3474
        %v3718 = vpack.c.b16 %v3484, %v3475
        %v3719 = vpack.c.b16 %v3485, %v3476
        %v3720 = vpack.c.b16 %v3495, %v3486
        %v3721 = vpack.c.b16 %v3496, %v3487
        %v3722 = vpack.c.b16 %v3497, %v3488
        %v3723 = vpack.c.b16 %v3498, %v3489
        %v3724 = vpack.c.b16 %v3499, %v3490
        %v3725 = vpack.c.b16 %v3500, %v3491
        %v3726 = vpack.c.b16 %v3501, %v3492
        %v3727 = vpack.c.b16 %v3502, %v3493
        %v3728 = vpack.c.b16 %v3503, %v3494
        %v3729 = vpack.c.b16 %v3513, %v3504
        %v3730 = vpack.c.b16 %v3514, %v3505
        %v3731 = vpack.c.b16 %v3515, %v3506
        %v3732 = vpack.c.b16 %v3516, %v3507
        %v3733 = vpack.c.b16 %v3517, %v3508
        %v3734 = vpack.c.b16 %v3518, %v3509
        %v3735 = vpack.c.b16 %v3519, %v3510
        %v3736 = vpack.c.b16 %v3520, %v3511
        %v3737 = vpack.c.b16 %v3521, %v3512
        %v3738 = vpack.c.b16 %v3531, %v3522
        %v3739 = vpack.c.b16 %v3532, %v3523
        %v3740 = vpack.c.b16 %v3533, %v3524
        %v3741 = vpack.c.b16 %v3534, %v3525
        %v3742 = vpack.c.b16 %v3535, %v3526
        %v3743 = vpack.c.b16 %v3536, %v3527
        %v3744 = vpack.c.b16 %v3537, %v3528
        %v3745 = vpack.c.b16 %v3538, %v3529
        %v3746 = vpack.c.b16 %v3539, %v3530
        %v3747 = vpack.c.b16 %v3549, %v3540
        %v3748 = vpack.c.b16 %v3550, %v3541
        %v3749 = vpack.c.b16 %v3551, %v3542
        %v3750 = vpack.c.b16 %v3552, %v3543
        %v3751 = vpack.c.b16 %v3553, %v3544
        %v3752 = vpack.c.b16 %v3554, %v3545
        %v3753 = vpack.c.b16 %v3555, %v3546
        %v3754 = vpack.c.b16 %v3556, %v3547
        %v3755 = vpack.c.b16 %v3557, %v3548
        %v3756 = vpack.c.b16 %v3567, %v3558
        %v3757 = vpack.c.b16 %v3568, %v3559
        %v3758 = vpack.c.b16 %v3569, %v3560
        %v3759 = vpack.c.b16 %v3570, %v3561
        %v3760 = vpack.c.b16 %v3571, %v3562
        %v3761 = vpack.c.b16 %v3572, %v3563
        %v3762 = vpack.c.b16 %v3573, %v3564
        %v3763 = vpack.c.b16 %v3574, %v3565
        %v3764 = vpack.c.b16 %v3575, %v3566
        %v3765 = vpack.c.b16 %v3585, %v3576
        %v3766 = vpack.c.b16 %v3586, %v3577
        %v3767 = vpack.c.b16 %v3587, %v3578
        %v3768 = vpack.c.b16 %v3588, %v3579
        %v3769 = vpack.c.b16 %v3589, %v3580
        %v3770 = vpack.c.b16 %v3590, %v3581
        %v3771 = vpack.c.b16 %v3591, %v3582
        %v3772 = vpack.c.b16 %v3592, %v3583
        %v3773 = vpack.c.b16 %v3593, %v3584
        %v3774 = vpack.c.b16 %v3603, %v3594
        %v3775 = vpack.c.b16 %v3604, %v3595
        %v3776 = vpack.c.b16 %v3605, %v3596
        %v3777 = vpack.c.b16 %v3606, %v3597
        %v3778 = vpack.c.b16 %v3607, %v3598
        %v3779 = vpack.c.b16 %v3608, %v3599
        %v3780 = vpack.c.b16 %v3609, %v3600
        %v3781 = vpack.c.b16 %v3610, %v3601
        %v3782 = vpack.c.b16 %v3611, %v3602
        %v3783 = vpack.c.b16 %v3621, %v3612
        %v3784 = vpack.c.b16 %v3622, %v3613
        %v3785 = vpack.c.b16 %v3623, %v3614
        %v3786 = vpack.c.b16 %v3624, %v3615
        %v3787 = vpack.c.b16 %v3625, %v3616
        %v3788 = vpack.c.b16 %v3626, %v3617
        %v3789 = vpack.c.b16 %v3627, %v3618
        %v3790 = vpack.c.b16 %v3628, %v3619
        %v3791 = vpack.c.b16 %v3629, %v3620
        %v3792 = vpack.c.b16 %v3639, %v3630
        %v3793 = vpack.c.b16 %v3640, %v3631
        %v3794 = vpack.c.b16 %v3641, %v3632
        %v3795 = vpack.c.b16 %v3642, %v3633
        %v3796 = vpack.c.b16 %v3643, %v3634
        %v3797 = vpack.c.b16 %v3644, %v3635
        %v3798 = vpack.c.b16 %v3645, %v3636
        %v3799 = vpack.c.b16 %v3646, %v3637
        %v3800 = vpack.c.b16 %v3647, %v3638
        %v3801 = vpack.c.b16 %v3657, %v3648
        %v3802 = vpack.c.b16 %v3658, %v3649
        %v3803 = vpack.c.b16 %v3659, %v3650
        %v3804 = vpack.c.b16 %v3660, %v3651
        %v3805 = vpack.c.b16 %v3661, %v3652
        %v3806 = vpack.c.b16 %v3662, %v3653
        %v3807 = vpack.c.b16 %v3663, %v3654
        %v3808 = vpack.c.b16 %v3664, %v3655
        %v3809 = vpack.c.b16 %v3665, %v3656
        %v4098 = vunpack.c.l.b16 %v3071
        %v4099 = vunpack.c.l.b16 %v3072
        %v4100 = vunpack.c.l.b16 %v3073
        %v4101 = vunpack.c.l.b16 %v3074
        %v4102 = vunpack.c.l.b16 %v3075
        %v4103 = vunpack.c.l.b16 %v3076
        %v4104 = vunpack.c.l.b16 %v3077
        %v4105 = vunpack.c.l.b16 %v3078
        %v4106 = vunpack.c.l.b16 %v3079
        %v4107 = vunpack.c.l.b16 %v3080
        %v4108 = vunpack.c.l.b16 %v3081
        %v4109 = vunpack.c.l.b16 %v3082
        %v4110 = vunpack.c.l.b16 %v3083
        %v4111 = vunpack.c.l.b16 %v3084
        %v4112 = vunpack.c.l.b16 %v3085
        %v4113 = vunpack.c.l.b16 %v3086
        %v4114 = vunpack.c.l.b16 %v3087
        %v4115 = vunpack.c.l.b16 %v3088
        %v4116 = vunpack.c.l.b16 %v3089
        %v4117 = vunpack.c.l.b16 %v3090
        %v4118 = vunpack.c.l.b16 %v3091
        %v4119 = vunpack.c.l.b16 %v3092
        %v4120 = vunpack.c.l.b16 %v3093
        %v4121 = vunpack.c.l.b16 %v3094
        %v4122 = vunpack.c.l.b16 %v3095
        %v4123 = vunpack.c.l.b16 %v3096
        %v4124 = vunpack.c.l.b16 %v3097
        %v4125 = vunpack.c.l.b16 %v3098
        %v4126 = vunpack.c.l.b16 %v3099
        %v4127 = vunpack.c.l.b16 %v3100
        %v4128 = vunpack.c.l.b16 %v3101
        %v4129 = vunpack.c.l.b16 %v3102
        %v4130 = vunpack.c.l.b16 %v3103
        %v4131 = vunpack.c.l.b16 %v3104
        %v4132 = vunpack.c.l.b16 %v3105
        %v4133 = vunpack.c.l.b16 %v3106
        %v4134 = vunpack.c.l.b16 %v3107
        %v4135 = vunpack.c.l.b16 %v3108
        %v4136 = vunpack.c.l.b16 %v3109
        %v4137 = vunpack.c.l.b16 %v3110
        %v4138 = vunpack.c.l.b16 %v3111
        %v4139 = vunpack.c.l.b16 %v3112
        %v4140 = vunpack.c.l.b16 %v3113
        %v4141 = vunpack.c.l.b16 %v3114
        %v4142 = vunpack.c.l.b16 %v3115
        %v4143 = vunpack.c.l.b16 %v3116
        %v4144 = vunpack.c.l.b16 %v3117
        %v4145 = vunpack.c.l.b16 %v3118
        %v4146 = vunpack.c.l.b16 %v3119
        %v4147 = vunpack.c.l.b16 %v3120
        %v4148 = vunpack.c.l.b16 %v3121
        %v4149 = vunpack.c.l.b16 %v3122
        %v4150 = vunpack.c.l.b16 %v3123
        %v4151 = vunpack.c.l.b16 %v3124
        %v4152 = vunpack.c.l.b16 %v3125
        %v4153 = vunpack.c.l.b16 %v3126
        %v4154 = vunpack.c.l.b16 %v3127
        %v4155 = vunpack.c.l.b16 %v3128
        %v4156 = vunpack.c.l.b16 %v3129
        %v4157 = vunpack.c.l.b16 %v3130
        %v4158 = vunpack.c.l.b16 %v3131
        %v4159 = vunpack.c.l.b16 %v3132
        %v4160 = vunpack.c.l.b16 %v3133
        %v4161 = vunpack.c.l.b16 %v3134
        %v4162 = vunpack.c.l.b16 %v3135
        %v4163 = vunpack.c.l.b16 %v3136
        %v4164 = vunpack.c.l.b16 %v3137
        %v4165 = vunpack.c.l.b16 %v3138
        %v4166 = vunpack.c.l.b16 %v3139
        %v4167 = vunpack.c.l.b16 %v3140
        %v4168 = vunpack.c.l.b16 %v3141
        %v4169 = vunpack.c.l.b16 %v3142
        %v4170 = vunpack.c.l.b16 %v3143
        %v4171 = vunpack.c.l.b16 %v3144
        %v4172 = vunpack.c.l.b16 %v3145
        %v4173 = vunpack.c.l.b16 %v3146
        %v4174 = vunpack.c.l.b16 %v3147
        %v4175 = vunpack.c.l.b16 %v3148
        %v4176 = vunpack.c.l.b16 %v3149
        %v4177 = vunpack.c.l.b16 %v3150
        %v4178 = vunpack.c.l.b16 %v3151
        %v4179 = vunpack.c.l.b16 %v3152
        %v4180 = vunpack.c.l.b16 %v3153
        %v4181 = vunpack.c.l.b16 %v3154
        %v4182 = vunpack.c.l.b16 %v3155
        %v4183 = vunpack.c.l.b16 %v3156
        %v4184 = vunpack.c.l.b16 %v3157
        %v4185 = vunpack.c.l.b16 %v3158
        %v4186 = vunpack.c.l.b16 %v3159
        %v4187 = vunpack.c.l.b16 %v3160
        %v4188 = vunpack.c.l.b16 %v3161
        %v4189 = vunpack.c.l.b16 %v3162
        %v4190 = vunpack.c.l.b16 %v3163
        %v4191 = vunpack.c.l.b16 %v3164
        %v4192 = vunpack.c.l.b16 %v3165
        %v4193 = vunpack.c.l.b16 %v3166
        %v4194 = vunpack.c.l.b16 %v3167
        %v4195 = vunpack.c.l.b16 %v3168
        %v4196 = vunpack.c.l.b16 %v3169
        %v4197 = vunpack.c.l.b16 %v3170
        %v4198 = vunpack.c.l.b16 %v3171
        %v4199 = vunpack.c.l.b16 %v3172
        %v4200 = vunpack.c.l.b16 %v3173
        %v4201 = vunpack.c.l.b16 %v3174
        %v4202 = vunpack.c.l.b16 %v3175
        %v4203 = vunpack.c.l.b16 %v3176
        %v4204 = vunpack.c.l.b16 %v3177
        %v4205 = vunpack.c.l.b16 %v3178
        %v4206 = vunpack.c.l.b16 %v3179
        %v4207 = vunpack.c.l.b16 %v3180
        %v4208 = vunpack.c.l.b16 %v3181
        %v4209 = vunpack.c.l.b16 %v3182
        %v4210 = vunpack.c.l.b16 %v3183
        %v4211 = vunpack.c.l.b16 %v3184
        %v4212 = vunpack.c.l.b16 %v3185
        %v4213 = vunpack.c.l.b16 %v3186
        %v4214 = vunpack.c.l.b16 %v3187
        %v4215 = vunpack.c.l.b16 %v3188
        %v4216 = vunpack.c.l.b16 %v3189
        %v4217 = vunpack.c.l.b16 %v3190
        %v4218 = vunpack.c.l.b16 %v3191
        %v4219 = vunpack.c.l.b16 %v3192
        %v4220 = vunpack.c.l.b16 %v3193
        %v4221 = vunpack.c.l.b16 %v3194
        %v4222 = vunpack.c.l.b16 %v3195
        %v4223 = vunpack.c.l.b16 %v3196
        %v4224 = vunpack.c.l.b16 %v3197
        %v4225 = vunpack.c.l.b16 %v3198
        %v4226 = vunpack.c.l.b16 %v3199
        %v4227 = vunpack.c.l.b16 %v3200
        %v4228 = vunpack.c.l.b16 %v3201
        %v4229 = vunpack.c.l.b16 %v3202
        %v4230 = vunpack.c.l.b16 %v3203
        %v4231 = vunpack.c.l.b16 %v3204
        %v4232 = vunpack.c.l.b16 %v3205
        %v4233 = vunpack.c.l.b16 %v3206
        %v4234 = vunpack.c.l.b16 %v3207
        %v4235 = vunpack.c.l.b16 %v3208
        %v4236 = vunpack.c.l.b16 %v3209
        %v4237 = vunpack.c.l.b16 %v3210
        %v4238 = vunpack.c.l.b16 %v3211
        %v4239 = vunpack.c.l.b16 %v3212
        %v4240 = vunpack.c.l.b16 %v3213
        %v4241 = vunpack.c.l.b16 %v3214
        %v4242 = vpack.c.b16 %v4099, %v4098
        %v4243 = vpack.c.b16 %v4101, %v4100
        %v4244 = vpack.c.b16 %v4103, %v4102
        %v4245 = vpack.c.b16 %v4105, %v4104
        %v4246 = vpack.c.b16 %v4107, %v4106
        %v4247 = vpack.c.b16 %v4109, %v4108
        %v4248 = vpack.c.b16 %v4111, %v4110
        %v4249 = vpack.c.b16 %v4113, %v4112
        %v4250 = vpack.c.b16 %v4115, %v4114
        %v4251 = vpack.c.b16 %v4117, %v4116
        %v4252 = vpack.c.b16 %v4119, %v4118
        %v4253 = vpack.c.b16 %v4121, %v4120
        %v4254 = vpack.c.b16 %v4123, %v4122
        %v4255 = vpack.c.b16 %v4125, %v4124
        %v4256 = vpack.c.b16 %v4127, %v4126
        %v4257 = vpack.c.b16 %v4129, %v4128
        %v4258 = vpack.c.b16 %v4131, %v4130
        %v4259 = vpack.c.b16 %v4133, %v4132
        %v4260 = vpack.c.b16 %v4135, %v4134
        %v4261 = vpack.c.b16 %v4137, %v4136
        %v4262 = vpack.c.b16 %v4139, %v4138
        %v4263 = vpack.c.b16 %v4141, %v4140
        %v4264 = vpack.c.b16 %v4143, %v4142
        %v4265 = vpack.c.b16 %v4145, %v4144
        %v4266 = vpack.c.b16 %v4147, %v4146
        %v4267 = vpack.c.b16 %v4149, %v4148
        %v4268 = vpack.c.b16 %v4151, %v4150
        %v4269 = vpack.c.b16 %v4153, %v4152
        %v4270 = vpack.c.b16 %v4155, %v4154
        %v4271 = vpack.c.b16 %v4157, %v4156
        %v4272 = vpack.c.b16 %v4159, %v4158
        %v4273 = vpack.c.b16 %v4161, %v4160
        %v4274 = vpack.c.b16 %v4163, %v4162
        %v4275 = vpack.c.b16 %v4165, %v4164
        %v4276 = vpack.c.b16 %v4167, %v4166
        %v4277 = vpack.c.b16 %v4169, %v4168
        %v4278 = vpack.c.b16 %v4171, %v4170
        %v4279 = vpack.c.b16 %v4173, %v4172
        %v4280 = vpack.c.b16 %v4175, %v4174
        %v4281 = vpack.c.b16 %v4177, %v4176
        %v4282 = vpack.c.b16 %v4179, %v4178
        %v4283 = vpack.c.b16 %v4181, %v4180
        %v4284 = vpack.c.b16 %v4183, %v4182
        %v4285 = vpack.c.b16 %v4185, %v4184
        %v4286 = vpack.c.b16 %v4187, %v4186
        %v4287 = vpack.c.b16 %v4189, %v4188
        %v4288 = vpack.c.b16 %v4191, %v4190
        %v4289 = vpack.c.b16 %v4193, %v4192
        %v4290 = vpack.c.b16 %v4195, %v4194
        %v4291 = vpack.c.b16 %v4197, %v4196
        %v4292 = vpack.c.b16 %v4199, %v4198
        %v4293 = vpack.c.b16 %v4201, %v4200
        %v4294 = vpack.c.b16 %v4203, %v4202
        %v4295 = vpack.c.b16 %v4205, %v4204
        %v4296 = vpack.c.b16 %v4207, %v4206
        %v4297 = vpack.c.b16 %v4209, %v4208
        %v4298 = vpack.c.b16 %v4211, %v4210
        %v4299 = vpack.c.b16 %v4213, %v4212
        %v4300 = vpack.c.b16 %v4215, %v4214
        %v4301 = vpack.c.b16 %v4217, %v4216
        %v4302 = vpack.c.b16 %v4219, %v4218
        %v4303 = vpack.c.b16 %v4221, %v4220
        %v4304 = vpack.c.b16 %v4223, %v4222
        %v4305 = vpack.c.b16 %v4225, %v4224
        %v4306 = vpack.c.b16 %v4227, %v4226
        %v4307 = vpack.c.b16 %v4229, %v4228
        %v4308 = vpack.c.b16 %v4231, %v4230
        %v4309 = vpack.c.b16 %v4233, %v4232
        %v4310 = vpack.c.b16 %v4235, %v4234
        %v4311 = vpack.c.b16 %v4237, %v4236
        %v4312 = vpack.c.b16 %v4239, %v4238
        %v4313 = vpack.c.b16 %v4241, %v4240
        %4386 = vmatpush.bf16.msra.mxu0 %v4249
        %4387 = vmatpush.bf16.msra.mxu0 %v4248
        %4388 = vmatpush.bf16.msra.mxu0 %v4247
        %4389 = vmatpush.bf16.msra.mxu0 %v4246
        %4390 = vmatpush.bf16.msra.mxu0 %v4245
        %4391 = vmatpush.bf16.msra.mxu0 %v4244
        %4392 = vmatpush.bf16.msra.mxu0 %v4243
        %4393 = vmatpush.bf16.msra.mxu0 %v4242
        %4394 = vmatmul.bf16.gmra.mxu0 %v3666
        %v4395 = vpop.f32.mrf.mxu0
        %v4396 = vadd.f32 %v3216, %v4395
        %v4397 = vpop.f32.mrf.mxu0
        %v4398 = vadd.f32 %v3216, %v4397
        %4399 = vmatmul.bf16.gmra.mxu0 %v3675
        %v4400 = vpop.f32.mrf.mxu0
        %v4401 = vadd.f32 %v3216, %v4400
        %v4402 = vpop.f32.mrf.mxu0
        %v4403 = vadd.f32 %v3216, %v4402
        %4404 = vmatmul.bf16.gmra.mxu0 %v3684
        %v4405 = vpop.f32.mrf.mxu0
        %v4406 = vadd.f32 %v3216, %v4405
        %v4407 = vpop.f32.mrf.mxu0
        %v4408 = vadd.f32 %v3216, %v4407
        %4409 = vmatmul.bf16.gmra.mxu0 %v3693
        %v4410 = vpop.f32.mrf.mxu0
        %v4411 = vadd.f32 %v3216, %v4410
        %v4412 = vpop.f32.mrf.mxu0
        %v4413 = vadd.f32 %v3216, %v4412
        %4414 = vmatmul.bf16.gmra.mxu0 %v3702
        %v4415 = vpop.f32.mrf.mxu0
        %v4416 = vadd.f32 %v3216, %v4415
        %v4417 = vpop.f32.mrf.mxu0
        %v4418 = vadd.f32 %v3216, %v4417
        %4419 = vmatmul.bf16.gmra.mxu0 %v3711
        %v4420 = vpop.f32.mrf.mxu0
        %v4421 = vadd.f32 %v3216, %v4420
        %v4422 = vpop.f32.mrf.mxu0
        %v4423 = vadd.f32 %v3216, %v4422
        %4424 = vmatmul.bf16.gmra.mxu0 %v3720
        %v4425 = vpop.f32.mrf.mxu0
        %v4426 = vadd.f32 %v3216, %v4425
        %v4427 = vpop.f32.mrf.mxu0
        %v4428 = vadd.f32 %v3216, %v4427
        %4429 = vmatmul.bf16.gmra.mxu0 %v3729
        %v4430 = vpop.f32.mrf.mxu0
        %v4431 = vadd.f32 %v3216, %v4430
        %v4432 = vpop.f32.mrf.mxu0
        %v4433 = vadd.f32 %v3216, %v4432
        %4434 = vmatmul.bf16.gmra.mxu0 %v3738
        %v4435 = vpop.f32.mrf.mxu0
        %v4436 = vadd.f32 %v3216, %v4435
        %v4437 = vpop.f32.mrf.mxu0
        %v4438 = vadd.f32 %v3216, %v4437
        %4439 = vmatmul.bf16.gmra.mxu0 %v3747
        %v4440 = vpop.f32.mrf.mxu0
        %v4441 = vadd.f32 %v3216, %v4440
        %v4442 = vpop.f32.mrf.mxu0
        %v4443 = vadd.f32 %v3216, %v4442
        %4444 = vmatmul.bf16.gmra.mxu0 %v3756
        %v4445 = vpop.f32.mrf.mxu0
        %v4446 = vadd.f32 %v3216, %v4445
        %v4447 = vpop.f32.mrf.mxu0
        %v4448 = vadd.f32 %v3216, %v4447
        %4449 = vmatmul.bf16.gmra.mxu0 %v3765
        %v4450 = vpop.f32.mrf.mxu0
        %v4451 = vadd.f32 %v3216, %v4450
        %v4452 = vpop.f32.mrf.mxu0
        %v4453 = vadd.f32 %v3216, %v4452
        %4454 = vmatmul.bf16.gmra.mxu0 %v3774
        %v4455 = vpop.f32.mrf.mxu0
        %v4456 = vadd.f32 %v3216, %v4455
        %v4457 = vpop.f32.mrf.mxu0
        %v4458 = vadd.f32 %v3216, %v4457
        %4459 = vmatmul.bf16.gmra.mxu0 %v3783
        %v4460 = vpop.f32.mrf.mxu0
        %v4461 = vadd.f32 %v3216, %v4460
        %v4462 = vpop.f32.mrf.mxu0
        %v4463 = vadd.f32 %v3216, %v4462
        %4464 = vmatmul.bf16.gmra.mxu0 %v3792
        %v4465 = vpop.f32.mrf.mxu0
        %v4466 = vadd.f32 %v3216, %v4465
        %v4467 = vpop.f32.mrf.mxu0
        %v4468 = vadd.f32 %v3216, %v4467
        %4469 = vmatmul.bf16.gmra.mxu0 %v3801
        %v4470 = vpop.f32.mrf.mxu0
        %v4471 = vadd.f32 %v3216, %v4470
        %v4472 = vpop.f32.mrf.mxu0
        %v4473 = vadd.f32 %v3216, %v4472
        %4474 = vdwg.mxu0
        %4475 = vmatpush.bf16.msra.mxu0 %v4257
        %4476 = vmatpush.bf16.msra.mxu0 %v4256
        %4477 = vmatpush.bf16.msra.mxu0 %v4255
        %4478 = vmatpush.bf16.msra.mxu0 %v4254
        %4479 = vmatpush.bf16.msra.mxu0 %v4253
        %4480 = vmatpush.bf16.msra.mxu0 %v4252
        %4481 = vmatpush.bf16.msra.mxu0 %v4251
        %4482 = vmatpush.bf16.msra.mxu0 %v4250
        %4483 = vmatmul.bf16.gmra.mxu0 %v3667
        %v4484 = vpop.f32.mrf.mxu0
        %v4485 = vadd.f32 %v4396, %v4484
        %v4486 = vpop.f32.mrf.mxu0
        %v4487 = vadd.f32 %v4398, %v4486
        %4488 = vmatmul.bf16.gmra.mxu0 %v3676
        %v4489 = vpop.f32.mrf.mxu0
        %v4490 = vadd.f32 %v4401, %v4489
        %v4491 = vpop.f32.mrf.mxu0
        %v4492 = vadd.f32 %v4403, %v4491
        %4493 = vmatmul.bf16.gmra.mxu0 %v3685
        %v4494 = vpop.f32.mrf.mxu0
        %v4495 = vadd.f32 %v4406, %v4494
        %v4496 = vpop.f32.mrf.mxu0
        %v4497 = vadd.f32 %v4408, %v4496
        %4498 = vmatmul.bf16.gmra.mxu0 %v3694
        %v4499 = vpop.f32.mrf.mxu0
        %v4500 = vadd.f32 %v4411, %v4499
        %v4501 = vpop.f32.mrf.mxu0
        %v4502 = vadd.f32 %v4413, %v4501
        %4503 = vmatmul.bf16.gmra.mxu0 %v3703
        %v4504 = vpop.f32.mrf.mxu0
        %v4505 = vadd.f32 %v4416, %v4504
        %v4506 = vpop.f32.mrf.mxu0
        %v4507 = vadd.f32 %v4418, %v4506
        %4508 = vmatmul.bf16.gmra.mxu0 %v3712
        %v4509 = vpop.f32.mrf.mxu0
        %v4510 = vadd.f32 %v4421, %v4509
        %v4511 = vpop.f32.mrf.mxu0
        %v4512 = vadd.f32 %v4423, %v4511
        %4513 = vmatmul.bf16.gmra.mxu0 %v3721
        %v4514 = vpop.f32.mrf.mxu0
        %v4515 = vadd.f32 %v4426, %v4514
        %v4516 = vpop.f32.mrf.mxu0
        %v4517 = vadd.f32 %v4428, %v4516
        %4518 = vmatmul.bf16.gmra.mxu0 %v3730
        %v4519 = vpop.f32.mrf.mxu0
        %v4520 = vadd.f32 %v4431, %v4519
        %v4521 = vpop.f32.mrf.mxu0
        %v4522 = vadd.f32 %v4433, %v4521
        %4523 = vmatmul.bf16.gmra.mxu0 %v3739
        %v4524 = vpop.f32.mrf.mxu0
        %v4525 = vadd.f32 %v4436, %v4524
        %v4526 = vpop.f32.mrf.mxu0
        %v4527 = vadd.f32 %v4438, %v4526
        %4528 = vmatmul.bf16.gmra.mxu0 %v3748
        %v4529 = vpop.f32.mrf.mxu0
        %v4530 = vadd.f32 %v4441, %v4529
        %v4531 = vpop.f32.mrf.mxu0
        %v4532 = vadd.f32 %v4443, %v4531
        %4533 = vmatmul.bf16.gmra.mxu0 %v3757
        %v4534 = vpop.f32.mrf.mxu0
        %v4535 = vadd.f32 %v4446, %v4534
        %v4536 = vpop.f32.mrf.mxu0
        %v4537 = vadd.f32 %v4448, %v4536
        %4538 = vmatmul.bf16.gmra.mxu0 %v3766
        %v4539 = vpop.f32.mrf.mxu0
        %v4540 = vadd.f32 %v4451, %v4539
        %v4541 = vpop.f32.mrf.mxu0
        %v4542 = vadd.f32 %v4453, %v4541
        %4543 = vmatmul.bf16.gmra.mxu0 %v3775
        %v4544 = vpop.f32.mrf.mxu0
        %v4545 = vadd.f32 %v4456, %v4544
        %v4546 = vpop.f32.mrf.mxu0
        %v4547 = vadd.f32 %v4458, %v4546
        %4548 = vmatmul.bf16.gmra.mxu0 %v3784
        %v4549 = vpop.f32.mrf.mxu0
        %v4550 = vadd.f32 %v4461, %v4549
        %v4551 = vpop.f32.mrf.mxu0
        %v4552 = vadd.f32 %v4463, %v4551
        %4553 = vmatmul.bf16.gmra.mxu0 %v3793
        %v4554 = vpop.f32.mrf.mxu0
        %v4555 = vadd.f32 %v4466, %v4554
        %v4556 = vpop.f32.mrf.mxu0
        %v4557 = vadd.f32 %v4468, %v4556
        %4558 = vmatmul.bf16.gmra.mxu0 %v3802
        %v4559 = vpop.f32.mrf.mxu0
        %v4560 = vadd.f32 %v4471, %v4559
        %v4561 = vpop.f32.mrf.mxu0
        %v4562 = vadd.f32 %v4473, %v4561
        %4563 = vdwg.mxu0
        %4564 = vmatpush.bf16.msra.mxu0 %v4265
        %4565 = vmatpush.bf16.msra.mxu0 %v4264
        %4566 = vmatpush.bf16.msra.mxu0 %v4263
        %4567 = vmatpush.bf16.msra.mxu0 %v4262
        %4568 = vmatpush.bf16.msra.mxu0 %v4261
        %4569 = vmatpush.bf16.msra.mxu0 %v4260
        %4570 = vmatpush.bf16.msra.mxu0 %v4259
        %4571 = vmatpush.bf16.msra.mxu0 %v4258
        %4572 = vmatmul.bf16.gmra.mxu0 %v3668
        %v4573 = vpop.f32.mrf.mxu0
        %v4574 = vadd.f32 %v4485, %v4573
        %v4575 = vpop.f32.mrf.mxu0
        %v4576 = vadd.f32 %v4487, %v4575
        %4577 = vmatmul.bf16.gmra.mxu0 %v3677
        %v4578 = vpop.f32.mrf.mxu0
        %v4579 = vadd.f32 %v4490, %v4578
        %v4580 = vpop.f32.mrf.mxu0
        %v4581 = vadd.f32 %v4492, %v4580
        %4582 = vmatmul.bf16.gmra.mxu0 %v3686
        %v4583 = vpop.f32.mrf.mxu0
        %v4584 = vadd.f32 %v4495, %v4583
        %v4585 = vpop.f32.mrf.mxu0
        %v4586 = vadd.f32 %v4497, %v4585
        %4587 = vmatmul.bf16.gmra.mxu0 %v3695
        %v4588 = vpop.f32.mrf.mxu0
        %v4589 = vadd.f32 %v4500, %v4588
        %v4590 = vpop.f32.mrf.mxu0
        %v4591 = vadd.f32 %v4502, %v4590
        %4592 = vmatmul.bf16.gmra.mxu0 %v3704
        %v4593 = vpop.f32.mrf.mxu0
        %v4594 = vadd.f32 %v4505, %v4593
        %v4595 = vpop.f32.mrf.mxu0
        %v4596 = vadd.f32 %v4507, %v4595
        %4597 = vmatmul.bf16.gmra.mxu0 %v3713
        %v4598 = vpop.f32.mrf.mxu0
        %v4599 = vadd.f32 %v4510, %v4598
        %v4600 = vpop.f32.mrf.mxu0
        %v4601 = vadd.f32 %v4512, %v4600
        %4602 = vmatmul.bf16.gmra.mxu0 %v3722
        %v4603 = vpop.f32.mrf.mxu0
        %v4604 = vadd.f32 %v4515, %v4603
        %v4605 = vpop.f32.mrf.mxu0
        %v4606 = vadd.f32 %v4517, %v4605
        %4607 = vmatmul.bf16.gmra.mxu0 %v3731
        %v4608 = vpop.f32.mrf.mxu0
        %v4609 = vadd.f32 %v4520, %v4608
        %v4610 = vpop.f32.mrf.mxu0
        %v4611 = vadd.f32 %v4522, %v4610
        %4612 = vmatmul.bf16.gmra.mxu0 %v3740
        %v4613 = vpop.f32.mrf.mxu0
        %v4614 = vadd.f32 %v4525, %v4613
        %v4615 = vpop.f32.mrf.mxu0
        %v4616 = vadd.f32 %v4527, %v4615
        %4617 = vmatmul.bf16.gmra.mxu0 %v3749
        %v4618 = vpop.f32.mrf.mxu0
        %v4619 = vadd.f32 %v4530, %v4618
        %v4620 = vpop.f32.mrf.mxu0
        %v4621 = vadd.f32 %v4532, %v4620
        %4622 = vmatmul.bf16.gmra.mxu0 %v3758
        %v4623 = vpop.f32.mrf.mxu0
        %v4624 = vadd.f32 %v4535, %v4623
        %v4625 = vpop.f32.mrf.mxu0
        %v4626 = vadd.f32 %v4537, %v4625
        %4627 = vmatmul.bf16.gmra.mxu0 %v3767
        %v4628 = vpop.f32.mrf.mxu0
        %v4629 = vadd.f32 %v4540, %v4628
        %v4630 = vpop.f32.mrf.mxu0
        %v4631 = vadd.f32 %v4542, %v4630
        %4632 = vmatmul.bf16.gmra.mxu0 %v3776
        %v4633 = vpop.f32.mrf.mxu0
        %v4634 = vadd.f32 %v4545, %v4633
        %v4635 = vpop.f32.mrf.mxu0
        %v4636 = vadd.f32 %v4547, %v4635
        %4637 = vmatmul.bf16.gmra.mxu0 %v3785
        %v4638 = vpop.f32.mrf.mxu0
        %v4639 = vadd.f32 %v4550, %v4638
        %v4640 = vpop.f32.mrf.mxu0
        %v4641 = vadd.f32 %v4552, %v4640
        %4642 = vmatmul.bf16.gmra.mxu0 %v3794
        %v4643 = vpop.f32.mrf.mxu0
        %v4644 = vadd.f32 %v4555, %v4643
        %v4645 = vpop.f32.mrf.mxu0
        %v4646 = vadd.f32 %v4557, %v4645
        %4647 = vmatmul.bf16.gmra.mxu0 %v3803
        %v4648 = vpop.f32.mrf.mxu0
        %v4649 = vadd.f32 %v4560, %v4648
        %v4650 = vpop.f32.mrf.mxu0
        %v4651 = vadd.f32 %v4562, %v4650
        %4652 = vdwg.mxu0
        %4653 = vmatpush.bf16.msra.mxu0 %v4273
        %4654 = vmatpush.bf16.msra.mxu0 %v4272
        %4655 = vmatpush.bf16.msra.mxu0 %v4271
        %4656 = vmatpush.bf16.msra.mxu0 %v4270
        %4657 = vmatpush.bf16.msra.mxu0 %v4269
        %4658 = vmatpush.bf16.msra.mxu0 %v4268
        %4659 = vmatpush.bf16.msra.mxu0 %v4267
        %4660 = vmatpush.bf16.msra.mxu0 %v4266
        %4661 = vmatmul.bf16.gmra.mxu0 %v3669
        %v4662 = vpop.f32.mrf.mxu0
        %v4663 = vadd.f32 %v4574, %v4662
        %v4664 = vpop.f32.mrf.mxu0
        %v4665 = vadd.f32 %v4576, %v4664
        %4666 = vmatmul.bf16.gmra.mxu0 %v3678
        %v4667 = vpop.f32.mrf.mxu0
        %v4668 = vadd.f32 %v4579, %v4667
        %v4669 = vpop.f32.mrf.mxu0
        %v4670 = vadd.f32 %v4581, %v4669
        %4671 = vmatmul.bf16.gmra.mxu0 %v3687
        %v4672 = vpop.f32.mrf.mxu0
        %v4673 = vadd.f32 %v4584, %v4672
        %v4674 = vpop.f32.mrf.mxu0
        %v4675 = vadd.f32 %v4586, %v4674
        %4676 = vmatmul.bf16.gmra.mxu0 %v3696
        %v4677 = vpop.f32.mrf.mxu0
        %v4678 = vadd.f32 %v4589, %v4677
        %v4679 = vpop.f32.mrf.mxu0
        %v4680 = vadd.f32 %v4591, %v4679
        %4681 = vmatmul.bf16.gmra.mxu0 %v3705
        %v4682 = vpop.f32.mrf.mxu0
        %v4683 = vadd.f32 %v4594, %v4682
        %v4684 = vpop.f32.mrf.mxu0
        %v4685 = vadd.f32 %v4596, %v4684
        %4686 = vmatmul.bf16.gmra.mxu0 %v3714
        %v4687 = vpop.f32.mrf.mxu0
        %v4688 = vadd.f32 %v4599, %v4687
        %v4689 = vpop.f32.mrf.mxu0
        %v4690 = vadd.f32 %v4601, %v4689
        %4691 = vmatmul.bf16.gmra.mxu0 %v3723
        %v4692 = vpop.f32.mrf.mxu0
        %v4693 = vadd.f32 %v4604, %v4692
        %v4694 = vpop.f32.mrf.mxu0
        %v4695 = vadd.f32 %v4606, %v4694
        %4696 = vmatmul.bf16.gmra.mxu0 %v3732
        %v4697 = vpop.f32.mrf.mxu0
        %v4698 = vadd.f32 %v4609, %v4697
        %v4699 = vpop.f32.mrf.mxu0
        %v4700 = vadd.f32 %v4611, %v4699
        %4701 = vmatmul.bf16.gmra.mxu0 %v3741
        %v4702 = vpop.f32.mrf.mxu0
        %v4703 = vadd.f32 %v4614, %v4702
        %v4704 = vpop.f32.mrf.mxu0
        %v4705 = vadd.f32 %v4616, %v4704
        %4706 = vmatmul.bf16.gmra.mxu0 %v3750
        %v4707 = vpop.f32.mrf.mxu0
        %v4708 = vadd.f32 %v4619, %v4707
        %v4709 = vpop.f32.mrf.mxu0
        %v4710 = vadd.f32 %v4621, %v4709
        %4711 = vmatmul.bf16.gmra.mxu0 %v3759
        %v4712 = vpop.f32.mrf.mxu0
        %v4713 = vadd.f32 %v4624, %v4712
        %v4714 = vpop.f32.mrf.mxu0
        %v4715 = vadd.f32 %v4626, %v4714
        %4716 = vmatmul.bf16.gmra.mxu0 %v3768
        %v4717 = vpop.f32.mrf.mxu0
        %v4718 = vadd.f32 %v4629, %v4717
        %v4719 = vpop.f32.mrf.mxu0
        %v4720 = vadd.f32 %v4631, %v4719
        %4721 = vmatmul.bf16.gmra.mxu0 %v3777
        %v4722 = vpop.f32.mrf.mxu0
        %v4723 = vadd.f32 %v4634, %v4722
        %v4724 = vpop.f32.mrf.mxu0
        %v4725 = vadd.f32 %v4636, %v4724
        %4726 = vmatmul.bf16.gmra.mxu0 %v3786
        %v4727 = vpop.f32.mrf.mxu0
        %v4728 = vadd.f32 %v4639, %v4727
        %v4729 = vpop.f32.mrf.mxu0
        %v4730 = vadd.f32 %v4641, %v4729
        %4731 = vmatmul.bf16.gmra.mxu0 %v3795
        %v4732 = vpop.f32.mrf.mxu0
        %v4733 = vadd.f32 %v4644, %v4732
        %v4734 = vpop.f32.mrf.mxu0
        %v4735 = vadd.f32 %v4646, %v4734
        %4736 = vmatmul.bf16.gmra.mxu0 %v3804
        %v4737 = vpop.f32.mrf.mxu0
        %v4738 = vadd.f32 %v4649, %v4737
        %v4739 = vpop.f32.mrf.mxu0
        %v4740 = vadd.f32 %v4651, %v4739
        %4741 = vdwg.mxu0
        %4742 = vmatpush.bf16.msra.mxu0 %v4281
        %4743 = vmatpush.bf16.msra.mxu0 %v4280
        %4744 = vmatpush.bf16.msra.mxu0 %v4279
        %4745 = vmatpush.bf16.msra.mxu0 %v4278
        %4746 = vmatpush.bf16.msra.mxu0 %v4277
        %4747 = vmatpush.bf16.msra.mxu0 %v4276
        %4748 = vmatpush.bf16.msra.mxu0 %v4275
        %4749 = vmatpush.bf16.msra.mxu0 %v4274
        %4750 = vmatmul.bf16.gmra.mxu0 %v3670
        %v4751 = vpop.f32.mrf.mxu0
        %v4752 = vadd.f32 %v4663, %v4751
        %v4753 = vpop.f32.mrf.mxu0
        %v4754 = vadd.f32 %v4665, %v4753
        %4755 = vmatmul.bf16.gmra.mxu0 %v3679
        %v4756 = vpop.f32.mrf.mxu0
        %v4757 = vadd.f32 %v4668, %v4756
        %v4758 = vpop.f32.mrf.mxu0
        %v4759 = vadd.f32 %v4670, %v4758
        %4760 = vmatmul.bf16.gmra.mxu0 %v3688
        %v4761 = vpop.f32.mrf.mxu0
        %v4762 = vadd.f32 %v4673, %v4761
        %v4763 = vpop.f32.mrf.mxu0
        %v4764 = vadd.f32 %v4675, %v4763
        %4765 = vmatmul.bf16.gmra.mxu0 %v3697
        %v4766 = vpop.f32.mrf.mxu0
        %v4767 = vadd.f32 %v4678, %v4766
        %v4768 = vpop.f32.mrf.mxu0
        %v4769 = vadd.f32 %v4680, %v4768
        %4770 = vmatmul.bf16.gmra.mxu0 %v3706
        %v4771 = vpop.f32.mrf.mxu0
        %v4772 = vadd.f32 %v4683, %v4771
        %v4773 = vpop.f32.mrf.mxu0
        %v4774 = vadd.f32 %v4685, %v4773
        %4775 = vmatmul.bf16.gmra.mxu0 %v3715
        %v4776 = vpop.f32.mrf.mxu0
        %v4777 = vadd.f32 %v4688, %v4776
        %v4778 = vpop.f32.mrf.mxu0
        %v4779 = vadd.f32 %v4690, %v4778
        %4780 = vmatmul.bf16.gmra.mxu0 %v3724
        %v4781 = vpop.f32.mrf.mxu0
        %v4782 = vadd.f32 %v4693, %v4781
        %v4783 = vpop.f32.mrf.mxu0
        %v4784 = vadd.f32 %v4695, %v4783
        %4785 = vmatmul.bf16.gmra.mxu0 %v3733
        %v4786 = vpop.f32.mrf.mxu0
        %v4787 = vadd.f32 %v4698, %v4786
        %v4788 = vpop.f32.mrf.mxu0
        %v4789 = vadd.f32 %v4700, %v4788
        %4790 = vmatmul.bf16.gmra.mxu0 %v3742
        %v4791 = vpop.f32.mrf.mxu0
        %v4792 = vadd.f32 %v4703, %v4791
        %v4793 = vpop.f32.mrf.mxu0
        %v4794 = vadd.f32 %v4705, %v4793
        %4795 = vmatmul.bf16.gmra.mxu0 %v3751
        %v4796 = vpop.f32.mrf.mxu0
        %v4797 = vadd.f32 %v4708, %v4796
        %v4798 = vpop.f32.mrf.mxu0
        %v4799 = vadd.f32 %v4710, %v4798
        %4800 = vmatmul.bf16.gmra.mxu0 %v3760
        %v4801 = vpop.f32.mrf.mxu0
        %v4802 = vadd.f32 %v4713, %v4801
        %v4803 = vpop.f32.mrf.mxu0
        %v4804 = vadd.f32 %v4715, %v4803
        %4805 = vmatmul.bf16.gmra.mxu0 %v3769
        %v4806 = vpop.f32.mrf.mxu0
        %v4807 = vadd.f32 %v4718, %v4806
        %v4808 = vpop.f32.mrf.mxu0
        %v4809 = vadd.f32 %v4720, %v4808
        %4810 = vmatmul.bf16.gmra.mxu0 %v3778
        %v4811 = vpop.f32.mrf.mxu0
        %v4812 = vadd.f32 %v4723, %v4811
        %v4813 = vpop.f32.mrf.mxu0
        %v4814 = vadd.f32 %v4725, %v4813
        %4815 = vmatmul.bf16.gmra.mxu0 %v3787
        %v4816 = vpop.f32.mrf.mxu0
        %v4817 = vadd.f32 %v4728, %v4816
        %v4818 = vpop.f32.mrf.mxu0
        %v4819 = vadd.f32 %v4730, %v4818
        %4820 = vmatmul.bf16.gmra.mxu0 %v3796
        %v4821 = vpop.f32.mrf.mxu0
        %v4822 = vadd.f32 %v4733, %v4821
        %v4823 = vpop.f32.mrf.mxu0
        %v4824 = vadd.f32 %v4735, %v4823
        %4825 = vmatmul.bf16.gmra.mxu0 %v3805
        %v4826 = vpop.f32.mrf.mxu0
        %v4827 = vadd.f32 %v4738, %v4826
        %v4828 = vpop.f32.mrf.mxu0
        %v4829 = vadd.f32 %v4740, %v4828
        %4830 = vdwg.mxu0
        %4831 = vmatpush.bf16.msra.mxu0 %v4289
        %4832 = vmatpush.bf16.msra.mxu0 %v4288
        %4833 = vmatpush.bf16.msra.mxu0 %v4287
        %4834 = vmatpush.bf16.msra.mxu0 %v4286
        %4835 = vmatpush.bf16.msra.mxu0 %v4285
        %4836 = vmatpush.bf16.msra.mxu0 %v4284
        %4837 = vmatpush.bf16.msra.mxu0 %v4283
        %4838 = vmatpush.bf16.msra.mxu0 %v4282
        %4839 = vmatmul.bf16.gmra.mxu0 %v3671
        %v4840 = vpop.f32.mrf.mxu0
        %v4841 = vadd.f32 %v4752, %v4840
        %v4842 = vpop.f32.mrf.mxu0
        %v4843 = vadd.f32 %v4754, %v4842
        %4844 = vmatmul.bf16.gmra.mxu0 %v3680
        %v4845 = vpop.f32.mrf.mxu0
        %v4846 = vadd.f32 %v4757, %v4845
        %v4847 = vpop.f32.mrf.mxu0
        %v4848 = vadd.f32 %v4759, %v4847
        %4849 = vmatmul.bf16.gmra.mxu0 %v3689
        %v4850 = vpop.f32.mrf.mxu0
        %v4851 = vadd.f32 %v4762, %v4850
        %v4852 = vpop.f32.mrf.mxu0
        %v4853 = vadd.f32 %v4764, %v4852
        %4854 = vmatmul.bf16.gmra.mxu0 %v3698
        %v4855 = vpop.f32.mrf.mxu0
        %v4856 = vadd.f32 %v4767, %v4855
        %v4857 = vpop.f32.mrf.mxu0
        %v4858 = vadd.f32 %v4769, %v4857
        %4859 = vmatmul.bf16.gmra.mxu0 %v3707
        %v4860 = vpop.f32.mrf.mxu0
        %v4861 = vadd.f32 %v4772, %v4860
        %v4862 = vpop.f32.mrf.mxu0
        %v4863 = vadd.f32 %v4774, %v4862
        %4864 = vmatmul.bf16.gmra.mxu0 %v3716
        %v4865 = vpop.f32.mrf.mxu0
        %v4866 = vadd.f32 %v4777, %v4865
        %v4867 = vpop.f32.mrf.mxu0
        %v4868 = vadd.f32 %v4779, %v4867
        %4869 = vmatmul.bf16.gmra.mxu0 %v3725
        %v4870 = vpop.f32.mrf.mxu0
        %v4871 = vadd.f32 %v4782, %v4870
        %v4872 = vpop.f32.mrf.mxu0
        %v4873 = vadd.f32 %v4784, %v4872
        %4874 = vmatmul.bf16.gmra.mxu0 %v3734
        %v4875 = vpop.f32.mrf.mxu0
        %v4876 = vadd.f32 %v4787, %v4875
        %v4877 = vpop.f32.mrf.mxu0
        %v4878 = vadd.f32 %v4789, %v4877
        %4879 = vmatmul.bf16.gmra.mxu0 %v3743
        %v4880 = vpop.f32.mrf.mxu0
        %v4881 = vadd.f32 %v4792, %v4880
        %v4882 = vpop.f32.mrf.mxu0
        %v4883 = vadd.f32 %v4794, %v4882
        %4884 = vmatmul.bf16.gmra.mxu0 %v3752
        %v4885 = vpop.f32.mrf.mxu0
        %v4886 = vadd.f32 %v4797, %v4885
        %v4887 = vpop.f32.mrf.mxu0
        %v4888 = vadd.f32 %v4799, %v4887
        %4889 = vmatmul.bf16.gmra.mxu0 %v3761
        %v4890 = vpop.f32.mrf.mxu0
        %v4891 = vadd.f32 %v4802, %v4890
        %v4892 = vpop.f32.mrf.mxu0
        %v4893 = vadd.f32 %v4804, %v4892
        %4894 = vmatmul.bf16.gmra.mxu0 %v3770
        %v4895 = vpop.f32.mrf.mxu0
        %v4896 = vadd.f32 %v4807, %v4895
        %v4897 = vpop.f32.mrf.mxu0
        %v4898 = vadd.f32 %v4809, %v4897
        %4899 = vmatmul.bf16.gmra.mxu0 %v3779
        %v4900 = vpop.f32.mrf.mxu0
        %v4901 = vadd.f32 %v4812, %v4900
        %v4902 = vpop.f32.mrf.mxu0
        %v4903 = vadd.f32 %v4814, %v4902
        %4904 = vmatmul.bf16.gmra.mxu0 %v3788
        %v4905 = vpop.f32.mrf.mxu0
        %v4906 = vadd.f32 %v4817, %v4905
        %v4907 = vpop.f32.mrf.mxu0
        %v4908 = vadd.f32 %v4819, %v4907
        %4909 = vmatmul.bf16.gmra.mxu0 %v3797
        %v4910 = vpop.f32.mrf.mxu0
        %v4911 = vadd.f32 %v4822, %v4910
        %v4912 = vpop.f32.mrf.mxu0
        %v4913 = vadd.f32 %v4824, %v4912
        %4914 = vmatmul.bf16.gmra.mxu0 %v3806
        %v4915 = vpop.f32.mrf.mxu0
        %v4916 = vadd.f32 %v4827, %v4915
        %v4917 = vpop.f32.mrf.mxu0
        %v4918 = vadd.f32 %v4829, %v4917
        %4919 = vdwg.mxu0
        %4920 = vmatpush.bf16.msra.mxu0 %v4297
        %4921 = vmatpush.bf16.msra.mxu0 %v4296
        %4922 = vmatpush.bf16.msra.mxu0 %v4295
        %4923 = vmatpush.bf16.msra.mxu0 %v4294
        %4924 = vmatpush.bf16.msra.mxu0 %v4293
        %4925 = vmatpush.bf16.msra.mxu0 %v4292
        %4926 = vmatpush.bf16.msra.mxu0 %v4291
        %4927 = vmatpush.bf16.msra.mxu0 %v4290
        %4928 = vmatmul.bf16.gmra.mxu0 %v3672
        %v4929 = vpop.f32.mrf.mxu0
        %v4930 = vadd.f32 %v4841, %v4929
        %v4931 = vpop.f32.mrf.mxu0
        %v4932 = vadd.f32 %v4843, %v4931
        %4933 = vmatmul.bf16.gmra.mxu0 %v3681
        %v4934 = vpop.f32.mrf.mxu0
        %v4935 = vadd.f32 %v4846, %v4934
        %v4936 = vpop.f32.mrf.mxu0
        %v4937 = vadd.f32 %v4848, %v4936
        %4938 = vmatmul.bf16.gmra.mxu0 %v3690
        %v4939 = vpop.f32.mrf.mxu0
        %v4940 = vadd.f32 %v4851, %v4939
        %v4941 = vpop.f32.mrf.mxu0
        %v4942 = vadd.f32 %v4853, %v4941
        %4943 = vmatmul.bf16.gmra.mxu0 %v3699
        %v4944 = vpop.f32.mrf.mxu0
        %v4945 = vadd.f32 %v4856, %v4944
        %v4946 = vpop.f32.mrf.mxu0
        %v4947 = vadd.f32 %v4858, %v4946
        %4948 = vmatmul.bf16.gmra.mxu0 %v3708
        %v4949 = vpop.f32.mrf.mxu0
        %v4950 = vadd.f32 %v4861, %v4949
        %v4951 = vpop.f32.mrf.mxu0
        %v4952 = vadd.f32 %v4863, %v4951
        %4953 = vmatmul.bf16.gmra.mxu0 %v3717
        %v4954 = vpop.f32.mrf.mxu0
        %v4955 = vadd.f32 %v4866, %v4954
        %v4956 = vpop.f32.mrf.mxu0
        %v4957 = vadd.f32 %v4868, %v4956
        %4958 = vmatmul.bf16.gmra.mxu0 %v3726
        %v4959 = vpop.f32.mrf.mxu0
        %v4960 = vadd.f32 %v4871, %v4959
        %v4961 = vpop.f32.mrf.mxu0
        %v4962 = vadd.f32 %v4873, %v4961
        %4963 = vmatmul.bf16.gmra.mxu0 %v3735
        %v4964 = vpop.f32.mrf.mxu0
        %v4965 = vadd.f32 %v4876, %v4964
        %v4966 = vpop.f32.mrf.mxu0
        %v4967 = vadd.f32 %v4878, %v4966
        %4968 = vmatmul.bf16.gmra.mxu0 %v3744
        %v4969 = vpop.f32.mrf.mxu0
        %v4970 = vadd.f32 %v4881, %v4969
        %v4971 = vpop.f32.mrf.mxu0
        %v4972 = vadd.f32 %v4883, %v4971
        %4973 = vmatmul.bf16.gmra.mxu0 %v3753
        %v4974 = vpop.f32.mrf.mxu0
        %v4975 = vadd.f32 %v4886, %v4974
        %v4976 = vpop.f32.mrf.mxu0
        %v4977 = vadd.f32 %v4888, %v4976
        %4978 = vmatmul.bf16.gmra.mxu0 %v3762
        %v4979 = vpop.f32.mrf.mxu0
        %v4980 = vadd.f32 %v4891, %v4979
        %v4981 = vpop.f32.mrf.mxu0
        %v4982 = vadd.f32 %v4893, %v4981
        %4983 = vmatmul.bf16.gmra.mxu0 %v3771
        %v4984 = vpop.f32.mrf.mxu0
        %v4985 = vadd.f32 %v4896, %v4984
        %v4986 = vpop.f32.mrf.mxu0
        %v4987 = vadd.f32 %v4898, %v4986
        %4988 = vmatmul.bf16.gmra.mxu0 %v3780
        %v4989 = vpop.f32.mrf.mxu0
        %v4990 = vadd.f32 %v4901, %v4989
        %v4991 = vpop.f32.mrf.mxu0
        %v4992 = vadd.f32 %v4903, %v4991
        %4993 = vmatmul.bf16.gmra.mxu0 %v3789
        %v4994 = vpop.f32.mrf.mxu0
        %v4995 = vadd.f32 %v4906, %v4994
        %v4996 = vpop.f32.mrf.mxu0
        %v4997 = vadd.f32 %v4908, %v4996
        %4998 = vmatmul.bf16.gmra.mxu0 %v3798
        %v4999 = vpop.f32.mrf.mxu0
        %v5000 = vadd.f32 %v4911, %v4999
        %v5001 = vpop.f32.mrf.mxu0
        %v5002 = vadd.f32 %v4913, %v5001
        %5003 = vmatmul.bf16.gmra.mxu0 %v3807
        %v5004 = vpop.f32.mrf.mxu0
        %v5005 = vadd.f32 %v4916, %v5004
        %v5006 = vpop.f32.mrf.mxu0
        %v5007 = vadd.f32 %v4918, %v5006
        %5008 = vdwg.mxu0
        %5009 = vmatpush.bf16.msra.mxu0 %v4305
        %5010 = vmatpush.bf16.msra.mxu0 %v4304
        %5011 = vmatpush.bf16.msra.mxu0 %v4303
        %5012 = vmatpush.bf16.msra.mxu0 %v4302
        %5013 = vmatpush.bf16.msra.mxu0 %v4301
        %5014 = vmatpush.bf16.msra.mxu0 %v4300
        %5015 = vmatpush.bf16.msra.mxu0 %v4299
        %5016 = vmatpush.bf16.msra.mxu0 %v4298
        %5017 = vmatmul.bf16.gmra.mxu0 %v3673
        %v5018 = vpop.f32.mrf.mxu0
        %v5019 = vadd.f32 %v4930, %v5018
        %v5020 = vpop.f32.mrf.mxu0
        %v5021 = vadd.f32 %v4932, %v5020
        %5022 = vmatmul.bf16.gmra.mxu0 %v3682
        %v5023 = vpop.f32.mrf.mxu0
        %v5024 = vadd.f32 %v4935, %v5023
        %v5025 = vpop.f32.mrf.mxu0
        %v5026 = vadd.f32 %v4937, %v5025
        %5027 = vmatmul.bf16.gmra.mxu0 %v3691
        %v5028 = vpop.f32.mrf.mxu0
        %v5029 = vadd.f32 %v4940, %v5028
        %v5030 = vpop.f32.mrf.mxu0
        %v5031 = vadd.f32 %v4942, %v5030
        %5032 = vmatmul.bf16.gmra.mxu0 %v3700
        %v5033 = vpop.f32.mrf.mxu0
        %v5034 = vadd.f32 %v4945, %v5033
        %v5035 = vpop.f32.mrf.mxu0
        %v5036 = vadd.f32 %v4947, %v5035
        %5037 = vmatmul.bf16.gmra.mxu0 %v3709
        %v5038 = vpop.f32.mrf.mxu0
        %v5039 = vadd.f32 %v4950, %v5038
        %v5040 = vpop.f32.mrf.mxu0
        %v5041 = vadd.f32 %v4952, %v5040
        %5042 = vmatmul.bf16.gmra.mxu0 %v3718
        %v5043 = vpop.f32.mrf.mxu0
        %v5044 = vadd.f32 %v4955, %v5043
        %v5045 = vpop.f32.mrf.mxu0
        %v5046 = vadd.f32 %v4957, %v5045
        %5047 = vmatmul.bf16.gmra.mxu0 %v3727
        %v5048 = vpop.f32.mrf.mxu0
        %v5049 = vadd.f32 %v4960, %v5048
        %v5050 = vpop.f32.mrf.mxu0
        %v5051 = vadd.f32 %v4962, %v5050
        %5052 = vmatmul.bf16.gmra.mxu0 %v3736
        %v5053 = vpop.f32.mrf.mxu0
        %v5054 = vadd.f32 %v4965, %v5053
        %v5055 = vpop.f32.mrf.mxu0
        %v5056 = vadd.f32 %v4967, %v5055
        %5057 = vmatmul.bf16.gmra.mxu0 %v3745
        %v5058 = vpop.f32.mrf.mxu0
        %v5059 = vadd.f32 %v4970, %v5058
        %v5060 = vpop.f32.mrf.mxu0
        %v5061 = vadd.f32 %v4972, %v5060
        %5062 = vmatmul.bf16.gmra.mxu0 %v3754
        %v5063 = vpop.f32.mrf.mxu0
        %v5064 = vadd.f32 %v4975, %v5063
        %v5065 = vpop.f32.mrf.mxu0
        %v5066 = vadd.f32 %v4977, %v5065
        %5067 = vmatmul.bf16.gmra.mxu0 %v3763
        %v5068 = vpop.f32.mrf.mxu0
        %v5069 = vadd.f32 %v4980, %v5068
        %v5070 = vpop.f32.mrf.mxu0
        %v5071 = vadd.f32 %v4982, %v5070
        %5072 = vmatmul.bf16.gmra.mxu0 %v3772
        %v5073 = vpop.f32.mrf.mxu0
        %v5074 = vadd.f32 %v4985, %v5073
        %v5075 = vpop.f32.mrf.mxu0
        %v5076 = vadd.f32 %v4987, %v5075
        %5077 = vmatmul.bf16.gmra.mxu0 %v3781
        %v5078 = vpop.f32.mrf.mxu0
        %v5079 = vadd.f32 %v4990, %v5078
        %v5080 = vpop.f32.mrf.mxu0
        %v5081 = vadd.f32 %v4992, %v5080
        %5082 = vmatmul.bf16.gmra.mxu0 %v3790
        %v5083 = vpop.f32.mrf.mxu0
        %v5084 = vadd.f32 %v4995, %v5083
        %v5085 = vpop.f32.mrf.mxu0
        %v5086 = vadd.f32 %v4997, %v5085
        %5087 = vmatmul.bf16.gmra.mxu0 %v3799
        %v5088 = vpop.f32.mrf.mxu0
        %v5089 = vadd.f32 %v5000, %v5088
        %v5090 = vpop.f32.mrf.mxu0
        %v5091 = vadd.f32 %v5002, %v5090
        %5092 = vmatmul.bf16.gmra.mxu0 %v3808
        %v5093 = vpop.f32.mrf.mxu0
        %v5094 = vadd.f32 %v5005, %v5093
        %v5095 = vpop.f32.mrf.mxu0
        %v5096 = vadd.f32 %v5007, %v5095
        %5097 = vdwg.mxu0
        %5098 = vmatpush.bf16.msra.mxu0 %v4313
        %5099 = vmatpush.bf16.msra.mxu0 %v4312
        %5100 = vmatpush.bf16.msra.mxu0 %v4311
        %5101 = vmatpush.bf16.msra.mxu0 %v4310
        %5102 = vmatpush.bf16.msra.mxu0 %v4309
        %5103 = vmatpush.bf16.msra.mxu0 %v4308
        %5104 = vmatpush.bf16.msra.mxu0 %v4307
        %5105 = vmatpush.bf16.msra.mxu0 %v4306
        %5106 = vmatmul.bf16.gmra.mxu0 %v3674
        %v5107 = vpop.f32.mrf.mxu0
        %v5108 = vadd.f32 %v5019, %v5107
        %v5109 = vpop.f32.mrf.mxu0
        %v5110 = vadd.f32 %v5021, %v5109
        %5111 = vmatmul.bf16.gmra.mxu0 %v3683
        %v5112 = vpop.f32.mrf.mxu0
        %v5113 = vadd.f32 %v5024, %v5112
        %v5114 = vpop.f32.mrf.mxu0
        %v5115 = vadd.f32 %v5026, %v5114
        %5116 = vmatmul.bf16.gmra.mxu0 %v3692
        %v5117 = vpop.f32.mrf.mxu0
        %v5118 = vadd.f32 %v5029, %v5117
        %v5119 = vpop.f32.mrf.mxu0
        %v5120 = vadd.f32 %v5031, %v5119
        %5121 = vmatmul.bf16.gmra.mxu0 %v3701
        %v5122 = vpop.f32.mrf.mxu0
        %v5123 = vadd.f32 %v5034, %v5122
        %v5124 = vpop.f32.mrf.mxu0
        %v5125 = vadd.f32 %v5036, %v5124
        %5126 = vmatmul.bf16.gmra.mxu0 %v3710
        %v5127 = vpop.f32.mrf.mxu0
        %v5128 = vadd.f32 %v5039, %v5127
        %v5129 = vpop.f32.mrf.mxu0
        %v5130 = vadd.f32 %v5041, %v5129
        %5131 = vmatmul.bf16.gmra.mxu0 %v3719
        %v5132 = vpop.f32.mrf.mxu0
        %v5133 = vadd.f32 %v5044, %v5132
        %v5134 = vpop.f32.mrf.mxu0
        %v5135 = vadd.f32 %v5046, %v5134
        %5136 = vmatmul.bf16.gmra.mxu0 %v3728
        %v5137 = vpop.f32.mrf.mxu0
        %v5138 = vadd.f32 %v5049, %v5137
        %v5139 = vpop.f32.mrf.mxu0
        %v5140 = vadd.f32 %v5051, %v5139
        %5141 = vmatmul.bf16.gmra.mxu0 %v3737
        %v5142 = vpop.f32.mrf.mxu0
        %v5143 = vadd.f32 %v5054, %v5142
        %v5144 = vpop.f32.mrf.mxu0
        %v5145 = vadd.f32 %v5056, %v5144
        %5146 = vmatmul.bf16.gmra.mxu0 %v3746
        %v5147 = vpop.f32.mrf.mxu0
        %v5148 = vadd.f32 %v5059, %v5147
        %v5149 = vpop.f32.mrf.mxu0
        %v5150 = vadd.f32 %v5061, %v5149
        %5151 = vmatmul.bf16.gmra.mxu0 %v3755
        %v5152 = vpop.f32.mrf.mxu0
        %v5153 = vadd.f32 %v5064, %v5152
        %v5154 = vpop.f32.mrf.mxu0
        %v5155 = vadd.f32 %v5066, %v5154
        %5156 = vmatmul.bf16.gmra.mxu0 %v3764
        %v5157 = vpop.f32.mrf.mxu0
        %v5158 = vadd.f32 %v5069, %v5157
        %v5159 = vpop.f32.mrf.mxu0
        %v5160 = vadd.f32 %v5071, %v5159
        %5161 = vmatmul.bf16.gmra.mxu0 %v3773
        %v5162 = vpop.f32.mrf.mxu0
        %v5163 = vadd.f32 %v5074, %v5162
        %v5164 = vpop.f32.mrf.mxu0
        %v5165 = vadd.f32 %v5076, %v5164
        %5166 = vmatmul.bf16.gmra.mxu0 %v3782
        %v5167 = vpop.f32.mrf.mxu0
        %v5168 = vadd.f32 %v5079, %v5167
        %v5169 = vpop.f32.mrf.mxu0
        %v5170 = vadd.f32 %v5081, %v5169
        %5171 = vmatmul.bf16.gmra.mxu0 %v3791
        %v5172 = vpop.f32.mrf.mxu0
        %v5173 = vadd.f32 %v5084, %v5172
        %v5174 = vpop.f32.mrf.mxu0
        %v5175 = vadd.f32 %v5086, %v5174
        %5176 = vmatmul.bf16.gmra.mxu0 %v3800
        %v5177 = vpop.f32.mrf.mxu0
        %v5178 = vadd.f32 %v5089, %v5177
        %v5179 = vpop.f32.mrf.mxu0
        %v5180 = vadd.f32 %v5091, %v5179
        %5181 = vmatmul.bf16.gmra.mxu0 %v3809
        %v5182 = vpop.f32.mrf.mxu0
        %v5183 = vadd.f32 %v5094, %v5182
        %v5184 = vpop.f32.mrf.mxu0
        %v5185 = vadd.f32 %v5096, %v5184
        %5186 = vdwg.mxu0
        %v5187 = vmax.f32 %v5108, 0.0
        %v5188 = vmax.f32 %v5110, 0.0
        %v5189 = vmax.f32 %v5113, 0.0
        %v5190 = vmax.f32 %v5115, 0.0
        %v5191 = vmax.f32 %v5118, 0.0
        %v5192 = vmax.f32 %v5120, 0.0
        %v5193 = vmax.f32 %v5123, 0.0
        %v5194 = vmax.f32 %v5125, 0.0
        %v5195 = vmax.f32 %v5128, 0.0
        %v5196 = vmax.f32 %v5130, 0.0
        %v5197 = vmax.f32 %v5133, 0.0
        %v5198 = vmax.f32 %v5135, 0.0
        %v5199 = vmax.f32 %v5138, 0.0
        %v5200 = vmax.f32 %v5140, 0.0
        %v5201 = vmax.f32 %v5143, 0.0
        %v5202 = vmax.f32 %v5145, 0.0
        %v5203 = vmax.f32 %v5148, 0.0
        %v5204 = vmax.f32 %v5150, 0.0
        %v5205 = vmax.f32 %v5153, 0.0
        %v5206 = vmax.f32 %v5155, 0.0
        %v5207 = vmax.f32 %v5158, 0.0
        %v5208 = vmax.f32 %v5160, 0.0
        %v5209 = vmax.f32 %v5163, 0.0
        %v5210 = vmax.f32 %v5165, 0.0
        %v5211 = vmax.f32 %v5168, 0.0
        %v5212 = vmax.f32 %v5170, 0.0
        %v5213 = vmax.f32 %v5173, 0.0
        %v5214 = vmax.f32 %v5175, 0.0
        %v5215 = vmax.f32 %v5178, 0.0
        %v5216 = vmax.f32 %v5180, 0.0
        %v5217 = vmax.f32 %v5183, 0.0
        %v5218 = vmax.f32 %v5185, 0.0
        %v5219 = vpack.c.bf16 %v5187, %v5187
        %v5220 = vpack.c.bf16 %v5188, %v5188
        %v5221 = vpack.c.bf16 %v5189, %v5189
        %v5222 = vpack.c.bf16 %v5190, %v5190
        %v5223 = vpack.c.bf16 %v5191, %v5191
        %v5224 = vpack.c.bf16 %v5192, %v5192
        %v5225 = vpack.c.bf16 %v5193, %v5193
        %v5226 = vpack.c.bf16 %v5194, %v5194
        %v5227 = vpack.c.bf16 %v5195, %v5195
        %v5228 = vpack.c.bf16 %v5196, %v5196
        %v5229 = vpack.c.bf16 %v5197, %v5197
        %v5230 = vpack.c.bf16 %v5198, %v5198
        %v5231 = vpack.c.bf16 %v5199, %v5199
        %v5232 = vpack.c.bf16 %v5200, %v5200
        %v5233 = vpack.c.bf16 %v5201, %v5201
        %v5234 = vpack.c.bf16 %v5202, %v5202
        %v5235 = vpack.c.bf16 %v5203, %v5203
        %v5236 = vpack.c.bf16 %v5204, %v5204
        %v5237 = vpack.c.bf16 %v5205, %v5205
        %v5238 = vpack.c.bf16 %v5206, %v5206
        %v5239 = vpack.c.bf16 %v5207, %v5207
        %v5240 = vpack.c.bf16 %v5208, %v5208
        %v5241 = vpack.c.bf16 %v5209, %v5209
        %v5242 = vpack.c.bf16 %v5210, %v5210
        %v5243 = vpack.c.bf16 %v5211, %v5211
        %v5244 = vpack.c.bf16 %v5212, %v5212
        %v5245 = vpack.c.bf16 %v5213, %v5213
        %v5246 = vpack.c.bf16 %v5214, %v5214
        %v5247 = vpack.c.bf16 %v5215, %v5215
        %v5248 = vpack.c.bf16 %v5216, %v5216
        %v5249 = vpack.c.bf16 %v5217, %v5217
        %v5250 = vpack.c.bf16 %v5218, %v5218
        %vm5251 = vsmask.f32 4368
        %vm5252 = vmor %vm307, %vm5251
        %v5254 = vshrl.u32 %v5219, 16
        %v5256 = vrot.slane %v5254, 7
        %v5257 = vshll.u32 %v5219, 16
        %v5259 = vor.u32 %v5256, %v5257
        %v5260 = vrot.slane %v5256, 4
        %v5262 = vshrl.u32 %v5220, 16
        %v5264 = vrot.slane %v5262, 7
        %v5265 = vshll.u32 %v5220, 16
        %v5267 = vor.u32 %v5264, %v5265
        %v5268 = vsel %vm5252, %v5260, %v5267
        %v5269 = vrot.slane %v5264, 4
        %v5271 = vshrl.u32 %v5221, 16
        %v5273 = vrot.slane %v5271, 7
        %v5274 = vshll.u32 %v5221, 16
        %v5276 = vor.u32 %v5273, %v5274
        %v5277 = vrot.slane %v5273, 4
        %v5279 = vshrl.u32 %v5222, 16
        %v5281 = vrot.slane %v5279, 7
        %v5282 = vshll.u32 %v5222, 16
        %v5284 = vor.u32 %v5281, %v5282
        %v5285 = vsel %vm5252, %v5277, %v5284
        %v5286 = vrot.slane %v5281, 4
        %v5288 = vshrl.u32 %v5223, 16
        %v5290 = vrot.slane %v5288, 7
        %v5291 = vshll.u32 %v5223, 16
        %v5293 = vor.u32 %v5290, %v5291
        %v5294 = vrot.slane %v5290, 4
        %v5296 = vshrl.u32 %v5224, 16
        %v5298 = vrot.slane %v5296, 7
        %v5299 = vshll.u32 %v5224, 16
        %v5301 = vor.u32 %v5298, %v5299
        %v5302 = vsel %vm5252, %v5294, %v5301
        %v5303 = vrot.slane %v5298, 4
        %v5305 = vshrl.u32 %v5225, 16
        %v5307 = vrot.slane %v5305, 7
        %v5308 = vshll.u32 %v5225, 16
        %v5310 = vor.u32 %v5307, %v5308
        %v5311 = vrot.slane %v5307, 4
        %v5313 = vshrl.u32 %v5226, 16
        %v5315 = vrot.slane %v5313, 7
        %v5316 = vshll.u32 %v5226, 16
        %v5318 = vor.u32 %v5315, %v5316
        %v5319 = vsel %vm5252, %v5311, %v5318
        %v5320 = vrot.slane %v5315, 4
        %v5322 = vshrl.u32 %v5227, 16
        %v5324 = vrot.slane %v5322, 7
        %v5325 = vshll.u32 %v5227, 16
        %v5327 = vor.u32 %v5324, %v5325
        %v5328 = vrot.slane %v5324, 4
        %v5330 = vshrl.u32 %v5228, 16
        %v5332 = vrot.slane %v5330, 7
        %v5333 = vshll.u32 %v5228, 16
        %v5335 = vor.u32 %v5332, %v5333
        %v5336 = vsel %vm5252, %v5328, %v5335
        %v5337 = vrot.slane %v5332, 4
        %v5339 = vshrl.u32 %v5229, 16
        %v5341 = vrot.slane %v5339, 7
        %v5342 = vshll.u32 %v5229, 16
        %v5344 = vor.u32 %v5341, %v5342
        %v5345 = vrot.slane %v5341, 4
        %v5347 = vshrl.u32 %v5230, 16
        %v5349 = vrot.slane %v5347, 7
        %v5350 = vshll.u32 %v5230, 16
        %v5352 = vor.u32 %v5349, %v5350
        %v5353 = vsel %vm5252, %v5345, %v5352
        %v5354 = vrot.slane %v5349, 4
        %v5356 = vshrl.u32 %v5231, 16
        %v5358 = vrot.slane %v5356, 7
        %v5359 = vshll.u32 %v5231, 16
        %v5361 = vor.u32 %v5358, %v5359
        %v5362 = vrot.slane %v5358, 4
        %v5364 = vshrl.u32 %v5232, 16
        %v5366 = vrot.slane %v5364, 7
        %v5367 = vshll.u32 %v5232, 16
        %v5369 = vor.u32 %v5366, %v5367
        %v5370 = vsel %vm5252, %v5362, %v5369
        %v5371 = vrot.slane %v5366, 4
        %v5373 = vshrl.u32 %v5233, 16
        %v5375 = vrot.slane %v5373, 7
        %v5376 = vshll.u32 %v5233, 16
        %v5378 = vor.u32 %v5375, %v5376
        %v5379 = vrot.slane %v5375, 4
        %v5381 = vshrl.u32 %v5234, 16
        %v5383 = vrot.slane %v5381, 7
        %v5384 = vshll.u32 %v5234, 16
        %v5386 = vor.u32 %v5383, %v5384
        %v5387 = vsel %vm5252, %v5379, %v5386
        %v5388 = vrot.slane %v5383, 4
        %v5390 = vshrl.u32 %v5235, 16
        %v5392 = vrot.slane %v5390, 7
        %v5393 = vshll.u32 %v5235, 16
        %v5395 = vor.u32 %v5392, %v5393
        %v5396 = vrot.slane %v5392, 4
        %v5398 = vshrl.u32 %v5236, 16
        %v5400 = vrot.slane %v5398, 7
        %v5401 = vshll.u32 %v5236, 16
        %v5403 = vor.u32 %v5400, %v5401
        %v5404 = vsel %vm5252, %v5396, %v5403
        %v5405 = vrot.slane %v5400, 4
        %v5407 = vshrl.u32 %v5237, 16
        %v5409 = vrot.slane %v5407, 7
        %v5410 = vshll.u32 %v5237, 16
        %v5412 = vor.u32 %v5409, %v5410
        %v5413 = vrot.slane %v5409, 4
        %v5415 = vshrl.u32 %v5238, 16
        %v5417 = vrot.slane %v5415, 7
        %v5418 = vshll.u32 %v5238, 16
        %v5420 = vor.u32 %v5417, %v5418
        %v5421 = vsel %vm5252, %v5413, %v5420
        %v5422 = vrot.slane %v5417, 4
        %v5424 = vshrl.u32 %v5239, 16
        %v5426 = vrot.slane %v5424, 7
        %v5427 = vshll.u32 %v5239, 16
        %v5429 = vor.u32 %v5426, %v5427
        %v5430 = vrot.slane %v5426, 4
        %v5432 = vshrl.u32 %v5240, 16
        %v5434 = vrot.slane %v5432, 7
        %v5435 = vshll.u32 %v5240, 16
        %v5437 = vor.u32 %v5434, %v5435
        %v5438 = vsel %vm5252, %v5430, %v5437
        %v5439 = vrot.slane %v5434, 4
        %v5441 = vshrl.u32 %v5241, 16
        %v5443 = vrot.slane %v5441, 7
        %v5444 = vshll.u32 %v5241, 16
        %v5446 = vor.u32 %v5443, %v5444
        %v5447 = vrot.slane %v5443, 4
        %v5449 = vshrl.u32 %v5242, 16
        %v5451 = vrot.slane %v5449, 7
        %v5452 = vshll.u32 %v5242, 16
        %v5454 = vor.u32 %v5451, %v5452
        %v5455 = vsel %vm5252, %v5447, %v5454
        %v5456 = vrot.slane %v5451, 4
        %v5458 = vshrl.u32 %v5243, 16
        %v5460 = vrot.slane %v5458, 7
        %v5461 = vshll.u32 %v5243, 16
        %v5463 = vor.u32 %v5460, %v5461
        %v5464 = vrot.slane %v5460, 4
        %v5466 = vshrl.u32 %v5244, 16
        %v5468 = vrot.slane %v5466, 7
        %v5469 = vshll.u32 %v5244, 16
        %v5471 = vor.u32 %v5468, %v5469
        %v5472 = vsel %vm5252, %v5464, %v5471
        %v5473 = vrot.slane %v5468, 4
        %v5475 = vshrl.u32 %v5245, 16
        %v5477 = vrot.slane %v5475, 7
        %v5478 = vshll.u32 %v5245, 16
        %v5480 = vor.u32 %v5477, %v5478
        %v5481 = vrot.slane %v5477, 4
        %v5483 = vshrl.u32 %v5246, 16
        %v5485 = vrot.slane %v5483, 7
        %v5486 = vshll.u32 %v5246, 16
        %v5488 = vor.u32 %v5485, %v5486
        %v5489 = vsel %vm5252, %v5481, %v5488
        %v5490 = vrot.slane %v5485, 4
        %v5492 = vshrl.u32 %v5247, 16
        %v5494 = vrot.slane %v5492, 7
        %v5495 = vshll.u32 %v5247, 16
        %v5497 = vor.u32 %v5494, %v5495
        %v5498 = vrot.slane %v5494, 4
        %v5500 = vshrl.u32 %v5248, 16
        %v5502 = vrot.slane %v5500, 7
        %v5503 = vshll.u32 %v5248, 16
        %v5505 = vor.u32 %v5502, %v5503
        %v5506 = vsel %vm5252, %v5498, %v5505
        %v5507 = vrot.slane %v5502, 4
        %v5509 = vshrl.u32 %v5249, 16
        %v5511 = vrot.slane %v5509, 7
        %v5512 = vshll.u32 %v5249, 16
        %v5514 = vor.u32 %v5511, %v5512
        %v5515 = vrot.slane %v5511, 4
        %v5517 = vshrl.u32 %v5250, 16
        %v5519 = vrot.slane %v5517, 7
        %v5520 = vshll.u32 %v5250, 16
        %v5522 = vor.u32 %v5519, %v5520
        %v5523 = vsel %vm5252, %v5515, %v5522
        %v5524 = vrot.slane %v5519, 4
        %vm5573 = vcmask 1043456
        %vm5574 = vmand %vm5573, %vm357
        %v5575 = vld [vmem:[%s305] sm:$0xf]
        %v5576 = vsel %vm5574, %v5259, %v5575
        %5577 = vst [vmem:[%s305] sm:$0xf] %v5576
        %5578 = vst [vmem:[%s305 + $0x4] sm:$0xf] %v5268
        %v5579 = vld [vmem:[%s305 + $0x8] sm:$0x1]
        %v5580 = vsel %vm308, %v5269, %v5579
        %5581 = vst [vmem:[%s305 + $0x8] sm:$0x1] %v5580
        %v5582 = vld [vmem:[%s305 + $0xc] sm:$0xf]
        %v5583 = vsel %vm5574, %v5276, %v5582
        %5584 = vst [vmem:[%s305 + $0xc] sm:$0xf] %v5583
        %5585 = vst [vmem:[%s305 + $0x10] sm:$0xf] %v5285
        %v5586 = vld [vmem:[%s305 + $0x14] sm:$0x1]
        %v5587 = vsel %vm308, %v5286, %v5586
        %5588 = vst [vmem:[%s305 + $0x14] sm:$0x1] %v5587
        %v5589 = vld [vmem:[%s305 + $0x18] sm:$0xf]
        %v5590 = vsel %vm5574, %v5293, %v5589
        %5591 = vst [vmem:[%s305 + $0x18] sm:$0xf] %v5590
        %5592 = vst [vmem:[%s305 + $0x1c] sm:$0xf] %v5302
        %v5593 = vld [vmem:[%s305 + $0x20] sm:$0x1]
        %v5594 = vsel %vm308, %v5303, %v5593
        %5595 = vst [vmem:[%s305 + $0x20] sm:$0x1] %v5594
        %v5596 = vld [vmem:[%s305 + $0x24] sm:$0xf]
        %v5597 = vsel %vm5574, %v5310, %v5596
        %5598 = vst [vmem:[%s305 + $0x24] sm:$0xf] %v5597
        %5599 = vst [vmem:[%s305 + $0x28] sm:$0xf] %v5319
        %v5600 = vld [vmem:[%s305 + $0x2c] sm:$0x1]
        %v5601 = vsel %vm308, %v5320, %v5600
        %5602 = vst [vmem:[%s305 + $0x2c] sm:$0x1] %v5601
        %v5603 = vld [vmem:[%s305 + $0x30] sm:$0xf]
        %v5604 = vsel %vm5574, %v5327, %v5603
        %5605 = vst [vmem:[%s305 + $0x30] sm:$0xf] %v5604
        %5606 = vst [vmem:[%s305 + $0x34] sm:$0xf] %v5336
        %v5607 = vld [vmem:[%s305 + $0x38] sm:$0x1]
        %v5608 = vsel %vm308, %v5337, %v5607
        %5609 = vst [vmem:[%s305 + $0x38] sm:$0x1] %v5608
        %v5610 = vld [vmem:[%s305 + $0x3c] sm:$0xf]
        %v5611 = vsel %vm5574, %v5344, %v5610
        %5612 = vst [vmem:[%s305 + $0x3c] sm:$0xf] %v5611
        %5613 = vst [vmem:[%s305 + $0x40] sm:$0xf] %v5353
        %v5614 = vld [vmem:[%s305 + $0x44] sm:$0x1]
        %v5615 = vsel %vm308, %v5354, %v5614
        %5616 = vst [vmem:[%s305 + $0x44] sm:$0x1] %v5615
        %v5617 = vld [vmem:[%s305 + $0x48] sm:$0xf]
        %v5618 = vsel %vm5574, %v5361, %v5617
        %5619 = vst [vmem:[%s305 + $0x48] sm:$0xf] %v5618
        %5620 = vst [vmem:[%s305 + $0x4c] sm:$0xf] %v5370
        %v5621 = vld [vmem:[%s305 + $0x50] sm:$0x1]
        %v5622 = vsel %vm308, %v5371, %v5621
        %5623 = vst [vmem:[%s305 + $0x50] sm:$0x1] %v5622
        %v5624 = vld [vmem:[%s305 + $0x54] sm:$0xf]
        %v5625 = vsel %vm5574, %v5378, %v5624
        %5626 = vst [vmem:[%s305 + $0x54] sm:$0xf] %v5625
        %5627 = vst [vmem:[%s305 + $0x58] sm:$0xf] %v5387
        %v5628 = vld [vmem:[%s305 + $0x5c] sm:$0x1]
        %v5629 = vsel %vm308, %v5388, %v5628
        %5630 = vst [vmem:[%s305 + $0x5c] sm:$0x1] %v5629
        %v5631 = vld [vmem:[%s305 + $0x60] sm:$0xf]
        %v5632 = vsel %vm5574, %v5395, %v5631
        %5633 = vst [vmem:[%s305 + $0x60] sm:$0xf] %v5632
        %5634 = vst [vmem:[%s305 + $0x64] sm:$0xf] %v5404
        %v5635 = vld [vmem:[%s305 + $0x68] sm:$0x1]
        %v5636 = vsel %vm308, %v5405, %v5635
        %5637 = vst [vmem:[%s305 + $0x68] sm:$0x1] %v5636
        %v5638 = vld [vmem:[%s305 + $0x6c] sm:$0xf]
        %v5639 = vsel %vm5574, %v5412, %v5638
        %5640 = vst [vmem:[%s305 + $0x6c] sm:$0xf] %v5639
        %5641 = vst [vmem:[%s305 + $0x70] sm:$0xf] %v5421
        %v5642 = vld [vmem:[%s305 + $0x74] sm:$0x1]
        %v5643 = vsel %vm308, %v5422, %v5642
        %5644 = vst [vmem:[%s305 + $0x74] sm:$0x1] %v5643
        %v5645 = vld [vmem:[%s305 + $0x78] sm:$0xf]
        %v5646 = vsel %vm5574, %v5429, %v5645
        %5647 = vst [vmem:[%s305 + $0x78] sm:$0xf] %v5646
        %5648 = vst [vmem:[%s305 + $0x7c] sm:$0xf] %v5438
        %v5649 = vld [vmem:[%s305 + $0x80] sm:$0x1]
        %v5650 = vsel %vm308, %v5439, %v5649
        %5651 = vst [vmem:[%s305 + $0x80] sm:$0x1] %v5650
        %v5652 = vld [vmem:[%s305 + $0x84] sm:$0xf]
        %v5653 = vsel %vm5574, %v5446, %v5652
        %5654 = vst [vmem:[%s305 + $0x84] sm:$0xf] %v5653
        %5655 = vst [vmem:[%s305 + $0x88] sm:$0xf] %v5455
        %v5656 = vld [vmem:[%s305 + $0x8c] sm:$0x1]
        %v5657 = vsel %vm308, %v5456, %v5656
        %5658 = vst [vmem:[%s305 + $0x8c] sm:$0x1] %v5657
        %v5659 = vld [vmem:[%s305 + $0x90] sm:$0xf]
        %v5660 = vsel %vm5574, %v5463, %v5659
        %5661 = vst [vmem:[%s305 + $0x90] sm:$0xf] %v5660
        %5662 = vst [vmem:[%s305 + $0x94] sm:$0xf] %v5472
        %v5663 = vld [vmem:[%s305 + $0x98] sm:$0x1]
        %v5664 = vsel %vm308, %v5473, %v5663
        %5665 = vst [vmem:[%s305 + $0x98] sm:$0x1] %v5664
        %v5666 = vld [vmem:[%s305 + $0x9c] sm:$0xf]
        %v5667 = vsel %vm5574, %v5480, %v5666
        %5668 = vst [vmem:[%s305 + $0x9c] sm:$0xf] %v5667
        %5669 = vst [vmem:[%s305 + $0xa0] sm:$0xf] %v5489
        %v5670 = vld [vmem:[%s305 + $0xa4] sm:$0x1]
        %v5671 = vsel %vm308, %v5490, %v5670
        %5672 = vst [vmem:[%s305 + $0xa4] sm:$0x1] %v5671
        %v5673 = vld [vmem:[%s305 + $0xa8] sm:$0xf]
        %v5674 = vsel %vm5574, %v5497, %v5673
        %5675 = vst [vmem:[%s305 + $0xa8] sm:$0xf] %v5674
        %5676 = vst [vmem:[%s305 + $0xac] sm:$0xf] %v5506
        %v5677 = vld [vmem:[%s305 + $0xb0] sm:$0x1]
        %v5678 = vsel %vm308, %v5507, %v5677
        %5679 = vst [vmem:[%s305 + $0xb0] sm:$0x1] %v5678
        %v5680 = vld [vmem:[%s305 + $0xb4] sm:$0xf]
        %v5681 = vsel %vm5574, %v5514, %v5680
        %5682 = vst [vmem:[%s305 + $0xb4] sm:$0xf] %v5681
        %5683 = vst [vmem:[%s305 + $0xb8] sm:$0xf] %v5523
        %v5684 = vld [vmem:[%s305 + $0xbc] sm:$0x1]
        %v5685 = vsel %vm308, %v5524, %v5684
        %5686 = vst [vmem:[%s305 + $0xbc] sm:$0x1] %v5685
        %v5687 = vld [vmem:[#allocation3 + $0x10] sm:$0xf]
        %v5688 = vld [vmem:[#allocation3 + $0x34] sm:$0xf]
        %v5689 = vld [vmem:[#allocation3 + $0x58] sm:$0xf]
        %v5690 = vld [vmem:[#allocation3 + $0x7c] sm:$0xf]
        %v5691 = vld [vmem:[#allocation3 + $0xa0] sm:$0xf]
        %v5692 = vld [vmem:[#allocation3 + $0xc4] sm:$0xf]
        %v5693 = vld [vmem:[#allocation3 + $0xe8] sm:$0xf]
        %v5694 = vld [vmem:[#allocation3 + $0x10c] sm:$0xf]
        %v5695 = vld [vmem:[#allocation3 + $0x130] sm:$0xf]
        %v5696 = vld [vmem:[#allocation3 + $0x154] sm:$0xf]
        %v5697 = vld [vmem:[#allocation3 + $0x178] sm:$0xf]
        %v5698 = vld [vmem:[#allocation3 + $0x19c] sm:$0xf]
        %v5699 = vld [vmem:[#allocation3 + $0x1c0] sm:$0xf]
        %v5700 = vld [vmem:[#allocation3 + $0x1e4] sm:$0xf]
        %v5701 = vld [vmem:[#allocation3 + $0x208] sm:$0xf]
        %v5702 = vld [vmem:[#allocation3 + $0x22c] sm:$0xf]
        %v5703 = vld [vmem:[#allocation3 + $0x250] sm:$0xf]
        %v5704 = vld [vmem:[#allocation3 + $0x274] sm:$0xf]
        %v5705 = vld [vmem:[#allocation3 + $0x298] sm:$0xf]
        %v5706 = vld [vmem:[#allocation3 + $0x2bc] sm:$0xf]
        %v5707 = vld [vmem:[#allocation3 + $0x2e0] sm:$0xf]
        %v5708 = vld [vmem:[#allocation3 + $0x304] sm:$0xf]
        %v5709 = vld [vmem:[#allocation3 + $0x328] sm:$0xf]
        %v5710 = vld [vmem:[#allocation3 + $0x34c] sm:$0xf]
        %v5711 = vld [vmem:[#allocation3 + $0x370] sm:$0xf]
        %v5712 = vld [vmem:[#allocation3 + $0x394] sm:$0xf]
        %v5713 = vld [vmem:[#allocation3 + $0x3b8] sm:$0xf]
        %v5714 = vld [vmem:[#allocation3 + $0x3dc] sm:$0xf]
        %v5715 = vld [vmem:[#allocation3 + $0x400] sm:$0xf]
        %v5716 = vld [vmem:[#allocation3 + $0x424] sm:$0xf]
        %v5717 = vld [vmem:[#allocation3 + $0x448] sm:$0xf]
        %v5718 = vld [vmem:[#allocation3 + $0x46c] sm:$0xf]
        %v5719 = vld [vmem:[%s5] sm:$0xf]
        %v5720 = vld [vmem:[%s5 + $0x4] sm:$0xf]
        %v5721 = vld [vmem:[%s5 + $0x8] sm:$0xf]
        %v5722 = vld [vmem:[%s5 + $0xc] sm:$0xf]
        %v5723 = vld [vmem:[%s5 + $0x10] sm:$0xf]
        %v5724 = vld [vmem:[%s5 + $0x14] sm:$0xf]
        %v5725 = vld [vmem:[%s5 + $0x18] sm:$0xf]
        %v5726 = vld [vmem:[%s5 + $0x1c] sm:$0xf]
        %v5727 = vld [vmem:[%s5 + $0x20] sm:$0xf]
        %v5728 = vld [vmem:[%s5 + $0x24] sm:$0xf]
        %v5729 = vld [vmem:[%s5 + $0x28] sm:$0xf]
        %v5730 = vld [vmem:[%s5 + $0x2c] sm:$0xf]
        %v5731 = vld [vmem:[%s5 + $0x30] sm:$0xf]
        %v5732 = vld [vmem:[%s5 + $0x34] sm:$0xf]
        %v5733 = vld [vmem:[%s5 + $0x38] sm:$0xf]
        %v5734 = vld [vmem:[%s5 + $0x3c] sm:$0xf]
        %v5736 = vperm.slane %v297, 0
        %v5770 = vunpack.c.l.b16 %v5687
        %v5771 = vunpack.c.l.b16 %v5688
        %v5772 = vunpack.c.l.b16 %v5689
        %v5773 = vunpack.c.l.b16 %v5690
        %v5774 = vunpack.c.l.b16 %v5691
        %v5775 = vunpack.c.l.b16 %v5692
        %v5776 = vunpack.c.l.b16 %v5693
        %v5777 = vunpack.c.l.b16 %v5694
        %v5778 = vunpack.c.l.b16 %v5695
        %v5779 = vunpack.c.l.b16 %v5696
        %v5780 = vunpack.c.l.b16 %v5697
        %v5781 = vunpack.c.l.b16 %v5698
        %v5782 = vunpack.c.l.b16 %v5699
        %v5783 = vunpack.c.l.b16 %v5700
        %v5784 = vunpack.c.l.b16 %v5701
        %v5785 = vunpack.c.l.b16 %v5702
        %v5786 = vunpack.c.l.b16 %v5703
        %v5787 = vunpack.c.l.b16 %v5704
        %v5788 = vunpack.c.l.b16 %v5705
        %v5789 = vunpack.c.l.b16 %v5706
        %v5790 = vunpack.c.l.b16 %v5707
        %v5791 = vunpack.c.l.b16 %v5708
        %v5792 = vunpack.c.l.b16 %v5709
        %v5793 = vunpack.c.l.b16 %v5710
        %v5794 = vunpack.c.l.b16 %v5711
        %v5795 = vunpack.c.l.b16 %v5712
        %v5796 = vunpack.c.l.b16 %v5713
        %v5797 = vunpack.c.l.b16 %v5714
        %v5798 = vunpack.c.l.b16 %v5715
        %v5799 = vunpack.c.l.b16 %v5716
        %v5800 = vunpack.c.l.b16 %v5717
        %v5801 = vunpack.c.l.b16 %v5718
        %v5802 = vpack.c.b16 %v5771, %v5770
        %v5803 = vpack.c.b16 %v5773, %v5772
        %v5804 = vpack.c.b16 %v5775, %v5774
        %v5805 = vpack.c.b16 %v5777, %v5776
        %v5806 = vpack.c.b16 %v5779, %v5778
        %v5807 = vpack.c.b16 %v5781, %v5780
        %v5808 = vpack.c.b16 %v5783, %v5782
        %v5809 = vpack.c.b16 %v5785, %v5784
        %v5810 = vpack.c.b16 %v5787, %v5786
        %v5811 = vpack.c.b16 %v5789, %v5788
        %v5812 = vpack.c.b16 %v5791, %v5790
        %v5813 = vpack.c.b16 %v5793, %v5792
        %v5814 = vpack.c.b16 %v5795, %v5794
        %v5815 = vpack.c.b16 %v5797, %v5796
        %v5816 = vpack.c.b16 %v5799, %v5798
        %v5817 = vpack.c.b16 %v5801, %v5800
        %v5850 = vunpack.c.l.b16 %v5719
        %v5851 = vunpack.c.l.b16 %v5720
        %v5852 = vunpack.c.l.b16 %v5721
        %v5853 = vunpack.c.l.b16 %v5722
        %v5854 = vunpack.c.l.b16 %v5723
        %v5855 = vunpack.c.l.b16 %v5724
        %v5856 = vunpack.c.l.b16 %v5725
        %v5857 = vunpack.c.l.b16 %v5726
        %v5858 = vunpack.c.l.b16 %v5727
        %v5859 = vunpack.c.l.b16 %v5728
        %v5860 = vunpack.c.l.b16 %v5729
        %v5861 = vunpack.c.l.b16 %v5730
        %v5862 = vunpack.c.l.b16 %v5731
        %v5863 = vunpack.c.l.b16 %v5732
        %v5864 = vunpack.c.l.b16 %v5733
        %v5865 = vunpack.c.l.b16 %v5734
        %v5866 = vpack.c.b16 %v5851, %v5850
        %v5867 = vpack.c.b16 %v5853, %v5852
        %v5868 = vpack.c.b16 %v5855, %v5854
        %v5869 = vpack.c.b16 %v5857, %v5856
        %v5870 = vpack.c.b16 %v5859, %v5858
        %v5871 = vpack.c.b16 %v5861, %v5860
        %v5872 = vpack.c.b16 %v5863, %v5862
        %v5873 = vpack.c.b16 %v5865, %v5864
        %5882 = vmatpush.bf16.msra.mxu0 %v5873
        %5883 = vmatpush.bf16.msra.mxu0 %v5872
        %5884 = vmatpush.bf16.msra.mxu0 %v5871
        %5885 = vmatpush.bf16.msra.mxu0 %v5870
        %5886 = vmatpush.bf16.msra.mxu0 %v5869
        %5887 = vmatpush.bf16.msra.mxu0 %v5868
        %5888 = vmatpush.bf16.msra.mxu0 %v5867
        %5889 = vmatpush.bf16.msra.mxu0 %v5866
        %5890 = vmatmul.bf16.gmra.mxu0 %v5802
        %v5891 = vpop.f32.mrf.mxu0
        %v5892 = vadd.f32 %v5736, %v5891
        %v5893 = vpop.f32.mrf.mxu0
        %v5894 = vadd.f32 %v5736, %v5893
        %5895 = vmatmul.bf16.gmra.mxu0 %v5803
        %v5896 = vpop.f32.mrf.mxu0
        %v5897 = vadd.f32 %v5736, %v5896
        %v5898 = vpop.f32.mrf.mxu0
        %v5899 = vadd.f32 %v5736, %v5898
        %5900 = vmatmul.bf16.gmra.mxu0 %v5804
        %v5901 = vpop.f32.mrf.mxu0
        %v5902 = vadd.f32 %v5736, %v5901
        %v5903 = vpop.f32.mrf.mxu0
        %v5904 = vadd.f32 %v5736, %v5903
        %5905 = vmatmul.bf16.gmra.mxu0 %v5805
        %v5906 = vpop.f32.mrf.mxu0
        %v5907 = vadd.f32 %v5736, %v5906
        %v5908 = vpop.f32.mrf.mxu0
        %v5909 = vadd.f32 %v5736, %v5908
        %5910 = vmatmul.bf16.gmra.mxu0 %v5806
        %v5911 = vpop.f32.mrf.mxu0
        %v5912 = vadd.f32 %v5736, %v5911
        %v5913 = vpop.f32.mrf.mxu0
        %v5914 = vadd.f32 %v5736, %v5913
        %5915 = vmatmul.bf16.gmra.mxu0 %v5807
        %v5916 = vpop.f32.mrf.mxu0
        %v5917 = vadd.f32 %v5736, %v5916
        %v5918 = vpop.f32.mrf.mxu0
        %v5919 = vadd.f32 %v5736, %v5918
        %5920 = vmatmul.bf16.gmra.mxu0 %v5808
        %v5921 = vpop.f32.mrf.mxu0
        %v5922 = vadd.f32 %v5736, %v5921
        %v5923 = vpop.f32.mrf.mxu0
        %v5924 = vadd.f32 %v5736, %v5923
        %5925 = vmatmul.bf16.gmra.mxu0 %v5809
        %v5926 = vpop.f32.mrf.mxu0
        %v5927 = vadd.f32 %v5736, %v5926
        %v5928 = vpop.f32.mrf.mxu0
        %v5929 = vadd.f32 %v5736, %v5928
        %5930 = vmatmul.bf16.gmra.mxu0 %v5810
        %v5931 = vpop.f32.mrf.mxu0
        %v5932 = vadd.f32 %v5736, %v5931
        %v5933 = vpop.f32.mrf.mxu0
        %v5934 = vadd.f32 %v5736, %v5933
        %5935 = vmatmul.bf16.gmra.mxu0 %v5811
        %v5936 = vpop.f32.mrf.mxu0
        %v5937 = vadd.f32 %v5736, %v5936
        %v5938 = vpop.f32.mrf.mxu0
        %v5939 = vadd.f32 %v5736, %v5938
        %5940 = vmatmul.bf16.gmra.mxu0 %v5812
        %v5941 = vpop.f32.mrf.mxu0
        %v5942 = vadd.f32 %v5736, %v5941
        %v5943 = vpop.f32.mrf.mxu0
        %v5944 = vadd.f32 %v5736, %v5943
        %5945 = vmatmul.bf16.gmra.mxu0 %v5813
        %v5946 = vpop.f32.mrf.mxu0
        %v5947 = vadd.f32 %v5736, %v5946
        %v5948 = vpop.f32.mrf.mxu0
        %v5949 = vadd.f32 %v5736, %v5948
        %5950 = vmatmul.bf16.gmra.mxu0 %v5814
        %v5951 = vpop.f32.mrf.mxu0
        %v5952 = vadd.f32 %v5736, %v5951
        %v5953 = vpop.f32.mrf.mxu0
        %v5954 = vadd.f32 %v5736, %v5953
        %5955 = vmatmul.bf16.gmra.mxu0 %v5815
        %v5956 = vpop.f32.mrf.mxu0
        %v5957 = vadd.f32 %v5736, %v5956
        %v5958 = vpop.f32.mrf.mxu0
        %v5959 = vadd.f32 %v5736, %v5958
        %5960 = vmatmul.bf16.gmra.mxu0 %v5816
        %v5961 = vpop.f32.mrf.mxu0
        %v5962 = vadd.f32 %v5736, %v5961
        %v5963 = vpop.f32.mrf.mxu0
        %v5964 = vadd.f32 %v5736, %v5963
        %5965 = vmatmul.bf16.gmra.mxu0 %v5817
        %v5966 = vpop.f32.mrf.mxu0
        %v5967 = vadd.f32 %v5736, %v5966
        %v5968 = vpop.f32.mrf.mxu0
        %v5969 = vadd.f32 %v5736, %v5968
        %5970 = vdwg.mxu0
        %5971 = vst [vmem:[%s288] sm:$0xff] %v5892
        %5972 = vst [vmem:[%s288 + $0x8] sm:$0xff] %v5894
        %5973 = vst [vmem:[%s288 + $0x10] sm:$0xff] %v5897
        %5974 = vst [vmem:[%s288 + $0x18] sm:$0xff] %v5899
        %5975 = vst [vmem:[%s288 + $0x20] sm:$0xff] %v5902
        %5976 = vst [vmem:[%s288 + $0x28] sm:$0xff] %v5904
        %5977 = vst [vmem:[%s288 + $0x30] sm:$0xff] %v5907
        %5978 = vst [vmem:[%s288 + $0x38] sm:$0xff] %v5909
        %5979 = vst [vmem:[%s288 + $0x40] sm:$0xff] %v5912
        %5980 = vst [vmem:[%s288 + $0x48] sm:$0xff] %v5914
        %5981 = vst [vmem:[%s288 + $0x50] sm:$0xff] %v5917
        %5982 = vst [vmem:[%s288 + $0x58] sm:$0xff] %v5919
        %5983 = vst [vmem:[%s288 + $0x60] sm:$0xff] %v5922
        %5984 = vst [vmem:[%s288 + $0x68] sm:$0xff] %v5924
        %5985 = vst [vmem:[%s288 + $0x70] sm:$0xff] %v5927
        %5986 = vst [vmem:[%s288 + $0x78] sm:$0xff] %v5929
        %5987 = vst [vmem:[%s288 + $0x80] sm:$0xff] %v5932
        %5988 = vst [vmem:[%s288 + $0x88] sm:$0xff] %v5934
        %5989 = vst [vmem:[%s288 + $0x90] sm:$0xff] %v5937
        %5990 = vst [vmem:[%s288 + $0x98] sm:$0xff] %v5939
        %5991 = vst [vmem:[%s288 + $0xa0] sm:$0xff] %v5942
        %5992 = vst [vmem:[%s288 + $0xa8] sm:$0xff] %v5944
        %5993 = vst [vmem:[%s288 + $0xb0] sm:$0xff] %v5947
        %5994 = vst [vmem:[%s288 + $0xb8] sm:$0xff] %v5949
        %5995 = vst [vmem:[%s288 + $0xc0] sm:$0xff] %v5952
        %5996 = vst [vmem:[%s288 + $0xc8] sm:$0xff] %v5954
        %5997 = vst [vmem:[%s288 + $0xd0] sm:$0xff] %v5957
        %5998 = vst [vmem:[%s288 + $0xd8] sm:$0xff] %v5959
        %5999 = vst [vmem:[%s288 + $0xe0] sm:$0xff] %v5962
        %6000 = vst [vmem:[%s288 + $0xe8] sm:$0xff] %v5964
        %6001 = vst [vmem:[%s288 + $0xf0] sm:$0xff] %v5967
        %6002 = vst [vmem:[%s288 + $0xf8] sm:$0xff] %v5969
        %v6003 = vld [vmem:[#allocation2] sm:$0xf]
        %v6004 = vld [vmem:[#allocation2 + $0x4] sm:$0xf]
        %v6005 = vld [vmem:[#allocation2 + $0xc] sm:$0xf]
        %v6006 = vld [vmem:[#allocation2 + $0x10] sm:$0xf]
        %v6007 = vld [vmem:[#allocation2 + $0x18] sm:$0xf]
        %v6008 = vld [vmem:[#allocation2 + $0x1c] sm:$0xf]
        %v6009 = vld [vmem:[#allocation2 + $0x24] sm:$0xf]
        %v6010 = vld [vmem:[#allocation2 + $0x28] sm:$0xf]
        %v6011 = vld [vmem:[#allocation2 + $0x30] sm:$0xf]
        %v6012 = vld [vmem:[#allocation2 + $0x34] sm:$0xf]
        %v6013 = vld [vmem:[#allocation2 + $0x3c] sm:$0xf]
        %v6014 = vld [vmem:[#allocation2 + $0x40] sm:$0xf]
        %v6015 = vld [vmem:[#allocation2 + $0x48] sm:$0xf]
        %v6016 = vld [vmem:[#allocation2 + $0x4c] sm:$0xf]
        %v6017 = vld [vmem:[#allocation2 + $0x54] sm:$0xf]
        %v6018 = vld [vmem:[#allocation2 + $0x58] sm:$0xf]
        %v6019 = vld [vmem:[#allocation2 + $0x60] sm:$0xf]
        %v6020 = vld [vmem:[#allocation2 + $0x64] sm:$0xf]
        %v6021 = vld [vmem:[#allocation2 + $0x6c] sm:$0xf]
        %v6022 = vld [vmem:[#allocation2 + $0x70] sm:$0xf]
        %v6023 = vld [vmem:[#allocation2 + $0x78] sm:$0xf]
        %v6024 = vld [vmem:[#allocation2 + $0x7c] sm:$0xf]
        %v6025 = vld [vmem:[#allocation2 + $0x84] sm:$0xf]
        %v6026 = vld [vmem:[#allocation2 + $0x88] sm:$0xf]
        %v6027 = vld [vmem:[#allocation2 + $0x90] sm:$0xf]
        %v6028 = vld [vmem:[#allocation2 + $0x94] sm:$0xf]
        %v6029 = vld [vmem:[#allocation2 + $0x9c] sm:$0xf]
        %v6030 = vld [vmem:[#allocation2 + $0xa0] sm:$0xf]
        %v6031 = vld [vmem:[#allocation2 + $0xa8] sm:$0xf]
        %v6032 = vld [vmem:[#allocation2 + $0xac] sm:$0xf]
        %v6033 = vld [vmem:[#allocation2 + $0xb4] sm:$0xf]
        %v6034 = vld [vmem:[#allocation2 + $0xb8] sm:$0xf]
        %6035 = vst [vmem:[#allocation3] sm:$0xf] %v6003
        %6036 = vst [vmem:[#allocation3 + $0x24] sm:$0xf] %v6004
        %6037 = vst [vmem:[#allocation3 + $0x48] sm:$0xf] %v6005
        %6038 = vst [vmem:[#allocation3 + $0x6c] sm:$0xf] %v6006
        %6039 = vst [vmem:[#allocation3 + $0x90] sm:$0xf] %v6007
        %6040 = vst [vmem:[#allocation3 + $0xb4] sm:$0xf] %v6008
        %6041 = vst [vmem:[#allocation3 + $0xd8] sm:$0xf] %v6009
        %6042 = vst [vmem:[#allocation3 + $0xfc] sm:$0xf] %v6010
        %6043 = vst [vmem:[#allocation3 + $0x120] sm:$0xf] %v6011
        %6044 = vst [vmem:[#allocation3 + $0x144] sm:$0xf] %v6012
        %6045 = vst [vmem:[#allocation3 + $0x168] sm:$0xf] %v6013
        %6046 = vst [vmem:[#allocation3 + $0x18c] sm:$0xf] %v6014
        %6047 = vst [vmem:[#allocation3 + $0x1b0] sm:$0xf] %v6015
        %6048 = vst [vmem:[#allocation3 + $0x1d4] sm:$0xf] %v6016
        %6049 = vst [vmem:[#allocation3 + $0x1f8] sm:$0xf] %v6017
        %6050 = vst [vmem:[#allocation3 + $0x21c] sm:$0xf] %v6018
        %6051 = vst [vmem:[#allocation3 + $0x240] sm:$0xf] %v6019
        %6052 = vst [vmem:[#allocation3 + $0x264] sm:$0xf] %v6020
        %6053 = vst [vmem:[#allocation3 + $0x288] sm:$0xf] %v6021
        %6054 = vst [vmem:[#allocation3 + $0x2ac] sm:$0xf] %v6022
        %6055 = vst [vmem:[#allocation3 + $0x2d0] sm:$0xf] %v6023
        %6056 = vst [vmem:[#allocation3 + $0x2f4] sm:$0xf] %v6024
        %6057 = vst [vmem:[#allocation3 + $0x318] sm:$0xf] %v6025
        %6058 = vst [vmem:[#allocation3 + $0x33c] sm:$0xf] %v6026
        %6059 = vst [vmem:[#allocation3 + $0x360] sm:$0xf] %v6027
        %6060 = vst [vmem:[#allocation3 + $0x384] sm:$0xf] %v6028
        %6061 = vst [vmem:[#allocation3 + $0x3a8] sm:$0xf] %v6029
        %6062 = vst [vmem:[#allocation3 + $0x3cc] sm:$0xf] %v6030
        %6063 = vst [vmem:[#allocation3 + $0x3f0] sm:$0xf] %v6031
        %6064 = vst [vmem:[#allocation3 + $0x414] sm:$0xf] %v6032
        %6065 = vst [vmem:[#allocation3 + $0x438] sm:$0xf] %v6033
        %6066 = vst [vmem:[#allocation3 + $0x45c] sm:$0xf] %v6034
        %v6067 = vld [vmem:[#allocation2] sm:$0xf]
        %v6068 = vld [vmem:[#allocation2 + $0x4] sm:$0xf]
        %v6069 = vld [vmem:[#allocation2 + $0x8] sm:$0x1]
        %v6070 = vld [vmem:[#allocation2 + $0xc] sm:$0xf]
        %v6071 = vld [vmem:[#allocation2 + $0x10] sm:$0xf]
        %v6072 = vld [vmem:[#allocation2 + $0x14] sm:$0x1]
        %v6073 = vld [vmem:[#allocation2 + $0x18] sm:$0xf]
        %v6074 = vld [vmem:[#allocation2 + $0x1c] sm:$0xf]
        %v6075 = vld [vmem:[#allocation2 + $0x20] sm:$0x1]
        %v6076 = vld [vmem:[#allocation2 + $0x24] sm:$0xf]
        %v6077 = vld [vmem:[#allocation2 + $0x28] sm:$0xf]
        %v6078 = vld [vmem:[#allocation2 + $0x2c] sm:$0x1]
        %v6079 = vld [vmem:[#allocation2 + $0x30] sm:$0xf]
        %v6080 = vld [vmem:[#allocation2 + $0x34] sm:$0xf]
        %v6081 = vld [vmem:[#allocation2 + $0x38] sm:$0x1]
        %v6082 = vld [vmem:[#allocation2 + $0x3c] sm:$0xf]
        %v6083 = vld [vmem:[#allocation2 + $0x40] sm:$0xf]
        %v6084 = vld [vmem:[#allocation2 + $0x44] sm:$0x1]
        %v6085 = vld [vmem:[#allocation2 + $0x48] sm:$0xf]
        %v6086 = vld [vmem:[#allocation2 + $0x4c] sm:$0xf]
        %v6087 = vld [vmem:[#allocation2 + $0x50] sm:$0x1]
        %v6088 = vld [vmem:[#allocation2 + $0x54] sm:$0xf]
        %v6089 = vld [vmem:[#allocation2 + $0x58] sm:$0xf]
        %v6090 = vld [vmem:[#allocation2 + $0x5c] sm:$0x1]
        %v6091 = vld [vmem:[#allocation2 + $0x60] sm:$0xf]
        %v6092 = vld [vmem:[#allocation2 + $0x64] sm:$0xf]
        %v6093 = vld [vmem:[#allocation2 + $0x68] sm:$0x1]
        %v6094 = vld [vmem:[#allocation2 + $0x6c] sm:$0xf]
        %v6095 = vld [vmem:[#allocation2 + $0x70] sm:$0xf]
        %v6096 = vld [vmem:[#allocation2 + $0x74] sm:$0x1]
        %v6097 = vld [vmem:[#allocation2 + $0x78] sm:$0xf]
        %v6098 = vld [vmem:[#allocation2 + $0x7c] sm:$0xf]
        %v6099 = vld [vmem:[#allocation2 + $0x80] sm:$0x1]
        %v6100 = vld [vmem:[#allocation2 + $0x84] sm:$0xf]
        %v6101 = vld [vmem:[#allocation2 + $0x88] sm:$0xf]
        %v6102 = vld [vmem:[#allocation2 + $0x8c] sm:$0x1]
        %v6103 = vld [vmem:[#allocation2 + $0x90] sm:$0xf]
        %v6104 = vld [vmem:[#allocation2 + $0x94] sm:$0xf]
        %v6105 = vld [vmem:[#allocation2 + $0x98] sm:$0x1]
        %v6106 = vld [vmem:[#allocation2 + $0x9c] sm:$0xf]
        %v6107 = vld [vmem:[#allocation2 + $0xa0] sm:$0xf]
        %v6108 = vld [vmem:[#allocation2 + $0xa4] sm:$0x1]
        %v6109 = vld [vmem:[#allocation2 + $0xa8] sm:$0xf]
        %v6110 = vld [vmem:[#allocation2 + $0xac] sm:$0xf]
        %v6111 = vld [vmem:[#allocation2 + $0xb0] sm:$0x1]
        %v6112 = vld [vmem:[#allocation2 + $0xb4] sm:$0xf]
        %v6113 = vld [vmem:[#allocation2 + $0xb8] sm:$0xf]
        %v6114 = vld [vmem:[#allocation2 + $0xbc] sm:$0x1]
        %v6116 = vshrl.u32 %v6067, 16
        %v6118 = vrot.slane %v6116, 4
        %v6119 = vshll.u32 %v6067, 16
        %v6121 = vrot.slane %v6119, 5
        %v6122 = vor.u32 %v6118, %v6121
        %v6123 = vrot.slane %v6122, 4
        %v6125 = vshll.u32 %v6068, 16
        %v6127 = vrot.slane %v6125, 5
        %v6128 = vsel %vm521, %v6123, %v6127
        %v6129 = vshrl.u32 %v6068, 16
        %v6131 = vrot.slane %v6129, 4
        %v6132 = vor.u32 %v6131, %v6127
        %v6133 = vrot.slane %v6132, 4
        %v6135 = vshll.u32 %v6069, 16
        %v6137 = vrot.slane %v6135, 5
        %v6138 = vsel %vm521, %v6133, %v6137
        %v6140 = vshrl.u32 %v6070, 16
        %v6142 = vrot.slane %v6140, 4
        %v6143 = vshll.u32 %v6070, 16
        %v6145 = vrot.slane %v6143, 5
        %v6146 = vor.u32 %v6142, %v6145
        %v6147 = vrot.slane %v6146, 4
        %v6149 = vshll.u32 %v6071, 16
        %v6151 = vrot.slane %v6149, 5
        %v6152 = vsel %vm521, %v6147, %v6151
        %v6153 = vshrl.u32 %v6071, 16
        %v6155 = vrot.slane %v6153, 4
        %v6156 = vor.u32 %v6155, %v6151
        %v6157 = vrot.slane %v6156, 4
        %v6159 = vshll.u32 %v6072, 16
        %v6161 = vrot.slane %v6159, 5
        %v6162 = vsel %vm521, %v6157, %v6161
        %v6164 = vshrl.u32 %v6073, 16
        %v6166 = vrot.slane %v6164, 4
        %v6167 = vshll.u32 %v6073, 16
        %v6169 = vrot.slane %v6167, 5
        %v6170 = vor.u32 %v6166, %v6169
        %v6171 = vrot.slane %v6170, 4
        %v6173 = vshll.u32 %v6074, 16
        %v6175 = vrot.slane %v6173, 5
        %v6176 = vsel %vm521, %v6171, %v6175
        %v6177 = vshrl.u32 %v6074, 16
        %v6179 = vrot.slane %v6177, 4
        %v6180 = vor.u32 %v6179, %v6175
        %v6181 = vrot.slane %v6180, 4
        %v6183 = vshll.u32 %v6075, 16
        %v6185 = vrot.slane %v6183, 5
        %v6186 = vsel %vm521, %v6181, %v6185
        %v6188 = vshrl.u32 %v6076, 16
        %v6190 = vrot.slane %v6188, 4
        %v6191 = vshll.u32 %v6076, 16
        %v6193 = vrot.slane %v6191, 5
        %v6194 = vor.u32 %v6190, %v6193
        %v6195 = vrot.slane %v6194, 4
        %v6197 = vshll.u32 %v6077, 16
        %v6199 = vrot.slane %v6197, 5
        %v6200 = vsel %vm521, %v6195, %v6199
        %v6201 = vshrl.u32 %v6077, 16
        %v6203 = vrot.slane %v6201, 4
        %v6204 = vor.u32 %v6203, %v6199
        %v6205 = vrot.slane %v6204, 4
        %v6207 = vshll.u32 %v6078, 16
        %v6209 = vrot.slane %v6207, 5
        %v6210 = vsel %vm521, %v6205, %v6209
        %v6212 = vshrl.u32 %v6079, 16
        %v6214 = vrot.slane %v6212, 4
        %v6215 = vshll.u32 %v6079, 16
        %v6217 = vrot.slane %v6215, 5
        %v6218 = vor.u32 %v6214, %v6217
        %v6219 = vrot.slane %v6218, 4
        %v6221 = vshll.u32 %v6080, 16
        %v6223 = vrot.slane %v6221, 5
        %v6224 = vsel %vm521, %v6219, %v6223
        %v6225 = vshrl.u32 %v6080, 16
        %v6227 = vrot.slane %v6225, 4
        %v6228 = vor.u32 %v6227, %v6223
        %v6229 = vrot.slane %v6228, 4
        %v6231 = vshll.u32 %v6081, 16
        %v6233 = vrot.slane %v6231, 5
        %v6234 = vsel %vm521, %v6229, %v6233
        %v6236 = vshrl.u32 %v6082, 16
        %v6238 = vrot.slane %v6236, 4
        %v6239 = vshll.u32 %v6082, 16
        %v6241 = vrot.slane %v6239, 5
        %v6242 = vor.u32 %v6238, %v6241
        %v6243 = vrot.slane %v6242, 4
        %v6245 = vshll.u32 %v6083, 16
        %v6247 = vrot.slane %v6245, 5
        %v6248 = vsel %vm521, %v6243, %v6247
        %v6249 = vshrl.u32 %v6083, 16
        %v6251 = vrot.slane %v6249, 4
        %v6252 = vor.u32 %v6251, %v6247
        %v6253 = vrot.slane %v6252, 4
        %v6255 = vshll.u32 %v6084, 16
        %v6257 = vrot.slane %v6255, 5
        %v6258 = vsel %vm521, %v6253, %v6257
        %v6260 = vshrl.u32 %v6085, 16
        %v6262 = vrot.slane %v6260, 4
        %v6263 = vshll.u32 %v6085, 16
        %v6265 = vrot.slane %v6263, 5
        %v6266 = vor.u32 %v6262, %v6265
        %v6267 = vrot.slane %v6266, 4
        %v6269 = vshll.u32 %v6086, 16
        %v6271 = vrot.slane %v6269, 5
        %v6272 = vsel %vm521, %v6267, %v6271
        %v6273 = vshrl.u32 %v6086, 16
        %v6275 = vrot.slane %v6273, 4
        %v6276 = vor.u32 %v6275, %v6271
        %v6277 = vrot.slane %v6276, 4
        %v6279 = vshll.u32 %v6087, 16
        %v6281 = vrot.slane %v6279, 5
        %v6282 = vsel %vm521, %v6277, %v6281
        %v6284 = vshrl.u32 %v6088, 16
        %v6286 = vrot.slane %v6284, 4
        %v6287 = vshll.u32 %v6088, 16
        %v6289 = vrot.slane %v6287, 5
        %v6290 = vor.u32 %v6286, %v6289
        %v6291 = vrot.slane %v6290, 4
        %v6293 = vshll.u32 %v6089, 16
        %v6295 = vrot.slane %v6293, 5
        %v6296 = vsel %vm521, %v6291, %v6295
        %v6297 = vshrl.u32 %v6089, 16
        %v6299 = vrot.slane %v6297, 4
        %v6300 = vor.u32 %v6299, %v6295
        %v6301 = vrot.slane %v6300, 4
        %v6303 = vshll.u32 %v6090, 16
        %v6305 = vrot.slane %v6303, 5
        %v6306 = vsel %vm521, %v6301, %v6305
        %v6308 = vshrl.u32 %v6091, 16
        %v6310 = vrot.slane %v6308, 4
        %v6311 = vshll.u32 %v6091, 16
        %v6313 = vrot.slane %v6311, 5
        %v6314 = vor.u32 %v6310, %v6313
        %v6315 = vrot.slane %v6314, 4
        %v6317 = vshll.u32 %v6092, 16
        %v6319 = vrot.slane %v6317, 5
        %v6320 = vsel %vm521, %v6315, %v6319
        %v6321 = vshrl.u32 %v6092, 16
        %v6323 = vrot.slane %v6321, 4
        %v6324 = vor.u32 %v6323, %v6319
        %v6325 = vrot.slane %v6324, 4
        %v6327 = vshll.u32 %v6093, 16
        %v6329 = vrot.slane %v6327, 5
        %v6330 = vsel %vm521, %v6325, %v6329
        %v6332 = vshrl.u32 %v6094, 16
        %v6334 = vrot.slane %v6332, 4
        %v6335 = vshll.u32 %v6094, 16
        %v6337 = vrot.slane %v6335, 5
        %v6338 = vor.u32 %v6334, %v6337
        %v6339 = vrot.slane %v6338, 4
        %v6341 = vshll.u32 %v6095, 16
        %v6343 = vrot.slane %v6341, 5
        %v6344 = vsel %vm521, %v6339, %v6343
        %v6345 = vshrl.u32 %v6095, 16
        %v6347 = vrot.slane %v6345, 4
        %v6348 = vor.u32 %v6347, %v6343
        %v6349 = vrot.slane %v6348, 4
        %v6351 = vshll.u32 %v6096, 16
        %v6353 = vrot.slane %v6351, 5
        %v6354 = vsel %vm521, %v6349, %v6353
        %v6356 = vshrl.u32 %v6097, 16
        %v6358 = vrot.slane %v6356, 4
        %v6359 = vshll.u32 %v6097, 16
        %v6361 = vrot.slane %v6359, 5
        %v6362 = vor.u32 %v6358, %v6361
        %v6363 = vrot.slane %v6362, 4
        %v6365 = vshll.u32 %v6098, 16
        %v6367 = vrot.slane %v6365, 5
        %v6368 = vsel %vm521, %v6363, %v6367
        %v6369 = vshrl.u32 %v6098, 16
        %v6371 = vrot.slane %v6369, 4
        %v6372 = vor.u32 %v6371, %v6367
        %v6373 = vrot.slane %v6372, 4
        %v6375 = vshll.u32 %v6099, 16
        %v6377 = vrot.slane %v6375, 5
        %v6378 = vsel %vm521, %v6373, %v6377
        %v6380 = vshrl.u32 %v6100, 16
        %v6382 = vrot.slane %v6380, 4
        %v6383 = vshll.u32 %v6100, 16
        %v6385 = vrot.slane %v6383, 5
        %v6386 = vor.u32 %v6382, %v6385
        %v6387 = vrot.slane %v6386, 4
        %v6389 = vshll.u32 %v6101, 16
        %v6391 = vrot.slane %v6389, 5
        %v6392 = vsel %vm521, %v6387, %v6391
        %v6393 = vshrl.u32 %v6101, 16
        %v6395 = vrot.slane %v6393, 4
        %v6396 = vor.u32 %v6395, %v6391
        %v6397 = vrot.slane %v6396, 4
        %v6399 = vshll.u32 %v6102, 16
        %v6401 = vrot.slane %v6399, 5
        %v6402 = vsel %vm521, %v6397, %v6401
        %v6404 = vshrl.u32 %v6103, 16
        %v6406 = vrot.slane %v6404, 4
        %v6407 = vshll.u32 %v6103, 16
        %v6409 = vrot.slane %v6407, 5
        %v6410 = vor.u32 %v6406, %v6409
        %v6411 = vrot.slane %v6410, 4
        %v6413 = vshll.u32 %v6104, 16
        %v6415 = vrot.slane %v6413, 5
        %v6416 = vsel %vm521, %v6411, %v6415
        %v6417 = vshrl.u32 %v6104, 16
        %v6419 = vrot.slane %v6417, 4
        %v6420 = vor.u32 %v6419, %v6415
        %v6421 = vrot.slane %v6420, 4
        %v6423 = vshll.u32 %v6105, 16
        %v6425 = vrot.slane %v6423, 5
        %v6426 = vsel %vm521, %v6421, %v6425
        %v6428 = vshrl.u32 %v6106, 16
        %v6430 = vrot.slane %v6428, 4
        %v6431 = vshll.u32 %v6106, 16
        %v6433 = vrot.slane %v6431, 5
        %v6434 = vor.u32 %v6430, %v6433
        %v6435 = vrot.slane %v6434, 4
        %v6437 = vshll.u32 %v6107, 16
        %v6439 = vrot.slane %v6437, 5
        %v6440 = vsel %vm521, %v6435, %v6439
        %v6441 = vshrl.u32 %v6107, 16
        %v6443 = vrot.slane %v6441, 4
        %v6444 = vor.u32 %v6443, %v6439
        %v6445 = vrot.slane %v6444, 4
        %v6447 = vshll.u32 %v6108, 16
        %v6449 = vrot.slane %v6447, 5
        %v6450 = vsel %vm521, %v6445, %v6449
        %v6452 = vshrl.u32 %v6109, 16
        %v6454 = vrot.slane %v6452, 4
        %v6455 = vshll.u32 %v6109, 16
        %v6457 = vrot.slane %v6455, 5
        %v6458 = vor.u32 %v6454, %v6457
        %v6459 = vrot.slane %v6458, 4
        %v6461 = vshll.u32 %v6110, 16
        %v6463 = vrot.slane %v6461, 5
        %v6464 = vsel %vm521, %v6459, %v6463
        %v6465 = vshrl.u32 %v6110, 16
        %v6467 = vrot.slane %v6465, 4
        %v6468 = vor.u32 %v6467, %v6463
        %v6469 = vrot.slane %v6468, 4
        %v6471 = vshll.u32 %v6111, 16
        %v6473 = vrot.slane %v6471, 5
        %v6474 = vsel %vm521, %v6469, %v6473
        %v6476 = vshrl.u32 %v6112, 16
        %v6478 = vrot.slane %v6476, 4
        %v6479 = vshll.u32 %v6112, 16
        %v6481 = vrot.slane %v6479, 5
        %v6482 = vor.u32 %v6478, %v6481
        %v6483 = vrot.slane %v6482, 4
        %v6485 = vshll.u32 %v6113, 16
        %v6487 = vrot.slane %v6485, 5
        %v6488 = vsel %vm521, %v6483, %v6487
        %v6489 = vshrl.u32 %v6113, 16
        %v6491 = vrot.slane %v6489, 4
        %v6492 = vor.u32 %v6491, %v6487
        %v6493 = vrot.slane %v6492, 4
        %v6495 = vshll.u32 %v6114, 16
        %v6497 = vrot.slane %v6495, 5
        %v6498 = vsel %vm521, %v6493, %v6497
        %6531 = vst [vmem:[#allocation3 + $0x4] sm:$0xf] %v6128
        %6532 = vst [vmem:[#allocation3 + $0x28] sm:$0xf] %v6138
        %6533 = vst [vmem:[#allocation3 + $0x4c] sm:$0xf] %v6152
        %6534 = vst [vmem:[#allocation3 + $0x70] sm:$0xf] %v6162
        %6535 = vst [vmem:[#allocation3 + $0x94] sm:$0xf] %v6176
        %6536 = vst [vmem:[#allocation3 + $0xb8] sm:$0xf] %v6186
        %6537 = vst [vmem:[#allocation3 + $0xdc] sm:$0xf] %v6200
        %6538 = vst [vmem:[#allocation3 + $0x100] sm:$0xf] %v6210
        %6539 = vst [vmem:[#allocation3 + $0x124] sm:$0xf] %v6224
        %6540 = vst [vmem:[#allocation3 + $0x148] sm:$0xf] %v6234
        %6541 = vst [vmem:[#allocation3 + $0x16c] sm:$0xf] %v6248
        %6542 = vst [vmem:[#allocation3 + $0x190] sm:$0xf] %v6258
        %6543 = vst [vmem:[#allocation3 + $0x1b4] sm:$0xf] %v6272
        %6544 = vst [vmem:[#allocation3 + $0x1d8] sm:$0xf] %v6282
        %6545 = vst [vmem:[#allocation3 + $0x1fc] sm:$0xf] %v6296
        %6546 = vst [vmem:[#allocation3 + $0x220] sm:$0xf] %v6306
        %6547 = vst [vmem:[#allocation3 + $0x244] sm:$0xf] %v6320
        %6548 = vst [vmem:[#allocation3 + $0x268] sm:$0xf] %v6330
        %6549 = vst [vmem:[#allocation3 + $0x28c] sm:$0xf] %v6344
        %6550 = vst [vmem:[#allocation3 + $0x2b0] sm:$0xf] %v6354
        %6551 = vst [vmem:[#allocation3 + $0x2d4] sm:$0xf] %v6368
        %6552 = vst [vmem:[#allocation3 + $0x2f8] sm:$0xf] %v6378
        %6553 = vst [vmem:[#allocation3 + $0x31c] sm:$0xf] %v6392
        %6554 = vst [vmem:[#allocation3 + $0x340] sm:$0xf] %v6402
        %6555 = vst [vmem:[#allocation3 + $0x364] sm:$0xf] %v6416
        %6556 = vst [vmem:[#allocation3 + $0x388] sm:$0xf] %v6426
        %6557 = vst [vmem:[#allocation3 + $0x3ac] sm:$0xf] %v6440
        %6558 = vst [vmem:[#allocation3 + $0x3d0] sm:$0xf] %v6450
        %6559 = vst [vmem:[#allocation3 + $0x3f4] sm:$0xf] %v6464
        %6560 = vst [vmem:[#allocation3 + $0x418] sm:$0xf] %v6474
        %6561 = vst [vmem:[#allocation3 + $0x43c] sm:$0xf] %v6488
        %6562 = vst [vmem:[#allocation3 + $0x460] sm:$0xf] %v6498
        %v6563 = vld [vmem:[#allocation2] sm:$0xe]
        %v6564 = vld [vmem:[#allocation2 + $0x4] sm:$0xf]
        %v6565 = vld [vmem:[#allocation2 + $0x8] sm:$0x1]
        %v6566 = vld [vmem:[#allocation2 + $0xc] sm:$0xe]
        %v6567 = vld [vmem:[#allocation2 + $0x10] sm:$0xf]
        %v6568 = vld [vmem:[#allocation2 + $0x14] sm:$0x1]
        %v6569 = vld [vmem:[#allocation2 + $0x18] sm:$0xe]
        %v6570 = vld [vmem:[#allocation2 + $0x1c] sm:$0xf]
        %v6571 = vld [vmem:[#allocation2 + $0x20] sm:$0x1]
        %v6572 = vld [vmem:[#allocation2 + $0x24] sm:$0xe]
        %v6573 = vld [vmem:[#allocation2 + $0x28] sm:$0xf]
        %v6574 = vld [vmem:[#allocation2 + $0x2c] sm:$0x1]
        %v6575 = vld [vmem:[#allocation2 + $0x30] sm:$0xe]
        %v6576 = vld [vmem:[#allocation2 + $0x34] sm:$0xf]
        %v6577 = vld [vmem:[#allocation2 + $0x38] sm:$0x1]
        %v6578 = vld [vmem:[#allocation2 + $0x3c] sm:$0xe]
        %v6579 = vld [vmem:[#allocation2 + $0x40] sm:$0xf]
        %v6580 = vld [vmem:[#allocation2 + $0x44] sm:$0x1]
        %v6581 = vld [vmem:[#allocation2 + $0x48] sm:$0xe]
        %v6582 = vld [vmem:[#allocation2 + $0x4c] sm:$0xf]
        %v6583 = vld [vmem:[#allocation2 + $0x50] sm:$0x1]
        %v6584 = vld [vmem:[#allocation2 + $0x54] sm:$0xe]
        %v6585 = vld [vmem:[#allocation2 + $0x58] sm:$0xf]
        %v6586 = vld [vmem:[#allocation2 + $0x5c] sm:$0x1]
        %v6587 = vld [vmem:[#allocation2 + $0x60] sm:$0xe]
        %v6588 = vld [vmem:[#allocation2 + $0x64] sm:$0xf]
        %v6589 = vld [vmem:[#allocation2 + $0x68] sm:$0x1]
        %v6590 = vld [vmem:[#allocation2 + $0x6c] sm:$0xe]
        %v6591 = vld [vmem:[#allocation2 + $0x70] sm:$0xf]
        %v6592 = vld [vmem:[#allocation2 + $0x74] sm:$0x1]
        %v6593 = vld [vmem:[#allocation2 + $0x78] sm:$0xe]
        %v6594 = vld [vmem:[#allocation2 + $0x7c] sm:$0xf]
        %v6595 = vld [vmem:[#allocation2 + $0x80] sm:$0x1]
        %v6596 = vld [vmem:[#allocation2 + $0x84] sm:$0xe]
        %v6597 = vld [vmem:[#allocation2 + $0x88] sm:$0xf]
        %v6598 = vld [vmem:[#allocation2 + $0x8c] sm:$0x1]
        %v6599 = vld [vmem:[#allocation2 + $0x90] sm:$0xe]
        %v6600 = vld [vmem:[#allocation2 + $0x94] sm:$0xf]
        %v6601 = vld [vmem:[#allocation2 + $0x98] sm:$0x1]
        %v6602 = vld [vmem:[#allocation2 + $0x9c] sm:$0xe]
        %v6603 = vld [vmem:[#allocation2 + $0xa0] sm:$0xf]
        %v6604 = vld [vmem:[#allocation2 + $0xa4] sm:$0x1]
        %v6605 = vld [vmem:[#allocation2 + $0xa8] sm:$0xe]
        %v6606 = vld [vmem:[#allocation2 + $0xac] sm:$0xf]
        %v6607 = vld [vmem:[#allocation2 + $0xb0] sm:$0x1]
        %v6608 = vld [vmem:[#allocation2 + $0xb4] sm:$0xe]
        %v6609 = vld [vmem:[#allocation2 + $0xb8] sm:$0xf]
        %v6610 = vld [vmem:[#allocation2 + $0xbc] sm:$0x1]
        %v6659 = vrot.slane %v6563, 5
        %v6660 = vrot.slane %v6659, 4
        %v6661 = vrot.slane %v6564, 5
        %v6662 = vsel %vm1068, %v6660, %v6661
        %v6663 = vrot.slane %v6661, 4
        %v6664 = vrot.slane %v6565, 5
        %v6665 = vsel %vm1068, %v6663, %v6664
        %v6666 = vrot.slane %v6566, 5
        %v6667 = vrot.slane %v6666, 4
        %v6668 = vrot.slane %v6567, 5
        %v6669 = vsel %vm1068, %v6667, %v6668
        %v6670 = vrot.slane %v6668, 4
        %v6671 = vrot.slane %v6568, 5
        %v6672 = vsel %vm1068, %v6670, %v6671
        %v6673 = vrot.slane %v6569, 5
        %v6674 = vrot.slane %v6673, 4
        %v6675 = vrot.slane %v6570, 5
        %v6676 = vsel %vm1068, %v6674, %v6675
        %v6677 = vrot.slane %v6675, 4
        %v6678 = vrot.slane %v6571, 5
        %v6679 = vsel %vm1068, %v6677, %v6678
        %v6680 = vrot.slane %v6572, 5
        %v6681 = vrot.slane %v6680, 4
        %v6682 = vrot.slane %v6573, 5
        %v6683 = vsel %vm1068, %v6681, %v6682
        %v6684 = vrot.slane %v6682, 4
        %v6685 = vrot.slane %v6574, 5
        %v6686 = vsel %vm1068, %v6684, %v6685
        %v6687 = vrot.slane %v6575, 5
        %v6688 = vrot.slane %v6687, 4
        %v6689 = vrot.slane %v6576, 5
        %v6690 = vsel %vm1068, %v6688, %v6689
        %v6691 = vrot.slane %v6689, 4
        %v6692 = vrot.slane %v6577, 5
        %v6693 = vsel %vm1068, %v6691, %v6692
        %v6694 = vrot.slane %v6578, 5
        %v6695 = vrot.slane %v6694, 4
        %v6696 = vrot.slane %v6579, 5
        %v6697 = vsel %vm1068, %v6695, %v6696
        %v6698 = vrot.slane %v6696, 4
        %v6699 = vrot.slane %v6580, 5
        %v6700 = vsel %vm1068, %v6698, %v6699
        %v6701 = vrot.slane %v6581, 5
        %v6702 = vrot.slane %v6701, 4
        %v6703 = vrot.slane %v6582, 5
        %v6704 = vsel %vm1068, %v6702, %v6703
        %v6705 = vrot.slane %v6703, 4
        %v6706 = vrot.slane %v6583, 5
        %v6707 = vsel %vm1068, %v6705, %v6706
        %v6708 = vrot.slane %v6584, 5
        %v6709 = vrot.slane %v6708, 4
        %v6710 = vrot.slane %v6585, 5
        %v6711 = vsel %vm1068, %v6709, %v6710
        %v6712 = vrot.slane %v6710, 4
        %v6713 = vrot.slane %v6586, 5
        %v6714 = vsel %vm1068, %v6712, %v6713
        %v6715 = vrot.slane %v6587, 5
        %v6716 = vrot.slane %v6715, 4
        %v6717 = vrot.slane %v6588, 5
        %v6718 = vsel %vm1068, %v6716, %v6717
        %v6719 = vrot.slane %v6717, 4
        %v6720 = vrot.slane %v6589, 5
        %v6721 = vsel %vm1068, %v6719, %v6720
        %v6722 = vrot.slane %v6590, 5
        %v6723 = vrot.slane %v6722, 4
        %v6724 = vrot.slane %v6591, 5
        %v6725 = vsel %vm1068, %v6723, %v6724
        %v6726 = vrot.slane %v6724, 4
        %v6727 = vrot.slane %v6592, 5
        %v6728 = vsel %vm1068, %v6726, %v6727
        %v6729 = vrot.slane %v6593, 5
        %v6730 = vrot.slane %v6729, 4
        %v6731 = vrot.slane %v6594, 5
        %v6732 = vsel %vm1068, %v6730, %v6731
        %v6733 = vrot.slane %v6731, 4
        %v6734 = vrot.slane %v6595, 5
        %v6735 = vsel %vm1068, %v6733, %v6734
        %v6736 = vrot.slane %v6596, 5
        %v6737 = vrot.slane %v6736, 4
        %v6738 = vrot.slane %v6597, 5
        %v6739 = vsel %vm1068, %v6737, %v6738
        %v6740 = vrot.slane %v6738, 4
        %v6741 = vrot.slane %v6598, 5
        %v6742 = vsel %vm1068, %v6740, %v6741
        %v6743 = vrot.slane %v6599, 5
        %v6744 = vrot.slane %v6743, 4
        %v6745 = vrot.slane %v6600, 5
        %v6746 = vsel %vm1068, %v6744, %v6745
        %v6747 = vrot.slane %v6745, 4
        %v6748 = vrot.slane %v6601, 5
        %v6749 = vsel %vm1068, %v6747, %v6748
        %v6750 = vrot.slane %v6602, 5
        %v6751 = vrot.slane %v6750, 4
        %v6752 = vrot.slane %v6603, 5
        %v6753 = vsel %vm1068, %v6751, %v6752
        %v6754 = vrot.slane %v6752, 4
        %v6755 = vrot.slane %v6604, 5
        %v6756 = vsel %vm1068, %v6754, %v6755
        %v6757 = vrot.slane %v6605, 5
        %v6758 = vrot.slane %v6757, 4
        %v6759 = vrot.slane %v6606, 5
        %v6760 = vsel %vm1068, %v6758, %v6759
        %v6761 = vrot.slane %v6759, 4
        %v6762 = vrot.slane %v6607, 5
        %v6763 = vsel %vm1068, %v6761, %v6762
        %v6764 = vrot.slane %v6608, 5
        %v6765 = vrot.slane %v6764, 4
        %v6766 = vrot.slane %v6609, 5
        %v6767 = vsel %vm1068, %v6765, %v6766
        %v6768 = vrot.slane %v6766, 4
        %v6769 = vrot.slane %v6610, 5
        %v6770 = vsel %vm1068, %v6768, %v6769
        %6803 = vst [vmem:[#allocation3 + $0x8] sm:$0xf] %v6662
        %6804 = vst [vmem:[#allocation3 + $0x2c] sm:$0xf] %v6665
        %6805 = vst [vmem:[#allocation3 + $0x50] sm:$0xf] %v6669
        %6806 = vst [vmem:[#allocation3 + $0x74] sm:$0xf] %v6672
        %6807 = vst [vmem:[#allocation3 + $0x98] sm:$0xf] %v6676
        %6808 = vst [vmem:[#allocation3 + $0xbc] sm:$0xf] %v6679
        %6809 = vst [vmem:[#allocation3 + $0xe0] sm:$0xf] %v6683
        %6810 = vst [vmem:[#allocation3 + $0x104] sm:$0xf] %v6686
        %6811 = vst [vmem:[#allocation3 + $0x128] sm:$0xf] %v6690
        %6812 = vst [vmem:[#allocation3 + $0x14c] sm:$0xf] %v6693
        %6813 = vst [vmem:[#allocation3 + $0x170] sm:$0xf] %v6697
        %6814 = vst [vmem:[#allocation3 + $0x194] sm:$0xf] %v6700
        %6815 = vst [vmem:[#allocation3 + $0x1b8] sm:$0xf] %v6704
        %6816 = vst [vmem:[#allocation3 + $0x1dc] sm:$0xf] %v6707
        %6817 = vst [vmem:[#allocation3 + $0x200] sm:$0xf] %v6711
        %6818 = vst [vmem:[#allocation3 + $0x224] sm:$0xf] %v6714
        %6819 = vst [vmem:[#allocation3 + $0x248] sm:$0xf] %v6718
        %6820 = vst [vmem:[#allocation3 + $0x26c] sm:$0xf] %v6721
        %6821 = vst [vmem:[#allocation3 + $0x290] sm:$0xf] %v6725
        %6822 = vst [vmem:[#allocation3 + $0x2b4] sm:$0xf] %v6728
        %6823 = vst [vmem:[#allocation3 + $0x2d8] sm:$0xf] %v6732
        %6824 = vst [vmem:[#allocation3 + $0x2fc] sm:$0xf] %v6735
        %6825 = vst [vmem:[#allocation3 + $0x320] sm:$0xf] %v6739
        %6826 = vst [vmem:[#allocation3 + $0x344] sm:$0xf] %v6742
        %6827 = vst [vmem:[#allocation3 + $0x368] sm:$0xf] %v6746
        %6828 = vst [vmem:[#allocation3 + $0x38c] sm:$0xf] %v6749
        %6829 = vst [vmem:[#allocation3 + $0x3b0] sm:$0xf] %v6753
        %6830 = vst [vmem:[#allocation3 + $0x3d4] sm:$0xf] %v6756
        %6831 = vst [vmem:[#allocation3 + $0x3f8] sm:$0xf] %v6760
        %6832 = vst [vmem:[#allocation3 + $0x41c] sm:$0xf] %v6763
        %6833 = vst [vmem:[#allocation3 + $0x440] sm:$0xf] %v6767
        %6834 = vst [vmem:[#allocation3 + $0x464] sm:$0xf] %v6770
        %v6835 = vld [vmem:[%s305] sm:$0xf]
        %v6836 = vld [vmem:[%s305 + $0x4] sm:$0xf]
        %v6837 = vld [vmem:[%s305 + $0xc] sm:$0xf]
        %v6838 = vld [vmem:[%s305 + $0x10] sm:$0xf]
        %v6839 = vld [vmem:[%s305 + $0x18] sm:$0xf]
        %v6840 = vld [vmem:[%s305 + $0x1c] sm:$0xf]
        %v6841 = vld [vmem:[%s305 + $0x24] sm:$0xf]
        %v6842 = vld [vmem:[%s305 + $0x28] sm:$0xf]
        %v6843 = vld [vmem:[%s305 + $0x30] sm:$0xf]
        %v6844 = vld [vmem:[%s305 + $0x34] sm:$0xf]
        %v6845 = vld [vmem:[%s305 + $0x3c] sm:$0xf]
        %v6846 = vld [vmem:[%s305 + $0x40] sm:$0xf]
        %v6847 = vld [vmem:[%s305 + $0x48] sm:$0xf]
        %v6848 = vld [vmem:[%s305 + $0x4c] sm:$0xf]
        %v6849 = vld [vmem:[%s305 + $0x54] sm:$0xf]
        %v6850 = vld [vmem:[%s305 + $0x58] sm:$0xf]
        %v6851 = vld [vmem:[%s305 + $0x60] sm:$0xf]
        %v6852 = vld [vmem:[%s305 + $0x64] sm:$0xf]
        %v6853 = vld [vmem:[%s305 + $0x6c] sm:$0xf]
        %v6854 = vld [vmem:[%s305 + $0x70] sm:$0xf]
        %v6855 = vld [vmem:[%s305 + $0x78] sm:$0xf]
        %v6856 = vld [vmem:[%s305 + $0x7c] sm:$0xf]
        %v6857 = vld [vmem:[%s305 + $0x84] sm:$0xf]
        %v6858 = vld [vmem:[%s305 + $0x88] sm:$0xf]
        %v6859 = vld [vmem:[%s305 + $0x90] sm:$0xf]
        %v6860 = vld [vmem:[%s305 + $0x94] sm:$0xf]
        %v6861 = vld [vmem:[%s305 + $0x9c] sm:$0xf]
        %v6862 = vld [vmem:[%s305 + $0xa0] sm:$0xf]
        %v6863 = vld [vmem:[%s305 + $0xa8] sm:$0xf]
        %v6864 = vld [vmem:[%s305 + $0xac] sm:$0xf]
        %v6865 = vld [vmem:[%s305 + $0xb4] sm:$0xf]
        %v6866 = vld [vmem:[%s305 + $0xb8] sm:$0xf]
        %6867 = vst [vmem:[#allocation3 + $0xc] sm:$0xf] %v6835
        %6868 = vst [vmem:[#allocation3 + $0x30] sm:$0xf] %v6836
        %6869 = vst [vmem:[#allocation3 + $0x54] sm:$0xf] %v6837
        %6870 = vst [vmem:[#allocation3 + $0x78] sm:$0xf] %v6838
        %6871 = vst [vmem:[#allocation3 + $0x9c] sm:$0xf] %v6839
        %6872 = vst [vmem:[#allocation3 + $0xc0] sm:$0xf] %v6840
        %6873 = vst [vmem:[#allocation3 + $0xe4] sm:$0xf] %v6841
        %6874 = vst [vmem:[#allocation3 + $0x108] sm:$0xf] %v6842
        %6875 = vst [vmem:[#allocation3 + $0x12c] sm:$0xf] %v6843
        %6876 = vst [vmem:[#allocation3 + $0x150] sm:$0xf] %v6844
        %6877 = vst [vmem:[#allocation3 + $0x174] sm:$0xf] %v6845
        %6878 = vst [vmem:[#allocation3 + $0x198] sm:$0xf] %v6846
        %6879 = vst [vmem:[#allocation3 + $0x1bc] sm:$0xf] %v6847
        %6880 = vst [vmem:[#allocation3 + $0x1e0] sm:$0xf] %v6848
        %6881 = vst [vmem:[#allocation3 + $0x204] sm:$0xf] %v6849
        %6882 = vst [vmem:[#allocation3 + $0x228] sm:$0xf] %v6850
        %6883 = vst [vmem:[#allocation3 + $0x24c] sm:$0xf] %v6851
        %6884 = vst [vmem:[#allocation3 + $0x270] sm:$0xf] %v6852
        %6885 = vst [vmem:[#allocation3 + $0x294] sm:$0xf] %v6853
        %6886 = vst [vmem:[#allocation3 + $0x2b8] sm:$0xf] %v6854
        %6887 = vst [vmem:[#allocation3 + $0x2dc] sm:$0xf] %v6855
        %6888 = vst [vmem:[#allocation3 + $0x300] sm:$0xf] %v6856
        %6889 = vst [vmem:[#allocation3 + $0x324] sm:$0xf] %v6857
        %6890 = vst [vmem:[#allocation3 + $0x348] sm:$0xf] %v6858
        %6891 = vst [vmem:[#allocation3 + $0x36c] sm:$0xf] %v6859
        %6892 = vst [vmem:[#allocation3 + $0x390] sm:$0xf] %v6860
        %6893 = vst [vmem:[#allocation3 + $0x3b4] sm:$0xf] %v6861
        %6894 = vst [vmem:[#allocation3 + $0x3d8] sm:$0xf] %v6862
        %6895 = vst [vmem:[#allocation3 + $0x3fc] sm:$0xf] %v6863
        %6896 = vst [vmem:[#allocation3 + $0x420] sm:$0xf] %v6864
        %6897 = vst [vmem:[#allocation3 + $0x444] sm:$0xf] %v6865
        %6898 = vst [vmem:[#allocation3 + $0x468] sm:$0xf] %v6866
        %v6899 = vld [vmem:[%s305] sm:$0xf]
        %v6900 = vld [vmem:[%s305 + $0x4] sm:$0xf]
        %v6901 = vld [vmem:[%s305 + $0x8] sm:$0x1]
        %v6902 = vld [vmem:[%s305 + $0xc] sm:$0xf]
        %v6903 = vld [vmem:[%s305 + $0x10] sm:$0xf]
        %v6904 = vld [vmem:[%s305 + $0x14] sm:$0x1]
        %v6905 = vld [vmem:[%s305 + $0x18] sm:$0xf]
        %v6906 = vld [vmem:[%s305 + $0x1c] sm:$0xf]
        %v6907 = vld [vmem:[%s305 + $0x20] sm:$0x1]
        %v6908 = vld [vmem:[%s305 + $0x24] sm:$0xf]
        %v6909 = vld [vmem:[%s305 + $0x28] sm:$0xf]
        %v6910 = vld [vmem:[%s305 + $0x2c] sm:$0x1]
        %v6911 = vld [vmem:[%s305 + $0x30] sm:$0xf]
        %v6912 = vld [vmem:[%s305 + $0x34] sm:$0xf]
        %v6913 = vld [vmem:[%s305 + $0x38] sm:$0x1]
        %v6914 = vld [vmem:[%s305 + $0x3c] sm:$0xf]
        %v6915 = vld [vmem:[%s305 + $0x40] sm:$0xf]
        %v6916 = vld [vmem:[%s305 + $0x44] sm:$0x1]
        %v6917 = vld [vmem:[%s305 + $0x48] sm:$0xf]
        %v6918 = vld [vmem:[%s305 + $0x4c] sm:$0xf]
        %v6919 = vld [vmem:[%s305 + $0x50] sm:$0x1]
        %v6920 = vld [vmem:[%s305 + $0x54] sm:$0xf]
        %v6921 = vld [vmem:[%s305 + $0x58] sm:$0xf]
        %v6922 = vld [vmem:[%s305 + $0x5c] sm:$0x1]
        %v6923 = vld [vmem:[%s305 + $0x60] sm:$0xf]
        %v6924 = vld [vmem:[%s305 + $0x64] sm:$0xf]
        %v6925 = vld [vmem:[%s305 + $0x68] sm:$0x1]
        %v6926 = vld [vmem:[%s305 + $0x6c] sm:$0xf]
        %v6927 = vld [vmem:[%s305 + $0x70] sm:$0xf]
        %v6928 = vld [vmem:[%s305 + $0x74] sm:$0x1]
        %v6929 = vld [vmem:[%s305 + $0x78] sm:$0xf]
        %v6930 = vld [vmem:[%s305 + $0x7c] sm:$0xf]
        %v6931 = vld [vmem:[%s305 + $0x80] sm:$0x1]
        %v6932 = vld [vmem:[%s305 + $0x84] sm:$0xf]
        %v6933 = vld [vmem:[%s305 + $0x88] sm:$0xf]
        %v6934 = vld [vmem:[%s305 + $0x8c] sm:$0x1]
        %v6935 = vld [vmem:[%s305 + $0x90] sm:$0xf]
        %v6936 = vld [vmem:[%s305 + $0x94] sm:$0xf]
        %v6937 = vld [vmem:[%s305 + $0x98] sm:$0x1]
        %v6938 = vld [vmem:[%s305 + $0x9c] sm:$0xf]
        %v6939 = vld [vmem:[%s305 + $0xa0] sm:$0xf]
        %v6940 = vld [vmem:[%s305 + $0xa4] sm:$0x1]
        %v6941 = vld [vmem:[%s305 + $0xa8] sm:$0xf]
        %v6942 = vld [vmem:[%s305 + $0xac] sm:$0xf]
        %v6943 = vld [vmem:[%s305 + $0xb0] sm:$0x1]
        %v6944 = vld [vmem:[%s305 + $0xb4] sm:$0xf]
        %v6945 = vld [vmem:[%s305 + $0xb8] sm:$0xf]
        %v6946 = vld [vmem:[%s305 + $0xbc] sm:$0x1]
        %v6948 = vshrl.u32 %v6899, 16
        %v6950 = vrot.slane %v6948, 4
        %v6951 = vshll.u32 %v6899, 16
        %v6953 = vrot.slane %v6951, 5
        %v6954 = vor.u32 %v6950, %v6953
        %v6955 = vrot.slane %v6954, 4
        %v6957 = vshll.u32 %v6900, 16
        %v6959 = vrot.slane %v6957, 5
        %v6960 = vsel %vm521, %v6955, %v6959
        %v6961 = vshrl.u32 %v6900, 16
        %v6963 = vrot.slane %v6961, 4
        %v6964 = vor.u32 %v6963, %v6959
        %v6965 = vrot.slane %v6964, 4
        %v6967 = vshll.u32 %v6901, 16
        %v6969 = vrot.slane %v6967, 5
        %v6970 = vsel %vm521, %v6965, %v6969
        %v6972 = vshrl.u32 %v6902, 16
        %v6974 = vrot.slane %v6972, 4
        %v6975 = vshll.u32 %v6902, 16
        %v6977 = vrot.slane %v6975, 5
        %v6978 = vor.u32 %v6974, %v6977
        %v6979 = vrot.slane %v6978, 4
        %v6981 = vshll.u32 %v6903, 16
        %v6983 = vrot.slane %v6981, 5
        %v6984 = vsel %vm521, %v6979, %v6983
        %v6985 = vshrl.u32 %v6903, 16
        %v6987 = vrot.slane %v6985, 4
        %v6988 = vor.u32 %v6987, %v6983
        %v6989 = vrot.slane %v6988, 4
        %v6991 = vshll.u32 %v6904, 16
        %v6993 = vrot.slane %v6991, 5
        %v6994 = vsel %vm521, %v6989, %v6993
        %v6996 = vshrl.u32 %v6905, 16
        %v6998 = vrot.slane %v6996, 4
        %v6999 = vshll.u32 %v6905, 16
        %v7001 = vrot.slane %v6999, 5
        %v7002 = vor.u32 %v6998, %v7001
        %v7003 = vrot.slane %v7002, 4
        %v7005 = vshll.u32 %v6906, 16
        %v7007 = vrot.slane %v7005, 5
        %v7008 = vsel %vm521, %v7003, %v7007
        %v7009 = vshrl.u32 %v6906, 16
        %v7011 = vrot.slane %v7009, 4
        %v7012 = vor.u32 %v7011, %v7007
        %v7013 = vrot.slane %v7012, 4
        %v7015 = vshll.u32 %v6907, 16
        %v7017 = vrot.slane %v7015, 5
        %v7018 = vsel %vm521, %v7013, %v7017
        %v7020 = vshrl.u32 %v6908, 16
        %v7022 = vrot.slane %v7020, 4
        %v7023 = vshll.u32 %v6908, 16
        %v7025 = vrot.slane %v7023, 5
        %v7026 = vor.u32 %v7022, %v7025
        %v7027 = vrot.slane %v7026, 4
        %v7029 = vshll.u32 %v6909, 16
        %v7031 = vrot.slane %v7029, 5
        %v7032 = vsel %vm521, %v7027, %v7031
        %v7033 = vshrl.u32 %v6909, 16
        %v7035 = vrot.slane %v7033, 4
        %v7036 = vor.u32 %v7035, %v7031
        %v7037 = vrot.slane %v7036, 4
        %v7039 = vshll.u32 %v6910, 16
        %v7041 = vrot.slane %v7039, 5
        %v7042 = vsel %vm521, %v7037, %v7041
        %v7044 = vshrl.u32 %v6911, 16
        %v7046 = vrot.slane %v7044, 4
        %v7047 = vshll.u32 %v6911, 16
        %v7049 = vrot.slane %v7047, 5
        %v7050 = vor.u32 %v7046, %v7049
        %v7051 = vrot.slane %v7050, 4
        %v7053 = vshll.u32 %v6912, 16
        %v7055 = vrot.slane %v7053, 5
        %v7056 = vsel %vm521, %v7051, %v7055
        %v7057 = vshrl.u32 %v6912, 16
        %v7059 = vrot.slane %v7057, 4
        %v7060 = vor.u32 %v7059, %v7055
        %v7061 = vrot.slane %v7060, 4
        %v7063 = vshll.u32 %v6913, 16
        %v7065 = vrot.slane %v7063, 5
        %v7066 = vsel %vm521, %v7061, %v7065
        %v7068 = vshrl.u32 %v6914, 16
        %v7070 = vrot.slane %v7068, 4
        %v7071 = vshll.u32 %v6914, 16
        %v7073 = vrot.slane %v7071, 5
        %v7074 = vor.u32 %v7070, %v7073
        %v7075 = vrot.slane %v7074, 4
        %v7077 = vshll.u32 %v6915, 16
        %v7079 = vrot.slane %v7077, 5
        %v7080 = vsel %vm521, %v7075, %v7079
        %v7081 = vshrl.u32 %v6915, 16
        %v7083 = vrot.slane %v7081, 4
        %v7084 = vor.u32 %v7083, %v7079
        %v7085 = vrot.slane %v7084, 4
        %v7087 = vshll.u32 %v6916, 16
        %v7089 = vrot.slane %v7087, 5
        %v7090 = vsel %vm521, %v7085, %v7089
        %v7092 = vshrl.u32 %v6917, 16
        %v7094 = vrot.slane %v7092, 4
        %v7095 = vshll.u32 %v6917, 16
        %v7097 = vrot.slane %v7095, 5
        %v7098 = vor.u32 %v7094, %v7097
        %v7099 = vrot.slane %v7098, 4
        %v7101 = vshll.u32 %v6918, 16
        %v7103 = vrot.slane %v7101, 5
        %v7104 = vsel %vm521, %v7099, %v7103
        %v7105 = vshrl.u32 %v6918, 16
        %v7107 = vrot.slane %v7105, 4
        %v7108 = vor.u32 %v7107, %v7103
        %v7109 = vrot.slane %v7108, 4
        %v7111 = vshll.u32 %v6919, 16
        %v7113 = vrot.slane %v7111, 5
        %v7114 = vsel %vm521, %v7109, %v7113
        %v7116 = vshrl.u32 %v6920, 16
        %v7118 = vrot.slane %v7116, 4
        %v7119 = vshll.u32 %v6920, 16
        %v7121 = vrot.slane %v7119, 5
        %v7122 = vor.u32 %v7118, %v7121
        %v7123 = vrot.slane %v7122, 4
        %v7125 = vshll.u32 %v6921, 16
        %v7127 = vrot.slane %v7125, 5
        %v7128 = vsel %vm521, %v7123, %v7127
        %v7129 = vshrl.u32 %v6921, 16
        %v7131 = vrot.slane %v7129, 4
        %v7132 = vor.u32 %v7131, %v7127
        %v7133 = vrot.slane %v7132, 4
        %v7135 = vshll.u32 %v6922, 16
        %v7137 = vrot.slane %v7135, 5
        %v7138 = vsel %vm521, %v7133, %v7137
        %v7140 = vshrl.u32 %v6923, 16
        %v7142 = vrot.slane %v7140, 4
        %v7143 = vshll.u32 %v6923, 16
        %v7145 = vrot.slane %v7143, 5
        %v7146 = vor.u32 %v7142, %v7145
        %v7147 = vrot.slane %v7146, 4
        %v7149 = vshll.u32 %v6924, 16
        %v7151 = vrot.slane %v7149, 5
        %v7152 = vsel %vm521, %v7147, %v7151
        %v7153 = vshrl.u32 %v6924, 16
        %v7155 = vrot.slane %v7153, 4
        %v7156 = vor.u32 %v7155, %v7151
        %v7157 = vrot.slane %v7156, 4
        %v7159 = vshll.u32 %v6925, 16
        %v7161 = vrot.slane %v7159, 5
        %v7162 = vsel %vm521, %v7157, %v7161
        %v7164 = vshrl.u32 %v6926, 16
        %v7166 = vrot.slane %v7164, 4
        %v7167 = vshll.u32 %v6926, 16
        %v7169 = vrot.slane %v7167, 5
        %v7170 = vor.u32 %v7166, %v7169
        %v7171 = vrot.slane %v7170, 4
        %v7173 = vshll.u32 %v6927, 16
        %v7175 = vrot.slane %v7173, 5
        %v7176 = vsel %vm521, %v7171, %v7175
        %v7177 = vshrl.u32 %v6927, 16
        %v7179 = vrot.slane %v7177, 4
        %v7180 = vor.u32 %v7179, %v7175
        %v7181 = vrot.slane %v7180, 4
        %v7183 = vshll.u32 %v6928, 16
        %v7185 = vrot.slane %v7183, 5
        %v7186 = vsel %vm521, %v7181, %v7185
        %v7188 = vshrl.u32 %v6929, 16
        %v7190 = vrot.slane %v7188, 4
        %v7191 = vshll.u32 %v6929, 16
        %v7193 = vrot.slane %v7191, 5
        %v7194 = vor.u32 %v7190, %v7193
        %v7195 = vrot.slane %v7194, 4
        %v7197 = vshll.u32 %v6930, 16
        %v7199 = vrot.slane %v7197, 5
        %v7200 = vsel %vm521, %v7195, %v7199
        %v7201 = vshrl.u32 %v6930, 16
        %v7203 = vrot.slane %v7201, 4
        %v7204 = vor.u32 %v7203, %v7199
        %v7205 = vrot.slane %v7204, 4
        %v7207 = vshll.u32 %v6931, 16
        %v7209 = vrot.slane %v7207, 5
        %v7210 = vsel %vm521, %v7205, %v7209
        %v7212 = vshrl.u32 %v6932, 16
        %v7214 = vrot.slane %v7212, 4
        %v7215 = vshll.u32 %v6932, 16
        %v7217 = vrot.slane %v7215, 5
        %v7218 = vor.u32 %v7214, %v7217
        %v7219 = vrot.slane %v7218, 4
        %v7221 = vshll.u32 %v6933, 16
        %v7223 = vrot.slane %v7221, 5
        %v7224 = vsel %vm521, %v7219, %v7223
        %v7225 = vshrl.u32 %v6933, 16
        %v7227 = vrot.slane %v7225, 4
        %v7228 = vor.u32 %v7227, %v7223
        %v7229 = vrot.slane %v7228, 4
        %v7231 = vshll.u32 %v6934, 16
        %v7233 = vrot.slane %v7231, 5
        %v7234 = vsel %vm521, %v7229, %v7233
        %v7236 = vshrl.u32 %v6935, 16
        %v7238 = vrot.slane %v7236, 4
        %v7239 = vshll.u32 %v6935, 16
        %v7241 = vrot.slane %v7239, 5
        %v7242 = vor.u32 %v7238, %v7241
        %v7243 = vrot.slane %v7242, 4
        %v7245 = vshll.u32 %v6936, 16
        %v7247 = vrot.slane %v7245, 5
        %v7248 = vsel %vm521, %v7243, %v7247
        %v7249 = vshrl.u32 %v6936, 16
        %v7251 = vrot.slane %v7249, 4
        %v7252 = vor.u32 %v7251, %v7247
        %v7253 = vrot.slane %v7252, 4
        %v7255 = vshll.u32 %v6937, 16
        %v7257 = vrot.slane %v7255, 5
        %v7258 = vsel %vm521, %v7253, %v7257
        %v7260 = vshrl.u32 %v6938, 16
        %v7262 = vrot.slane %v7260, 4
        %v7263 = vshll.u32 %v6938, 16
        %v7265 = vrot.slane %v7263, 5
        %v7266 = vor.u32 %v7262, %v7265
        %v7267 = vrot.slane %v7266, 4
        %v7269 = vshll.u32 %v6939, 16
        %v7271 = vrot.slane %v7269, 5
        %v7272 = vsel %vm521, %v7267, %v7271
        %v7273 = vshrl.u32 %v6939, 16
        %v7275 = vrot.slane %v7273, 4
        %v7276 = vor.u32 %v7275, %v7271
        %v7277 = vrot.slane %v7276, 4
        %v7279 = vshll.u32 %v6940, 16
        %v7281 = vrot.slane %v7279, 5
        %v7282 = vsel %vm521, %v7277, %v7281
        %v7284 = vshrl.u32 %v6941, 16
        %v7286 = vrot.slane %v7284, 4
        %v7287 = vshll.u32 %v6941, 16
        %v7289 = vrot.slane %v7287, 5
        %v7290 = vor.u32 %v7286, %v7289
        %v7291 = vrot.slane %v7290, 4
        %v7293 = vshll.u32 %v6942, 16
        %v7295 = vrot.slane %v7293, 5
        %v7296 = vsel %vm521, %v7291, %v7295
        %v7297 = vshrl.u32 %v6942, 16
        %v7299 = vrot.slane %v7297, 4
        %v7300 = vor.u32 %v7299, %v7295
        %v7301 = vrot.slane %v7300, 4
        %v7303 = vshll.u32 %v6943, 16
        %v7305 = vrot.slane %v7303, 5
        %v7306 = vsel %vm521, %v7301, %v7305
        %v7308 = vshrl.u32 %v6944, 16
        %v7310 = vrot.slane %v7308, 4
        %v7311 = vshll.u32 %v6944, 16
        %v7313 = vrot.slane %v7311, 5
        %v7314 = vor.u32 %v7310, %v7313
        %v7315 = vrot.slane %v7314, 4
        %v7317 = vshll.u32 %v6945, 16
        %v7319 = vrot.slane %v7317, 5
        %v7320 = vsel %vm521, %v7315, %v7319
        %v7321 = vshrl.u32 %v6945, 16
        %v7323 = vrot.slane %v7321, 4
        %v7324 = vor.u32 %v7323, %v7319
        %v7325 = vrot.slane %v7324, 4
        %v7327 = vshll.u32 %v6946, 16
        %v7329 = vrot.slane %v7327, 5
        %v7330 = vsel %vm521, %v7325, %v7329
        %7363 = vst [vmem:[#allocation3 + $0x10] sm:$0xf] %v6960
        %7364 = vst [vmem:[#allocation3 + $0x34] sm:$0xf] %v6970
        %7365 = vst [vmem:[#allocation3 + $0x58] sm:$0xf] %v6984
        %7366 = vst [vmem:[#allocation3 + $0x7c] sm:$0xf] %v6994
        %7367 = vst [vmem:[#allocation3 + $0xa0] sm:$0xf] %v7008
        %7368 = vst [vmem:[#allocation3 + $0xc4] sm:$0xf] %v7018
        %7369 = vst [vmem:[#allocation3 + $0xe8] sm:$0xf] %v7032
        %7370 = vst [vmem:[#allocation3 + $0x10c] sm:$0xf] %v7042
        %7371 = vst [vmem:[#allocation3 + $0x130] sm:$0xf] %v7056
        %7372 = vst [vmem:[#allocation3 + $0x154] sm:$0xf] %v7066
        %7373 = vst [vmem:[#allocation3 + $0x178] sm:$0xf] %v7080
        %7374 = vst [vmem:[#allocation3 + $0x19c] sm:$0xf] %v7090
        %7375 = vst [vmem:[#allocation3 + $0x1c0] sm:$0xf] %v7104
        %7376 = vst [vmem:[#allocation3 + $0x1e4] sm:$0xf] %v7114
        %7377 = vst [vmem:[#allocation3 + $0x208] sm:$0xf] %v7128
        %7378 = vst [vmem:[#allocation3 + $0x22c] sm:$0xf] %v7138
        %7379 = vst [vmem:[#allocation3 + $0x250] sm:$0xf] %v7152
        %7380 = vst [vmem:[#allocation3 + $0x274] sm:$0xf] %v7162
        %7381 = vst [vmem:[#allocation3 + $0x298] sm:$0xf] %v7176
        %7382 = vst [vmem:[#allocation3 + $0x2bc] sm:$0xf] %v7186
        %7383 = vst [vmem:[#allocation3 + $0x2e0] sm:$0xf] %v7200
        %7384 = vst [vmem:[#allocation3 + $0x304] sm:$0xf] %v7210
        %7385 = vst [vmem:[#allocation3 + $0x328] sm:$0xf] %v7224
        %7386 = vst [vmem:[#allocation3 + $0x34c] sm:$0xf] %v7234
        %7387 = vst [vmem:[#allocation3 + $0x370] sm:$0xf] %v7248
        %7388 = vst [vmem:[#allocation3 + $0x394] sm:$0xf] %v7258
        %7389 = vst [vmem:[#allocation3 + $0x3b8] sm:$0xf] %v7272
        %7390 = vst [vmem:[#allocation3 + $0x3dc] sm:$0xf] %v7282
        %7391 = vst [vmem:[#allocation3 + $0x400] sm:$0xf] %v7296
        %7392 = vst [vmem:[#allocation3 + $0x424] sm:$0xf] %v7306
        %7393 = vst [vmem:[#allocation3 + $0x448] sm:$0xf] %v7320
        %7394 = vst [vmem:[#allocation3 + $0x46c] sm:$0xf] %v7330
        %v7395 = vld [vmem:[%s305] sm:$0xe]
        %v7396 = vld [vmem:[%s305 + $0x4] sm:$0xf]
        %v7397 = vld [vmem:[%s305 + $0x8] sm:$0x1]
        %v7398 = vld [vmem:[%s305 + $0xc] sm:$0xe]
        %v7399 = vld [vmem:[%s305 + $0x10] sm:$0xf]
        %v7400 = vld [vmem:[%s305 + $0x14] sm:$0x1]
        %v7401 = vld [vmem:[%s305 + $0x18] sm:$0xe]
        %v7402 = vld [vmem:[%s305 + $0x1c] sm:$0xf]
        %v7403 = vld [vmem:[%s305 + $0x20] sm:$0x1]
        %v7404 = vld [vmem:[%s305 + $0x24] sm:$0xe]
        %v7405 = vld [vmem:[%s305 + $0x28] sm:$0xf]
        %v7406 = vld [vmem:[%s305 + $0x2c] sm:$0x1]
        %v7407 = vld [vmem:[%s305 + $0x30] sm:$0xe]
        %v7408 = vld [vmem:[%s305 + $0x34] sm:$0xf]
        %v7409 = vld [vmem:[%s305 + $0x38] sm:$0x1]
        %v7410 = vld [vmem:[%s305 + $0x3c] sm:$0xe]
        %v7411 = vld [vmem:[%s305 + $0x40] sm:$0xf]
        %v7412 = vld [vmem:[%s305 + $0x44] sm:$0x1]
        %v7413 = vld [vmem:[%s305 + $0x48] sm:$0xe]
        %v7414 = vld [vmem:[%s305 + $0x4c] sm:$0xf]
        %v7415 = vld [vmem:[%s305 + $0x50] sm:$0x1]
        %v7416 = vld [vmem:[%s305 + $0x54] sm:$0xe]
        %v7417 = vld [vmem:[%s305 + $0x58] sm:$0xf]
        %v7418 = vld [vmem:[%s305 + $0x5c] sm:$0x1]
        %v7419 = vld [vmem:[%s305 + $0x60] sm:$0xe]
        %v7420 = vld [vmem:[%s305 + $0x64] sm:$0xf]
        %v7421 = vld [vmem:[%s305 + $0x68] sm:$0x1]
        %v7422 = vld [vmem:[%s305 + $0x6c] sm:$0xe]
        %v7423 = vld [vmem:[%s305 + $0x70] sm:$0xf]
        %v7424 = vld [vmem:[%s305 + $0x74] sm:$0x1]
        %v7425 = vld [vmem:[%s305 + $0x78] sm:$0xe]
        %v7426 = vld [vmem:[%s305 + $0x7c] sm:$0xf]
        %v7427 = vld [vmem:[%s305 + $0x80] sm:$0x1]
        %v7428 = vld [vmem:[%s305 + $0x84] sm:$0xe]
        %v7429 = vld [vmem:[%s305 + $0x88] sm:$0xf]
        %v7430 = vld [vmem:[%s305 + $0x8c] sm:$0x1]
        %v7431 = vld [vmem:[%s305 + $0x90] sm:$0xe]
        %v7432 = vld [vmem:[%s305 + $0x94] sm:$0xf]
        %v7433 = vld [vmem:[%s305 + $0x98] sm:$0x1]
        %v7434 = vld [vmem:[%s305 + $0x9c] sm:$0xe]
        %v7435 = vld [vmem:[%s305 + $0xa0] sm:$0xf]
        %v7436 = vld [vmem:[%s305 + $0xa4] sm:$0x1]
        %v7437 = vld [vmem:[%s305 + $0xa8] sm:$0xe]
        %v7438 = vld [vmem:[%s305 + $0xac] sm:$0xf]
        %v7439 = vld [vmem:[%s305 + $0xb0] sm:$0x1]
        %v7440 = vld [vmem:[%s305 + $0xb4] sm:$0xe]
        %v7441 = vld [vmem:[%s305 + $0xb8] sm:$0xf]
        %v7442 = vld [vmem:[%s305 + $0xbc] sm:$0x1]
        %v7491 = vrot.slane %v7395, 5
        %v7492 = vrot.slane %v7491, 4
        %v7493 = vrot.slane %v7396, 5
        %v7494 = vsel %vm1068, %v7492, %v7493
        %v7495 = vrot.slane %v7493, 4
        %v7496 = vrot.slane %v7397, 5
        %v7497 = vsel %vm1068, %v7495, %v7496
        %v7498 = vrot.slane %v7398, 5
        %v7499 = vrot.slane %v7498, 4
        %v7500 = vrot.slane %v7399, 5
        %v7501 = vsel %vm1068, %v7499, %v7500
        %v7502 = vrot.slane %v7500, 4
        %v7503 = vrot.slane %v7400, 5
        %v7504 = vsel %vm1068, %v7502, %v7503
        %v7505 = vrot.slane %v7401, 5
        %v7506 = vrot.slane %v7505, 4
        %v7507 = vrot.slane %v7402, 5
        %v7508 = vsel %vm1068, %v7506, %v7507
        %v7509 = vrot.slane %v7507, 4
        %v7510 = vrot.slane %v7403, 5
        %v7511 = vsel %vm1068, %v7509, %v7510
        %v7512 = vrot.slane %v7404, 5
        %v7513 = vrot.slane %v7512, 4
        %v7514 = vrot.slane %v7405, 5
        %v7515 = vsel %vm1068, %v7513, %v7514
        %v7516 = vrot.slane %v7514, 4
        %v7517 = vrot.slane %v7406, 5
        %v7518 = vsel %vm1068, %v7516, %v7517
        %v7519 = vrot.slane %v7407, 5
        %v7520 = vrot.slane %v7519, 4
        %v7521 = vrot.slane %v7408, 5
        %v7522 = vsel %vm1068, %v7520, %v7521
        %v7523 = vrot.slane %v7521, 4
        %v7524 = vrot.slane %v7409, 5
        %v7525 = vsel %vm1068, %v7523, %v7524
        %v7526 = vrot.slane %v7410, 5
        %v7527 = vrot.slane %v7526, 4
        %v7528 = vrot.slane %v7411, 5
        %v7529 = vsel %vm1068, %v7527, %v7528
        %v7530 = vrot.slane %v7528, 4
        %v7531 = vrot.slane %v7412, 5
        %v7532 = vsel %vm1068, %v7530, %v7531
        %v7533 = vrot.slane %v7413, 5
        %v7534 = vrot.slane %v7533, 4
        %v7535 = vrot.slane %v7414, 5
        %v7536 = vsel %vm1068, %v7534, %v7535
        %v7537 = vrot.slane %v7535, 4
        %v7538 = vrot.slane %v7415, 5
        %v7539 = vsel %vm1068, %v7537, %v7538
        %v7540 = vrot.slane %v7416, 5
        %v7541 = vrot.slane %v7540, 4
        %v7542 = vrot.slane %v7417, 5
        %v7543 = vsel %vm1068, %v7541, %v7542
        %v7544 = vrot.slane %v7542, 4
        %v7545 = vrot.slane %v7418, 5
        %v7546 = vsel %vm1068, %v7544, %v7545
        %v7547 = vrot.slane %v7419, 5
        %v7548 = vrot.slane %v7547, 4
        %v7549 = vrot.slane %v7420, 5
        %v7550 = vsel %vm1068, %v7548, %v7549
        %v7551 = vrot.slane %v7549, 4
        %v7552 = vrot.slane %v7421, 5
        %v7553 = vsel %vm1068, %v7551, %v7552
        %v7554 = vrot.slane %v7422, 5
        %v7555 = vrot.slane %v7554, 4
        %v7556 = vrot.slane %v7423, 5
        %v7557 = vsel %vm1068, %v7555, %v7556
        %v7558 = vrot.slane %v7556, 4
        %v7559 = vrot.slane %v7424, 5
        %v7560 = vsel %vm1068, %v7558, %v7559
        %v7561 = vrot.slane %v7425, 5
        %v7562 = vrot.slane %v7561, 4
        %v7563 = vrot.slane %v7426, 5
        %v7564 = vsel %vm1068, %v7562, %v7563
        %v7565 = vrot.slane %v7563, 4
        %v7566 = vrot.slane %v7427, 5
        %v7567 = vsel %vm1068, %v7565, %v7566
        %v7568 = vrot.slane %v7428, 5
        %v7569 = vrot.slane %v7568, 4
        %v7570 = vrot.slane %v7429, 5
        %v7571 = vsel %vm1068, %v7569, %v7570
        %v7572 = vrot.slane %v7570, 4
        %v7573 = vrot.slane %v7430, 5
        %v7574 = vsel %vm1068, %v7572, %v7573
        %v7575 = vrot.slane %v7431, 5
        %v7576 = vrot.slane %v7575, 4
        %v7577 = vrot.slane %v7432, 5
        %v7578 = vsel %vm1068, %v7576, %v7577
        %v7579 = vrot.slane %v7577, 4
        %v7580 = vrot.slane %v7433, 5
        %v7581 = vsel %vm1068, %v7579, %v7580
        %v7582 = vrot.slane %v7434, 5
        %v7583 = vrot.slane %v7582, 4
        %v7584 = vrot.slane %v7435, 5
        %v7585 = vsel %vm1068, %v7583, %v7584
        %v7586 = vrot.slane %v7584, 4
        %v7587 = vrot.slane %v7436, 5
        %v7588 = vsel %vm1068, %v7586, %v7587
        %v7589 = vrot.slane %v7437, 5
        %v7590 = vrot.slane %v7589, 4
        %v7591 = vrot.slane %v7438, 5
        %v7592 = vsel %vm1068, %v7590, %v7591
        %v7593 = vrot.slane %v7591, 4
        %v7594 = vrot.slane %v7439, 5
        %v7595 = vsel %vm1068, %v7593, %v7594
        %v7596 = vrot.slane %v7440, 5
        %v7597 = vrot.slane %v7596, 4
        %v7598 = vrot.slane %v7441, 5
        %v7599 = vsel %vm1068, %v7597, %v7598
        %v7600 = vrot.slane %v7598, 4
        %v7601 = vrot.slane %v7442, 5
        %v7602 = vsel %vm1068, %v7600, %v7601
        %7635 = vst [vmem:[#allocation3 + $0x14] sm:$0xf] %v7494
        %7636 = vst [vmem:[#allocation3 + $0x38] sm:$0xf] %v7497
        %7637 = vst [vmem:[#allocation3 + $0x5c] sm:$0xf] %v7501
        %7638 = vst [vmem:[#allocation3 + $0x80] sm:$0xf] %v7504
        %7639 = vst [vmem:[#allocation3 + $0xa4] sm:$0xf] %v7508
        %7640 = vst [vmem:[#allocation3 + $0xc8] sm:$0xf] %v7511
        %7641 = vst [vmem:[#allocation3 + $0xec] sm:$0xf] %v7515
        %7642 = vst [vmem:[#allocation3 + $0x110] sm:$0xf] %v7518
        %7643 = vst [vmem:[#allocation3 + $0x134] sm:$0xf] %v7522
        %7644 = vst [vmem:[#allocation3 + $0x158] sm:$0xf] %v7525
        %7645 = vst [vmem:[#allocation3 + $0x17c] sm:$0xf] %v7529
        %7646 = vst [vmem:[#allocation3 + $0x1a0] sm:$0xf] %v7532
        %7647 = vst [vmem:[#allocation3 + $0x1c4] sm:$0xf] %v7536
        %7648 = vst [vmem:[#allocation3 + $0x1e8] sm:$0xf] %v7539
        %7649 = vst [vmem:[#allocation3 + $0x20c] sm:$0xf] %v7543
        %7650 = vst [vmem:[#allocation3 + $0x230] sm:$0xf] %v7546
        %7651 = vst [vmem:[#allocation3 + $0x254] sm:$0xf] %v7550
        %7652 = vst [vmem:[#allocation3 + $0x278] sm:$0xf] %v7553
        %7653 = vst [vmem:[#allocation3 + $0x29c] sm:$0xf] %v7557
        %7654 = vst [vmem:[#allocation3 + $0x2c0] sm:$0xf] %v7560
        %7655 = vst [vmem:[#allocation3 + $0x2e4] sm:$0xf] %v7564
        %7656 = vst [vmem:[#allocation3 + $0x308] sm:$0xf] %v7567
        %7657 = vst [vmem:[#allocation3 + $0x32c] sm:$0xf] %v7571
        %7658 = vst [vmem:[#allocation3 + $0x350] sm:$0xf] %v7574
        %7659 = vst [vmem:[#allocation3 + $0x374] sm:$0xf] %v7578
        %7660 = vst [vmem:[#allocation3 + $0x398] sm:$0xf] %v7581
        %7661 = vst [vmem:[#allocation3 + $0x3bc] sm:$0xf] %v7585
        %7662 = vst [vmem:[#allocation3 + $0x3e0] sm:$0xf] %v7588
        %7663 = vst [vmem:[#allocation3 + $0x404] sm:$0xf] %v7592
        %7664 = vst [vmem:[#allocation3 + $0x428] sm:$0xf] %v7595
        %7665 = vst [vmem:[#allocation3 + $0x44c] sm:$0xf] %v7599
        %7666 = vst [vmem:[#allocation3 + $0x470] sm:$0xf] %v7602
        %s7667 = scalar_lea.vmem [#allocation2], 24
        %v7668 = vld [vmem:[%s7667] sm:$0xf]
        %v7669 = vld [vmem:[%s7667 + $0x4] sm:$0xf]
        %v7670 = vld [vmem:[%s7667 + $0xc] sm:$0xf]
        %v7671 = vld [vmem:[%s7667 + $0x10] sm:$0xf]
        %v7672 = vld [vmem:[%s7667 + $0x18] sm:$0xf]
        %v7673 = vld [vmem:[%s7667 + $0x1c] sm:$0xf]
        %v7674 = vld [vmem:[%s7667 + $0x24] sm:$0xf]
        %v7675 = vld [vmem:[%s7667 + $0x28] sm:$0xf]
        %v7676 = vld [vmem:[%s7667 + $0x30] sm:$0xf]
        %v7677 = vld [vmem:[%s7667 + $0x34] sm:$0xf]
        %v7678 = vld [vmem:[%s7667 + $0x3c] sm:$0xf]
        %v7679 = vld [vmem:[%s7667 + $0x40] sm:$0xf]
        %v7680 = vld [vmem:[%s7667 + $0x48] sm:$0xf]
        %v7681 = vld [vmem:[%s7667 + $0x4c] sm:$0xf]
        %v7682 = vld [vmem:[%s7667 + $0x54] sm:$0xf]
        %v7683 = vld [vmem:[%s7667 + $0x58] sm:$0xf]
        %v7684 = vld [vmem:[%s7667 + $0x60] sm:$0xf]
        %v7685 = vld [vmem:[%s7667 + $0x64] sm:$0xf]
        %v7686 = vld [vmem:[%s7667 + $0x6c] sm:$0xf]
        %v7687 = vld [vmem:[%s7667 + $0x70] sm:$0xf]
        %v7688 = vld [vmem:[%s7667 + $0x78] sm:$0xf]
        %v7689 = vld [vmem:[%s7667 + $0x7c] sm:$0xf]
        %v7690 = vld [vmem:[%s7667 + $0x84] sm:$0xf]
        %v7691 = vld [vmem:[%s7667 + $0x88] sm:$0xf]
        %v7692 = vld [vmem:[%s7667 + $0x90] sm:$0xf]
        %v7693 = vld [vmem:[%s7667 + $0x94] sm:$0xf]
        %v7694 = vld [vmem:[%s7667 + $0x9c] sm:$0xf]
        %v7695 = vld [vmem:[%s7667 + $0xa0] sm:$0xf]
        %v7696 = vld [vmem:[%s7667 + $0xa8] sm:$0xf]
        %v7697 = vld [vmem:[%s7667 + $0xac] sm:$0xf]
        %v7698 = vld [vmem:[%s7667 + $0xb4] sm:$0xf]
        %v7699 = vld [vmem:[%s7667 + $0xb8] sm:$0xf]
        %7700 = vst [vmem:[#allocation3 + $0x18] sm:$0xf] %v7668
        %7701 = vst [vmem:[#allocation3 + $0x3c] sm:$0xf] %v7669
        %7702 = vst [vmem:[#allocation3 + $0x60] sm:$0xf] %v7670
        %7703 = vst [vmem:[#allocation3 + $0x84] sm:$0xf] %v7671
        %7704 = vst [vmem:[#allocation3 + $0xa8] sm:$0xf] %v7672
        %7705 = vst [vmem:[#allocation3 + $0xcc] sm:$0xf] %v7673
        %7706 = vst [vmem:[#allocation3 + $0xf0] sm:$0xf] %v7674
        %7707 = vst [vmem:[#allocation3 + $0x114] sm:$0xf] %v7675
        %7708 = vst [vmem:[#allocation3 + $0x138] sm:$0xf] %v7676
        %7709 = vst [vmem:[#allocation3 + $0x15c] sm:$0xf] %v7677
        %7710 = vst [vmem:[#allocation3 + $0x180] sm:$0xf] %v7678
        %7711 = vst [vmem:[#allocation3 + $0x1a4] sm:$0xf] %v7679
        %7712 = vst [vmem:[#allocation3 + $0x1c8] sm:$0xf] %v7680
        %7713 = vst [vmem:[#allocation3 + $0x1ec] sm:$0xf] %v7681
        %7714 = vst [vmem:[#allocation3 + $0x210] sm:$0xf] %v7682
        %7715 = vst [vmem:[#allocation3 + $0x234] sm:$0xf] %v7683
        %7716 = vst [vmem:[#allocation3 + $0x258] sm:$0xf] %v7684
        %7717 = vst [vmem:[#allocation3 + $0x27c] sm:$0xf] %v7685
        %7718 = vst [vmem:[#allocation3 + $0x2a0] sm:$0xf] %v7686
        %7719 = vst [vmem:[#allocation3 + $0x2c4] sm:$0xf] %v7687
        %7720 = vst [vmem:[#allocation3 + $0x2e8] sm:$0xf] %v7688
        %7721 = vst [vmem:[#allocation3 + $0x30c] sm:$0xf] %v7689
        %7722 = vst [vmem:[#allocation3 + $0x330] sm:$0xf] %v7690
        %7723 = vst [vmem:[#allocation3 + $0x354] sm:$0xf] %v7691
        %7724 = vst [vmem:[#allocation3 + $0x378] sm:$0xf] %v7692
        %7725 = vst [vmem:[#allocation3 + $0x39c] sm:$0xf] %v7693
        %7726 = vst [vmem:[#allocation3 + $0x3c0] sm:$0xf] %v7694
        %7727 = vst [vmem:[#allocation3 + $0x3e4] sm:$0xf] %v7695
        %7728 = vst [vmem:[#allocation3 + $0x408] sm:$0xf] %v7696
        %7729 = vst [vmem:[#allocation3 + $0x42c] sm:$0xf] %v7697
        %7730 = vst [vmem:[#allocation3 + $0x450] sm:$0xf] %v7698
        %7731 = vst [vmem:[#allocation3 + $0x474] sm:$0xf] %v7699
        %v7732 = vld [vmem:[%s7667] sm:$0xf]
        %v7733 = vld [vmem:[%s7667 + $0x4] sm:$0xf]
        %v7734 = vld [vmem:[%s7667 + $0x8] sm:$0x1]
        %v7735 = vld [vmem:[%s7667 + $0xc] sm:$0xf]
        %v7736 = vld [vmem:[%s7667 + $0x10] sm:$0xf]
        %v7737 = vld [vmem:[%s7667 + $0x14] sm:$0x1]
        %v7738 = vld [vmem:[%s7667 + $0x18] sm:$0xf]
        %v7739 = vld [vmem:[%s7667 + $0x1c] sm:$0xf]
        %v7740 = vld [vmem:[%s7667 + $0x20] sm:$0x1]
        %v7741 = vld [vmem:[%s7667 + $0x24] sm:$0xf]
        %v7742 = vld [vmem:[%s7667 + $0x28] sm:$0xf]
        %v7743 = vld [vmem:[%s7667 + $0x2c] sm:$0x1]
        %v7744 = vld [vmem:[%s7667 + $0x30] sm:$0xf]
        %v7745 = vld [vmem:[%s7667 + $0x34] sm:$0xf]
        %v7746 = vld [vmem:[%s7667 + $0x38] sm:$0x1]
        %v7747 = vld [vmem:[%s7667 + $0x3c] sm:$0xf]
        %v7748 = vld [vmem:[%s7667 + $0x40] sm:$0xf]
        %v7749 = vld [vmem:[%s7667 + $0x44] sm:$0x1]
        %v7750 = vld [vmem:[%s7667 + $0x48] sm:$0xf]
        %v7751 = vld [vmem:[%s7667 + $0x4c] sm:$0xf]
        %v7752 = vld [vmem:[%s7667 + $0x50] sm:$0x1]
        %v7753 = vld [vmem:[%s7667 + $0x54] sm:$0xf]
        %v7754 = vld [vmem:[%s7667 + $0x58] sm:$0xf]
        %v7755 = vld [vmem:[%s7667 + $0x5c] sm:$0x1]
        %v7756 = vld [vmem:[%s7667 + $0x60] sm:$0xf]
        %v7757 = vld [vmem:[%s7667 + $0x64] sm:$0xf]
        %v7758 = vld [vmem:[%s7667 + $0x68] sm:$0x1]
        %v7759 = vld [vmem:[%s7667 + $0x6c] sm:$0xf]
        %v7760 = vld [vmem:[%s7667 + $0x70] sm:$0xf]
        %v7761 = vld [vmem:[%s7667 + $0x74] sm:$0x1]
        %v7762 = vld [vmem:[%s7667 + $0x78] sm:$0xf]
        %v7763 = vld [vmem:[%s7667 + $0x7c] sm:$0xf]
        %v7764 = vld [vmem:[%s7667 + $0x80] sm:$0x1]
        %v7765 = vld [vmem:[%s7667 + $0x84] sm:$0xf]
        %v7766 = vld [vmem:[%s7667 + $0x88] sm:$0xf]
        %v7767 = vld [vmem:[%s7667 + $0x8c] sm:$0x1]
        %v7768 = vld [vmem:[%s7667 + $0x90] sm:$0xf]
        %v7769 = vld [vmem:[%s7667 + $0x94] sm:$0xf]
        %v7770 = vld [vmem:[%s7667 + $0x98] sm:$0x1]
        %v7771 = vld [vmem:[%s7667 + $0x9c] sm:$0xf]
        %v7772 = vld [vmem:[%s7667 + $0xa0] sm:$0xf]
        %v7773 = vld [vmem:[%s7667 + $0xa4] sm:$0x1]
        %v7774 = vld [vmem:[%s7667 + $0xa8] sm:$0xf]
        %v7775 = vld [vmem:[%s7667 + $0xac] sm:$0xf]
        %v7776 = vld [vmem:[%s7667 + $0xb0] sm:$0x1]
        %v7777 = vld [vmem:[%s7667 + $0xb4] sm:$0xf]
        %v7778 = vld [vmem:[%s7667 + $0xb8] sm:$0xf]
        %v7779 = vld [vmem:[%s7667 + $0xbc] sm:$0x1]
        %v7781 = vshrl.u32 %v7732, 16
        %v7783 = vrot.slane %v7781, 4
        %v7784 = vshll.u32 %v7732, 16
        %v7786 = vrot.slane %v7784, 5
        %v7787 = vor.u32 %v7783, %v7786
        %v7788 = vrot.slane %v7787, 4
        %v7790 = vshll.u32 %v7733, 16
        %v7792 = vrot.slane %v7790, 5
        %v7793 = vsel %vm521, %v7788, %v7792
        %v7794 = vshrl.u32 %v7733, 16
        %v7796 = vrot.slane %v7794, 4
        %v7797 = vor.u32 %v7796, %v7792
        %v7798 = vrot.slane %v7797, 4
        %v7800 = vshll.u32 %v7734, 16
        %v7802 = vrot.slane %v7800, 5
        %v7803 = vsel %vm521, %v7798, %v7802
        %v7805 = vshrl.u32 %v7735, 16
        %v7807 = vrot.slane %v7805, 4
        %v7808 = vshll.u32 %v7735, 16
        %v7810 = vrot.slane %v7808, 5
        %v7811 = vor.u32 %v7807, %v7810
        %v7812 = vrot.slane %v7811, 4
        %v7814 = vshll.u32 %v7736, 16
        %v7816 = vrot.slane %v7814, 5
        %v7817 = vsel %vm521, %v7812, %v7816
        %v7818 = vshrl.u32 %v7736, 16
        %v7820 = vrot.slane %v7818, 4
        %v7821 = vor.u32 %v7820, %v7816
        %v7822 = vrot.slane %v7821, 4
        %v7824 = vshll.u32 %v7737, 16
        %v7826 = vrot.slane %v7824, 5
        %v7827 = vsel %vm521, %v7822, %v7826
        %v7829 = vshrl.u32 %v7738, 16
        %v7831 = vrot.slane %v7829, 4
        %v7832 = vshll.u32 %v7738, 16
        %v7834 = vrot.slane %v7832, 5
        %v7835 = vor.u32 %v7831, %v7834
        %v7836 = vrot.slane %v7835, 4
        %v7838 = vshll.u32 %v7739, 16
        %v7840 = vrot.slane %v7838, 5
        %v7841 = vsel %vm521, %v7836, %v7840
        %v7842 = vshrl.u32 %v7739, 16
        %v7844 = vrot.slane %v7842, 4
        %v7845 = vor.u32 %v7844, %v7840
        %v7846 = vrot.slane %v7845, 4
        %v7848 = vshll.u32 %v7740, 16
        %v7850 = vrot.slane %v7848, 5
        %v7851 = vsel %vm521, %v7846, %v7850
        %v7853 = vshrl.u32 %v7741, 16
        %v7855 = vrot.slane %v7853, 4
        %v7856 = vshll.u32 %v7741, 16
        %v7858 = vrot.slane %v7856, 5
        %v7859 = vor.u32 %v7855, %v7858
        %v7860 = vrot.slane %v7859, 4
        %v7862 = vshll.u32 %v7742, 16
        %v7864 = vrot.slane %v7862, 5
        %v7865 = vsel %vm521, %v7860, %v7864
        %v7866 = vshrl.u32 %v7742, 16
        %v7868 = vrot.slane %v7866, 4
        %v7869 = vor.u32 %v7868, %v7864
        %v7870 = vrot.slane %v7869, 4
        %v7872 = vshll.u32 %v7743, 16
        %v7874 = vrot.slane %v7872, 5
        %v7875 = vsel %vm521, %v7870, %v7874
        %v7877 = vshrl.u32 %v7744, 16
        %v7879 = vrot.slane %v7877, 4
        %v7880 = vshll.u32 %v7744, 16
        %v7882 = vrot.slane %v7880, 5
        %v7883 = vor.u32 %v7879, %v7882
        %v7884 = vrot.slane %v7883, 4
        %v7886 = vshll.u32 %v7745, 16
        %v7888 = vrot.slane %v7886, 5
        %v7889 = vsel %vm521, %v7884, %v7888
        %v7890 = vshrl.u32 %v7745, 16
        %v7892 = vrot.slane %v7890, 4
        %v7893 = vor.u32 %v7892, %v7888
        %v7894 = vrot.slane %v7893, 4
        %v7896 = vshll.u32 %v7746, 16
        %v7898 = vrot.slane %v7896, 5
        %v7899 = vsel %vm521, %v7894, %v7898
        %v7901 = vshrl.u32 %v7747, 16
        %v7903 = vrot.slane %v7901, 4
        %v7904 = vshll.u32 %v7747, 16
        %v7906 = vrot.slane %v7904, 5
        %v7907 = vor.u32 %v7903, %v7906
        %v7908 = vrot.slane %v7907, 4
        %v7910 = vshll.u32 %v7748, 16
        %v7912 = vrot.slane %v7910, 5
        %v7913 = vsel %vm521, %v7908, %v7912
        %v7914 = vshrl.u32 %v7748, 16
        %v7916 = vrot.slane %v7914, 4
        %v7917 = vor.u32 %v7916, %v7912
        %v7918 = vrot.slane %v7917, 4
        %v7920 = vshll.u32 %v7749, 16
        %v7922 = vrot.slane %v7920, 5
        %v7923 = vsel %vm521, %v7918, %v7922
        %v7925 = vshrl.u32 %v7750, 16
        %v7927 = vrot.slane %v7925, 4
        %v7928 = vshll.u32 %v7750, 16
        %v7930 = vrot.slane %v7928, 5
        %v7931 = vor.u32 %v7927, %v7930
        %v7932 = vrot.slane %v7931, 4
        %v7934 = vshll.u32 %v7751, 16
        %v7936 = vrot.slane %v7934, 5
        %v7937 = vsel %vm521, %v7932, %v7936
        %v7938 = vshrl.u32 %v7751, 16
        %v7940 = vrot.slane %v7938, 4
        %v7941 = vor.u32 %v7940, %v7936
        %v7942 = vrot.slane %v7941, 4
        %v7944 = vshll.u32 %v7752, 16
        %v7946 = vrot.slane %v7944, 5
        %v7947 = vsel %vm521, %v7942, %v7946
        %v7949 = vshrl.u32 %v7753, 16
        %v7951 = vrot.slane %v7949, 4
        %v7952 = vshll.u32 %v7753, 16
        %v7954 = vrot.slane %v7952, 5
        %v7955 = vor.u32 %v7951, %v7954
        %v7956 = vrot.slane %v7955, 4
        %v7958 = vshll.u32 %v7754, 16
        %v7960 = vrot.slane %v7958, 5
        %v7961 = vsel %vm521, %v7956, %v7960
        %v7962 = vshrl.u32 %v7754, 16
        %v7964 = vrot.slane %v7962, 4
        %v7965 = vor.u32 %v7964, %v7960
        %v7966 = vrot.slane %v7965, 4
        %v7968 = vshll.u32 %v7755, 16
        %v7970 = vrot.slane %v7968, 5
        %v7971 = vsel %vm521, %v7966, %v7970
        %v7973 = vshrl.u32 %v7756, 16
        %v7975 = vrot.slane %v7973, 4
        %v7976 = vshll.u32 %v7756, 16
        %v7978 = vrot.slane %v7976, 5
        %v7979 = vor.u32 %v7975, %v7978
        %v7980 = vrot.slane %v7979, 4
        %v7982 = vshll.u32 %v7757, 16
        %v7984 = vrot.slane %v7982, 5
        %v7985 = vsel %vm521, %v7980, %v7984
        %v7986 = vshrl.u32 %v7757, 16
        %v7988 = vrot.slane %v7986, 4
        %v7989 = vor.u32 %v7988, %v7984
        %v7990 = vrot.slane %v7989, 4
        %v7992 = vshll.u32 %v7758, 16
        %v7994 = vrot.slane %v7992, 5
        %v7995 = vsel %vm521, %v7990, %v7994
        %v7997 = vshrl.u32 %v7759, 16
        %v7999 = vrot.slane %v7997, 4
        %v8000 = vshll.u32 %v7759, 16
        %v8002 = vrot.slane %v8000, 5
        %v8003 = vor.u32 %v7999, %v8002
        %v8004 = vrot.slane %v8003, 4
        %v8006 = vshll.u32 %v7760, 16
        %v8008 = vrot.slane %v8006, 5
        %v8009 = vsel %vm521, %v8004, %v8008
        %v8010 = vshrl.u32 %v7760, 16
        %v8012 = vrot.slane %v8010, 4
        %v8013 = vor.u32 %v8012, %v8008
        %v8014 = vrot.slane %v8013, 4
        %v8016 = vshll.u32 %v7761, 16
        %v8018 = vrot.slane %v8016, 5
        %v8019 = vsel %vm521, %v8014, %v8018
        %v8021 = vshrl.u32 %v7762, 16
        %v8023 = vrot.slane %v8021, 4
        %v8024 = vshll.u32 %v7762, 16
        %v8026 = vrot.slane %v8024, 5
        %v8027 = vor.u32 %v8023, %v8026
        %v8028 = vrot.slane %v8027, 4
        %v8030 = vshll.u32 %v7763, 16
        %v8032 = vrot.slane %v8030, 5
        %v8033 = vsel %vm521, %v8028, %v8032
        %v8034 = vshrl.u32 %v7763, 16
        %v8036 = vrot.slane %v8034, 4
        %v8037 = vor.u32 %v8036, %v8032
        %v8038 = vrot.slane %v8037, 4
        %v8040 = vshll.u32 %v7764, 16
        %v8042 = vrot.slane %v8040, 5
        %v8043 = vsel %vm521, %v8038, %v8042
        %v8045 = vshrl.u32 %v7765, 16
        %v8047 = vrot.slane %v8045, 4
        %v8048 = vshll.u32 %v7765, 16
        %v8050 = vrot.slane %v8048, 5
        %v8051 = vor.u32 %v8047, %v8050
        %v8052 = vrot.slane %v8051, 4
        %v8054 = vshll.u32 %v7766, 16
        %v8056 = vrot.slane %v8054, 5
        %v8057 = vsel %vm521, %v8052, %v8056
        %v8058 = vshrl.u32 %v7766, 16
        %v8060 = vrot.slane %v8058, 4
        %v8061 = vor.u32 %v8060, %v8056
        %v8062 = vrot.slane %v8061, 4
        %v8064 = vshll.u32 %v7767, 16
        %v8066 = vrot.slane %v8064, 5
        %v8067 = vsel %vm521, %v8062, %v8066
        %v8069 = vshrl.u32 %v7768, 16
        %v8071 = vrot.slane %v8069, 4
        %v8072 = vshll.u32 %v7768, 16
        %v8074 = vrot.slane %v8072, 5
        %v8075 = vor.u32 %v8071, %v8074
        %v8076 = vrot.slane %v8075, 4
        %v8078 = vshll.u32 %v7769, 16
        %v8080 = vrot.slane %v8078, 5
        %v8081 = vsel %vm521, %v8076, %v8080
        %v8082 = vshrl.u32 %v7769, 16
        %v8084 = vrot.slane %v8082, 4
        %v8085 = vor.u32 %v8084, %v8080
        %v8086 = vrot.slane %v8085, 4
        %v8088 = vshll.u32 %v7770, 16
        %v8090 = vrot.slane %v8088, 5
        %v8091 = vsel %vm521, %v8086, %v8090
        %v8093 = vshrl.u32 %v7771, 16
        %v8095 = vrot.slane %v8093, 4
        %v8096 = vshll.u32 %v7771, 16
        %v8098 = vrot.slane %v8096, 5
        %v8099 = vor.u32 %v8095, %v8098
        %v8100 = vrot.slane %v8099, 4
        %v8102 = vshll.u32 %v7772, 16
        %v8104 = vrot.slane %v8102, 5
        %v8105 = vsel %vm521, %v8100, %v8104
        %v8106 = vshrl.u32 %v7772, 16
        %v8108 = vrot.slane %v8106, 4
        %v8109 = vor.u32 %v8108, %v8104
        %v8110 = vrot.slane %v8109, 4
        %v8112 = vshll.u32 %v7773, 16
        %v8114 = vrot.slane %v8112, 5
        %v8115 = vsel %vm521, %v8110, %v8114
        %v8117 = vshrl.u32 %v7774, 16
        %v8119 = vrot.slane %v8117, 4
        %v8120 = vshll.u32 %v7774, 16
        %v8122 = vrot.slane %v8120, 5
        %v8123 = vor.u32 %v8119, %v8122
        %v8124 = vrot.slane %v8123, 4
        %v8126 = vshll.u32 %v7775, 16
        %v8128 = vrot.slane %v8126, 5
        %v8129 = vsel %vm521, %v8124, %v8128
        %v8130 = vshrl.u32 %v7775, 16
        %v8132 = vrot.slane %v8130, 4
        %v8133 = vor.u32 %v8132, %v8128
        %v8134 = vrot.slane %v8133, 4
        %v8136 = vshll.u32 %v7776, 16
        %v8138 = vrot.slane %v8136, 5
        %v8139 = vsel %vm521, %v8134, %v8138
        %v8141 = vshrl.u32 %v7777, 16
        %v8143 = vrot.slane %v8141, 4
        %v8144 = vshll.u32 %v7777, 16
        %v8146 = vrot.slane %v8144, 5
        %v8147 = vor.u32 %v8143, %v8146
        %v8148 = vrot.slane %v8147, 4
        %v8150 = vshll.u32 %v7778, 16
        %v8152 = vrot.slane %v8150, 5
        %v8153 = vsel %vm521, %v8148, %v8152
        %v8154 = vshrl.u32 %v7778, 16
        %v8156 = vrot.slane %v8154, 4
        %v8157 = vor.u32 %v8156, %v8152
        %v8158 = vrot.slane %v8157, 4
        %v8160 = vshll.u32 %v7779, 16
        %v8162 = vrot.slane %v8160, 5
        %v8163 = vsel %vm521, %v8158, %v8162
        %8196 = vst [vmem:[#allocation3 + $0x1c] sm:$0xf] %v7793
        %8197 = vst [vmem:[#allocation3 + $0x40] sm:$0xf] %v7803
        %8198 = vst [vmem:[#allocation3 + $0x64] sm:$0xf] %v7817
        %8199 = vst [vmem:[#allocation3 + $0x88] sm:$0xf] %v7827
        %8200 = vst [vmem:[#allocation3 + $0xac] sm:$0xf] %v7841
        %8201 = vst [vmem:[#allocation3 + $0xd0] sm:$0xf] %v7851
        %8202 = vst [vmem:[#allocation3 + $0xf4] sm:$0xf] %v7865
        %8203 = vst [vmem:[#allocation3 + $0x118] sm:$0xf] %v7875
        %8204 = vst [vmem:[#allocation3 + $0x13c] sm:$0xf] %v7889
        %8205 = vst [vmem:[#allocation3 + $0x160] sm:$0xf] %v7899
        %8206 = vst [vmem:[#allocation3 + $0x184] sm:$0xf] %v7913
        %8207 = vst [vmem:[#allocation3 + $0x1a8] sm:$0xf] %v7923
        %8208 = vst [vmem:[#allocation3 + $0x1cc] sm:$0xf] %v7937
        %8209 = vst [vmem:[#allocation3 + $0x1f0] sm:$0xf] %v7947
        %8210 = vst [vmem:[#allocation3 + $0x214] sm:$0xf] %v7961
        %8211 = vst [vmem:[#allocation3 + $0x238] sm:$0xf] %v7971
        %8212 = vst [vmem:[#allocation3 + $0x25c] sm:$0xf] %v7985
        %8213 = vst [vmem:[#allocation3 + $0x280] sm:$0xf] %v7995
        %8214 = vst [vmem:[#allocation3 + $0x2a4] sm:$0xf] %v8009
        %8215 = vst [vmem:[#allocation3 + $0x2c8] sm:$0xf] %v8019
        %8216 = vst [vmem:[#allocation3 + $0x2ec] sm:$0xf] %v8033
        %8217 = vst [vmem:[#allocation3 + $0x310] sm:$0xf] %v8043
        %8218 = vst [vmem:[#allocation3 + $0x334] sm:$0xf] %v8057
        %8219 = vst [vmem:[#allocation3 + $0x358] sm:$0xf] %v8067
        %8220 = vst [vmem:[#allocation3 + $0x37c] sm:$0xf] %v8081
        %8221 = vst [vmem:[#allocation3 + $0x3a0] sm:$0xf] %v8091
        %8222 = vst [vmem:[#allocation3 + $0x3c4] sm:$0xf] %v8105
        %8223 = vst [vmem:[#allocation3 + $0x3e8] sm:$0xf] %v8115
        %8224 = vst [vmem:[#allocation3 + $0x40c] sm:$0xf] %v8129
        %8225 = vst [vmem:[#allocation3 + $0x430] sm:$0xf] %v8139
        %8226 = vst [vmem:[#allocation3 + $0x454] sm:$0xf] %v8153
        %8227 = vst [vmem:[#allocation3 + $0x478] sm:$0xf] %v8163
        %v8228 = vld [vmem:[%s7667] sm:$0xe]
        %v8229 = vld [vmem:[%s7667 + $0x4] sm:$0xf]
        %v8230 = vld [vmem:[%s7667 + $0x8] sm:$0x1]
        %v8231 = vld [vmem:[%s7667 + $0xc] sm:$0xe]
        %v8232 = vld [vmem:[%s7667 + $0x10] sm:$0xf]
        %v8233 = vld [vmem:[%s7667 + $0x14] sm:$0x1]
        %v8234 = vld [vmem:[%s7667 + $0x18] sm:$0xe]
        %v8235 = vld [vmem:[%s7667 + $0x1c] sm:$0xf]
        %v8236 = vld [vmem:[%s7667 + $0x20] sm:$0x1]
        %v8237 = vld [vmem:[%s7667 + $0x24] sm:$0xe]
        %v8238 = vld [vmem:[%s7667 + $0x28] sm:$0xf]
        %v8239 = vld [vmem:[%s7667 + $0x2c] sm:$0x1]
        %v8240 = vld [vmem:[%s7667 + $0x30] sm:$0xe]
        %v8241 = vld [vmem:[%s7667 + $0x34] sm:$0xf]
        %v8242 = vld [vmem:[%s7667 + $0x38] sm:$0x1]
        %v8243 = vld [vmem:[%s7667 + $0x3c] sm:$0xe]
        %v8244 = vld [vmem:[%s7667 + $0x40] sm:$0xf]
        %v8245 = vld [vmem:[%s7667 + $0x44] sm:$0x1]
        %v8246 = vld [vmem:[%s7667 + $0x48] sm:$0xe]
        %v8247 = vld [vmem:[%s7667 + $0x4c] sm:$0xf]
        %v8248 = vld [vmem:[%s7667 + $0x50] sm:$0x1]
        %v8249 = vld [vmem:[%s7667 + $0x54] sm:$0xe]
        %v8250 = vld [vmem:[%s7667 + $0x58] sm:$0xf]
        %v8251 = vld [vmem:[%s7667 + $0x5c] sm:$0x1]
        %v8252 = vld [vmem:[%s7667 + $0x60] sm:$0xe]
        %v8253 = vld [vmem:[%s7667 + $0x64] sm:$0xf]
        %v8254 = vld [vmem:[%s7667 + $0x68] sm:$0x1]
        %v8255 = vld [vmem:[%s7667 + $0x6c] sm:$0xe]
        %v8256 = vld [vmem:[%s7667 + $0x70] sm:$0xf]
        %v8257 = vld [vmem:[%s7667 + $0x74] sm:$0x1]
        %v8258 = vld [vmem:[%s7667 + $0x78] sm:$0xe]
        %v8259 = vld [vmem:[%s7667 + $0x7c] sm:$0xf]
        %v8260 = vld [vmem:[%s7667 + $0x80] sm:$0x1]
        %v8261 = vld [vmem:[%s7667 + $0x84] sm:$0xe]
        %v8262 = vld [vmem:[%s7667 + $0x88] sm:$0xf]
        %v8263 = vld [vmem:[%s7667 + $0x8c] sm:$0x1]
        %v8264 = vld [vmem:[%s7667 + $0x90] sm:$0xe]
        %v8265 = vld [vmem:[%s7667 + $0x94] sm:$0xf]
        %v8266 = vld [vmem:[%s7667 + $0x98] sm:$0x1]
        %v8267 = vld [vmem:[%s7667 + $0x9c] sm:$0xe]
        %v8268 = vld [vmem:[%s7667 + $0xa0] sm:$0xf]
        %v8269 = vld [vmem:[%s7667 + $0xa4] sm:$0x1]
        %v8270 = vld [vmem:[%s7667 + $0xa8] sm:$0xe]
        %v8271 = vld [vmem:[%s7667 + $0xac] sm:$0xf]
        %v8272 = vld [vmem:[%s7667 + $0xb0] sm:$0x1]
        %v8273 = vld [vmem:[%s7667 + $0xb4] sm:$0xe]
        %v8274 = vld [vmem:[%s7667 + $0xb8] sm:$0xf]
        %v8275 = vld [vmem:[%s7667 + $0xbc] sm:$0x1]
        %v8324 = vrot.slane %v8228, 5
        %v8325 = vrot.slane %v8324, 4
        %v8326 = vrot.slane %v8229, 5
        %v8327 = vsel %vm1068, %v8325, %v8326
        %v8328 = vrot.slane %v8326, 4
        %v8329 = vrot.slane %v8230, 5
        %v8330 = vsel %vm1068, %v8328, %v8329
        %v8331 = vrot.slane %v8231, 5
        %v8332 = vrot.slane %v8331, 4
        %v8333 = vrot.slane %v8232, 5
        %v8334 = vsel %vm1068, %v8332, %v8333
        %v8335 = vrot.slane %v8333, 4
        %v8336 = vrot.slane %v8233, 5
        %v8337 = vsel %vm1068, %v8335, %v8336
        %v8338 = vrot.slane %v8234, 5
        %v8339 = vrot.slane %v8338, 4
        %v8340 = vrot.slane %v8235, 5
        %v8341 = vsel %vm1068, %v8339, %v8340
        %v8342 = vrot.slane %v8340, 4
        %v8343 = vrot.slane %v8236, 5
        %v8344 = vsel %vm1068, %v8342, %v8343
        %v8345 = vrot.slane %v8237, 5
        %v8346 = vrot.slane %v8345, 4
        %v8347 = vrot.slane %v8238, 5
        %v8348 = vsel %vm1068, %v8346, %v8347
        %v8349 = vrot.slane %v8347, 4
        %v8350 = vrot.slane %v8239, 5
        %v8351 = vsel %vm1068, %v8349, %v8350
        %v8352 = vrot.slane %v8240, 5
        %v8353 = vrot.slane %v8352, 4
        %v8354 = vrot.slane %v8241, 5
        %v8355 = vsel %vm1068, %v8353, %v8354
        %v8356 = vrot.slane %v8354, 4
        %v8357 = vrot.slane %v8242, 5
        %v8358 = vsel %vm1068, %v8356, %v8357
        %v8359 = vrot.slane %v8243, 5
        %v8360 = vrot.slane %v8359, 4
        %v8361 = vrot.slane %v8244, 5
        %v8362 = vsel %vm1068, %v8360, %v8361
        %v8363 = vrot.slane %v8361, 4
        %v8364 = vrot.slane %v8245, 5
        %v8365 = vsel %vm1068, %v8363, %v8364
        %v8366 = vrot.slane %v8246, 5
        %v8367 = vrot.slane %v8366, 4
        %v8368 = vrot.slane %v8247, 5
        %v8369 = vsel %vm1068, %v8367, %v8368
        %v8370 = vrot.slane %v8368, 4
        %v8371 = vrot.slane %v8248, 5
        %v8372 = vsel %vm1068, %v8370, %v8371
        %v8373 = vrot.slane %v8249, 5
        %v8374 = vrot.slane %v8373, 4
        %v8375 = vrot.slane %v8250, 5
        %v8376 = vsel %vm1068, %v8374, %v8375
        %v8377 = vrot.slane %v8375, 4
        %v8378 = vrot.slane %v8251, 5
        %v8379 = vsel %vm1068, %v8377, %v8378
        %v8380 = vrot.slane %v8252, 5
        %v8381 = vrot.slane %v8380, 4
        %v8382 = vrot.slane %v8253, 5
        %v8383 = vsel %vm1068, %v8381, %v8382
        %v8384 = vrot.slane %v8382, 4
        %v8385 = vrot.slane %v8254, 5
        %v8386 = vsel %vm1068, %v8384, %v8385
        %v8387 = vrot.slane %v8255, 5
        %v8388 = vrot.slane %v8387, 4
        %v8389 = vrot.slane %v8256, 5
        %v8390 = vsel %vm1068, %v8388, %v8389
        %v8391 = vrot.slane %v8389, 4
        %v8392 = vrot.slane %v8257, 5
        %v8393 = vsel %vm1068, %v8391, %v8392
        %v8394 = vrot.slane %v8258, 5
        %v8395 = vrot.slane %v8394, 4
        %v8396 = vrot.slane %v8259, 5
        %v8397 = vsel %vm1068, %v8395, %v8396
        %v8398 = vrot.slane %v8396, 4
        %v8399 = vrot.slane %v8260, 5
        %v8400 = vsel %vm1068, %v8398, %v8399
        %v8401 = vrot.slane %v8261, 5
        %v8402 = vrot.slane %v8401, 4
        %v8403 = vrot.slane %v8262, 5
        %v8404 = vsel %vm1068, %v8402, %v8403
        %v8405 = vrot.slane %v8403, 4
        %v8406 = vrot.slane %v8263, 5
        %v8407 = vsel %vm1068, %v8405, %v8406
        %v8408 = vrot.slane %v8264, 5
        %v8409 = vrot.slane %v8408, 4
        %v8410 = vrot.slane %v8265, 5
        %v8411 = vsel %vm1068, %v8409, %v8410
        %v8412 = vrot.slane %v8410, 4
        %v8413 = vrot.slane %v8266, 5
        %v8414 = vsel %vm1068, %v8412, %v8413
        %v8415 = vrot.slane %v8267, 5
        %v8416 = vrot.slane %v8415, 4
        %v8417 = vrot.slane %v8268, 5
        %v8418 = vsel %vm1068, %v8416, %v8417
        %v8419 = vrot.slane %v8417, 4
        %v8420 = vrot.slane %v8269, 5
        %v8421 = vsel %vm1068, %v8419, %v8420
        %v8422 = vrot.slane %v8270, 5
        %v8423 = vrot.slane %v8422, 4
        %v8424 = vrot.slane %v8271, 5
        %v8425 = vsel %vm1068, %v8423, %v8424
        %v8426 = vrot.slane %v8424, 4
        %v8427 = vrot.slane %v8272, 5
        %v8428 = vsel %vm1068, %v8426, %v8427
        %v8429 = vrot.slane %v8273, 5
        %v8430 = vrot.slane %v8429, 4
        %v8431 = vrot.slane %v8274, 5
        %v8432 = vsel %vm1068, %v8430, %v8431
        %v8433 = vrot.slane %v8431, 4
        %v8434 = vrot.slane %v8275, 5
        %v8435 = vsel %vm1068, %v8433, %v8434
        %8468 = vst [vmem:[#allocation3 + $0x20] sm:$0xf] %v8327
        %8469 = vst [vmem:[#allocation3 + $0x44] sm:$0xf] %v8330
        %8470 = vst [vmem:[#allocation3 + $0x68] sm:$0xf] %v8334
        %8471 = vst [vmem:[#allocation3 + $0x8c] sm:$0xf] %v8337
        %8472 = vst [vmem:[#allocation3 + $0xb0] sm:$0xf] %v8341
        %8473 = vst [vmem:[#allocation3 + $0xd4] sm:$0xf] %v8344
        %8474 = vst [vmem:[#allocation3 + $0xf8] sm:$0xf] %v8348
        %8475 = vst [vmem:[#allocation3 + $0x11c] sm:$0xf] %v8351
        %8476 = vst [vmem:[#allocation3 + $0x140] sm:$0xf] %v8355
        %8477 = vst [vmem:[#allocation3 + $0x164] sm:$0xf] %v8358
        %8478 = vst [vmem:[#allocation3 + $0x188] sm:$0xf] %v8362
        %8479 = vst [vmem:[#allocation3 + $0x1ac] sm:$0xf] %v8365
        %8480 = vst [vmem:[#allocation3 + $0x1d0] sm:$0xf] %v8369
        %8481 = vst [vmem:[#allocation3 + $0x1f4] sm:$0xf] %v8372
        %8482 = vst [vmem:[#allocation3 + $0x218] sm:$0xf] %v8376
        %8483 = vst [vmem:[#allocation3 + $0x23c] sm:$0xf] %v8379
        %8484 = vst [vmem:[#allocation3 + $0x260] sm:$0xf] %v8383
        %8485 = vst [vmem:[#allocation3 + $0x284] sm:$0xf] %v8386
        %8486 = vst [vmem:[#allocation3 + $0x2a8] sm:$0xf] %v8390
        %8487 = vst [vmem:[#allocation3 + $0x2cc] sm:$0xf] %v8393
        %8488 = vst [vmem:[#allocation3 + $0x2f0] sm:$0xf] %v8397
        %8489 = vst [vmem:[#allocation3 + $0x314] sm:$0xf] %v8400
        %8490 = vst [vmem:[#allocation3 + $0x338] sm:$0xf] %v8404
        %8491 = vst [vmem:[#allocation3 + $0x35c] sm:$0xf] %v8407
        %8492 = vst [vmem:[#allocation3 + $0x380] sm:$0xf] %v8411
        %8493 = vst [vmem:[#allocation3 + $0x3a4] sm:$0xf] %v8414
        %8494 = vst [vmem:[#allocation3 + $0x3c8] sm:$0xf] %v8418
        %8495 = vst [vmem:[#allocation3 + $0x3ec] sm:$0xf] %v8421
        %8496 = vst [vmem:[#allocation3 + $0x410] sm:$0xf] %v8425
        %8497 = vst [vmem:[#allocation3 + $0x434] sm:$0xf] %v8428
        %8498 = vst [vmem:[#allocation3 + $0x458] sm:$0xf] %v8432
        %8499 = vst [vmem:[#allocation3 + $0x47c] sm:$0xf] %v8435
        %v8500 = vld [vmem:[#allocation3] sm:$0xff]
        %v8501 = vld [vmem:[#allocation3 + $0x8] sm:$0xff]
        %v8502 = vld [vmem:[#allocation3 + $0x10] sm:$0xff]
        %v8503 = vld [vmem:[#allocation3 + $0x18] sm:$0xff]
        %v8504 = vld [vmem:[#allocation3 + $0x20] sm:$0xf]
        %v8505 = vld [vmem:[#allocation3 + $0x24] sm:$0xff]
        %v8506 = vld [vmem:[#allocation3 + $0x2c] sm:$0xff]
        %v8507 = vld [vmem:[#allocation3 + $0x34] sm:$0xff]
        %v8508 = vld [vmem:[#allocation3 + $0x3c] sm:$0xff]
        %v8509 = vld [vmem:[#allocation3 + $0x44] sm:$0xf]
        %v8510 = vld [vmem:[#allocation3 + $0x48] sm:$0xff]
        %v8511 = vld [vmem:[#allocation3 + $0x50] sm:$0xff]
        %v8512 = vld [vmem:[#allocation3 + $0x58] sm:$0xff]
        %v8513 = vld [vmem:[#allocation3 + $0x60] sm:$0xff]
        %v8514 = vld [vmem:[#allocation3 + $0x68] sm:$0xf]
        %v8515 = vld [vmem:[#allocation3 + $0x6c] sm:$0xff]
        %v8516 = vld [vmem:[#allocation3 + $0x74] sm:$0xff]
        %v8517 = vld [vmem:[#allocation3 + $0x7c] sm:$0xff]
        %v8518 = vld [vmem:[#allocation3 + $0x84] sm:$0xff]
        %v8519 = vld [vmem:[#allocation3 + $0x8c] sm:$0xf]
        %v8520 = vld [vmem:[#allocation3 + $0x90] sm:$0xff]
        %v8521 = vld [vmem:[#allocation3 + $0x98] sm:$0xff]
        %v8522 = vld [vmem:[#allocation3 + $0xa0] sm:$0xff]
        %v8523 = vld [vmem:[#allocation3 + $0xa8] sm:$0xff]
        %v8524 = vld [vmem:[#allocation3 + $0xb0] sm:$0xf]
        %v8525 = vld [vmem:[#allocation3 + $0xb4] sm:$0xff]
        %v8526 = vld [vmem:[#allocation3 + $0xbc] sm:$0xff]
        %v8527 = vld [vmem:[#allocation3 + $0xc4] sm:$0xff]
        %v8528 = vld [vmem:[#allocation3 + $0xcc] sm:$0xff]
        %v8529 = vld [vmem:[#allocation3 + $0xd4] sm:$0xf]
        %v8530 = vld [vmem:[#allocation3 + $0xd8] sm:$0xff]
        %v8531 = vld [vmem:[#allocation3 + $0xe0] sm:$0xff]
        %v8532 = vld [vmem:[#allocation3 + $0xe8] sm:$0xff]
        %v8533 = vld [vmem:[#allocation3 + $0xf0] sm:$0xff]
        %v8534 = vld [vmem:[#allocation3 + $0xf8] sm:$0xf]
        %v8535 = vld [vmem:[#allocation3 + $0xfc] sm:$0xff]
        %v8536 = vld [vmem:[#allocation3 + $0x104] sm:$0xff]
        %v8537 = vld [vmem:[#allocation3 + $0x10c] sm:$0xff]
        %v8538 = vld [vmem:[#allocation3 + $0x114] sm:$0xff]
        %v8539 = vld [vmem:[#allocation3 + $0x11c] sm:$0xf]
        %v8540 = vld [vmem:[#allocation3 + $0x120] sm:$0xff]
        %v8541 = vld [vmem:[#allocation3 + $0x128] sm:$0xff]
        %v8542 = vld [vmem:[#allocation3 + $0x130] sm:$0xff]
        %v8543 = vld [vmem:[#allocation3 + $0x138] sm:$0xff]
        %v8544 = vld [vmem:[#allocation3 + $0x140] sm:$0xf]
        %v8545 = vld [vmem:[#allocation3 + $0x144] sm:$0xff]
        %v8546 = vld [vmem:[#allocation3 + $0x14c] sm:$0xff]
        %v8547 = vld [vmem:[#allocation3 + $0x154] sm:$0xff]
        %v8548 = vld [vmem:[#allocation3 + $0x15c] sm:$0xff]
        %v8549 = vld [vmem:[#allocation3 + $0x164] sm:$0xf]
        %v8550 = vld [vmem:[#allocation3 + $0x168] sm:$0xff]
        %v8551 = vld [vmem:[#allocation3 + $0x170] sm:$0xff]
        %v8552 = vld [vmem:[#allocation3 + $0x178] sm:$0xff]
        %v8553 = vld [vmem:[#allocation3 + $0x180] sm:$0xff]
        %v8554 = vld [vmem:[#allocation3 + $0x188] sm:$0xf]
        %v8555 = vld [vmem:[#allocation3 + $0x18c] sm:$0xff]
        %v8556 = vld [vmem:[#allocation3 + $0x194] sm:$0xff]
        %v8557 = vld [vmem:[#allocation3 + $0x19c] sm:$0xff]
        %v8558 = vld [vmem:[#allocation3 + $0x1a4] sm:$0xff]
        %v8559 = vld [vmem:[#allocation3 + $0x1ac] sm:$0xf]
        %v8560 = vld [vmem:[#allocation3 + $0x1b0] sm:$0xff]
        %v8561 = vld [vmem:[#allocation3 + $0x1b8] sm:$0xff]
        %v8562 = vld [vmem:[#allocation3 + $0x1c0] sm:$0xff]
        %v8563 = vld [vmem:[#allocation3 + $0x1c8] sm:$0xff]
        %v8564 = vld [vmem:[#allocation3 + $0x1d0] sm:$0xf]
        %v8565 = vld [vmem:[#allocation3 + $0x1d4] sm:$0xff]
        %v8566 = vld [vmem:[#allocation3 + $0x1dc] sm:$0xff]
        %v8567 = vld [vmem:[#allocation3 + $0x1e4] sm:$0xff]
        %v8568 = vld [vmem:[#allocation3 + $0x1ec] sm:$0xff]
        %v8569 = vld [vmem:[#allocation3 + $0x1f4] sm:$0xf]
        %v8570 = vld [vmem:[#allocation3 + $0x1f8] sm:$0xff]
        %v8571 = vld [vmem:[#allocation3 + $0x200] sm:$0xff]
        %v8572 = vld [vmem:[#allocation3 + $0x208] sm:$0xff]
        %v8573 = vld [vmem:[#allocation3 + $0x210] sm:$0xff]
        %v8574 = vld [vmem:[#allocation3 + $0x218] sm:$0xf]
        %v8575 = vld [vmem:[#allocation3 + $0x21c] sm:$0xff]
        %v8576 = vld [vmem:[#allocation3 + $0x224] sm:$0xff]
        %v8577 = vld [vmem:[#allocation3 + $0x22c] sm:$0xff]
        %v8578 = vld [vmem:[#allocation3 + $0x234] sm:$0xff]
        %v8579 = vld [vmem:[#allocation3 + $0x23c] sm:$0xf]
        %v8580 = vld [vmem:[#allocation3 + $0x240] sm:$0xff]
        %v8581 = vld [vmem:[#allocation3 + $0x248] sm:$0xff]
        %v8582 = vld [vmem:[#allocation3 + $0x250] sm:$0xff]
        %v8583 = vld [vmem:[#allocation3 + $0x258] sm:$0xff]
        %v8584 = vld [vmem:[#allocation3 + $0x260] sm:$0xf]
        %v8585 = vld [vmem:[#allocation3 + $0x264] sm:$0xff]
        %v8586 = vld [vmem:[#allocation3 + $0x26c] sm:$0xff]
        %v8587 = vld [vmem:[#allocation3 + $0x274] sm:$0xff]
        %v8588 = vld [vmem:[#allocation3 + $0x27c] sm:$0xff]
        %v8589 = vld [vmem:[#allocation3 + $0x284] sm:$0xf]
        %v8590 = vld [vmem:[#allocation3 + $0x288] sm:$0xff]
        %v8591 = vld [vmem:[#allocation3 + $0x290] sm:$0xff]
        %v8592 = vld [vmem:[#allocation3 + $0x298] sm:$0xff]
        %v8593 = vld [vmem:[#allocation3 + $0x2a0] sm:$0xff]
        %v8594 = vld [vmem:[#allocation3 + $0x2a8] sm:$0xf]
        %v8595 = vld [vmem:[#allocation3 + $0x2ac] sm:$0xff]
        %v8596 = vld [vmem:[#allocation3 + $0x2b4] sm:$0xff]
        %v8597 = vld [vmem:[#allocation3 + $0x2bc] sm:$0xff]
        %v8598 = vld [vmem:[#allocation3 + $0x2c4] sm:$0xff]
        %v8599 = vld [vmem:[#allocation3 + $0x2cc] sm:$0xf]
        %v8600 = vld [vmem:[#allocation3 + $0x2d0] sm:$0xff]
        %v8601 = vld [vmem:[#allocation3 + $0x2d8] sm:$0xff]
        %v8602 = vld [vmem:[#allocation3 + $0x2e0] sm:$0xff]
        %v8603 = vld [vmem:[#allocation3 + $0x2e8] sm:$0xff]
        %v8604 = vld [vmem:[#allocation3 + $0x2f0] sm:$0xf]
        %v8605 = vld [vmem:[#allocation3 + $0x2f4] sm:$0xff]
        %v8606 = vld [vmem:[#allocation3 + $0x2fc] sm:$0xff]
        %v8607 = vld [vmem:[#allocation3 + $0x304] sm:$0xff]
        %v8608 = vld [vmem:[#allocation3 + $0x30c] sm:$0xff]
        %v8609 = vld [vmem:[#allocation3 + $0x314] sm:$0xf]
        %v8610 = vld [vmem:[#allocation3 + $0x318] sm:$0xff]
        %v8611 = vld [vmem:[#allocation3 + $0x320] sm:$0xff]
        %v8612 = vld [vmem:[#allocation3 + $0x328] sm:$0xff]
        %v8613 = vld [vmem:[#allocation3 + $0x330] sm:$0xff]
        %v8614 = vld [vmem:[#allocation3 + $0x338] sm:$0xf]
        %v8615 = vld [vmem:[#allocation3 + $0x33c] sm:$0xff]
        %v8616 = vld [vmem:[#allocation3 + $0x344] sm:$0xff]
        %v8617 = vld [vmem:[#allocation3 + $0x34c] sm:$0xff]
        %v8618 = vld [vmem:[#allocation3 + $0x354] sm:$0xff]
        %v8619 = vld [vmem:[#allocation3 + $0x35c] sm:$0xf]
        %v8620 = vld [vmem:[#allocation3 + $0x360] sm:$0xff]
        %v8621 = vld [vmem:[#allocation3 + $0x368] sm:$0xff]
        %v8622 = vld [vmem:[#allocation3 + $0x370] sm:$0xff]
        %v8623 = vld [vmem:[#allocation3 + $0x378] sm:$0xff]
        %v8624 = vld [vmem:[#allocation3 + $0x380] sm:$0xf]
        %v8625 = vld [vmem:[#allocation3 + $0x384] sm:$0xff]
        %v8626 = vld [vmem:[#allocation3 + $0x38c] sm:$0xff]
        %v8627 = vld [vmem:[#allocation3 + $0x394] sm:$0xff]
        %v8628 = vld [vmem:[#allocation3 + $0x39c] sm:$0xff]
        %v8629 = vld [vmem:[#allocation3 + $0x3a4] sm:$0xf]
        %v8630 = vld [vmem:[#allocation3 + $0x3a8] sm:$0xff]
        %v8631 = vld [vmem:[#allocation3 + $0x3b0] sm:$0xff]
        %v8632 = vld [vmem:[#allocation3 + $0x3b8] sm:$0xff]
        %v8633 = vld [vmem:[#allocation3 + $0x3c0] sm:$0xff]
        %v8634 = vld [vmem:[#allocation3 + $0x3c8] sm:$0xf]
        %v8635 = vld [vmem:[#allocation3 + $0x3cc] sm:$0xff]
        %v8636 = vld [vmem:[#allocation3 + $0x3d4] sm:$0xff]
        %v8637 = vld [vmem:[#allocation3 + $0x3dc] sm:$0xff]
        %v8638 = vld [vmem:[#allocation3 + $0x3e4] sm:$0xff]
        %v8639 = vld [vmem:[#allocation3 + $0x3ec] sm:$0xf]
        %v8640 = vld [vmem:[#allocation3 + $0x3f0] sm:$0xff]
        %v8641 = vld [vmem:[#allocation3 + $0x3f8] sm:$0xff]
        %v8642 = vld [vmem:[#allocation3 + $0x400] sm:$0xff]
        %v8643 = vld [vmem:[#allocation3 + $0x408] sm:$0xff]
        %v8644 = vld [vmem:[#allocation3 + $0x410] sm:$0xf]
        %v8645 = vld [vmem:[#allocation3 + $0x414] sm:$0xff]
        %v8646 = vld [vmem:[#allocation3 + $0x41c] sm:$0xff]
        %v8647 = vld [vmem:[#allocation3 + $0x424] sm:$0xff]
        %v8648 = vld [vmem:[#allocation3 + $0x42c] sm:$0xff]
        %v8649 = vld [vmem:[#allocation3 + $0x434] sm:$0xf]
        %v8650 = vld [vmem:[#allocation3 + $0x438] sm:$0xff]
        %v8651 = vld [vmem:[#allocation3 + $0x440] sm:$0xff]
        %v8652 = vld [vmem:[#allocation3 + $0x448] sm:$0xff]
        %v8653 = vld [vmem:[#allocation3 + $0x450] sm:$0xff]
        %v8654 = vld [vmem:[#allocation3 + $0x458] sm:$0xf]
        %v8655 = vld [vmem:[#allocation3 + $0x45c] sm:$0xff]
        %v8656 = vld [vmem:[#allocation3 + $0x464] sm:$0xff]
        %v8657 = vld [vmem:[#allocation3 + $0x46c] sm:$0xff]
        %v8658 = vld [vmem:[#allocation3 + $0x474] sm:$0xff]
        %v8659 = vld [vmem:[#allocation3 + $0x47c] sm:$0xf]
        %v8660 = vld [vmem:[#allocation4] sm:$0xf]
        %v8661 = vld [vmem:[#allocation4 + $0x4] sm:$0xf]
        %v8662 = vld [vmem:[#allocation4 + $0x8] sm:$0xf]
        %v8663 = vld [vmem:[#allocation4 + $0xc] sm:$0xf]
        %v8664 = vld [vmem:[#allocation4 + $0x10] sm:$0xf]
        %v8665 = vld [vmem:[#allocation4 + $0x14] sm:$0xf]
        %v8666 = vld [vmem:[#allocation4 + $0x18] sm:$0xf]
        %v8667 = vld [vmem:[#allocation4 + $0x1c] sm:$0xf]
        %v8668 = vld [vmem:[#allocation4 + $0x20] sm:$0xf]
        %v8669 = vld [vmem:[#allocation4 + $0x24] sm:$0xf]
        %v8670 = vld [vmem:[#allocation4 + $0x28] sm:$0xf]
        %v8671 = vld [vmem:[#allocation4 + $0x2c] sm:$0xf]
        %v8672 = vld [vmem:[#allocation4 + $0x30] sm:$0xf]
        %v8673 = vld [vmem:[#allocation4 + $0x34] sm:$0xf]
        %v8674 = vld [vmem:[#allocation4 + $0x38] sm:$0xf]
        %v8675 = vld [vmem:[#allocation4 + $0x3c] sm:$0xf]
        %v8676 = vld [vmem:[#allocation4 + $0x40] sm:$0xf]
        %v8677 = vld [vmem:[#allocation4 + $0x44] sm:$0xf]
        %v8678 = vld [vmem:[#allocation4 + $0x48] sm:$0xf]
        %v8679 = vld [vmem:[#allocation4 + $0x4c] sm:$0xf]
        %v8680 = vld [vmem:[#allocation4 + $0x50] sm:$0xf]
        %v8681 = vld [vmem:[#allocation4 + $0x54] sm:$0xf]
        %v8682 = vld [vmem:[#allocation4 + $0x58] sm:$0xf]
        %v8683 = vld [vmem:[#allocation4 + $0x5c] sm:$0xf]
        %v8684 = vld [vmem:[#allocation4 + $0x60] sm:$0xf]
        %v8685 = vld [vmem:[#allocation4 + $0x64] sm:$0xf]
        %v8686 = vld [vmem:[#allocation4 + $0x68] sm:$0xf]
        %v8687 = vld [vmem:[#allocation4 + $0x6c] sm:$0xf]
        %v8688 = vld [vmem:[#allocation4 + $0x70] sm:$0xf]
        %v8689 = vld [vmem:[#allocation4 + $0x74] sm:$0xf]
        %v8690 = vld [vmem:[#allocation4 + $0x78] sm:$0xf]
        %v8691 = vld [vmem:[#allocation4 + $0x7c] sm:$0xf]
        %v8692 = vld [vmem:[#allocation4 + $0x80] sm:$0xf]
        %v8693 = vld [vmem:[#allocation4 + $0x84] sm:$0xf]
        %v8694 = vld [vmem:[#allocation4 + $0x88] sm:$0xf]
        %v8695 = vld [vmem:[#allocation4 + $0x8c] sm:$0xf]
        %v8696 = vld [vmem:[#allocation4 + $0x90] sm:$0xf]
        %v8697 = vld [vmem:[#allocation4 + $0x94] sm:$0xf]
        %v8698 = vld [vmem:[#allocation4 + $0x98] sm:$0xf]
        %v8699 = vld [vmem:[#allocation4 + $0x9c] sm:$0xf]
        %v8700 = vld [vmem:[#allocation4 + $0xa0] sm:$0xf]
        %v8701 = vld [vmem:[#allocation4 + $0xa4] sm:$0xf]
        %v8702 = vld [vmem:[#allocation4 + $0xa8] sm:$0xf]
        %v8703 = vld [vmem:[#allocation4 + $0xac] sm:$0xf]
        %v8704 = vld [vmem:[#allocation4 + $0xb0] sm:$0xf]
        %v8705 = vld [vmem:[#allocation4 + $0xb4] sm:$0xf]
        %v8706 = vld [vmem:[#allocation4 + $0xb8] sm:$0xf]
        %v8707 = vld [vmem:[#allocation4 + $0xbc] sm:$0xf]
        %v8708 = vld [vmem:[#allocation4 + $0xc0] sm:$0xf]
        %v8709 = vld [vmem:[#allocation4 + $0xc4] sm:$0xf]
        %v8710 = vld [vmem:[#allocation4 + $0xc8] sm:$0xf]
        %v8711 = vld [vmem:[#allocation4 + $0xcc] sm:$0xf]
        %v8712 = vld [vmem:[#allocation4 + $0xd0] sm:$0xf]
        %v8713 = vld [vmem:[#allocation4 + $0xd4] sm:$0xf]
        %v8714 = vld [vmem:[#allocation4 + $0xd8] sm:$0xf]
        %v8715 = vld [vmem:[#allocation4 + $0xdc] sm:$0xf]
        %v8716 = vld [vmem:[#allocation4 + $0xe0] sm:$0xf]
        %v8717 = vld [vmem:[#allocation4 + $0xe4] sm:$0xf]
        %v8718 = vld [vmem:[#allocation4 + $0xe8] sm:$0xf]
        %v8719 = vld [vmem:[#allocation4 + $0xec] sm:$0xf]
        %v8720 = vld [vmem:[#allocation4 + $0xf0] sm:$0xf]
        %v8721 = vld [vmem:[#allocation4 + $0xf4] sm:$0xf]
        %v8722 = vld [vmem:[#allocation4 + $0xf8] sm:$0xf]
        %v8723 = vld [vmem:[#allocation4 + $0xfc] sm:$0xf]
        %v8724 = vld [vmem:[#allocation4 + $0x100] sm:$0xf]
        %v8725 = vld [vmem:[#allocation4 + $0x104] sm:$0xf]
        %v8726 = vld [vmem:[#allocation4 + $0x108] sm:$0xf]
        %v8727 = vld [vmem:[#allocation4 + $0x10c] sm:$0xf]
        %v8728 = vld [vmem:[#allocation4 + $0x110] sm:$0xf]
        %v8729 = vld [vmem:[#allocation4 + $0x114] sm:$0xf]
        %v8730 = vld [vmem:[#allocation4 + $0x118] sm:$0xf]
        %v8731 = vld [vmem:[#allocation4 + $0x11c] sm:$0xf]
        %v8732 = vld [vmem:[#allocation4 + $0x120] sm:$0xf]
        %v8733 = vld [vmem:[#allocation4 + $0x124] sm:$0xf]
        %v8734 = vld [vmem:[#allocation4 + $0x128] sm:$0xf]
        %v8735 = vld [vmem:[#allocation4 + $0x12c] sm:$0xf]
        %v8736 = vld [vmem:[#allocation4 + $0x130] sm:$0xf]
        %v8737 = vld [vmem:[#allocation4 + $0x134] sm:$0xf]
        %v8738 = vld [vmem:[#allocation4 + $0x138] sm:$0xf]
        %v8739 = vld [vmem:[#allocation4 + $0x13c] sm:$0xf]
        %v8740 = vld [vmem:[#allocation4 + $0x140] sm:$0xf]
        %v8741 = vld [vmem:[#allocation4 + $0x144] sm:$0xf]
        %v8742 = vld [vmem:[#allocation4 + $0x148] sm:$0xf]
        %v8743 = vld [vmem:[#allocation4 + $0x14c] sm:$0xf]
        %v8744 = vld [vmem:[#allocation4 + $0x150] sm:$0xf]
        %v8745 = vld [vmem:[#allocation4 + $0x154] sm:$0xf]
        %v8746 = vld [vmem:[#allocation4 + $0x158] sm:$0xf]
        %v8747 = vld [vmem:[#allocation4 + $0x15c] sm:$0xf]
        %v8748 = vld [vmem:[#allocation4 + $0x160] sm:$0xf]
        %v8749 = vld [vmem:[#allocation4 + $0x164] sm:$0xf]
        %v8750 = vld [vmem:[#allocation4 + $0x168] sm:$0xf]
        %v8751 = vld [vmem:[#allocation4 + $0x16c] sm:$0xf]
        %v8752 = vld [vmem:[#allocation4 + $0x170] sm:$0xf]
        %v8753 = vld [vmem:[#allocation4 + $0x174] sm:$0xf]
        %v8754 = vld [vmem:[#allocation4 + $0x178] sm:$0xf]
        %v8755 = vld [vmem:[#allocation4 + $0x17c] sm:$0xf]
        %v8756 = vld [vmem:[#allocation4 + $0x180] sm:$0xf]
        %v8757 = vld [vmem:[#allocation4 + $0x184] sm:$0xf]
        %v8758 = vld [vmem:[#allocation4 + $0x188] sm:$0xf]
        %v8759 = vld [vmem:[#allocation4 + $0x18c] sm:$0xf]
        %v8760 = vld [vmem:[#allocation4 + $0x190] sm:$0xf]
        %v8761 = vld [vmem:[#allocation4 + $0x194] sm:$0xf]
        %v8762 = vld [vmem:[#allocation4 + $0x198] sm:$0xf]
        %v8763 = vld [vmem:[#allocation4 + $0x19c] sm:$0xf]
        %v8764 = vld [vmem:[#allocation4 + $0x1a0] sm:$0xf]
        %v8765 = vld [vmem:[#allocation4 + $0x1a4] sm:$0xf]
        %v8766 = vld [vmem:[#allocation4 + $0x1a8] sm:$0xf]
        %v8767 = vld [vmem:[#allocation4 + $0x1ac] sm:$0xf]
        %v8768 = vld [vmem:[#allocation4 + $0x1b0] sm:$0xf]
        %v8769 = vld [vmem:[#allocation4 + $0x1b4] sm:$0xf]
        %v8770 = vld [vmem:[#allocation4 + $0x1b8] sm:$0xf]
        %v8771 = vld [vmem:[#allocation4 + $0x1bc] sm:$0xf]
        %v8772 = vld [vmem:[#allocation4 + $0x1c0] sm:$0xf]
        %v8773 = vld [vmem:[#allocation4 + $0x1c4] sm:$0xf]
        %v8774 = vld [vmem:[#allocation4 + $0x1c8] sm:$0xf]
        %v8775 = vld [vmem:[#allocation4 + $0x1cc] sm:$0xf]
        %v8776 = vld [vmem:[#allocation4 + $0x1d0] sm:$0xf]
        %v8777 = vld [vmem:[#allocation4 + $0x1d4] sm:$0xf]
        %v8778 = vld [vmem:[#allocation4 + $0x1d8] sm:$0xf]
        %v8779 = vld [vmem:[#allocation4 + $0x1dc] sm:$0xf]
        %v8780 = vld [vmem:[#allocation4 + $0x1e0] sm:$0xf]
        %v8781 = vld [vmem:[#allocation4 + $0x1e4] sm:$0xf]
        %v8782 = vld [vmem:[#allocation4 + $0x1e8] sm:$0xf]
        %v8783 = vld [vmem:[#allocation4 + $0x1ec] sm:$0xf]
        %v8784 = vld [vmem:[#allocation4 + $0x1f0] sm:$0xf]
        %v8785 = vld [vmem:[#allocation4 + $0x1f4] sm:$0xf]
        %v8786 = vld [vmem:[#allocation4 + $0x1f8] sm:$0xf]
        %v8787 = vld [vmem:[#allocation4 + $0x1fc] sm:$0xf]
        %v8788 = vld [vmem:[#allocation4 + $0x200] sm:$0xf]
        %v8789 = vld [vmem:[#allocation4 + $0x204] sm:$0xf]
        %v8790 = vld [vmem:[#allocation4 + $0x208] sm:$0xf]
        %v8791 = vld [vmem:[#allocation4 + $0x20c] sm:$0xf]
        %v8792 = vld [vmem:[#allocation4 + $0x210] sm:$0xf]
        %v8793 = vld [vmem:[#allocation4 + $0x214] sm:$0xf]
        %v8794 = vld [vmem:[#allocation4 + $0x218] sm:$0xf]
        %v8795 = vld [vmem:[#allocation4 + $0x21c] sm:$0xf]
        %v8796 = vld [vmem:[#allocation4 + $0x220] sm:$0xf]
        %v8797 = vld [vmem:[#allocation4 + $0x224] sm:$0xf]
        %v8798 = vld [vmem:[#allocation4 + $0x228] sm:$0xf]
        %v8799 = vld [vmem:[#allocation4 + $0x22c] sm:$0xf]
        %v8800 = vld [vmem:[#allocation4 + $0x230] sm:$0xf]
        %v8801 = vld [vmem:[#allocation4 + $0x234] sm:$0xf]
        %v8802 = vld [vmem:[#allocation4 + $0x238] sm:$0xf]
        %v8803 = vld [vmem:[#allocation4 + $0x23c] sm:$0xf]
        %v8804 = vld [vmem:[%s288] sm:$0xff]
        %v8805 = vld [vmem:[%s288 + $0x8] sm:$0xff]
        %v8806 = vld [vmem:[%s288 + $0x10] sm:$0xff]
        %v8807 = vld [vmem:[%s288 + $0x18] sm:$0xff]
        %v8808 = vld [vmem:[%s288 + $0x20] sm:$0xff]
        %v8809 = vld [vmem:[%s288 + $0x28] sm:$0xff]
        %v8810 = vld [vmem:[%s288 + $0x30] sm:$0xff]
        %v8811 = vld [vmem:[%s288 + $0x38] sm:$0xff]
        %v8812 = vld [vmem:[%s288 + $0x40] sm:$0xff]
        %v8813 = vld [vmem:[%s288 + $0x48] sm:$0xff]
        %v8814 = vld [vmem:[%s288 + $0x50] sm:$0xff]
        %v8815 = vld [vmem:[%s288 + $0x58] sm:$0xff]
        %v8816 = vld [vmem:[%s288 + $0x60] sm:$0xff]
        %v8817 = vld [vmem:[%s288 + $0x68] sm:$0xff]
        %v8818 = vld [vmem:[%s288 + $0x70] sm:$0xff]
        %v8819 = vld [vmem:[%s288 + $0x78] sm:$0xff]
        %v8820 = vld [vmem:[%s288 + $0x80] sm:$0xff]
        %v8821 = vld [vmem:[%s288 + $0x88] sm:$0xff]
        %v8822 = vld [vmem:[%s288 + $0x90] sm:$0xff]
        %v8823 = vld [vmem:[%s288 + $0x98] sm:$0xff]
        %v8824 = vld [vmem:[%s288 + $0xa0] sm:$0xff]
        %v8825 = vld [vmem:[%s288 + $0xa8] sm:$0xff]
        %v8826 = vld [vmem:[%s288 + $0xb0] sm:$0xff]
        %v8827 = vld [vmem:[%s288 + $0xb8] sm:$0xff]
        %v8828 = vld [vmem:[%s288 + $0xc0] sm:$0xff]
        %v8829 = vld [vmem:[%s288 + $0xc8] sm:$0xff]
        %v8830 = vld [vmem:[%s288 + $0xd0] sm:$0xff]
        %v8831 = vld [vmem:[%s288 + $0xd8] sm:$0xff]
        %v8832 = vld [vmem:[%s288 + $0xe0] sm:$0xff]
        %v8833 = vld [vmem:[%s288 + $0xe8] sm:$0xff]
        %v8834 = vld [vmem:[%s288 + $0xf0] sm:$0xff]
        %v8835 = vld [vmem:[%s288 + $0xf8] sm:$0xff]
        %v8837 = vperm.slane %v296, 0
        %v8999 = vunpack.c.l.b16 %v8500
        %v9000 = vunpack.c.h.b16 %v8500
        %v9001 = vunpack.c.l.b16 %v8501
        %v9002 = vunpack.c.h.b16 %v8501
        %v9003 = vunpack.c.l.b16 %v8502
        %v9004 = vunpack.c.h.b16 %v8502
        %v9005 = vunpack.c.l.b16 %v8503
        %v9006 = vunpack.c.h.b16 %v8503
        %v9007 = vunpack.c.l.b16 %v8504
        %v9008 = vunpack.c.l.b16 %v8505
        %v9009 = vunpack.c.h.b16 %v8505
        %v9010 = vunpack.c.l.b16 %v8506
        %v9011 = vunpack.c.h.b16 %v8506
        %v9012 = vunpack.c.l.b16 %v8507
        %v9013 = vunpack.c.h.b16 %v8507
        %v9014 = vunpack.c.l.b16 %v8508
        %v9015 = vunpack.c.h.b16 %v8508
        %v9016 = vunpack.c.l.b16 %v8509
        %v9017 = vunpack.c.l.b16 %v8510
        %v9018 = vunpack.c.h.b16 %v8510
        %v9019 = vunpack.c.l.b16 %v8511
        %v9020 = vunpack.c.h.b16 %v8511
        %v9021 = vunpack.c.l.b16 %v8512
        %v9022 = vunpack.c.h.b16 %v8512
        %v9023 = vunpack.c.l.b16 %v8513
        %v9024 = vunpack.c.h.b16 %v8513
        %v9025 = vunpack.c.l.b16 %v8514
        %v9026 = vunpack.c.l.b16 %v8515
        %v9027 = vunpack.c.h.b16 %v8515
        %v9028 = vunpack.c.l.b16 %v8516
        %v9029 = vunpack.c.h.b16 %v8516
        %v9030 = vunpack.c.l.b16 %v8517
        %v9031 = vunpack.c.h.b16 %v8517
        %v9032 = vunpack.c.l.b16 %v8518
        %v9033 = vunpack.c.h.b16 %v8518
        %v9034 = vunpack.c.l.b16 %v8519
        %v9035 = vunpack.c.l.b16 %v8520
        %v9036 = vunpack.c.h.b16 %v8520
        %v9037 = vunpack.c.l.b16 %v8521
        %v9038 = vunpack.c.h.b16 %v8521
        %v9039 = vunpack.c.l.b16 %v8522
        %v9040 = vunpack.c.h.b16 %v8522
        %v9041 = vunpack.c.l.b16 %v8523
        %v9042 = vunpack.c.h.b16 %v8523
        %v9043 = vunpack.c.l.b16 %v8524
        %v9044 = vunpack.c.l.b16 %v8525
        %v9045 = vunpack.c.h.b16 %v8525
        %v9046 = vunpack.c.l.b16 %v8526
        %v9047 = vunpack.c.h.b16 %v8526
        %v9048 = vunpack.c.l.b16 %v8527
        %v9049 = vunpack.c.h.b16 %v8527
        %v9050 = vunpack.c.l.b16 %v8528
        %v9051 = vunpack.c.h.b16 %v8528
        %v9052 = vunpack.c.l.b16 %v8529
        %v9053 = vunpack.c.l.b16 %v8530
        %v9054 = vunpack.c.h.b16 %v8530
        %v9055 = vunpack.c.l.b16 %v8531
        %v9056 = vunpack.c.h.b16 %v8531
        %v9057 = vunpack.c.l.b16 %v8532
        %v9058 = vunpack.c.h.b16 %v8532
        %v9059 = vunpack.c.l.b16 %v8533
        %v9060 = vunpack.c.h.b16 %v8533
        %v9061 = vunpack.c.l.b16 %v8534
        %v9062 = vunpack.c.l.b16 %v8535
        %v9063 = vunpack.c.h.b16 %v8535
        %v9064 = vunpack.c.l.b16 %v8536
        %v9065 = vunpack.c.h.b16 %v8536
        %v9066 = vunpack.c.l.b16 %v8537
        %v9067 = vunpack.c.h.b16 %v8537
        %v9068 = vunpack.c.l.b16 %v8538
        %v9069 = vunpack.c.h.b16 %v8538
        %v9070 = vunpack.c.l.b16 %v8539
        %v9071 = vunpack.c.l.b16 %v8540
        %v9072 = vunpack.c.h.b16 %v8540
        %v9073 = vunpack.c.l.b16 %v8541
        %v9074 = vunpack.c.h.b16 %v8541
        %v9075 = vunpack.c.l.b16 %v8542
        %v9076 = vunpack.c.h.b16 %v8542
        %v9077 = vunpack.c.l.b16 %v8543
        %v9078 = vunpack.c.h.b16 %v8543
        %v9079 = vunpack.c.l.b16 %v8544
        %v9080 = vunpack.c.l.b16 %v8545
        %v9081 = vunpack.c.h.b16 %v8545
        %v9082 = vunpack.c.l.b16 %v8546
        %v9083 = vunpack.c.h.b16 %v8546
        %v9084 = vunpack.c.l.b16 %v8547
        %v9085 = vunpack.c.h.b16 %v8547
        %v9086 = vunpack.c.l.b16 %v8548
        %v9087 = vunpack.c.h.b16 %v8548
        %v9088 = vunpack.c.l.b16 %v8549
        %v9089 = vunpack.c.l.b16 %v8550
        %v9090 = vunpack.c.h.b16 %v8550
        %v9091 = vunpack.c.l.b16 %v8551
        %v9092 = vunpack.c.h.b16 %v8551
        %v9093 = vunpack.c.l.b16 %v8552
        %v9094 = vunpack.c.h.b16 %v8552
        %v9095 = vunpack.c.l.b16 %v8553
        %v9096 = vunpack.c.h.b16 %v8553
        %v9097 = vunpack.c.l.b16 %v8554
        %v9098 = vunpack.c.l.b16 %v8555
        %v9099 = vunpack.c.h.b16 %v8555
        %v9100 = vunpack.c.l.b16 %v8556
        %v9101 = vunpack.c.h.b16 %v8556
        %v9102 = vunpack.c.l.b16 %v8557
        %v9103 = vunpack.c.h.b16 %v8557
        %v9104 = vunpack.c.l.b16 %v8558
        %v9105 = vunpack.c.h.b16 %v8558
        %v9106 = vunpack.c.l.b16 %v8559
        %v9107 = vunpack.c.l.b16 %v8560
        %v9108 = vunpack.c.h.b16 %v8560
        %v9109 = vunpack.c.l.b16 %v8561
        %v9110 = vunpack.c.h.b16 %v8561
        %v9111 = vunpack.c.l.b16 %v8562
        %v9112 = vunpack.c.h.b16 %v8562
        %v9113 = vunpack.c.l.b16 %v8563
        %v9114 = vunpack.c.h.b16 %v8563
        %v9115 = vunpack.c.l.b16 %v8564
        %v9116 = vunpack.c.l.b16 %v8565
        %v9117 = vunpack.c.h.b16 %v8565
        %v9118 = vunpack.c.l.b16 %v8566
        %v9119 = vunpack.c.h.b16 %v8566
        %v9120 = vunpack.c.l.b16 %v8567
        %v9121 = vunpack.c.h.b16 %v8567
        %v9122 = vunpack.c.l.b16 %v8568
        %v9123 = vunpack.c.h.b16 %v8568
        %v9124 = vunpack.c.l.b16 %v8569
        %v9125 = vunpack.c.l.b16 %v8570
        %v9126 = vunpack.c.h.b16 %v8570
        %v9127 = vunpack.c.l.b16 %v8571
        %v9128 = vunpack.c.h.b16 %v8571
        %v9129 = vunpack.c.l.b16 %v8572
        %v9130 = vunpack.c.h.b16 %v8572
        %v9131 = vunpack.c.l.b16 %v8573
        %v9132 = vunpack.c.h.b16 %v8573
        %v9133 = vunpack.c.l.b16 %v8574
        %v9134 = vunpack.c.l.b16 %v8575
        %v9135 = vunpack.c.h.b16 %v8575
        %v9136 = vunpack.c.l.b16 %v8576
        %v9137 = vunpack.c.h.b16 %v8576
        %v9138 = vunpack.c.l.b16 %v8577
        %v9139 = vunpack.c.h.b16 %v8577
        %v9140 = vunpack.c.l.b16 %v8578
        %v9141 = vunpack.c.h.b16 %v8578
        %v9142 = vunpack.c.l.b16 %v8579
        %v9143 = vunpack.c.l.b16 %v8580
        %v9144 = vunpack.c.h.b16 %v8580
        %v9145 = vunpack.c.l.b16 %v8581
        %v9146 = vunpack.c.h.b16 %v8581
        %v9147 = vunpack.c.l.b16 %v8582
        %v9148 = vunpack.c.h.b16 %v8582
        %v9149 = vunpack.c.l.b16 %v8583
        %v9150 = vunpack.c.h.b16 %v8583
        %v9151 = vunpack.c.l.b16 %v8584
        %v9152 = vunpack.c.l.b16 %v8585
        %v9153 = vunpack.c.h.b16 %v8585
        %v9154 = vunpack.c.l.b16 %v8586
        %v9155 = vunpack.c.h.b16 %v8586
        %v9156 = vunpack.c.l.b16 %v8587
        %v9157 = vunpack.c.h.b16 %v8587
        %v9158 = vunpack.c.l.b16 %v8588
        %v9159 = vunpack.c.h.b16 %v8588
        %v9160 = vunpack.c.l.b16 %v8589
        %v9161 = vunpack.c.l.b16 %v8590
        %v9162 = vunpack.c.h.b16 %v8590
        %v9163 = vunpack.c.l.b16 %v8591
        %v9164 = vunpack.c.h.b16 %v8591
        %v9165 = vunpack.c.l.b16 %v8592
        %v9166 = vunpack.c.h.b16 %v8592
        %v9167 = vunpack.c.l.b16 %v8593
        %v9168 = vunpack.c.h.b16 %v8593
        %v9169 = vunpack.c.l.b16 %v8594
        %v9170 = vunpack.c.l.b16 %v8595
        %v9171 = vunpack.c.h.b16 %v8595
        %v9172 = vunpack.c.l.b16 %v8596
        %v9173 = vunpack.c.h.b16 %v8596
        %v9174 = vunpack.c.l.b16 %v8597
        %v9175 = vunpack.c.h.b16 %v8597
        %v9176 = vunpack.c.l.b16 %v8598
        %v9177 = vunpack.c.h.b16 %v8598
        %v9178 = vunpack.c.l.b16 %v8599
        %v9179 = vunpack.c.l.b16 %v8600
        %v9180 = vunpack.c.h.b16 %v8600
        %v9181 = vunpack.c.l.b16 %v8601
        %v9182 = vunpack.c.h.b16 %v8601
        %v9183 = vunpack.c.l.b16 %v8602
        %v9184 = vunpack.c.h.b16 %v8602
        %v9185 = vunpack.c.l.b16 %v8603
        %v9186 = vunpack.c.h.b16 %v8603
        %v9187 = vunpack.c.l.b16 %v8604
        %v9188 = vunpack.c.l.b16 %v8605
        %v9189 = vunpack.c.h.b16 %v8605
        %v9190 = vunpack.c.l.b16 %v8606
        %v9191 = vunpack.c.h.b16 %v8606
        %v9192 = vunpack.c.l.b16 %v8607
        %v9193 = vunpack.c.h.b16 %v8607
        %v9194 = vunpack.c.l.b16 %v8608
        %v9195 = vunpack.c.h.b16 %v8608
        %v9196 = vunpack.c.l.b16 %v8609
        %v9197 = vunpack.c.l.b16 %v8610
        %v9198 = vunpack.c.h.b16 %v8610
        %v9199 = vunpack.c.l.b16 %v8611
        %v9200 = vunpack.c.h.b16 %v8611
        %v9201 = vunpack.c.l.b16 %v8612
        %v9202 = vunpack.c.h.b16 %v8612
        %v9203 = vunpack.c.l.b16 %v8613
        %v9204 = vunpack.c.h.b16 %v8613
        %v9205 = vunpack.c.l.b16 %v8614
        %v9206 = vunpack.c.l.b16 %v8615
        %v9207 = vunpack.c.h.b16 %v8615
        %v9208 = vunpack.c.l.b16 %v8616
        %v9209 = vunpack.c.h.b16 %v8616
        %v9210 = vunpack.c.l.b16 %v8617
        %v9211 = vunpack.c.h.b16 %v8617
        %v9212 = vunpack.c.l.b16 %v8618
        %v9213 = vunpack.c.h.b16 %v8618
        %v9214 = vunpack.c.l.b16 %v8619
        %v9215 = vunpack.c.l.b16 %v8620
        %v9216 = vunpack.c.h.b16 %v8620
        %v9217 = vunpack.c.l.b16 %v8621
        %v9218 = vunpack.c.h.b16 %v8621
        %v9219 = vunpack.c.l.b16 %v8622
        %v9220 = vunpack.c.h.b16 %v8622
        %v9221 = vunpack.c.l.b16 %v8623
        %v9222 = vunpack.c.h.b16 %v8623
        %v9223 = vunpack.c.l.b16 %v8624
        %v9224 = vunpack.c.l.b16 %v8625
        %v9225 = vunpack.c.h.b16 %v8625
        %v9226 = vunpack.c.l.b16 %v8626
        %v9227 = vunpack.c.h.b16 %v8626
        %v9228 = vunpack.c.l.b16 %v8627
        %v9229 = vunpack.c.h.b16 %v8627
        %v9230 = vunpack.c.l.b16 %v8628
        %v9231 = vunpack.c.h.b16 %v8628
        %v9232 = vunpack.c.l.b16 %v8629
        %v9233 = vunpack.c.l.b16 %v8630
        %v9234 = vunpack.c.h.b16 %v8630
        %v9235 = vunpack.c.l.b16 %v8631
        %v9236 = vunpack.c.h.b16 %v8631
        %v9237 = vunpack.c.l.b16 %v8632
        %v9238 = vunpack.c.h.b16 %v8632
        %v9239 = vunpack.c.l.b16 %v8633
        %v9240 = vunpack.c.h.b16 %v8633
        %v9241 = vunpack.c.l.b16 %v8634
        %v9242 = vunpack.c.l.b16 %v8635
        %v9243 = vunpack.c.h.b16 %v8635
        %v9244 = vunpack.c.l.b16 %v8636
        %v9245 = vunpack.c.h.b16 %v8636
        %v9246 = vunpack.c.l.b16 %v8637
        %v9247 = vunpack.c.h.b16 %v8637
        %v9248 = vunpack.c.l.b16 %v8638
        %v9249 = vunpack.c.h.b16 %v8638
        %v9250 = vunpack.c.l.b16 %v8639
        %v9251 = vunpack.c.l.b16 %v8640
        %v9252 = vunpack.c.h.b16 %v8640
        %v9253 = vunpack.c.l.b16 %v8641
        %v9254 = vunpack.c.h.b16 %v8641
        %v9255 = vunpack.c.l.b16 %v8642
        %v9256 = vunpack.c.h.b16 %v8642
        %v9257 = vunpack.c.l.b16 %v8643
        %v9258 = vunpack.c.h.b16 %v8643
        %v9259 = vunpack.c.l.b16 %v8644
        %v9260 = vunpack.c.l.b16 %v8645
        %v9261 = vunpack.c.h.b16 %v8645
        %v9262 = vunpack.c.l.b16 %v8646
        %v9263 = vunpack.c.h.b16 %v8646
        %v9264 = vunpack.c.l.b16 %v8647
        %v9265 = vunpack.c.h.b16 %v8647
        %v9266 = vunpack.c.l.b16 %v8648
        %v9267 = vunpack.c.h.b16 %v8648
        %v9268 = vunpack.c.l.b16 %v8649
        %v9269 = vunpack.c.l.b16 %v8650
        %v9270 = vunpack.c.h.b16 %v8650
        %v9271 = vunpack.c.l.b16 %v8651
        %v9272 = vunpack.c.h.b16 %v8651
        %v9273 = vunpack.c.l.b16 %v8652
        %v9274 = vunpack.c.h.b16 %v8652
        %v9275 = vunpack.c.l.b16 %v8653
        %v9276 = vunpack.c.h.b16 %v8653
        %v9277 = vunpack.c.l.b16 %v8654
        %v9278 = vunpack.c.l.b16 %v8655
        %v9279 = vunpack.c.h.b16 %v8655
        %v9280 = vunpack.c.l.b16 %v8656
        %v9281 = vunpack.c.h.b16 %v8656
        %v9282 = vunpack.c.l.b16 %v8657
        %v9283 = vunpack.c.h.b16 %v8657
        %v9284 = vunpack.c.l.b16 %v8658
        %v9285 = vunpack.c.h.b16 %v8658
        %v9286 = vunpack.c.l.b16 %v8659
        %v9287 = vpack.c.b16 %v9008, %v8999
        %v9288 = vpack.c.b16 %v9009, %v9000
        %v9289 = vpack.c.b16 %v9010, %v9001
        %v9290 = vpack.c.b16 %v9011, %v9002
        %v9291 = vpack.c.b16 %v9012, %v9003
        %v9292 = vpack.c.b16 %v9013, %v9004
        %v9293 = vpack.c.b16 %v9014, %v9005
        %v9294 = vpack.c.b16 %v9015, %v9006
        %v9295 = vpack.c.b16 %v9016, %v9007
        %v9296 = vpack.c.b16 %v9026, %v9017
        %v9297 = vpack.c.b16 %v9027, %v9018
        %v9298 = vpack.c.b16 %v9028, %v9019
        %v9299 = vpack.c.b16 %v9029, %v9020
        %v9300 = vpack.c.b16 %v9030, %v9021
        %v9301 = vpack.c.b16 %v9031, %v9022
        %v9302 = vpack.c.b16 %v9032, %v9023
        %v9303 = vpack.c.b16 %v9033, %v9024
        %v9304 = vpack.c.b16 %v9034, %v9025
        %v9305 = vpack.c.b16 %v9044, %v9035
        %v9306 = vpack.c.b16 %v9045, %v9036
        %v9307 = vpack.c.b16 %v9046, %v9037
        %v9308 = vpack.c.b16 %v9047, %v9038
        %v9309 = vpack.c.b16 %v9048, %v9039
        %v9310 = vpack.c.b16 %v9049, %v9040
        %v9311 = vpack.c.b16 %v9050, %v9041
        %v9312 = vpack.c.b16 %v9051, %v9042
        %v9313 = vpack.c.b16 %v9052, %v9043
        %v9314 = vpack.c.b16 %v9062, %v9053
        %v9315 = vpack.c.b16 %v9063, %v9054
        %v9316 = vpack.c.b16 %v9064, %v9055
        %v9317 = vpack.c.b16 %v9065, %v9056
        %v9318 = vpack.c.b16 %v9066, %v9057
        %v9319 = vpack.c.b16 %v9067, %v9058
        %v9320 = vpack.c.b16 %v9068, %v9059
        %v9321 = vpack.c.b16 %v9069, %v9060
        %v9322 = vpack.c.b16 %v9070, %v9061
        %v9323 = vpack.c.b16 %v9080, %v9071
        %v9324 = vpack.c.b16 %v9081, %v9072
        %v9325 = vpack.c.b16 %v9082, %v9073
        %v9326 = vpack.c.b16 %v9083, %v9074
        %v9327 = vpack.c.b16 %v9084, %v9075
        %v9328 = vpack.c.b16 %v9085, %v9076
        %v9329 = vpack.c.b16 %v9086, %v9077
        %v9330 = vpack.c.b16 %v9087, %v9078
        %v9331 = vpack.c.b16 %v9088, %v9079
        %v9332 = vpack.c.b16 %v9098, %v9089
        %v9333 = vpack.c.b16 %v9099, %v9090
        %v9334 = vpack.c.b16 %v9100, %v9091
        %v9335 = vpack.c.b16 %v9101, %v9092
        %v9336 = vpack.c.b16 %v9102, %v9093
        %v9337 = vpack.c.b16 %v9103, %v9094
        %v9338 = vpack.c.b16 %v9104, %v9095
        %v9339 = vpack.c.b16 %v9105, %v9096
        %v9340 = vpack.c.b16 %v9106, %v9097
        %v9341 = vpack.c.b16 %v9116, %v9107
        %v9342 = vpack.c.b16 %v9117, %v9108
        %v9343 = vpack.c.b16 %v9118, %v9109
        %v9344 = vpack.c.b16 %v9119, %v9110
        %v9345 = vpack.c.b16 %v9120, %v9111
        %v9346 = vpack.c.b16 %v9121, %v9112
        %v9347 = vpack.c.b16 %v9122, %v9113
        %v9348 = vpack.c.b16 %v9123, %v9114
        %v9349 = vpack.c.b16 %v9124, %v9115
        %v9350 = vpack.c.b16 %v9134, %v9125
        %v9351 = vpack.c.b16 %v9135, %v9126
        %v9352 = vpack.c.b16 %v9136, %v9127
        %v9353 = vpack.c.b16 %v9137, %v9128
        %v9354 = vpack.c.b16 %v9138, %v9129
        %v9355 = vpack.c.b16 %v9139, %v9130
        %v9356 = vpack.c.b16 %v9140, %v9131
        %v9357 = vpack.c.b16 %v9141, %v9132
        %v9358 = vpack.c.b16 %v9142, %v9133
        %v9359 = vpack.c.b16 %v9152, %v9143
        %v9360 = vpack.c.b16 %v9153, %v9144
        %v9361 = vpack.c.b16 %v9154, %v9145
        %v9362 = vpack.c.b16 %v9155, %v9146
        %v9363 = vpack.c.b16 %v9156, %v9147
        %v9364 = vpack.c.b16 %v9157, %v9148
        %v9365 = vpack.c.b16 %v9158, %v9149
        %v9366 = vpack.c.b16 %v9159, %v9150
        %v9367 = vpack.c.b16 %v9160, %v9151
        %v9368 = vpack.c.b16 %v9170, %v9161
        %v9369 = vpack.c.b16 %v9171, %v9162
        %v9370 = vpack.c.b16 %v9172, %v9163
        %v9371 = vpack.c.b16 %v9173, %v9164
        %v9372 = vpack.c.b16 %v9174, %v9165
        %v9373 = vpack.c.b16 %v9175, %v9166
        %v9374 = vpack.c.b16 %v9176, %v9167
        %v9375 = vpack.c.b16 %v9177, %v9168
        %v9376 = vpack.c.b16 %v9178, %v9169
        %v9377 = vpack.c.b16 %v9188, %v9179
        %v9378 = vpack.c.b16 %v9189, %v9180
        %v9379 = vpack.c.b16 %v9190, %v9181
        %v9380 = vpack.c.b16 %v9191, %v9182
        %v9381 = vpack.c.b16 %v9192, %v9183
        %v9382 = vpack.c.b16 %v9193, %v9184
        %v9383 = vpack.c.b16 %v9194, %v9185
        %v9384 = vpack.c.b16 %v9195, %v9186
        %v9385 = vpack.c.b16 %v9196, %v9187
        %v9386 = vpack.c.b16 %v9206, %v9197
        %v9387 = vpack.c.b16 %v9207, %v9198
        %v9388 = vpack.c.b16 %v9208, %v9199
        %v9389 = vpack.c.b16 %v9209, %v9200
        %v9390 = vpack.c.b16 %v9210, %v9201
        %v9391 = vpack.c.b16 %v9211, %v9202
        %v9392 = vpack.c.b16 %v9212, %v9203
        %v9393 = vpack.c.b16 %v9213, %v9204
        %v9394 = vpack.c.b16 %v9214, %v9205
        %v9395 = vpack.c.b16 %v9224, %v9215
        %v9396 = vpack.c.b16 %v9225, %v9216
        %v9397 = vpack.c.b16 %v9226, %v9217
        %v9398 = vpack.c.b16 %v9227, %v9218
        %v9399 = vpack.c.b16 %v9228, %v9219
        %v9400 = vpack.c.b16 %v9229, %v9220
        %v9401 = vpack.c.b16 %v9230, %v9221
        %v9402 = vpack.c.b16 %v9231, %v9222
        %v9403 = vpack.c.b16 %v9232, %v9223
        %v9404 = vpack.c.b16 %v9242, %v9233
        %v9405 = vpack.c.b16 %v9243, %v9234
        %v9406 = vpack.c.b16 %v9244, %v9235
        %v9407 = vpack.c.b16 %v9245, %v9236
        %v9408 = vpack.c.b16 %v9246, %v9237
        %v9409 = vpack.c.b16 %v9247, %v9238
        %v9410 = vpack.c.b16 %v9248, %v9239
        %v9411 = vpack.c.b16 %v9249, %v9240
        %v9412 = vpack.c.b16 %v9250, %v9241
        %v9413 = vpack.c.b16 %v9260, %v9251
        %v9414 = vpack.c.b16 %v9261, %v9252
        %v9415 = vpack.c.b16 %v9262, %v9253
        %v9416 = vpack.c.b16 %v9263, %v9254
        %v9417 = vpack.c.b16 %v9264, %v9255
        %v9418 = vpack.c.b16 %v9265, %v9256
        %v9419 = vpack.c.b16 %v9266, %v9257
        %v9420 = vpack.c.b16 %v9267, %v9258
        %v9421 = vpack.c.b16 %v9268, %v9259
        %v9422 = vpack.c.b16 %v9278, %v9269
        %v9423 = vpack.c.b16 %v9279, %v9270
        %v9424 = vpack.c.b16 %v9280, %v9271
        %v9425 = vpack.c.b16 %v9281, %v9272
        %v9426 = vpack.c.b16 %v9282, %v9273
        %v9427 = vpack.c.b16 %v9283, %v9274
        %v9428 = vpack.c.b16 %v9284, %v9275
        %v9429 = vpack.c.b16 %v9285, %v9276
        %v9430 = vpack.c.b16 %v9286, %v9277
        %v9719 = vunpack.c.l.b16 %v8660
        %v9720 = vunpack.c.l.b16 %v8661
        %v9721 = vunpack.c.l.b16 %v8662
        %v9722 = vunpack.c.l.b16 %v8663
        %v9723 = vunpack.c.l.b16 %v8664
        %v9724 = vunpack.c.l.b16 %v8665
        %v9725 = vunpack.c.l.b16 %v8666
        %v9726 = vunpack.c.l.b16 %v8667
        %v9727 = vunpack.c.l.b16 %v8668
        %v9728 = vunpack.c.l.b16 %v8669
        %v9729 = vunpack.c.l.b16 %v8670
        %v9730 = vunpack.c.l.b16 %v8671
        %v9731 = vunpack.c.l.b16 %v8672
        %v9732 = vunpack.c.l.b16 %v8673
        %v9733 = vunpack.c.l.b16 %v8674
        %v9734 = vunpack.c.l.b16 %v8675
        %v9735 = vunpack.c.l.b16 %v8676
        %v9736 = vunpack.c.l.b16 %v8677
        %v9737 = vunpack.c.l.b16 %v8678
        %v9738 = vunpack.c.l.b16 %v8679
        %v9739 = vunpack.c.l.b16 %v8680
        %v9740 = vunpack.c.l.b16 %v8681
        %v9741 = vunpack.c.l.b16 %v8682
        %v9742 = vunpack.c.l.b16 %v8683
        %v9743 = vunpack.c.l.b16 %v8684
        %v9744 = vunpack.c.l.b16 %v8685
        %v9745 = vunpack.c.l.b16 %v8686
        %v9746 = vunpack.c.l.b16 %v8687
        %v9747 = vunpack.c.l.b16 %v8688
        %v9748 = vunpack.c.l.b16 %v8689
        %v9749 = vunpack.c.l.b16 %v8690
        %v9750 = vunpack.c.l.b16 %v8691
        %v9751 = vunpack.c.l.b16 %v8692
        %v9752 = vunpack.c.l.b16 %v8693
        %v9753 = vunpack.c.l.b16 %v8694
        %v9754 = vunpack.c.l.b16 %v8695
        %v9755 = vunpack.c.l.b16 %v8696
        %v9756 = vunpack.c.l.b16 %v8697
        %v9757 = vunpack.c.l.b16 %v8698
        %v9758 = vunpack.c.l.b16 %v8699
        %v9759 = vunpack.c.l.b16 %v8700
        %v9760 = vunpack.c.l.b16 %v8701
        %v9761 = vunpack.c.l.b16 %v8702
        %v9762 = vunpack.c.l.b16 %v8703
        %v9763 = vunpack.c.l.b16 %v8704
        %v9764 = vunpack.c.l.b16 %v8705
        %v9765 = vunpack.c.l.b16 %v8706
        %v9766 = vunpack.c.l.b16 %v8707
        %v9767 = vunpack.c.l.b16 %v8708
        %v9768 = vunpack.c.l.b16 %v8709
        %v9769 = vunpack.c.l.b16 %v8710
        %v9770 = vunpack.c.l.b16 %v8711
        %v9771 = vunpack.c.l.b16 %v8712
        %v9772 = vunpack.c.l.b16 %v8713
        %v9773 = vunpack.c.l.b16 %v8714
        %v9774 = vunpack.c.l.b16 %v8715
        %v9775 = vunpack.c.l.b16 %v8716
        %v9776 = vunpack.c.l.b16 %v8717
        %v9777 = vunpack.c.l.b16 %v8718
        %v9778 = vunpack.c.l.b16 %v8719
        %v9779 = vunpack.c.l.b16 %v8720
        %v9780 = vunpack.c.l.b16 %v8721
        %v9781 = vunpack.c.l.b16 %v8722
        %v9782 = vunpack.c.l.b16 %v8723
        %v9783 = vunpack.c.l.b16 %v8724
        %v9784 = vunpack.c.l.b16 %v8725
        %v9785 = vunpack.c.l.b16 %v8726
        %v9786 = vunpack.c.l.b16 %v8727
        %v9787 = vunpack.c.l.b16 %v8728
        %v9788 = vunpack.c.l.b16 %v8729
        %v9789 = vunpack.c.l.b16 %v8730
        %v9790 = vunpack.c.l.b16 %v8731
        %v9791 = vunpack.c.l.b16 %v8732
        %v9792 = vunpack.c.l.b16 %v8733
        %v9793 = vunpack.c.l.b16 %v8734
        %v9794 = vunpack.c.l.b16 %v8735
        %v9795 = vunpack.c.l.b16 %v8736
        %v9796 = vunpack.c.l.b16 %v8737
        %v9797 = vunpack.c.l.b16 %v8738
        %v9798 = vunpack.c.l.b16 %v8739
        %v9799 = vunpack.c.l.b16 %v8740
        %v9800 = vunpack.c.l.b16 %v8741
        %v9801 = vunpack.c.l.b16 %v8742
        %v9802 = vunpack.c.l.b16 %v8743
        %v9803 = vunpack.c.l.b16 %v8744
        %v9804 = vunpack.c.l.b16 %v8745
        %v9805 = vunpack.c.l.b16 %v8746
        %v9806 = vunpack.c.l.b16 %v8747
        %v9807 = vunpack.c.l.b16 %v8748
        %v9808 = vunpack.c.l.b16 %v8749
        %v9809 = vunpack.c.l.b16 %v8750
        %v9810 = vunpack.c.l.b16 %v8751
        %v9811 = vunpack.c.l.b16 %v8752
        %v9812 = vunpack.c.l.b16 %v8753
        %v9813 = vunpack.c.l.b16 %v8754
        %v9814 = vunpack.c.l.b16 %v8755
        %v9815 = vunpack.c.l.b16 %v8756
        %v9816 = vunpack.c.l.b16 %v8757
        %v9817 = vunpack.c.l.b16 %v8758
        %v9818 = vunpack.c.l.b16 %v8759
        %v9819 = vunpack.c.l.b16 %v8760
        %v9820 = vunpack.c.l.b16 %v8761
        %v9821 = vunpack.c.l.b16 %v8762
        %v9822 = vunpack.c.l.b16 %v8763
        %v9823 = vunpack.c.l.b16 %v8764
        %v9824 = vunpack.c.l.b16 %v8765
        %v9825 = vunpack.c.l.b16 %v8766
        %v9826 = vunpack.c.l.b16 %v8767
        %v9827 = vunpack.c.l.b16 %v8768
        %v9828 = vunpack.c.l.b16 %v8769
        %v9829 = vunpack.c.l.b16 %v8770
        %v9830 = vunpack.c.l.b16 %v8771
        %v9831 = vunpack.c.l.b16 %v8772
        %v9832 = vunpack.c.l.b16 %v8773
        %v9833 = vunpack.c.l.b16 %v8774
        %v9834 = vunpack.c.l.b16 %v8775
        %v9835 = vunpack.c.l.b16 %v8776
        %v9836 = vunpack.c.l.b16 %v8777
        %v9837 = vunpack.c.l.b16 %v8778
        %v9838 = vunpack.c.l.b16 %v8779
        %v9839 = vunpack.c.l.b16 %v8780
        %v9840 = vunpack.c.l.b16 %v8781
        %v9841 = vunpack.c.l.b16 %v8782
        %v9842 = vunpack.c.l.b16 %v8783
        %v9843 = vunpack.c.l.b16 %v8784
        %v9844 = vunpack.c.l.b16 %v8785
        %v9845 = vunpack.c.l.b16 %v8786
        %v9846 = vunpack.c.l.b16 %v8787
        %v9847 = vunpack.c.l.b16 %v8788
        %v9848 = vunpack.c.l.b16 %v8789
        %v9849 = vunpack.c.l.b16 %v8790
        %v9850 = vunpack.c.l.b16 %v8791
        %v9851 = vunpack.c.l.b16 %v8792
        %v9852 = vunpack.c.l.b16 %v8793
        %v9853 = vunpack.c.l.b16 %v8794
        %v9854 = vunpack.c.l.b16 %v8795
        %v9855 = vunpack.c.l.b16 %v8796
        %v9856 = vunpack.c.l.b16 %v8797
        %v9857 = vunpack.c.l.b16 %v8798
        %v9858 = vunpack.c.l.b16 %v8799
        %v9859 = vunpack.c.l.b16 %v8800
        %v9860 = vunpack.c.l.b16 %v8801
        %v9861 = vunpack.c.l.b16 %v8802
        %v9862 = vunpack.c.l.b16 %v8803
        %v9863 = vpack.c.b16 %v9720, %v9719
        %v9864 = vpack.c.b16 %v9722, %v9721
        %v9865 = vpack.c.b16 %v9724, %v9723
        %v9866 = vpack.c.b16 %v9726, %v9725
        %v9867 = vpack.c.b16 %v9728, %v9727
        %v9868 = vpack.c.b16 %v9730, %v9729
        %v9869 = vpack.c.b16 %v9732, %v9731
        %v9870 = vpack.c.b16 %v9734, %v9733
        %v9871 = vpack.c.b16 %v9736, %v9735
        %v9872 = vpack.c.b16 %v9738, %v9737
        %v9873 = vpack.c.b16 %v9740, %v9739
        %v9874 = vpack.c.b16 %v9742, %v9741
        %v9875 = vpack.c.b16 %v9744, %v9743
        %v9876 = vpack.c.b16 %v9746, %v9745
        %v9877 = vpack.c.b16 %v9748, %v9747
        %v9878 = vpack.c.b16 %v9750, %v9749
        %v9879 = vpack.c.b16 %v9752, %v9751
        %v9880 = vpack.c.b16 %v9754, %v9753
        %v9881 = vpack.c.b16 %v9756, %v9755
        %v9882 = vpack.c.b16 %v9758, %v9757
        %v9883 = vpack.c.b16 %v9760, %v9759
        %v9884 = vpack.c.b16 %v9762, %v9761
        %v9885 = vpack.c.b16 %v9764, %v9763
        %v9886 = vpack.c.b16 %v9766, %v9765
        %v9887 = vpack.c.b16 %v9768, %v9767
        %v9888 = vpack.c.b16 %v9770, %v9769
        %v9889 = vpack.c.b16 %v9772, %v9771
        %v9890 = vpack.c.b16 %v9774, %v9773
        %v9891 = vpack.c.b16 %v9776, %v9775
        %v9892 = vpack.c.b16 %v9778, %v9777
        %v9893 = vpack.c.b16 %v9780, %v9779
        %v9894 = vpack.c.b16 %v9782, %v9781
        %v9895 = vpack.c.b16 %v9784, %v9783
        %v9896 = vpack.c.b16 %v9786, %v9785
        %v9897 = vpack.c.b16 %v9788, %v9787
        %v9898 = vpack.c.b16 %v9790, %v9789
        %v9899 = vpack.c.b16 %v9792, %v9791
        %v9900 = vpack.c.b16 %v9794, %v9793
        %v9901 = vpack.c.b16 %v9796, %v9795
        %v9902 = vpack.c.b16 %v9798, %v9797
        %v9903 = vpack.c.b16 %v9800, %v9799
        %v9904 = vpack.c.b16 %v9802, %v9801
        %v9905 = vpack.c.b16 %v9804, %v9803
        %v9906 = vpack.c.b16 %v9806, %v9805
        %v9907 = vpack.c.b16 %v9808, %v9807
        %v9908 = vpack.c.b16 %v9810, %v9809
        %v9909 = vpack.c.b16 %v9812, %v9811
        %v9910 = vpack.c.b16 %v9814, %v9813
        %v9911 = vpack.c.b16 %v9816, %v9815
        %v9912 = vpack.c.b16 %v9818, %v9817
        %v9913 = vpack.c.b16 %v9820, %v9819
        %v9914 = vpack.c.b16 %v9822, %v9821
        %v9915 = vpack.c.b16 %v9824, %v9823
        %v9916 = vpack.c.b16 %v9826, %v9825
        %v9917 = vpack.c.b16 %v9828, %v9827
        %v9918 = vpack.c.b16 %v9830, %v9829
        %v9919 = vpack.c.b16 %v9832, %v9831
        %v9920 = vpack.c.b16 %v9834, %v9833
        %v9921 = vpack.c.b16 %v9836, %v9835
        %v9922 = vpack.c.b16 %v9838, %v9837
        %v9923 = vpack.c.b16 %v9840, %v9839
        %v9924 = vpack.c.b16 %v9842, %v9841
        %v9925 = vpack.c.b16 %v9844, %v9843
        %v9926 = vpack.c.b16 %v9846, %v9845
        %v9927 = vpack.c.b16 %v9848, %v9847
        %v9928 = vpack.c.b16 %v9850, %v9849
        %v9929 = vpack.c.b16 %v9852, %v9851
        %v9930 = vpack.c.b16 %v9854, %v9853
        %v9931 = vpack.c.b16 %v9856, %v9855
        %v9932 = vpack.c.b16 %v9858, %v9857
        %v9933 = vpack.c.b16 %v9860, %v9859
        %v9934 = vpack.c.b16 %v9862, %v9861
        %10007 = vmatpush.bf16.msra.mxu0 %v9870
        %10008 = vmatpush.bf16.msra.mxu0 %v9869
        %10009 = vmatpush.bf16.msra.mxu0 %v9868
        %10010 = vmatpush.bf16.msra.mxu0 %v9867
        %10011 = vmatpush.bf16.msra.mxu0 %v9866
        %10012 = vmatpush.bf16.msra.mxu0 %v9865
        %10013 = vmatpush.bf16.msra.mxu0 %v9864
        %10014 = vmatpush.bf16.msra.mxu0 %v9863
        %10015 = vmatmul.bf16.gmra.mxu0 %v9287
        %v10016 = vpop.f32.mrf.mxu0
        %v10017 = vadd.f32 %v8837, %v10016
        %v10018 = vpop.f32.mrf.mxu0
        %v10019 = vadd.f32 %v8837, %v10018
        %10020 = vmatmul.bf16.gmra.mxu0 %v9296
        %v10021 = vpop.f32.mrf.mxu0
        %v10022 = vadd.f32 %v8837, %v10021
        %v10023 = vpop.f32.mrf.mxu0
        %v10024 = vadd.f32 %v8837, %v10023
        %10025 = vmatmul.bf16.gmra.mxu0 %v9305
        %v10026 = vpop.f32.mrf.mxu0
        %v10027 = vadd.f32 %v8837, %v10026
        %v10028 = vpop.f32.mrf.mxu0
        %v10029 = vadd.f32 %v8837, %v10028
        %10030 = vmatmul.bf16.gmra.mxu0 %v9314
        %v10031 = vpop.f32.mrf.mxu0
        %v10032 = vadd.f32 %v8837, %v10031
        %v10033 = vpop.f32.mrf.mxu0
        %v10034 = vadd.f32 %v8837, %v10033
        %10035 = vmatmul.bf16.gmra.mxu0 %v9323
        %v10036 = vpop.f32.mrf.mxu0
        %v10037 = vadd.f32 %v8837, %v10036
        %v10038 = vpop.f32.mrf.mxu0
        %v10039 = vadd.f32 %v8837, %v10038
        %10040 = vmatmul.bf16.gmra.mxu0 %v9332
        %v10041 = vpop.f32.mrf.mxu0
        %v10042 = vadd.f32 %v8837, %v10041
        %v10043 = vpop.f32.mrf.mxu0
        %v10044 = vadd.f32 %v8837, %v10043
        %10045 = vmatmul.bf16.gmra.mxu0 %v9341
        %v10046 = vpop.f32.mrf.mxu0
        %v10047 = vadd.f32 %v8837, %v10046
        %v10048 = vpop.f32.mrf.mxu0
        %v10049 = vadd.f32 %v8837, %v10048
        %10050 = vmatmul.bf16.gmra.mxu0 %v9350
        %v10051 = vpop.f32.mrf.mxu0
        %v10052 = vadd.f32 %v8837, %v10051
        %v10053 = vpop.f32.mrf.mxu0
        %v10054 = vadd.f32 %v8837, %v10053
        %10055 = vmatmul.bf16.gmra.mxu0 %v9359
        %v10056 = vpop.f32.mrf.mxu0
        %v10057 = vadd.f32 %v8837, %v10056
        %v10058 = vpop.f32.mrf.mxu0
        %v10059 = vadd.f32 %v8837, %v10058
        %10060 = vmatmul.bf16.gmra.mxu0 %v9368
        %v10061 = vpop.f32.mrf.mxu0
        %v10062 = vadd.f32 %v8837, %v10061
        %v10063 = vpop.f32.mrf.mxu0
        %v10064 = vadd.f32 %v8837, %v10063
        %10065 = vmatmul.bf16.gmra.mxu0 %v9377
        %v10066 = vpop.f32.mrf.mxu0
        %v10067 = vadd.f32 %v8837, %v10066
        %v10068 = vpop.f32.mrf.mxu0
        %v10069 = vadd.f32 %v8837, %v10068
        %10070 = vmatmul.bf16.gmra.mxu0 %v9386
        %v10071 = vpop.f32.mrf.mxu0
        %v10072 = vadd.f32 %v8837, %v10071
        %v10073 = vpop.f32.mrf.mxu0
        %v10074 = vadd.f32 %v8837, %v10073
        %10075 = vmatmul.bf16.gmra.mxu0 %v9395
        %v10076 = vpop.f32.mrf.mxu0
        %v10077 = vadd.f32 %v8837, %v10076
        %v10078 = vpop.f32.mrf.mxu0
        %v10079 = vadd.f32 %v8837, %v10078
        %10080 = vmatmul.bf16.gmra.mxu0 %v9404
        %v10081 = vpop.f32.mrf.mxu0
        %v10082 = vadd.f32 %v8837, %v10081
        %v10083 = vpop.f32.mrf.mxu0
        %v10084 = vadd.f32 %v8837, %v10083
        %10085 = vmatmul.bf16.gmra.mxu0 %v9413
        %v10086 = vpop.f32.mrf.mxu0
        %v10087 = vadd.f32 %v8837, %v10086
        %v10088 = vpop.f32.mrf.mxu0
        %v10089 = vadd.f32 %v8837, %v10088
        %10090 = vmatmul.bf16.gmra.mxu0 %v9422
        %v10091 = vpop.f32.mrf.mxu0
        %v10092 = vadd.f32 %v8837, %v10091
        %v10093 = vpop.f32.mrf.mxu0
        %v10094 = vadd.f32 %v8837, %v10093
        %10095 = vdwg.mxu0
        %10096 = vmatpush.bf16.msra.mxu0 %v9878
        %10097 = vmatpush.bf16.msra.mxu0 %v9877
        %10098 = vmatpush.bf16.msra.mxu0 %v9876
        %10099 = vmatpush.bf16.msra.mxu0 %v9875
        %10100 = vmatpush.bf16.msra.mxu0 %v9874
        %10101 = vmatpush.bf16.msra.mxu0 %v9873
        %10102 = vmatpush.bf16.msra.mxu0 %v9872
        %10103 = vmatpush.bf16.msra.mxu0 %v9871
        %10104 = vmatmul.bf16.gmra.mxu0 %v9288
        %v10105 = vpop.f32.mrf.mxu0
        %v10106 = vadd.f32 %v10017, %v10105
        %v10107 = vpop.f32.mrf.mxu0
        %v10108 = vadd.f32 %v10019, %v10107
        %10109 = vmatmul.bf16.gmra.mxu0 %v9297
        %v10110 = vpop.f32.mrf.mxu0
        %v10111 = vadd.f32 %v10022, %v10110
        %v10112 = vpop.f32.mrf.mxu0
        %v10113 = vadd.f32 %v10024, %v10112
        %10114 = vmatmul.bf16.gmra.mxu0 %v9306
        %v10115 = vpop.f32.mrf.mxu0
        %v10116 = vadd.f32 %v10027, %v10115
        %v10117 = vpop.f32.mrf.mxu0
        %v10118 = vadd.f32 %v10029, %v10117
        %10119 = vmatmul.bf16.gmra.mxu0 %v9315
        %v10120 = vpop.f32.mrf.mxu0
        %v10121 = vadd.f32 %v10032, %v10120
        %v10122 = vpop.f32.mrf.mxu0
        %v10123 = vadd.f32 %v10034, %v10122
        %10124 = vmatmul.bf16.gmra.mxu0 %v9324
        %v10125 = vpop.f32.mrf.mxu0
        %v10126 = vadd.f32 %v10037, %v10125
        %v10127 = vpop.f32.mrf.mxu0
        %v10128 = vadd.f32 %v10039, %v10127
        %10129 = vmatmul.bf16.gmra.mxu0 %v9333
        %v10130 = vpop.f32.mrf.mxu0
        %v10131 = vadd.f32 %v10042, %v10130
        %v10132 = vpop.f32.mrf.mxu0
        %v10133 = vadd.f32 %v10044, %v10132
        %10134 = vmatmul.bf16.gmra.mxu0 %v9342
        %v10135 = vpop.f32.mrf.mxu0
        %v10136 = vadd.f32 %v10047, %v10135
        %v10137 = vpop.f32.mrf.mxu0
        %v10138 = vadd.f32 %v10049, %v10137
        %10139 = vmatmul.bf16.gmra.mxu0 %v9351
        %v10140 = vpop.f32.mrf.mxu0
        %v10141 = vadd.f32 %v10052, %v10140
        %v10142 = vpop.f32.mrf.mxu0
        %v10143 = vadd.f32 %v10054, %v10142
        %10144 = vmatmul.bf16.gmra.mxu0 %v9360
        %v10145 = vpop.f32.mrf.mxu0
        %v10146 = vadd.f32 %v10057, %v10145
        %v10147 = vpop.f32.mrf.mxu0
        %v10148 = vadd.f32 %v10059, %v10147
        %10149 = vmatmul.bf16.gmra.mxu0 %v9369
        %v10150 = vpop.f32.mrf.mxu0
        %v10151 = vadd.f32 %v10062, %v10150
        %v10152 = vpop.f32.mrf.mxu0
        %v10153 = vadd.f32 %v10064, %v10152
        %10154 = vmatmul.bf16.gmra.mxu0 %v9378
        %v10155 = vpop.f32.mrf.mxu0
        %v10156 = vadd.f32 %v10067, %v10155
        %v10157 = vpop.f32.mrf.mxu0
        %v10158 = vadd.f32 %v10069, %v10157
        %10159 = vmatmul.bf16.gmra.mxu0 %v9387
        %v10160 = vpop.f32.mrf.mxu0
        %v10161 = vadd.f32 %v10072, %v10160
        %v10162 = vpop.f32.mrf.mxu0
        %v10163 = vadd.f32 %v10074, %v10162
        %10164 = vmatmul.bf16.gmra.mxu0 %v9396
        %v10165 = vpop.f32.mrf.mxu0
        %v10166 = vadd.f32 %v10077, %v10165
        %v10167 = vpop.f32.mrf.mxu0
        %v10168 = vadd.f32 %v10079, %v10167
        %10169 = vmatmul.bf16.gmra.mxu0 %v9405
        %v10170 = vpop.f32.mrf.mxu0
        %v10171 = vadd.f32 %v10082, %v10170
        %v10172 = vpop.f32.mrf.mxu0
        %v10173 = vadd.f32 %v10084, %v10172
        %10174 = vmatmul.bf16.gmra.mxu0 %v9414
        %v10175 = vpop.f32.mrf.mxu0
        %v10176 = vadd.f32 %v10087, %v10175
        %v10177 = vpop.f32.mrf.mxu0
        %v10178 = vadd.f32 %v10089, %v10177
        %10179 = vmatmul.bf16.gmra.mxu0 %v9423
        %v10180 = vpop.f32.mrf.mxu0
        %v10181 = vadd.f32 %v10092, %v10180
        %v10182 = vpop.f32.mrf.mxu0
        %v10183 = vadd.f32 %v10094, %v10182
        %10184 = vdwg.mxu0
        %10185 = vmatpush.bf16.msra.mxu0 %v9886
        %10186 = vmatpush.bf16.msra.mxu0 %v9885
        %10187 = vmatpush.bf16.msra.mxu0 %v9884
        %10188 = vmatpush.bf16.msra.mxu0 %v9883
        %10189 = vmatpush.bf16.msra.mxu0 %v9882
        %10190 = vmatpush.bf16.msra.mxu0 %v9881
        %10191 = vmatpush.bf16.msra.mxu0 %v9880
        %10192 = vmatpush.bf16.msra.mxu0 %v9879
        %10193 = vmatmul.bf16.gmra.mxu0 %v9289
        %v10194 = vpop.f32.mrf.mxu0
        %v10195 = vadd.f32 %v10106, %v10194
        %v10196 = vpop.f32.mrf.mxu0
        %v10197 = vadd.f32 %v10108, %v10196
        %10198 = vmatmul.bf16.gmra.mxu0 %v9298
        %v10199 = vpop.f32.mrf.mxu0
        %v10200 = vadd.f32 %v10111, %v10199
        %v10201 = vpop.f32.mrf.mxu0
        %v10202 = vadd.f32 %v10113, %v10201
        %10203 = vmatmul.bf16.gmra.mxu0 %v9307
        %v10204 = vpop.f32.mrf.mxu0
        %v10205 = vadd.f32 %v10116, %v10204
        %v10206 = vpop.f32.mrf.mxu0
        %v10207 = vadd.f32 %v10118, %v10206
        %10208 = vmatmul.bf16.gmra.mxu0 %v9316
        %v10209 = vpop.f32.mrf.mxu0
        %v10210 = vadd.f32 %v10121, %v10209
        %v10211 = vpop.f32.mrf.mxu0
        %v10212 = vadd.f32 %v10123, %v10211
        %10213 = vmatmul.bf16.gmra.mxu0 %v9325
        %v10214 = vpop.f32.mrf.mxu0
        %v10215 = vadd.f32 %v10126, %v10214
        %v10216 = vpop.f32.mrf.mxu0
        %v10217 = vadd.f32 %v10128, %v10216
        %10218 = vmatmul.bf16.gmra.mxu0 %v9334
        %v10219 = vpop.f32.mrf.mxu0
        %v10220 = vadd.f32 %v10131, %v10219
        %v10221 = vpop.f32.mrf.mxu0
        %v10222 = vadd.f32 %v10133, %v10221
        %10223 = vmatmul.bf16.gmra.mxu0 %v9343
        %v10224 = vpop.f32.mrf.mxu0
        %v10225 = vadd.f32 %v10136, %v10224
        %v10226 = vpop.f32.mrf.mxu0
        %v10227 = vadd.f32 %v10138, %v10226
        %10228 = vmatmul.bf16.gmra.mxu0 %v9352
        %v10229 = vpop.f32.mrf.mxu0
        %v10230 = vadd.f32 %v10141, %v10229
        %v10231 = vpop.f32.mrf.mxu0
        %v10232 = vadd.f32 %v10143, %v10231
        %10233 = vmatmul.bf16.gmra.mxu0 %v9361
        %v10234 = vpop.f32.mrf.mxu0
        %v10235 = vadd.f32 %v10146, %v10234
        %v10236 = vpop.f32.mrf.mxu0
        %v10237 = vadd.f32 %v10148, %v10236
        %10238 = vmatmul.bf16.gmra.mxu0 %v9370
        %v10239 = vpop.f32.mrf.mxu0
        %v10240 = vadd.f32 %v10151, %v10239
        %v10241 = vpop.f32.mrf.mxu0
        %v10242 = vadd.f32 %v10153, %v10241
        %10243 = vmatmul.bf16.gmra.mxu0 %v9379
        %v10244 = vpop.f32.mrf.mxu0
        %v10245 = vadd.f32 %v10156, %v10244
        %v10246 = vpop.f32.mrf.mxu0
        %v10247 = vadd.f32 %v10158, %v10246
        %10248 = vmatmul.bf16.gmra.mxu0 %v9388
        %v10249 = vpop.f32.mrf.mxu0
        %v10250 = vadd.f32 %v10161, %v10249
        %v10251 = vpop.f32.mrf.mxu0
        %v10252 = vadd.f32 %v10163, %v10251
        %10253 = vmatmul.bf16.gmra.mxu0 %v9397
        %v10254 = vpop.f32.mrf.mxu0
        %v10255 = vadd.f32 %v10166, %v10254
        %v10256 = vpop.f32.mrf.mxu0
        %v10257 = vadd.f32 %v10168, %v10256
        %10258 = vmatmul.bf16.gmra.mxu0 %v9406
        %v10259 = vpop.f32.mrf.mxu0
        %v10260 = vadd.f32 %v10171, %v10259
        %v10261 = vpop.f32.mrf.mxu0
        %v10262 = vadd.f32 %v10173, %v10261
        %10263 = vmatmul.bf16.gmra.mxu0 %v9415
        %v10264 = vpop.f32.mrf.mxu0
        %v10265 = vadd.f32 %v10176, %v10264
        %v10266 = vpop.f32.mrf.mxu0
        %v10267 = vadd.f32 %v10178, %v10266
        %10268 = vmatmul.bf16.gmra.mxu0 %v9424
        %v10269 = vpop.f32.mrf.mxu0
        %v10270 = vadd.f32 %v10181, %v10269
        %v10271 = vpop.f32.mrf.mxu0
        %v10272 = vadd.f32 %v10183, %v10271
        %10273 = vdwg.mxu0
        %10274 = vmatpush.bf16.msra.mxu0 %v9894
        %10275 = vmatpush.bf16.msra.mxu0 %v9893
        %10276 = vmatpush.bf16.msra.mxu0 %v9892
        %10277 = vmatpush.bf16.msra.mxu0 %v9891
        %10278 = vmatpush.bf16.msra.mxu0 %v9890
        %10279 = vmatpush.bf16.msra.mxu0 %v9889
        %10280 = vmatpush.bf16.msra.mxu0 %v9888
        %10281 = vmatpush.bf16.msra.mxu0 %v9887
        %10282 = vmatmul.bf16.gmra.mxu0 %v9290
        %v10283 = vpop.f32.mrf.mxu0
        %v10284 = vadd.f32 %v10195, %v10283
        %v10285 = vpop.f32.mrf.mxu0
        %v10286 = vadd.f32 %v10197, %v10285
        %10287 = vmatmul.bf16.gmra.mxu0 %v9299
        %v10288 = vpop.f32.mrf.mxu0
        %v10289 = vadd.f32 %v10200, %v10288
        %v10290 = vpop.f32.mrf.mxu0
        %v10291 = vadd.f32 %v10202, %v10290
        %10292 = vmatmul.bf16.gmra.mxu0 %v9308
        %v10293 = vpop.f32.mrf.mxu0
        %v10294 = vadd.f32 %v10205, %v10293
        %v10295 = vpop.f32.mrf.mxu0
        %v10296 = vadd.f32 %v10207, %v10295
        %10297 = vmatmul.bf16.gmra.mxu0 %v9317
        %v10298 = vpop.f32.mrf.mxu0
        %v10299 = vadd.f32 %v10210, %v10298
        %v10300 = vpop.f32.mrf.mxu0
        %v10301 = vadd.f32 %v10212, %v10300
        %10302 = vmatmul.bf16.gmra.mxu0 %v9326
        %v10303 = vpop.f32.mrf.mxu0
        %v10304 = vadd.f32 %v10215, %v10303
        %v10305 = vpop.f32.mrf.mxu0
        %v10306 = vadd.f32 %v10217, %v10305
        %10307 = vmatmul.bf16.gmra.mxu0 %v9335
        %v10308 = vpop.f32.mrf.mxu0
        %v10309 = vadd.f32 %v10220, %v10308
        %v10310 = vpop.f32.mrf.mxu0
        %v10311 = vadd.f32 %v10222, %v10310
        %10312 = vmatmul.bf16.gmra.mxu0 %v9344
        %v10313 = vpop.f32.mrf.mxu0
        %v10314 = vadd.f32 %v10225, %v10313
        %v10315 = vpop.f32.mrf.mxu0
        %v10316 = vadd.f32 %v10227, %v10315
        %10317 = vmatmul.bf16.gmra.mxu0 %v9353
        %v10318 = vpop.f32.mrf.mxu0
        %v10319 = vadd.f32 %v10230, %v10318
        %v10320 = vpop.f32.mrf.mxu0
        %v10321 = vadd.f32 %v10232, %v10320
        %10322 = vmatmul.bf16.gmra.mxu0 %v9362
        %v10323 = vpop.f32.mrf.mxu0
        %v10324 = vadd.f32 %v10235, %v10323
        %v10325 = vpop.f32.mrf.mxu0
        %v10326 = vadd.f32 %v10237, %v10325
        %10327 = vmatmul.bf16.gmra.mxu0 %v9371
        %v10328 = vpop.f32.mrf.mxu0
        %v10329 = vadd.f32 %v10240, %v10328
        %v10330 = vpop.f32.mrf.mxu0
        %v10331 = vadd.f32 %v10242, %v10330
        %10332 = vmatmul.bf16.gmra.mxu0 %v9380
        %v10333 = vpop.f32.mrf.mxu0
        %v10334 = vadd.f32 %v10245, %v10333
        %v10335 = vpop.f32.mrf.mxu0
        %v10336 = vadd.f32 %v10247, %v10335
        %10337 = vmatmul.bf16.gmra.mxu0 %v9389
        %v10338 = vpop.f32.mrf.mxu0
        %v10339 = vadd.f32 %v10250, %v10338
        %v10340 = vpop.f32.mrf.mxu0
        %v10341 = vadd.f32 %v10252, %v10340
        %10342 = vmatmul.bf16.gmra.mxu0 %v9398
        %v10343 = vpop.f32.mrf.mxu0
        %v10344 = vadd.f32 %v10255, %v10343
        %v10345 = vpop.f32.mrf.mxu0
        %v10346 = vadd.f32 %v10257, %v10345
        %10347 = vmatmul.bf16.gmra.mxu0 %v9407
        %v10348 = vpop.f32.mrf.mxu0
        %v10349 = vadd.f32 %v10260, %v10348
        %v10350 = vpop.f32.mrf.mxu0
        %v10351 = vadd.f32 %v10262, %v10350
        %10352 = vmatmul.bf16.gmra.mxu0 %v9416
        %v10353 = vpop.f32.mrf.mxu0
        %v10354 = vadd.f32 %v10265, %v10353
        %v10355 = vpop.f32.mrf.mxu0
        %v10356 = vadd.f32 %v10267, %v10355
        %10357 = vmatmul.bf16.gmra.mxu0 %v9425
        %v10358 = vpop.f32.mrf.mxu0
        %v10359 = vadd.f32 %v10270, %v10358
        %v10360 = vpop.f32.mrf.mxu0
        %v10361 = vadd.f32 %v10272, %v10360
        %10362 = vdwg.mxu0
        %10363 = vmatpush.bf16.msra.mxu0 %v9902
        %10364 = vmatpush.bf16.msra.mxu0 %v9901
        %10365 = vmatpush.bf16.msra.mxu0 %v9900
        %10366 = vmatpush.bf16.msra.mxu0 %v9899
        %10367 = vmatpush.bf16.msra.mxu0 %v9898
        %10368 = vmatpush.bf16.msra.mxu0 %v9897
        %10369 = vmatpush.bf16.msra.mxu0 %v9896
        %10370 = vmatpush.bf16.msra.mxu0 %v9895
        %10371 = vmatmul.bf16.gmra.mxu0 %v9291
        %v10372 = vpop.f32.mrf.mxu0
        %v10373 = vadd.f32 %v10284, %v10372
        %v10374 = vpop.f32.mrf.mxu0
        %v10375 = vadd.f32 %v10286, %v10374
        %10376 = vmatmul.bf16.gmra.mxu0 %v9300
        %v10377 = vpop.f32.mrf.mxu0
        %v10378 = vadd.f32 %v10289, %v10377
        %v10379 = vpop.f32.mrf.mxu0
        %v10380 = vadd.f32 %v10291, %v10379
        %10381 = vmatmul.bf16.gmra.mxu0 %v9309
        %v10382 = vpop.f32.mrf.mxu0
        %v10383 = vadd.f32 %v10294, %v10382
        %v10384 = vpop.f32.mrf.mxu0
        %v10385 = vadd.f32 %v10296, %v10384
        %10386 = vmatmul.bf16.gmra.mxu0 %v9318
        %v10387 = vpop.f32.mrf.mxu0
        %v10388 = vadd.f32 %v10299, %v10387
        %v10389 = vpop.f32.mrf.mxu0
        %v10390 = vadd.f32 %v10301, %v10389
        %10391 = vmatmul.bf16.gmra.mxu0 %v9327
        %v10392 = vpop.f32.mrf.mxu0
        %v10393 = vadd.f32 %v10304, %v10392
        %v10394 = vpop.f32.mrf.mxu0
        %v10395 = vadd.f32 %v10306, %v10394
        %10396 = vmatmul.bf16.gmra.mxu0 %v9336
        %v10397 = vpop.f32.mrf.mxu0
        %v10398 = vadd.f32 %v10309, %v10397
        %v10399 = vpop.f32.mrf.mxu0
        %v10400 = vadd.f32 %v10311, %v10399
        %10401 = vmatmul.bf16.gmra.mxu0 %v9345
        %v10402 = vpop.f32.mrf.mxu0
        %v10403 = vadd.f32 %v10314, %v10402
        %v10404 = vpop.f32.mrf.mxu0
        %v10405 = vadd.f32 %v10316, %v10404
        %10406 = vmatmul.bf16.gmra.mxu0 %v9354
        %v10407 = vpop.f32.mrf.mxu0
        %v10408 = vadd.f32 %v10319, %v10407
        %v10409 = vpop.f32.mrf.mxu0
        %v10410 = vadd.f32 %v10321, %v10409
        %10411 = vmatmul.bf16.gmra.mxu0 %v9363
        %v10412 = vpop.f32.mrf.mxu0
        %v10413 = vadd.f32 %v10324, %v10412
        %v10414 = vpop.f32.mrf.mxu0
        %v10415 = vadd.f32 %v10326, %v10414
        %10416 = vmatmul.bf16.gmra.mxu0 %v9372
        %v10417 = vpop.f32.mrf.mxu0
        %v10418 = vadd.f32 %v10329, %v10417
        %v10419 = vpop.f32.mrf.mxu0
        %v10420 = vadd.f32 %v10331, %v10419
        %10421 = vmatmul.bf16.gmra.mxu0 %v9381
        %v10422 = vpop.f32.mrf.mxu0
        %v10423 = vadd.f32 %v10334, %v10422
        %v10424 = vpop.f32.mrf.mxu0
        %v10425 = vadd.f32 %v10336, %v10424
        %10426 = vmatmul.bf16.gmra.mxu0 %v9390
        %v10427 = vpop.f32.mrf.mxu0
        %v10428 = vadd.f32 %v10339, %v10427
        %v10429 = vpop.f32.mrf.mxu0
        %v10430 = vadd.f32 %v10341, %v10429
        %10431 = vmatmul.bf16.gmra.mxu0 %v9399
        %v10432 = vpop.f32.mrf.mxu0
        %v10433 = vadd.f32 %v10344, %v10432
        %v10434 = vpop.f32.mrf.mxu0
        %v10435 = vadd.f32 %v10346, %v10434
        %10436 = vmatmul.bf16.gmra.mxu0 %v9408
        %v10437 = vpop.f32.mrf.mxu0
        %v10438 = vadd.f32 %v10349, %v10437
        %v10439 = vpop.f32.mrf.mxu0
        %v10440 = vadd.f32 %v10351, %v10439
        %10441 = vmatmul.bf16.gmra.mxu0 %v9417
        %v10442 = vpop.f32.mrf.mxu0
        %v10443 = vadd.f32 %v10354, %v10442
        %v10444 = vpop.f32.mrf.mxu0
        %v10445 = vadd.f32 %v10356, %v10444
        %10446 = vmatmul.bf16.gmra.mxu0 %v9426
        %v10447 = vpop.f32.mrf.mxu0
        %v10448 = vadd.f32 %v10359, %v10447
        %v10449 = vpop.f32.mrf.mxu0
        %v10450 = vadd.f32 %v10361, %v10449
        %10451 = vdwg.mxu0
        %10452 = vmatpush.bf16.msra.mxu0 %v9910
        %10453 = vmatpush.bf16.msra.mxu0 %v9909
        %10454 = vmatpush.bf16.msra.mxu0 %v9908
        %10455 = vmatpush.bf16.msra.mxu0 %v9907
        %10456 = vmatpush.bf16.msra.mxu0 %v9906
        %10457 = vmatpush.bf16.msra.mxu0 %v9905
        %10458 = vmatpush.bf16.msra.mxu0 %v9904
        %10459 = vmatpush.bf16.msra.mxu0 %v9903
        %10460 = vmatmul.bf16.gmra.mxu0 %v9292
        %v10461 = vpop.f32.mrf.mxu0
        %v10462 = vadd.f32 %v10373, %v10461
        %v10463 = vpop.f32.mrf.mxu0
        %v10464 = vadd.f32 %v10375, %v10463
        %10465 = vmatmul.bf16.gmra.mxu0 %v9301
        %v10466 = vpop.f32.mrf.mxu0
        %v10467 = vadd.f32 %v10378, %v10466
        %v10468 = vpop.f32.mrf.mxu0
        %v10469 = vadd.f32 %v10380, %v10468
        %10470 = vmatmul.bf16.gmra.mxu0 %v9310
        %v10471 = vpop.f32.mrf.mxu0
        %v10472 = vadd.f32 %v10383, %v10471
        %v10473 = vpop.f32.mrf.mxu0
        %v10474 = vadd.f32 %v10385, %v10473
        %10475 = vmatmul.bf16.gmra.mxu0 %v9319
        %v10476 = vpop.f32.mrf.mxu0
        %v10477 = vadd.f32 %v10388, %v10476
        %v10478 = vpop.f32.mrf.mxu0
        %v10479 = vadd.f32 %v10390, %v10478
        %10480 = vmatmul.bf16.gmra.mxu0 %v9328
        %v10481 = vpop.f32.mrf.mxu0
        %v10482 = vadd.f32 %v10393, %v10481
        %v10483 = vpop.f32.mrf.mxu0
        %v10484 = vadd.f32 %v10395, %v10483
        %10485 = vmatmul.bf16.gmra.mxu0 %v9337
        %v10486 = vpop.f32.mrf.mxu0
        %v10487 = vadd.f32 %v10398, %v10486
        %v10488 = vpop.f32.mrf.mxu0
        %v10489 = vadd.f32 %v10400, %v10488
        %10490 = vmatmul.bf16.gmra.mxu0 %v9346
        %v10491 = vpop.f32.mrf.mxu0
        %v10492 = vadd.f32 %v10403, %v10491
        %v10493 = vpop.f32.mrf.mxu0
        %v10494 = vadd.f32 %v10405, %v10493
        %10495 = vmatmul.bf16.gmra.mxu0 %v9355
        %v10496 = vpop.f32.mrf.mxu0
        %v10497 = vadd.f32 %v10408, %v10496
        %v10498 = vpop.f32.mrf.mxu0
        %v10499 = vadd.f32 %v10410, %v10498
        %10500 = vmatmul.bf16.gmra.mxu0 %v9364
        %v10501 = vpop.f32.mrf.mxu0
        %v10502 = vadd.f32 %v10413, %v10501
        %v10503 = vpop.f32.mrf.mxu0
        %v10504 = vadd.f32 %v10415, %v10503
        %10505 = vmatmul.bf16.gmra.mxu0 %v9373
        %v10506 = vpop.f32.mrf.mxu0
        %v10507 = vadd.f32 %v10418, %v10506
        %v10508 = vpop.f32.mrf.mxu0
        %v10509 = vadd.f32 %v10420, %v10508
        %10510 = vmatmul.bf16.gmra.mxu0 %v9382
        %v10511 = vpop.f32.mrf.mxu0
        %v10512 = vadd.f32 %v10423, %v10511
        %v10513 = vpop.f32.mrf.mxu0
        %v10514 = vadd.f32 %v10425, %v10513
        %10515 = vmatmul.bf16.gmra.mxu0 %v9391
        %v10516 = vpop.f32.mrf.mxu0
        %v10517 = vadd.f32 %v10428, %v10516
        %v10518 = vpop.f32.mrf.mxu0
        %v10519 = vadd.f32 %v10430, %v10518
        %10520 = vmatmul.bf16.gmra.mxu0 %v9400
        %v10521 = vpop.f32.mrf.mxu0
        %v10522 = vadd.f32 %v10433, %v10521
        %v10523 = vpop.f32.mrf.mxu0
        %v10524 = vadd.f32 %v10435, %v10523
        %10525 = vmatmul.bf16.gmra.mxu0 %v9409
        %v10526 = vpop.f32.mrf.mxu0
        %v10527 = vadd.f32 %v10438, %v10526
        %v10528 = vpop.f32.mrf.mxu0
        %v10529 = vadd.f32 %v10440, %v10528
        %10530 = vmatmul.bf16.gmra.mxu0 %v9418
        %v10531 = vpop.f32.mrf.mxu0
        %v10532 = vadd.f32 %v10443, %v10531
        %v10533 = vpop.f32.mrf.mxu0
        %v10534 = vadd.f32 %v10445, %v10533
        %10535 = vmatmul.bf16.gmra.mxu0 %v9427
        %v10536 = vpop.f32.mrf.mxu0
        %v10537 = vadd.f32 %v10448, %v10536
        %v10538 = vpop.f32.mrf.mxu0
        %v10539 = vadd.f32 %v10450, %v10538
        %10540 = vdwg.mxu0
        %10541 = vmatpush.bf16.msra.mxu0 %v9918
        %10542 = vmatpush.bf16.msra.mxu0 %v9917
        %10543 = vmatpush.bf16.msra.mxu0 %v9916
        %10544 = vmatpush.bf16.msra.mxu0 %v9915
        %10545 = vmatpush.bf16.msra.mxu0 %v9914
        %10546 = vmatpush.bf16.msra.mxu0 %v9913
        %10547 = vmatpush.bf16.msra.mxu0 %v9912
        %10548 = vmatpush.bf16.msra.mxu0 %v9911
        %10549 = vmatmul.bf16.gmra.mxu0 %v9293
        %v10550 = vpop.f32.mrf.mxu0
        %v10551 = vadd.f32 %v10462, %v10550
        %v10552 = vpop.f32.mrf.mxu0
        %v10553 = vadd.f32 %v10464, %v10552
        %10554 = vmatmul.bf16.gmra.mxu0 %v9302
        %v10555 = vpop.f32.mrf.mxu0
        %v10556 = vadd.f32 %v10467, %v10555
        %v10557 = vpop.f32.mrf.mxu0
        %v10558 = vadd.f32 %v10469, %v10557
        %10559 = vmatmul.bf16.gmra.mxu0 %v9311
        %v10560 = vpop.f32.mrf.mxu0
        %v10561 = vadd.f32 %v10472, %v10560
        %v10562 = vpop.f32.mrf.mxu0
        %v10563 = vadd.f32 %v10474, %v10562
        %10564 = vmatmul.bf16.gmra.mxu0 %v9320
        %v10565 = vpop.f32.mrf.mxu0
        %v10566 = vadd.f32 %v10477, %v10565
        %v10567 = vpop.f32.mrf.mxu0
        %v10568 = vadd.f32 %v10479, %v10567
        %10569 = vmatmul.bf16.gmra.mxu0 %v9329
        %v10570 = vpop.f32.mrf.mxu0
        %v10571 = vadd.f32 %v10482, %v10570
        %v10572 = vpop.f32.mrf.mxu0
        %v10573 = vadd.f32 %v10484, %v10572
        %10574 = vmatmul.bf16.gmra.mxu0 %v9338
        %v10575 = vpop.f32.mrf.mxu0
        %v10576 = vadd.f32 %v10487, %v10575
        %v10577 = vpop.f32.mrf.mxu0
        %v10578 = vadd.f32 %v10489, %v10577
        %10579 = vmatmul.bf16.gmra.mxu0 %v9347
        %v10580 = vpop.f32.mrf.mxu0
        %v10581 = vadd.f32 %v10492, %v10580
        %v10582 = vpop.f32.mrf.mxu0
        %v10583 = vadd.f32 %v10494, %v10582
        %10584 = vmatmul.bf16.gmra.mxu0 %v9356
        %v10585 = vpop.f32.mrf.mxu0
        %v10586 = vadd.f32 %v10497, %v10585
        %v10587 = vpop.f32.mrf.mxu0
        %v10588 = vadd.f32 %v10499, %v10587
        %10589 = vmatmul.bf16.gmra.mxu0 %v9365
        %v10590 = vpop.f32.mrf.mxu0
        %v10591 = vadd.f32 %v10502, %v10590
        %v10592 = vpop.f32.mrf.mxu0
        %v10593 = vadd.f32 %v10504, %v10592
        %10594 = vmatmul.bf16.gmra.mxu0 %v9374
        %v10595 = vpop.f32.mrf.mxu0
        %v10596 = vadd.f32 %v10507, %v10595
        %v10597 = vpop.f32.mrf.mxu0
        %v10598 = vadd.f32 %v10509, %v10597
        %10599 = vmatmul.bf16.gmra.mxu0 %v9383
        %v10600 = vpop.f32.mrf.mxu0
        %v10601 = vadd.f32 %v10512, %v10600
        %v10602 = vpop.f32.mrf.mxu0
        %v10603 = vadd.f32 %v10514, %v10602
        %10604 = vmatmul.bf16.gmra.mxu0 %v9392
        %v10605 = vpop.f32.mrf.mxu0
        %v10606 = vadd.f32 %v10517, %v10605
        %v10607 = vpop.f32.mrf.mxu0
        %v10608 = vadd.f32 %v10519, %v10607
        %10609 = vmatmul.bf16.gmra.mxu0 %v9401
        %v10610 = vpop.f32.mrf.mxu0
        %v10611 = vadd.f32 %v10522, %v10610
        %v10612 = vpop.f32.mrf.mxu0
        %v10613 = vadd.f32 %v10524, %v10612
        %10614 = vmatmul.bf16.gmra.mxu0 %v9410
        %v10615 = vpop.f32.mrf.mxu0
        %v10616 = vadd.f32 %v10527, %v10615
        %v10617 = vpop.f32.mrf.mxu0
        %v10618 = vadd.f32 %v10529, %v10617
        %10619 = vmatmul.bf16.gmra.mxu0 %v9419
        %v10620 = vpop.f32.mrf.mxu0
        %v10621 = vadd.f32 %v10532, %v10620
        %v10622 = vpop.f32.mrf.mxu0
        %v10623 = vadd.f32 %v10534, %v10622
        %10624 = vmatmul.bf16.gmra.mxu0 %v9428
        %v10625 = vpop.f32.mrf.mxu0
        %v10626 = vadd.f32 %v10537, %v10625
        %v10627 = vpop.f32.mrf.mxu0
        %v10628 = vadd.f32 %v10539, %v10627
        %10629 = vdwg.mxu0
        %10630 = vmatpush.bf16.msra.mxu0 %v9926
        %10631 = vmatpush.bf16.msra.mxu0 %v9925
        %10632 = vmatpush.bf16.msra.mxu0 %v9924
        %10633 = vmatpush.bf16.msra.mxu0 %v9923
        %10634 = vmatpush.bf16.msra.mxu0 %v9922
        %10635 = vmatpush.bf16.msra.mxu0 %v9921
        %10636 = vmatpush.bf16.msra.mxu0 %v9920
        %10637 = vmatpush.bf16.msra.mxu0 %v9919
        %10638 = vmatmul.bf16.gmra.mxu0 %v9294
        %v10639 = vpop.f32.mrf.mxu0
        %v10640 = vadd.f32 %v10551, %v10639
        %v10641 = vpop.f32.mrf.mxu0
        %v10642 = vadd.f32 %v10553, %v10641
        %10643 = vmatmul.bf16.gmra.mxu0 %v9303
        %v10644 = vpop.f32.mrf.mxu0
        %v10645 = vadd.f32 %v10556, %v10644
        %v10646 = vpop.f32.mrf.mxu0
        %v10647 = vadd.f32 %v10558, %v10646
        %10648 = vmatmul.bf16.gmra.mxu0 %v9312
        %v10649 = vpop.f32.mrf.mxu0
        %v10650 = vadd.f32 %v10561, %v10649
        %v10651 = vpop.f32.mrf.mxu0
        %v10652 = vadd.f32 %v10563, %v10651
        %10653 = vmatmul.bf16.gmra.mxu0 %v9321
        %v10654 = vpop.f32.mrf.mxu0
        %v10655 = vadd.f32 %v10566, %v10654
        %v10656 = vpop.f32.mrf.mxu0
        %v10657 = vadd.f32 %v10568, %v10656
        %10658 = vmatmul.bf16.gmra.mxu0 %v9330
        %v10659 = vpop.f32.mrf.mxu0
        %v10660 = vadd.f32 %v10571, %v10659
        %v10661 = vpop.f32.mrf.mxu0
        %v10662 = vadd.f32 %v10573, %v10661
        %10663 = vmatmul.bf16.gmra.mxu0 %v9339
        %v10664 = vpop.f32.mrf.mxu0
        %v10665 = vadd.f32 %v10576, %v10664
        %v10666 = vpop.f32.mrf.mxu0
        %v10667 = vadd.f32 %v10578, %v10666
        %10668 = vmatmul.bf16.gmra.mxu0 %v9348
        %v10669 = vpop.f32.mrf.mxu0
        %v10670 = vadd.f32 %v10581, %v10669
        %v10671 = vpop.f32.mrf.mxu0
        %v10672 = vadd.f32 %v10583, %v10671
        %10673 = vmatmul.bf16.gmra.mxu0 %v9357
        %v10674 = vpop.f32.mrf.mxu0
        %v10675 = vadd.f32 %v10586, %v10674
        %v10676 = vpop.f32.mrf.mxu0
        %v10677 = vadd.f32 %v10588, %v10676
        %10678 = vmatmul.bf16.gmra.mxu0 %v9366
        %v10679 = vpop.f32.mrf.mxu0
        %v10680 = vadd.f32 %v10591, %v10679
        %v10681 = vpop.f32.mrf.mxu0
        %v10682 = vadd.f32 %v10593, %v10681
        %10683 = vmatmul.bf16.gmra.mxu0 %v9375
        %v10684 = vpop.f32.mrf.mxu0
        %v10685 = vadd.f32 %v10596, %v10684
        %v10686 = vpop.f32.mrf.mxu0
        %v10687 = vadd.f32 %v10598, %v10686
        %10688 = vmatmul.bf16.gmra.mxu0 %v9384
        %v10689 = vpop.f32.mrf.mxu0
        %v10690 = vadd.f32 %v10601, %v10689
        %v10691 = vpop.f32.mrf.mxu0
        %v10692 = vadd.f32 %v10603, %v10691
        %10693 = vmatmul.bf16.gmra.mxu0 %v9393
        %v10694 = vpop.f32.mrf.mxu0
        %v10695 = vadd.f32 %v10606, %v10694
        %v10696 = vpop.f32.mrf.mxu0
        %v10697 = vadd.f32 %v10608, %v10696
        %10698 = vmatmul.bf16.gmra.mxu0 %v9402
        %v10699 = vpop.f32.mrf.mxu0
        %v10700 = vadd.f32 %v10611, %v10699
        %v10701 = vpop.f32.mrf.mxu0
        %v10702 = vadd.f32 %v10613, %v10701
        %10703 = vmatmul.bf16.gmra.mxu0 %v9411
        %v10704 = vpop.f32.mrf.mxu0
        %v10705 = vadd.f32 %v10616, %v10704
        %v10706 = vpop.f32.mrf.mxu0
        %v10707 = vadd.f32 %v10618, %v10706
        %10708 = vmatmul.bf16.gmra.mxu0 %v9420
        %v10709 = vpop.f32.mrf.mxu0
        %v10710 = vadd.f32 %v10621, %v10709
        %v10711 = vpop.f32.mrf.mxu0
        %v10712 = vadd.f32 %v10623, %v10711
        %10713 = vmatmul.bf16.gmra.mxu0 %v9429
        %v10714 = vpop.f32.mrf.mxu0
        %v10715 = vadd.f32 %v10626, %v10714
        %v10716 = vpop.f32.mrf.mxu0
        %v10717 = vadd.f32 %v10628, %v10716
        %10718 = vdwg.mxu0
        %10719 = vmatpush.bf16.msra.mxu0 %v9934
        %10720 = vmatpush.bf16.msra.mxu0 %v9933
        %10721 = vmatpush.bf16.msra.mxu0 %v9932
        %10722 = vmatpush.bf16.msra.mxu0 %v9931
        %10723 = vmatpush.bf16.msra.mxu0 %v9930
        %10724 = vmatpush.bf16.msra.mxu0 %v9929
        %10725 = vmatpush.bf16.msra.mxu0 %v9928
        %10726 = vmatpush.bf16.msra.mxu0 %v9927
        %10727 = vmatmul.bf16.gmra.mxu0 %v9295
        %v10728 = vpop.f32.mrf.mxu0
        %v10729 = vadd.f32 %v10640, %v10728
        %v10730 = vpop.f32.mrf.mxu0
        %v10731 = vadd.f32 %v10642, %v10730
        %10732 = vmatmul.bf16.gmra.mxu0 %v9304
        %v10733 = vpop.f32.mrf.mxu0
        %v10734 = vadd.f32 %v10645, %v10733
        %v10735 = vpop.f32.mrf.mxu0
        %v10736 = vadd.f32 %v10647, %v10735
        %10737 = vmatmul.bf16.gmra.mxu0 %v9313
        %v10738 = vpop.f32.mrf.mxu0
        %v10739 = vadd.f32 %v10650, %v10738
        %v10740 = vpop.f32.mrf.mxu0
        %v10741 = vadd.f32 %v10652, %v10740
        %10742 = vmatmul.bf16.gmra.mxu0 %v9322
        %v10743 = vpop.f32.mrf.mxu0
        %v10744 = vadd.f32 %v10655, %v10743
        %v10745 = vpop.f32.mrf.mxu0
        %v10746 = vadd.f32 %v10657, %v10745
        %10747 = vmatmul.bf16.gmra.mxu0 %v9331
        %v10748 = vpop.f32.mrf.mxu0
        %v10749 = vadd.f32 %v10660, %v10748
        %v10750 = vpop.f32.mrf.mxu0
        %v10751 = vadd.f32 %v10662, %v10750
        %10752 = vmatmul.bf16.gmra.mxu0 %v9340
        %v10753 = vpop.f32.mrf.mxu0
        %v10754 = vadd.f32 %v10665, %v10753
        %v10755 = vpop.f32.mrf.mxu0
        %v10756 = vadd.f32 %v10667, %v10755
        %10757 = vmatmul.bf16.gmra.mxu0 %v9349
        %v10758 = vpop.f32.mrf.mxu0
        %v10759 = vadd.f32 %v10670, %v10758
        %v10760 = vpop.f32.mrf.mxu0
        %v10761 = vadd.f32 %v10672, %v10760
        %10762 = vmatmul.bf16.gmra.mxu0 %v9358
        %v10763 = vpop.f32.mrf.mxu0
        %v10764 = vadd.f32 %v10675, %v10763
        %v10765 = vpop.f32.mrf.mxu0
        %v10766 = vadd.f32 %v10677, %v10765
        %10767 = vmatmul.bf16.gmra.mxu0 %v9367
        %v10768 = vpop.f32.mrf.mxu0
        %v10769 = vadd.f32 %v10680, %v10768
        %v10770 = vpop.f32.mrf.mxu0
        %v10771 = vadd.f32 %v10682, %v10770
        %10772 = vmatmul.bf16.gmra.mxu0 %v9376
        %v10773 = vpop.f32.mrf.mxu0
        %v10774 = vadd.f32 %v10685, %v10773
        %v10775 = vpop.f32.mrf.mxu0
        %v10776 = vadd.f32 %v10687, %v10775
        %10777 = vmatmul.bf16.gmra.mxu0 %v9385
        %v10778 = vpop.f32.mrf.mxu0
        %v10779 = vadd.f32 %v10690, %v10778
        %v10780 = vpop.f32.mrf.mxu0
        %v10781 = vadd.f32 %v10692, %v10780
        %10782 = vmatmul.bf16.gmra.mxu0 %v9394
        %v10783 = vpop.f32.mrf.mxu0
        %v10784 = vadd.f32 %v10695, %v10783
        %v10785 = vpop.f32.mrf.mxu0
        %v10786 = vadd.f32 %v10697, %v10785
        %10787 = vmatmul.bf16.gmra.mxu0 %v9403
        %v10788 = vpop.f32.mrf.mxu0
        %v10789 = vadd.f32 %v10700, %v10788
        %v10790 = vpop.f32.mrf.mxu0
        %v10791 = vadd.f32 %v10702, %v10790
        %10792 = vmatmul.bf16.gmra.mxu0 %v9412
        %v10793 = vpop.f32.mrf.mxu0
        %v10794 = vadd.f32 %v10705, %v10793
        %v10795 = vpop.f32.mrf.mxu0
        %v10796 = vadd.f32 %v10707, %v10795
        %10797 = vmatmul.bf16.gmra.mxu0 %v9421
        %v10798 = vpop.f32.mrf.mxu0
        %v10799 = vadd.f32 %v10710, %v10798
        %v10800 = vpop.f32.mrf.mxu0
        %v10801 = vadd.f32 %v10712, %v10800
        %10802 = vmatmul.bf16.gmra.mxu0 %v9430
        %v10803 = vpop.f32.mrf.mxu0
        %v10804 = vadd.f32 %v10715, %v10803
        %v10805 = vpop.f32.mrf.mxu0
        %v10806 = vadd.f32 %v10717, %v10805
        %10807 = vdwg.mxu0
        %v10808 = vadd.f32 %v10729, %v8804
        %v10809 = vadd.f32 %v10731, %v8805
        %v10810 = vadd.f32 %v10734, %v8806
        %v10811 = vadd.f32 %v10736, %v8807
        %v10812 = vadd.f32 %v10739, %v8808
        %v10813 = vadd.f32 %v10741, %v8809
        %v10814 = vadd.f32 %v10744, %v8810
        %v10815 = vadd.f32 %v10746, %v8811
        %v10816 = vadd.f32 %v10749, %v8812
        %v10817 = vadd.f32 %v10751, %v8813
        %v10818 = vadd.f32 %v10754, %v8814
        %v10819 = vadd.f32 %v10756, %v8815
        %v10820 = vadd.f32 %v10759, %v8816
        %v10821 = vadd.f32 %v10761, %v8817
        %v10822 = vadd.f32 %v10764, %v8818
        %v10823 = vadd.f32 %v10766, %v8819
        %v10824 = vadd.f32 %v10769, %v8820
        %v10825 = vadd.f32 %v10771, %v8821
        %v10826 = vadd.f32 %v10774, %v8822
        %v10827 = vadd.f32 %v10776, %v8823
        %v10828 = vadd.f32 %v10779, %v8824
        %v10829 = vadd.f32 %v10781, %v8825
        %v10830 = vadd.f32 %v10784, %v8826
        %v10831 = vadd.f32 %v10786, %v8827
        %v10832 = vadd.f32 %v10789, %v8828
        %v10833 = vadd.f32 %v10791, %v8829
        %v10834 = vadd.f32 %v10794, %v8830
        %v10835 = vadd.f32 %v10796, %v8831
        %v10836 = vadd.f32 %v10799, %v8832
        %v10837 = vadd.f32 %v10801, %v8833
        %v10838 = vadd.f32 %v10804, %v8834
        %v10839 = vadd.f32 %v10806, %v8835
        %v10840 = vmax.f32 %v10808, 0.0
        %v10841 = vmax.f32 %v10809, 0.0
        %v10842 = vmax.f32 %v10810, 0.0
        %v10843 = vmax.f32 %v10811, 0.0
        %v10844 = vmax.f32 %v10812, 0.0
        %v10845 = vmax.f32 %v10813, 0.0
        %v10846 = vmax.f32 %v10814, 0.0
        %v10847 = vmax.f32 %v10815, 0.0
        %v10848 = vmax.f32 %v10816, 0.0
        %v10849 = vmax.f32 %v10817, 0.0
        %v10850 = vmax.f32 %v10818, 0.0
        %v10851 = vmax.f32 %v10819, 0.0
        %v10852 = vmax.f32 %v10820, 0.0
        %v10853 = vmax.f32 %v10821, 0.0
        %v10854 = vmax.f32 %v10822, 0.0
        %v10855 = vmax.f32 %v10823, 0.0
        %v10856 = vmax.f32 %v10824, 0.0
        %v10857 = vmax.f32 %v10825, 0.0
        %v10858 = vmax.f32 %v10826, 0.0
        %v10859 = vmax.f32 %v10827, 0.0
        %v10860 = vmax.f32 %v10828, 0.0
        %v10861 = vmax.f32 %v10829, 0.0
        %v10862 = vmax.f32 %v10830, 0.0
        %v10863 = vmax.f32 %v10831, 0.0
        %v10864 = vmax.f32 %v10832, 0.0
        %v10865 = vmax.f32 %v10833, 0.0
        %v10866 = vmax.f32 %v10834, 0.0
        %v10867 = vmax.f32 %v10835, 0.0
        %v10868 = vmax.f32 %v10836, 0.0
        %v10869 = vmax.f32 %v10837, 0.0
        %v10870 = vmax.f32 %v10838, 0.0
        %v10871 = vmax.f32 %v10839, 0.0
        %10872 = vst [vmem:[%s288] sm:$0xff] %v10840
        %10873 = vst [vmem:[%s288 + $0x8] sm:$0xff] %v10841
        %10874 = vst [vmem:[%s288 + $0x10] sm:$0xff] %v10842
        %10875 = vst [vmem:[%s288 + $0x18] sm:$0xff] %v10843
        %10876 = vst [vmem:[%s288 + $0x20] sm:$0xff] %v10844
        %10877 = vst [vmem:[%s288 + $0x28] sm:$0xff] %v10845
        %10878 = vst [vmem:[%s288 + $0x30] sm:$0xff] %v10846
        %10879 = vst [vmem:[%s288 + $0x38] sm:$0xff] %v10847
        %10880 = vst [vmem:[%s288 + $0x40] sm:$0xff] %v10848
        %10881 = vst [vmem:[%s288 + $0x48] sm:$0xff] %v10849
        %10882 = vst [vmem:[%s288 + $0x50] sm:$0xff] %v10850
        %10883 = vst [vmem:[%s288 + $0x58] sm:$0xff] %v10851
        %10884 = vst [vmem:[%s288 + $0x60] sm:$0xff] %v10852
        %10885 = vst [vmem:[%s288 + $0x68] sm:$0xff] %v10853
        %10886 = vst [vmem:[%s288 + $0x70] sm:$0xff] %v10854
        %10887 = vst [vmem:[%s288 + $0x78] sm:$0xff] %v10855
        %10888 = vst [vmem:[%s288 + $0x80] sm:$0xff] %v10856
        %10889 = vst [vmem:[%s288 + $0x88] sm:$0xff] %v10857
        %10890 = vst [vmem:[%s288 + $0x90] sm:$0xff] %v10858
        %10891 = vst [vmem:[%s288 + $0x98] sm:$0xff] %v10859
        %10892 = vst [vmem:[%s288 + $0xa0] sm:$0xff] %v10860
        %10893 = vst [vmem:[%s288 + $0xa8] sm:$0xff] %v10861
        %10894 = vst [vmem:[%s288 + $0xb0] sm:$0xff] %v10862
        %10895 = vst [vmem:[%s288 + $0xb8] sm:$0xff] %v10863
        %10896 = vst [vmem:[%s288 + $0xc0] sm:$0xff] %v10864
        %10897 = vst [vmem:[%s288 + $0xc8] sm:$0xff] %v10865
        %10898 = vst [vmem:[%s288 + $0xd0] sm:$0xff] %v10866
        %10899 = vst [vmem:[%s288 + $0xd8] sm:$0xff] %v10867
        %10900 = vst [vmem:[%s288 + $0xe0] sm:$0xff] %v10868
        %10901 = vst [vmem:[%s288 + $0xe8] sm:$0xff] %v10869
        %10902 = vst [vmem:[%s288 + $0xf0] sm:$0xff] %v10870
        %10903 = vst [vmem:[%s288 + $0xf8] sm:$0xff] %v10871
        %s10904 = sand.u32 %s182, 1
        %s10905 = scalar_lea.sflag [#allocation6], %s10904
        %s10906 = sand.u32 %s182, 1
        %s10907 = smul.addr %s10906, 256
        %s10908 = scalar_lea.vmem [#allocation7], %s10907
        // Predicated region
        $region53: #{tpu_custom_call.1} parent=47 // pred_check
          %p10909 = pneg %p192
        $region54: #{tpu_custom_call.1} parent=47 // pred_check_branch
          %10911 = sbr.rel (%p10909) target = $region56
        $region55: #{tpu_custom_call.1} parent=47 // pred_region
          %10913 = vsyncadd %s10905, 0
          %s10914 = smul.addr %s22, 32
          %s10915 = smul.addr %s10914, 8
          %s10916 = scalar_lea.hbm %s7, %s10915
          %s10917 = sshll.u32 %s10908, 4
          %s10918 = int_to_ptr.vmem [resolvable:$true] %s10917
          %s10919 = sshll.u32 %s10916, 4
          %s10920 = int_to_ptr.hbm [resolvable:$true] %s10919
          %10925 = dma.vmem_to_hbm [thread:$0]  %s10918, 4096, %s10920, %s10905, 128, 128, 8
        $region56: #{tpu_custom_call.1} parent=47 // pred_fallthru
          _
      $region48: #{tpu_custom_call.1} parent=5 // pred_fallthru
        _
      %p10926 = scmp.le.s32.totalorder 2, %s17
      // Predicated region
      $region57: #{tpu_custom_call.1} parent=5 // pred_check
        %p10927 = pneg %p10926
      $region58: #{tpu_custom_call.1} parent=5 // pred_check_branch
        %10929 = sbr.rel (%p10927) target = $region60
      $region59: #{tpu_custom_call.1} parent=5 // pred_region
        %s10930 = ssub.s32 %s17, 2
        // Predicated region
        $region61: #{tpu_custom_call.1} parent=59 // pred_check
          %p10931 = pneg %p198
        $region62: #{tpu_custom_call.1} parent=59 // pred_check_branch
          %10933 = sbr.rel (%p10931) target = $region64
        $region63: #{tpu_custom_call.1} parent=59 // pred_region
          %s10934 = sand.u32 %s183, 1
          %s10935 = scalar_lea.sflag [#allocation6], %s10934
          %s10936 = sand.u32 %s183, 1
          %s10937 = smul.addr %s10936, 256
          %s10938 = scalar_lea.vmem [#allocation7], %s10937
          %10940 = dma.done %s10935, 4096
        $region64: #{tpu_custom_call.1} parent=59 // pred_fallthru
          _
      $region60: #{tpu_custom_call.1} parent=5 // pred_fallthru
        _
    $region6: #{tpu_custom_call.1} parent=1 // loop_footer
      %s21 = sadd.s32 1, %s17
    $region7: #{tpu_custom_call.1} parent=1 // loop_footer_branch
      %16 = sbr.rel target = $region3
    $region8: #{tpu_custom_call.1} parent=1 // loop_exit
      _
    %10941 = vsyncpa [#allocation5], 1
    %s10942 = scalar_lea.sflag [#allocation5], 1
    %10943 = vsyncpa %s10942, 1
    %10944 = vsyncpa [#allocation6], 1
    %s10945 = scalar_lea.sflag [#allocation6], 1
    %10946 = vsyncpa %s10945, 1

</llo_original>
